<compile_context>
chip_gen: v7x
topology: tpu7x:2x2x1
jax: 0.10.0
libtpu: 0.0.40
codegen_flags: <defaults>
</compile_context>

<pallas_src>
import functools

import jax
import jax.numpy as jnp
from jax.experimental import pallas as pl
from jax.experimental.pallas import tpu as pltpu


def _round_up(x, m):
    return (x + m - 1) // m * m


# ----------------------------------------------------------------------------
# Kernel 1: fused steps 1-4 (feature extraction + shrink + mapping + expand)
# Per grid step: one row tile (TH rows) of one image.
# ----------------------------------------------------------------------------
def head_kernel(slopes_ref, xprev_ref, xcur_ref, xnext_ref,
                w1_ref, b1_ref, w2_ref, b2_ref, w4_ref, b4_ref,
                o_ref, xp_ref, patches_ref, *, TH, W, n_tiles):
    K, P = 5, 2
    Wk = W + 2 * P                  # padded working row stride
    Lo = o_ref.shape[-1]            # flat tile length (128-lane multiple)
    Cin = xcur_ref.shape[0]
    t = pl.program_id(1)

    # zero-padded working grid (pad border + 128-rounding junk stay zero)
    xp_ref[...] = jnp.zeros(xp_ref.shape, xp_ref.dtype)

    def put(src_ref, src_r, dst_i):
        d = dst_i * Wk + P
        xp_ref[:, d:d + W] = src_ref[:, src_r, :]

    @pl.when(t > 0)
    def _():
        for i in range(P):                      # top halo from previous tile
            put(xprev_ref, TH - P + i, i)

    for r in range(TH):                         # main rows
        put(xcur_ref, r, P + r)

    @pl.when(t < n_tiles - 1)
    def _():
        for i in range(P):                      # bottom halo from next tile
            put(xnext_ref, i, TH + P + i)

    # im2col: tap (a, b) is a contiguous lane slice at offset a*Wk + b
    for a in range(K):
        for b in range(K):
            tap = a * K + b
            off = a * Wk + b
            patches_ref[tap * Cin:(tap + 1) * Cin, :] = xp_ref[:, off:off + Lo]

    # step1: 5x5 conv + PReLU (single-multiply form)
    h = jnp.dot(w1_ref[...], patches_ref[...],
                preferred_element_type=jnp.float32) + b1_ref[...]
    h = h * jnp.where(h >= 0.0, slopes_ref[0, 0], slopes_ref[0, 1])
    # step2 (1x1) + collapsed chain of 11 PReLUs (step2 + 10x mapping)
    h = jnp.dot(w2_ref[...], h, preferred_element_type=jnp.float32) + b2_ref[...]
    h = h * jnp.where(h >= 0.0, slopes_ref[1, 0], slopes_ref[1, 1])
    # step4 (1x1) + PReLU
    h = jnp.dot(w4_ref[...], h, preferred_element_type=jnp.float32) + b4_ref[...]
    h = h * jnp.where(h >= 0.0, slopes_ref[2, 0], slopes_ref[2, 1])

    o_ref[...] = h.astype(o_ref.dtype)


# ----------------------------------------------------------------------------
# Generic KxK conv tile kernel (used for both deconv stages after rewriting
# them as convolutions on the un-upsampled grid).  Input/output are flat
# per-tile slabs (C, Ltile) with row stride Win_row / (W + 2*(K//2)).
# ----------------------------------------------------------------------------
def conv_tile_kernel(xprev_ref, xcur_ref, xnext_ref, w_ref, b_ref,
                     o_ref, xp_ref, patches_ref, *, TH, W, Win_row, K, n_tiles):
    P = K // 2
    Wk = W + 2 * P
    Lo = o_ref.shape[-1]
    Cin = xcur_ref.shape[0]
    t = pl.program_id(1)

    xp_ref[...] = jnp.zeros(xp_ref.shape, xp_ref.dtype)

    def put(src_ref, src_r, dst_i):
        d = dst_i * Wk + P
        s = src_r * Win_row
        xp_ref[:, d:d + W] = src_ref[:, s:s + W]

    @pl.when(t > 0)
    def _():
        for i in range(P):
            put(xprev_ref, TH - P + i, i)

    for r in range(TH):
        put(xcur_ref, r, P + r)

    @pl.when(t < n_tiles - 1)
    def _():
        for i in range(P):
            put(xnext_ref, i, TH + P + i)

    for a in range(K):
        for b in range(K):
            tap = a * K + b
            off = a * Wk + b
            patches_ref[tap * Cin:(tap + 1) * Cin, :] = xp_ref[:, off:off + Lo]

    # single stacked matmul over all output channels / phases
    y = jnp.dot(w_ref[...], patches_ref[...],
                preferred_element_type=jnp.float32) + b_ref[...]
    o_ref[...] = y.astype(o_ref.dtype)


# ----------------------------------------------------------------------------
# pallas_call wrappers
# ----------------------------------------------------------------------------
def _head_call(x, slopes, w1, b1, w2, b2, w4, b4, *, TH):
    N, Cin, H, W = x.shape
    out1, out2 = w1.shape[0], w2.shape[0]
    nT = H // TH
    Wk = W + 4
    Lt = _round_up(TH * Wk, 128)
    LP = Lt + 4 * Wk + 8

    kernel = functools.partial(head_kernel, TH=TH, W=W, n_tiles=nT)
    xspec = lambda f: pl.BlockSpec((None, Cin, TH, W), f)
    wspec = lambda shape: pl.BlockSpec(shape, lambda n, t: (0, 0))
    return pl.pallas_call(
        kernel,
        out_shape=jax.ShapeDtypeStruct((N, nT, out1, Lt), jnp.bfloat16),
        grid=(N, nT),
        in_specs=[
            pl.BlockSpec(memory_space=pltpu.MemorySpace.SMEM),             # slopes
            xspec(lambda n, t: (n, 0, jnp.maximum(t - 1, 0), 0)),          # prev tile
            xspec(lambda n, t: (n, 0, t, 0)),                              # cur tile
            xspec(lambda n, t: (n, 0, jnp.minimum(t + 1, nT - 1), 0)),     # next tile
            wspec((out1, 25 * Cin)),                                       # w1 (im2col)
            wspec((out1, 1)),                                              # b1
            wspec((out2, out1)),                                           # w2
            wspec((out2, 1)),                                              # b2
            wspec((out1, out2)),                                           # w4
            wspec((out1, 1)),                                              # b4
        ],
        out_specs=pl.BlockSpec((None, None, out1, Lt), lambda n, t: (n, t, 0, 0)),
        scratch_shapes=[
            pltpu.VMEM((Cin, LP), jnp.bfloat16),          # zero-padded input
            pltpu.VMEM((25 * Cin, Lt), jnp.bfloat16),     # im2col patches
        ],
        compiler_params=pltpu.CompilerParams(
            dimension_semantics=("parallel", "parallel")),
    )(slopes, x, x, x, w1, b1, w2, b2, w4, b4)


def _conv_call(x_tiles, w, b, *, K, W, TH, Win_row, out_dtype):
    N, nT, Cin, Lin = x_tiles.shape
    Cout = w.shape[0]
    P = K // 2
    Wk = W + 2 * P
    Lt = _round_up(TH * Wk, 128)
    LP = Lt + 2 * P * Wk + 8

    kernel = functools.partial(conv_tile_kernel, TH=TH, W=W, Win_row=Win_row,
                               K=K, n_tiles=nT)
    vspec = lambda f: pl.BlockSpec((None, None, Cin, Lin), f)
    return pl.pallas_call(
        kernel,
        out_shape=jax.ShapeDtypeStruct((N, nT, Cout, Lt), out_dtype),
        grid=(N, nT),
        in_specs=[
            vspec(lambda n, t: (n, jnp.maximum(t - 1, 0), 0, 0)),
            vspec(lambda n, t: (n, t, 0, 0)),
            vspec(lambda n, t: (n, jnp.minimum(t + 1, nT - 1), 0, 0)),
            pl.BlockSpec((Cout, K * K * Cin), lambda n, t: (0, 0)),
            pl.BlockSpec((Cout, 1), lambda n, t: (0, 0)),
        ],
        out_specs=pl.BlockSpec((None, None, Cout, Lt), lambda n, t: (n, t, 0, 0)),
        scratch_shapes=[
            pltpu.VMEM((Cin, LP), jnp.bfloat16),
            pltpu.VMEM((K * K * Cin, Lt), jnp.bfloat16),
        ],
        compiler_params=pltpu.CompilerParams(
            dimension_semantics=("parallel", "parallel")),
    )(x_tiles, x_tiles, x_tiles, w, b)


# ----------------------------------------------------------------------------
# Wrapper-side (weight-only / layout-only) helpers
# ----------------------------------------------------------------------------
def _prelu_chain_slopes(alphas):
    """Collapse a chain of PReLUs into (slope_pos, slope_neg) by tracing the
    chain on +1 / -1 (exact: PReLU chains are positively homogeneous)."""
    v = jnp.stack([jnp.float32(1.0), jnp.float32(-1.0)])
    for a in alphas:
        v = jnp.where(v >= 0.0, v, a * v)
    return jnp.stack([v[0], -v[1]])


def _conv_im2col_weight(w_oihw):
    """torch Conv2d weight (Cout, Cin, K, K) -> (Cout, K*K*Cin) with rows
    ordered (tap = a*K + b, ci) to match the in-kernel im2col layout."""
    Cout, Cin, K, _ = w_oihw.shape
    return jnp.transpose(w_oihw, (0, 2, 3, 1)).reshape(Cout, K * K * Cin)


def _subpixel_deconv_weight(w_t):
    """torch ConvTranspose2d weight (Cin, Cout, 9, 9), stride 2 -> four 5x5
    per-output-parity conv kernels in im2col layout: (4, Cout, 25*Cin), with
      y[co, 2*th+ph, 2*tw+pw] = sum_{ci,a,b} K[ph*2+pw][co,ci,a,b]
                                             * xpad2[ci, th+a, tw+b]."""
    Cin, Cout = w_t.shape[0], w_t.shape[1]
    mats = []
    for ph in range(2):
        for pw in range(2):
            k = w_t[:, :, ph::2, :][:, :, ::-1, :]
            k = k[:, :, :, pw::2][:, :, :, ::-1]
            k = jnp.transpose(k, (1, 0, 2, 3))          # (Cout, Cin, a, b)
            k = jnp.pad(k, ((0, 0), (0, 0),
                            (5 - k.shape[2], 0), (5 - k.shape[3], 0)))
            mats.append(jnp.transpose(k, (0, 2, 3, 1)).reshape(Cout, 25 * Cin))
    return jnp.stack(mats)                              # phase index = ph*2 + pw


def _ref_deconv(x, w_t, b, precision=None):
    """Reference ConvTranspose2d(k=9, s=2, p=4, op=1)."""
    K = w_t.shape[2]
    wf = jnp.transpose(jnp.flip(w_t, axis=(2, 3)), (1, 0, 2, 3))
    y = jax.lax.conv_general_dilated(
        x, wf, (1, 1), [(K - 1 - 4, K - 1 - 4 + 1)] * 2,
        lhs_dilation=(2, 2),
        dimension_numbers=("NCHW", "OIHW", "NCHW"), precision=precision)
    return y + b[None, :, None, None]


def _deconv6_conv3x3_weight(w6):
    """Second ConvTranspose2d re-expressed EXACTLY as a 3x3 conv (pad 1) on the
    4*mid-channel phase-separated output of the first deconv (channel order
    c64 = (p1h*2 + p1w)*mid + cm).  Weights are read off impulse responses of
    the reference op, so intermediate-grid cropping at borders is preserved.
    Returns the phase-stacked im2col weight (16*cf, 9*4*mid)."""
    mid, cf = w6.shape[0], w6.shape[1]
    C64 = 4 * mid
    S, m0 = 8, 4
    idx = jnp.arange(C64)
    p1h = idx // (2 * mid)
    p1w = (idx // mid) % 2
    ci = idx % mid
    imp = jnp.zeros((C64, mid, 2 * S, 2 * S), jnp.float32)
    imp = imp.at[idx, ci, 2 * m0 + p1h, 2 * m0 + p1w].set(1.0)
    resp = _ref_deconv(imp, w6, jnp.zeros((cf,), jnp.float32),
                       precision=jax.lax.Precision.HIGHEST)     # (C64, cf, 4S, 4S)
    blk = resp.reshape(C64, cf, S, 4, S, 4)[:, :, m0 - 1:m0 + 2, :,
                                            m0 - 1:m0 + 2, :]
    blk = jnp.flip(blk, axis=(2, 4))            # (c64, cf, dh, qh, dw, qw)
    w3 = jnp.transpose(blk, (3, 5, 1, 2, 4, 0))  # (qh, qw, cf, dh, dw, c64)
    return w3.reshape(16 * cf, 9 * C64)


# ----------------------------------------------------------------------------
# FSRCNN forward (Pallas)
# ----------------------------------------------------------------------------
def fsrcnn_forward_pallas(x_nchw, p):
    N, Cin, H, W = x_nchw.shape
    out1 = p["w1"].shape[0]
    out2 = p["w2"].shape[0]
    mid = p["w5"].shape[1]               # 2 * out2
    cf = p["w6"].shape[1]                # img_filter
    f32, bf16 = jnp.float32, jnp.bfloat16

    TH = 8 if (H % 8 == 0) else H        # row-tile height (TODO(synk): autosize)
    nT = H // TH

    # collapsed PReLU slopes: after step1 / after step2 + 10 mapping / after step4
    slopes = jnp.stack([
        _prelu_chain_slopes([p["a1"]]),
        _prelu_chain_slopes([p["a2"]] + [p["a3"][i] for i in range(10)]),
        _prelu_chain_slopes([p["a4"]]),
    ]).astype(f32)

    w1 = _conv_im2col_weight(p["w1"]).astype(bf16)       # (out1, 25*Cin)
    b1 = p["b1"].reshape(out1, 1).astype(f32)
    w2 = p["w2"].reshape(out2, out1).astype(f32)
    b2 = p["b2"].reshape(out2, 1).astype(f32)
    w4 = p["w4"].reshape(out1, out2).astype(f32)
    b4 = p["b4"].reshape(out1, 1).astype(f32)

    # deconv5: 4 sub-pixel phases stacked -> one (4*mid, 25*out1) weight
    w5 = _subpixel_deconv_weight(p["w5"]).reshape(4 * mid, 25 * out1).astype(bf16)
    b5 = jnp.tile(p["b5"], 4).reshape(4 * mid, 1).astype(f32)

    # deconv6 as a 3x3 conv on the phase-separated deconv5 output
    w6 = _deconv6_conv3x3_weight(p["w6"]).astype(bf16)    # (16*cf, 9*4*mid)
    b6 = jnp.tile(p["b6"], 16).reshape(16 * cf, 1).astype(f32)

    xb = x_nchw.astype(bf16)

    h4 = _head_call(xb, slopes, w1, b1, w2, b2, w4, b4, TH=TH)
    # h4: (N, nT, out1, Lt1) bf16, flat row stride W+4 (junk cols/lanes unread)
    y5 = _conv_call(h4, w5, b5, K=5, W=W, TH=TH, Win_row=W + 4, out_dtype=bf16)
    # y5: (N, nT, 4*mid, Lt2) bf16 phase-separated deconv5 output
    z = _conv_call(y5, w6, b6, K=3, W=W, TH=TH, Win_row=W + 4, out_dtype=f32)
    # z: (N, nT, 16*cf, Lt3) f32; channel = (qh*4 + qw)*cf + co

    # final scale-4 pixel shuffle (layout-only XLA glue)
    Wk3 = W + 2
    z = z[..., :TH * Wk3].reshape(N, nT, 4, 4, cf, TH, Wk3)[..., :W]
    out = jnp.transpose(z, (0, 4, 1, 5, 2, 6, 3))         # (N, cf, t, r, qh, c, qw)
    return out.reshape(N, cf, 4 * H, 4 * W)


# ----------------------------------------------------------------------------
# Pure-JAX reference (for verification)
# ----------------------------------------------------------------------------
def fsrcnn_forward_ref(x_nchw, p):
    prec = jax.lax.Precision.HIGHEST

    def conv(x, w, b, pad):
        y = jax.lax.conv_general_dilated(
            x, w, (1, 1), [(pad, pad), (pad, pad)],
            dimension_numbers=("NCHW", "OIHW", "NCHW"), precision=prec)
        return y + b[None, :, None, None]

    def prelu(x, a):
        return jnp.where(x >= 0, x, a * x)

    h = prelu(conv(x_nchw, p["w1"], p["b1"], 2), p["a1"])
    h = prelu(conv(h, p["w2"], p["b2"], 0), p["a2"])
    for i in range(10):                                   # mapping = 10 PReLUs
        h = prelu(h, p["a3"][i])
    h = prelu(conv(h, p["w4"], p["b4"], 0), p["a4"])
    h = _ref_deconv(h, p["w5"], p["b5"], precision=prec)
    h = _ref_deconv(h, p["w6"], p["b6"], precision=prec)
    return h


# ----------------------------------------------------------------------------
# Deterministic parameter init (shapes follow the PyTorch __init__)
# ----------------------------------------------------------------------------
def init_params(key, img_filter, out1, out2):
    ks = jax.random.split(key, 10)
    f32 = jnp.float32

    def conv_w(k, cout, cin, ksz):
        return jax.random.normal(k, (cout, cin, ksz, ksz), f32) * 0.1

    p = {}
    p["w1"] = conv_w(ks[0], out1, img_filter, 5)
    p["b1"] = jax.random.normal(ks[1], (out1,), f32) * 0.1
    p["a1"] = jnp.float32(0.25)                       # PReLU default init
    p["w2"] = conv_w(ks[2], out2, out1, 1)
    p["b2"] = jax.random.normal(ks[3], (out2,), f32) * 0.1
    p["a2"] = jnp.float32(0.25)
    p["a3"] = jnp.full((10,), 0.25, f32)              # mapping: 10 PReLUs
    p["w4"] = conv_w(ks[4], out1, out2, 1)
    p["b4"] = jax.random.normal(ks[5], (out1,), f32) * 0.1
    p["a4"] = jnp.float32(0.25)
    # transposed conv weights: torch layout (Cin, Cout, K, K)
    p["w5"] = jax.random.normal(ks[6], (out1, 2 * out2, 9, 9), f32) * 0.05
    p["b5"] = jax.random.normal(ks[7], (2 * out2,), f32) * 0.1
    p["w6"] = jax.random.normal(ks[8], (2 * out2, img_filter, 9, 9), f32) * 0.05
    p["b6"] = jax.random.normal(ks[9], (img_filter,), f32) * 0.1
    return p


if __name__ == "__main__":
    key = jax.random.PRNGKey(0)
    kx, kp = jax.random.split(key)

    img_filter, out1, out2 = 3, 16, 8
    N, H, W = 2, 16, 16

    x = jax.random.normal(kx, (N, img_filter, H, W), jnp.float32)
    params = init_params(kp, img_filter, out1, out2)

    fwd = jax.jit(fsrcnn_forward_pallas)
    y = jax.block_until_ready(fwd(x, params))
    assert y.shape == (N, img_filter, 4 * H, 4 * W), y.shape

    y_ref = jax.block_until_ready(jax.jit(fsrcnn_forward_ref)(x, params))
    err = float(jnp.max(jnp.abs(y - y_ref)))
    # tolerance accounts for bf16 operands (f32 accumulation) vs HIGHEST ref
    tol = 3e-2 * max(1.0, float(jnp.max(jnp.abs(y_ref))))
    assert err < tol, f"max abs err {err} (tol {tol})"

    print("KERNEL_OK")
</pallas_src>

<mosaic_0001>
module attributes {stable_mosaic.version = 11 : i64} {
  func.func @head_kernel(%arg0: i32, %arg1: i32, %arg2: memref<3x2xf32, #tpu.memory_space<smem>>, %arg3: memref<1x3x8x16xbf16, #tpu.memory_space<vmem>>, %arg4: memref<1x3x8x16xbf16, #tpu.memory_space<vmem>>, %arg5: memref<1x3x8x16xbf16, #tpu.memory_space<vmem>>, %arg6: memref<16x75xbf16, #tpu.memory_space<vmem>>, %arg7: memref<16x1xf32, #tpu.memory_space<vmem>>, %arg8: memref<8x16xf32, #tpu.memory_space<vmem>>, %arg9: memref<8x1xf32, #tpu.memory_space<vmem>>, %arg10: memref<16x8xf32, #tpu.memory_space<vmem>>, %arg11: memref<16x1xf32, #tpu.memory_space<vmem>>, %arg12: memref<1x1x16x256xbf16, #tpu.memory_space<vmem>>, %arg13: memref<3x344xbf16, #tpu.memory_space<vmem>>, %arg14: memref<75x256xbf16, #tpu.memory_space<vmem>>) attributes {dimension_semantics = [#tpu.dimension_semantics<parallel>, #tpu.dimension_semantics<parallel>], iteration_bounds = array<i64: 2, 2>, scalar_prefetch = 0 : i64, scratch_operands = 2 : i64, tpu.core_type = #tpu.core_type<tc>, window_params = [{transform_indices = @transform_0, window_bounds = array<i64: 3, 2>}, {transform_indices = @transform_1, window_bounds = array<i64: 1, 3, 8, 16>}, {transform_indices = @transform_2, window_bounds = array<i64: 1, 3, 8, 16>}, {transform_indices = @transform_3, window_bounds = array<i64: 1, 3, 8, 16>}, {pipeline_mode = #tpu.pipeline_mode<synchronous>, transform_indices = @transform_4, window_bounds = array<i64: 16, 75>}, {pipeline_mode = #tpu.pipeline_mode<synchronous>, transform_indices = @transform_5, window_bounds = array<i64: 16, 1>}, {pipeline_mode = #tpu.pipeline_mode<synchronous>, transform_indices = @transform_6, window_bounds = array<i64: 8, 16>}, {pipeline_mode = #tpu.pipeline_mode<synchronous>, transform_indices = @transform_7, window_bounds = array<i64: 8, 1>}, {pipeline_mode = #tpu.pipeline_mode<synchronous>, transform_indices = @transform_8, window_bounds = array<i64: 16, 8>}, {pipeline_mode = #tpu.pipeline_mode<synchronous>, transform_indices = @transform_9, window_bounds = array<i64: 16, 1>}, {transform_indices = @transform_10, window_bounds = array<i64: 1, 1, 16, 256>}]} {
    %cst = arith.constant 0.000000e+00 : bf16
    %0 = vector.broadcast %cst : bf16 to vector<3x344xbf16>
    %c0 = arith.constant 0 : index
    %c0_0 = arith.constant 0 : index
    %1 = vector.load %arg13[%c0, %c0_0] : memref<3x344xbf16, #tpu.memory_space<vmem>>, vector<3x344xbf16>
    tpu.vector_store %arg13[%c0, %c0_0], %0 {strides = array<i32>} : memref<3x344xbf16, #tpu.memory_space<vmem>>, vector<3x344xbf16>,
    %c0_i32 = arith.constant 0 : i32
    %2 = arith.cmpi sgt, %arg1, %c0_i32 : i32
    %3 = arith.extui %2 : i1 to i32
    %c0_i32_1 = arith.constant 0 : i32
    %4 = arith.cmpi ne, %3, %c0_i32_1 : i32
    scf.if %4 {
      %c0_138 = arith.constant 0 : index
      %c0_139 = arith.constant 0 : index
      %c6_140 = arith.constant 6 : index
      %c0_141 = arith.constant 0 : index
      %126 = vector.load %arg3[%c0_138, %c0_139, %c6_140, %c0_141] : memref<1x3x8x16xbf16, #tpu.memory_space<vmem>>, vector<1x3x1x16xbf16>
      %127 = vector.shape_cast %126 : vector<1x3x1x16xbf16> to vector<3x16xbf16>
      %c0_142 = arith.constant 0 : index
      %c2_143 = arith.constant 2 : index
      %128 = vector.load %arg13[%c0_142, %c2_143] : memref<3x344xbf16, #tpu.memory_space<vmem>>, vector<3x16xbf16>
      tpu.vector_store %arg13[%c0_142, %c2_143], %127 {strides = array<i32>} : memref<3x344xbf16, #tpu.memory_space<vmem>>, vector<3x16xbf16>,
      %c0_144 = arith.constant 0 : index
      %c0_145 = arith.constant 0 : index
      %c7_146 = arith.constant 7 : index
      %c0_147 = arith.constant 0 : index
      %129 = vector.load %arg3[%c0_144, %c0_145, %c7_146, %c0_147] : memref<1x3x8x16xbf16, #tpu.memory_space<vmem>>, vector<1x3x1x16xbf16>
      %130 = vector.shape_cast %129 : vector<1x3x1x16xbf16> to vector<3x16xbf16>
      %c0_148 = arith.constant 0 : index
      %c22_149 = arith.constant 22 : index
      %131 = vector.load %arg13[%c0_148, %c22_149] : memref<3x344xbf16, #tpu.memory_space<vmem>>, vector<3x16xbf16>
      tpu.vector_store %arg13[%c0_148, %c22_149], %130 {strides = array<i32>} : memref<3x344xbf16, #tpu.memory_space<vmem>>, vector<3x16xbf16>,
    } else {
    }
    %c0_2 = arith.constant 0 : index
    %c0_3 = arith.constant 0 : index
    %c0_4 = arith.constant 0 : index
    %c0_5 = arith.constant 0 : index
    %5 = vector.load %arg4[%c0_2, %c0_3, %c0_4, %c0_5] : memref<1x3x8x16xbf16, #tpu.memory_space<vmem>>, vector<1x3x1x16xbf16>
    %6 = vector.shape_cast %5 : vector<1x3x1x16xbf16> to vector<3x16xbf16>
    %c0_6 = arith.constant 0 : index
    %c42 = arith.constant 42 : index
    %7 = vector.load %arg13[%c0_6, %c42] : memref<3x344xbf16, #tpu.memory_space<vmem>>, vector<3x16xbf16>
    tpu.vector_store %arg13[%c0_6, %c42], %6 {strides = array<i32>} : memref<3x344xbf16, #tpu.memory_space<vmem>>, vector<3x16xbf16>,
    %c0_7 = arith.constant 0 : index
    %c0_8 = arith.constant 0 : index
    %c1 = arith.constant 1 : index
    %c0_9 = arith.constant 0 : index
    %8 = vector.load %arg4[%c0_7, %c0_8, %c1, %c0_9] : memref<1x3x8x16xbf16, #tpu.memory_space<vmem>>, vector<1x3x1x16xbf16>
    %9 = vector.shape_cast %8 : vector<1x3x1x16xbf16> to vector<3x16xbf16>
    %c0_10 = arith.constant 0 : index
    %c62 = arith.constant 62 : index
    %10 = vector.load %arg13[%c0_10, %c62] : memref<3x344xbf16, #tpu.memory_space<vmem>>, vector<3x16xbf16>
    tpu.vector_store %arg13[%c0_10, %c62], %9 {strides = array<i32>} : memref<3x344xbf16, #tpu.memory_space<vmem>>, vector<3x16xbf16>,
    %c0_11 = arith.constant 0 : index
    %c0_12 = arith.constant 0 : index
    %c2 = arith.constant 2 : index
    %c0_13 = arith.constant 0 : index
    %11 = vector.load %arg4[%c0_11, %c0_12, %c2, %c0_13] : memref<1x3x8x16xbf16, #tpu.memory_space<vmem>>, vector<1x3x1x16xbf16>
    %12 = vector.shape_cast %11 : vector<1x3x1x16xbf16> to vector<3x16xbf16>
    %c0_14 = arith.constant 0 : index
    %c82 = arith.constant 82 : index
    %13 = vector.load %arg13[%c0_14, %c82] : memref<3x344xbf16, #tpu.memory_space<vmem>>, vector<3x16xbf16>
    tpu.vector_store %arg13[%c0_14, %c82], %12 {strides = array<i32>} : memref<3x344xbf16, #tpu.memory_space<vmem>>, vector<3x16xbf16>,
    %c0_15 = arith.constant 0 : index
    %c0_16 = arith.constant 0 : index
    %c3 = arith.constant 3 : index
    %c0_17 = arith.constant 0 : index
    %14 = vector.load %arg4[%c0_15, %c0_16, %c3, %c0_17] : memref<1x3x8x16xbf16, #tpu.memory_space<vmem>>, vector<1x3x1x16xbf16>
    %15 = vector.shape_cast %14 : vector<1x3x1x16xbf16> to vector<3x16xbf16>
    %c0_18 = arith.constant 0 : index
    %c102 = arith.constant 102 : index
    %16 = vector.load %arg13[%c0_18, %c102] : memref<3x344xbf16, #tpu.memory_space<vmem>>, vector<3x16xbf16>
    tpu.vector_store %arg13[%c0_18, %c102], %15 {strides = array<i32>} : memref<3x344xbf16, #tpu.memory_space<vmem>>, vector<3x16xbf16>,
    %c0_19 = arith.constant 0 : index
    %c0_20 = arith.constant 0 : index
    %c4 = arith.constant 4 : index
    %c0_21 = arith.constant 0 : index
    %17 = vector.load %arg4[%c0_19, %c0_20, %c4, %c0_21] : memref<1x3x8x16xbf16, #tpu.memory_space<vmem>>, vector<1x3x1x16xbf16>
    %18 = vector.shape_cast %17 : vector<1x3x1x16xbf16> to vector<3x16xbf16>
    %c0_22 = arith.constant 0 : index
    %c122 = arith.constant 122 : index
    %19 = vector.load %arg13[%c0_22, %c122] : memref<3x344xbf16, #tpu.memory_space<vmem>>, vector<3x16xbf16>
    tpu.vector_store %arg13[%c0_22, %c122], %18 {strides = array<i32>} : memref<3x344xbf16, #tpu.memory_space<vmem>>, vector<3x16xbf16>,
    %c0_23 = arith.constant 0 : index
    %c0_24 = arith.constant 0 : index
    %c5 = arith.constant 5 : index
    %c0_25 = arith.constant 0 : index
    %20 = vector.load %arg4[%c0_23, %c0_24, %c5, %c0_25] : memref<1x3x8x16xbf16, #tpu.memory_space<vmem>>, vector<1x3x1x16xbf16>
    %21 = vector.shape_cast %20 : vector<1x3x1x16xbf16> to vector<3x16xbf16>
    %c0_26 = arith.constant 0 : index
    %c142 = arith.constant 142 : index
    %22 = vector.load %arg13[%c0_26, %c142] : memref<3x344xbf16, #tpu.memory_space<vmem>>, vector<3x16xbf16>
    tpu.vector_store %arg13[%c0_26, %c142], %21 {strides = array<i32>} : memref<3x344xbf16, #tpu.memory_space<vmem>>, vector<3x16xbf16>,
    %c0_27 = arith.constant 0 : index
    %c0_28 = arith.constant 0 : index
    %c6 = arith.constant 6 : index
    %c0_29 = arith.constant 0 : index
    %23 = vector.load %arg4[%c0_27, %c0_28, %c6, %c0_29] : memref<1x3x8x16xbf16, #tpu.memory_space<vmem>>, vector<1x3x1x16xbf16>
    %24 = vector.shape_cast %23 : vector<1x3x1x16xbf16> to vector<3x16xbf16>
    %c0_30 = arith.constant 0 : index
    %c162 = arith.constant 162 : index
    %25 = vector.load %arg13[%c0_30, %c162] : memref<3x344xbf16, #tpu.memory_space<vmem>>, vector<3x16xbf16>
    tpu.vector_store %arg13[%c0_30, %c162], %24 {strides = array<i32>} : memref<3x344xbf16, #tpu.memory_space<vmem>>, vector<3x16xbf16>,
    %c0_31 = arith.constant 0 : index
    %c0_32 = arith.constant 0 : index
    %c7 = arith.constant 7 : index
    %c0_33 = arith.constant 0 : index
    %26 = vector.load %arg4[%c0_31, %c0_32, %c7, %c0_33] : memref<1x3x8x16xbf16, #tpu.memory_space<vmem>>, vector<1x3x1x16xbf16>
    %27 = vector.shape_cast %26 : vector<1x3x1x16xbf16> to vector<3x16xbf16>
    %c0_34 = arith.constant 0 : index
    %c182 = arith.constant 182 : index
    %28 = vector.load %arg13[%c0_34, %c182] : memref<3x344xbf16, #tpu.memory_space<vmem>>, vector<3x16xbf16>
    tpu.vector_store %arg13[%c0_34, %c182], %27 {strides = array<i32>} : memref<3x344xbf16, #tpu.memory_space<vmem>>, vector<3x16xbf16>,
    %c1_i32 = arith.constant 1 : i32
    %29 = arith.cmpi slt, %arg1, %c1_i32 : i32
    %30 = arith.extui %29 : i1 to i32
    %c0_i32_35 = arith.constant 0 : i32
    %31 = arith.cmpi ne, %30, %c0_i32_35 : i32
    scf.if %31 {
      %c0_138 = arith.constant 0 : index
      %c0_139 = arith.constant 0 : index
      %c0_140 = arith.constant 0 : index
      %c0_141 = arith.constant 0 : index
      %126 = vector.load %arg5[%c0_138, %c0_139, %c0_140, %c0_141] : memref<1x3x8x16xbf16, #tpu.memory_space<vmem>>, vector<1x3x1x16xbf16>
      %127 = vector.shape_cast %126 : vector<1x3x1x16xbf16> to vector<3x16xbf16>
      %c0_142 = arith.constant 0 : index
      %c202 = arith.constant 202 : index
      %128 = vector.load %arg13[%c0_142, %c202] : memref<3x344xbf16, #tpu.memory_space<vmem>>, vector<3x16xbf16>
      tpu.vector_store %arg13[%c0_142, %c202], %127 {strides = array<i32>} : memref<3x344xbf16, #tpu.memory_space<vmem>>, vector<3x16xbf16>,
      %c0_143 = arith.constant 0 : index
      %c0_144 = arith.constant 0 : index
      %c1_145 = arith.constant 1 : index
      %c0_146 = arith.constant 0 : index
      %129 = vector.load %arg5[%c0_143, %c0_144, %c1_145, %c0_146] : memref<1x3x8x16xbf16, #tpu.memory_space<vmem>>, vector<1x3x1x16xbf16>
      %130 = vector.shape_cast %129 : vector<1x3x1x16xbf16> to vector<3x16xbf16>
      %c0_147 = arith.constant 0 : index
      %c222 = arith.constant 222 : index
      %131 = vector.load %arg13[%c0_147, %c222] : memref<3x344xbf16, #tpu.memory_space<vmem>>, vector<3x16xbf16>
      tpu.vector_store %arg13[%c0_147, %c222], %130 {strides = array<i32>} : memref<3x344xbf16, #tpu.memory_space<vmem>>, vector<3x16xbf16>,
    } else {
    }
    %c0_36 = arith.constant 0 : index
    %c0_37 = arith.constant 0 : index
    %32 = vector.load %arg13[%c0_36, %c0_37] : memref<3x344xbf16, #tpu.memory_space<vmem>>, vector<3x256xbf16>
    %c0_38 = arith.constant 0 : index
    %c0_39 = arith.constant 0 : index
    %33 = vector.load %arg14[%c0_38, %c0_39] : memref<75x256xbf16, #tpu.memory_space<vmem>>, vector<3x256xbf16>
    tpu.vector_store %arg14[%c0_38, %c0_39], %32 {strides = array<i32>} : memref<75x256xbf16, #tpu.memory_space<vmem>>, vector<3x256xbf16>,
    %c0_40 = arith.constant 0 : index
    %c1_41 = arith.constant 1 : index
    %34 = vector.load %arg13[%c0_40, %c1_41] : memref<3x344xbf16, #tpu.memory_space<vmem>>, vector<3x256xbf16>
    %c3_42 = arith.constant 3 : index
    %c0_43 = arith.constant 0 : index
    %35 = vector.load %arg14[%c3_42, %c0_43] : memref<75x256xbf16, #tpu.memory_space<vmem>>, vector<3x256xbf16>
    tpu.vector_store %arg14[%c3_42, %c0_43], %34 {strides = array<i32>} : memref<75x256xbf16, #tpu.memory_space<vmem>>, vector<3x256xbf16>,
    %c0_44 = arith.constant 0 : index
    %c2_45 = arith.constant 2 : index
    %36 = vector.load %arg13[%c0_44, %c2_45] : memref<3x344xbf16, #tpu.memory_space<vmem>>, vector<3x256xbf16>
    %c6_46 = arith.constant 6 : index
    %c0_47 = arith.constant 0 : index
    %37 = vector.load %arg14[%c6_46, %c0_47] : memref<75x256xbf16, #tpu.memory_space<vmem>>, vector<3x256xbf16>
    tpu.vector_store %arg14[%c6_46, %c0_47], %36 {strides = array<i32>} : memref<75x256xbf16, #tpu.memory_space<vmem>>, vector<3x256xbf16>,
    %c0_48 = arith.constant 0 : index
    %c3_49 = arith.constant 3 : index
    %38 = vector.load %arg13[%c0_48, %c3_49] : memref<3x344xbf16, #tpu.memory_space<vmem>>, vector<3x256xbf16>
    %c9 = arith.constant 9 : index
    %c0_50 = arith.constant 0 : index
    %39 = vector.load %arg14[%c9, %c0_50] : memref<75x256xbf16, #tpu.memory_space<vmem>>, vector<3x256xbf16>
    tpu.vector_store %arg14[%c9, %c0_50], %38 {strides = array<i32>} : memref<75x256xbf16, #tpu.memory_space<vmem>>, vector<3x256xbf16>,
    %c0_51 = arith.constant 0 : index
    %c4_52 = arith.constant 4 : index
    %40 = vector.load %arg13[%c0_51, %c4_52] : memref<3x344xbf16, #tpu.memory_space<vmem>>, vector<3x256xbf16>
    %c12 = arith.constant 12 : index
    %c0_53 = arith.constant 0 : index
    %41 = vector.load %arg14[%c12, %c0_53] : memref<75x256xbf16, #tpu.memory_space<vmem>>, vector<3x256xbf16>
    tpu.vector_store %arg14[%c12, %c0_53], %40 {strides = array<i32>} : memref<75x256xbf16, #tpu.memory_space<vmem>>, vector<3x256xbf16>,
    %c0_54 = arith.constant 0 : index
    %c20 = arith.constant 20 : index
    %42 = vector.load %arg13[%c0_54, %c20] : memref<3x344xbf16, #tpu.memory_space<vmem>>, vector<3x256xbf16>
    %c15 = arith.constant 15 : index
    %c0_55 = arith.constant 0 : index
    %43 = vector.load %arg14[%c15, %c0_55] : memref<75x256xbf16, #tpu.memory_space<vmem>>, vector<3x256xbf16>
    tpu.vector_store %arg14[%c15, %c0_55], %42 {strides = array<i32>} : memref<75x256xbf16, #tpu.memory_space<vmem>>, vector<3x256xbf16>,
    %c0_56 = arith.constant 0 : index
    %c21 = arith.constant 21 : index
    %44 = vector.load %arg13[%c0_56, %c21] : memref<3x344xbf16, #tpu.memory_space<vmem>>, vector<3x256xbf16>
    %c18 = arith.constant 18 : index
    %c0_57 = arith.constant 0 : index
    %45 = vector.load %arg14[%c18, %c0_57] : memref<75x256xbf16, #tpu.memory_space<vmem>>, vector<3x256xbf16>
    tpu.vector_store %arg14[%c18, %c0_57], %44 {strides = array<i32>} : memref<75x256xbf16, #tpu.memory_space<vmem>>, vector<3x256xbf16>,
    %c0_58 = arith.constant 0 : index
    %c22 = arith.constant 22 : index
    %46 = vector.load %arg13[%c0_58, %c22] : memref<3x344xbf16, #tpu.memory_space<vmem>>, vector<3x256xbf16>
    %c21_59 = arith.constant 21 : index
    %c0_60 = arith.constant 0 : index
    %47 = vector.load %arg14[%c21_59, %c0_60] : memref<75x256xbf16, #tpu.memory_space<vmem>>, vector<3x256xbf16>
    tpu.vector_store %arg14[%c21_59, %c0_60], %46 {strides = array<i32>} : memref<75x256xbf16, #tpu.memory_space<vmem>>, vector<3x256xbf16>,
    %c0_61 = arith.constant 0 : index
    %c23 = arith.constant 23 : index
    %48 = vector.load %arg13[%c0_61, %c23] : memref<3x344xbf16, #tpu.memory_space<vmem>>, vector<3x256xbf16>
    %c24 = arith.constant 24 : index
    %c0_62 = arith.constant 0 : index
    %49 = vector.load %arg14[%c24, %c0_62] : memref<75x256xbf16, #tpu.memory_space<vmem>>, vector<3x256xbf16>
    tpu.vector_store %arg14[%c24, %c0_62], %48 {strides = array<i32>} : memref<75x256xbf16, #tpu.memory_space<vmem>>, vector<3x256xbf16>,
    %c0_63 = arith.constant 0 : index
    %c24_64 = arith.constant 24 : index
    %50 = vector.load %arg13[%c0_63, %c24_64] : memref<3x344xbf16, #tpu.memory_space<vmem>>, vector<3x256xbf16>
    %c27 = arith.constant 27 : index
    %c0_65 = arith.constant 0 : index
    %51 = vector.load %arg14[%c27, %c0_65] : memref<75x256xbf16, #tpu.memory_space<vmem>>, vector<3x256xbf16>
    tpu.vector_store %arg14[%c27, %c0_65], %50 {strides = array<i32>} : memref<75x256xbf16, #tpu.memory_space<vmem>>, vector<3x256xbf16>,
    %c0_66 = arith.constant 0 : index
    %c40 = arith.constant 40 : index
    %52 = vector.load %arg13[%c0_66, %c40] : memref<3x344xbf16, #tpu.memory_space<vmem>>, vector<3x256xbf16>
    %c30 = arith.constant 30 : index
    %c0_67 = arith.constant 0 : index
    %53 = vector.load %arg14[%c30, %c0_67] : memref<75x256xbf16, #tpu.memory_space<vmem>>, vector<3x256xbf16>
    tpu.vector_store %arg14[%c30, %c0_67], %52 {strides = array<i32>} : memref<75x256xbf16, #tpu.memory_space<vmem>>, vector<3x256xbf16>,
    %c0_68 = arith.constant 0 : index
    %c41 = arith.constant 41 : index
    %54 = vector.load %arg13[%c0_68, %c41] : memref<3x344xbf16, #tpu.memory_space<vmem>>, vector<3x256xbf16>
    %c33 = arith.constant 33 : index
    %c0_69 = arith.constant 0 : index
    %55 = vector.load %arg14[%c33, %c0_69] : memref<75x256xbf16, #tpu.memory_space<vmem>>, vector<3x256xbf16>
    tpu.vector_store %arg14[%c33, %c0_69], %54 {strides = array<i32>} : memref<75x256xbf16, #tpu.memory_space<vmem>>, vector<3x256xbf16>,
    %c0_70 = arith.constant 0 : index
    %c42_71 = arith.constant 42 : index
    %56 = vector.load %arg13[%c0_70, %c42_71] : memref<3x344xbf16, #tpu.memory_space<vmem>>, vector<3x256xbf16>
    %c36 = arith.constant 36 : index
    %c0_72 = arith.constant 0 : index
    %57 = vector.load %arg14[%c36, %c0_72] : memref<75x256xbf16, #tpu.memory_space<vmem>>, vector<3x256xbf16>
    tpu.vector_store %arg14[%c36, %c0_72], %56 {strides = array<i32>} : memref<75x256xbf16, #tpu.memory_space<vmem>>, vector<3x256xbf16>,
    %c0_73 = arith.constant 0 : index
    %c43 = arith.constant 43 : index
    %58 = vector.load %arg13[%c0_73, %c43] : memref<3x344xbf16, #tpu.memory_space<vmem>>, vector<3x256xbf16>
    %c39 = arith.constant 39 : index
    %c0_74 = arith.constant 0 : index
    %59 = vector.load %arg14[%c39, %c0_74] : memref<75x256xbf16, #tpu.memory_space<vmem>>, vector<3x256xbf16>
    tpu.vector_store %arg14[%c39, %c0_74], %58 {strides = array<i32>} : memref<75x256xbf16, #tpu.memory_space<vmem>>, vector<3x256xbf16>,
    %c0_75 = arith.constant 0 : index
    %c44 = arith.constant 44 : index
    %60 = vector.load %arg13[%c0_75, %c44] : memref<3x344xbf16, #tpu.memory_space<vmem>>, vector<3x256xbf16>
    %c42_76 = arith.constant 42 : index
    %c0_77 = arith.constant 0 : index
    %61 = vector.load %arg14[%c42_76, %c0_77] : memref<75x256xbf16, #tpu.memory_space<vmem>>, vector<3x256xbf16>
    tpu.vector_store %arg14[%c42_76, %c0_77], %60 {strides = array<i32>} : memref<75x256xbf16, #tpu.memory_space<vmem>>, vector<3x256xbf16>,
    %c0_78 = arith.constant 0 : index
    %c60 = arith.constant 60 : index
    %62 = vector.load %arg13[%c0_78, %c60] : memref<3x344xbf16, #tpu.memory_space<vmem>>, vector<3x256xbf16>
    %c45 = arith.constant 45 : index
    %c0_79 = arith.constant 0 : index
    %63 = vector.load %arg14[%c45, %c0_79] : memref<75x256xbf16, #tpu.memory_space<vmem>>, vector<3x256xbf16>
    tpu.vector_store %arg14[%c45, %c0_79], %62 {strides = array<i32>} : memref<75x256xbf16, #tpu.memory_space<vmem>>, vector<3x256xbf16>,
    %c0_80 = arith.constant 0 : index
    %c61 = arith.constant 61 : index
    %64 = vector.load %arg13[%c0_80, %c61] : memref<3x344xbf16, #tpu.memory_space<vmem>>, vector<3x256xbf16>
    %c48 = arith.constant 48 : index
    %c0_81 = arith.constant 0 : index
    %65 = vector.load %arg14[%c48, %c0_81] : memref<75x256xbf16, #tpu.memory_space<vmem>>, vector<3x256xbf16>
    tpu.vector_store %arg14[%c48, %c0_81], %64 {strides = array<i32>} : memref<75x256xbf16, #tpu.memory_space<vmem>>, vector<3x256xbf16>,
    %c0_82 = arith.constant 0 : index
    %c62_83 = arith.constant 62 : index
    %66 = vector.load %arg13[%c0_82, %c62_83] : memref<3x344xbf16, #tpu.memory_space<vmem>>, vector<3x256xbf16>
    %c51 = arith.constant 51 : index
    %c0_84 = arith.constant 0 : index
    %67 = vector.load %arg14[%c51, %c0_84] : memref<75x256xbf16, #tpu.memory_space<vmem>>, vector<3x256xbf16>
    tpu.vector_store %arg14[%c51, %c0_84], %66 {strides = array<i32>} : memref<75x256xbf16, #tpu.memory_space<vmem>>, vector<3x256xbf16>,
    %c0_85 = arith.constant 0 : index
    %c63 = arith.constant 63 : index
    %68 = vector.load %arg13[%c0_85, %c63] : memref<3x344xbf16, #tpu.memory_space<vmem>>, vector<3x256xbf16>
    %c54 = arith.constant 54 : index
    %c0_86 = arith.constant 0 : index
    %69 = vector.load %arg14[%c54, %c0_86] : memref<75x256xbf16, #tpu.memory_space<vmem>>, vector<3x256xbf16>
    tpu.vector_store %arg14[%c54, %c0_86], %68 {strides = array<i32>} : memref<75x256xbf16, #tpu.memory_space<vmem>>, vector<3x256xbf16>,
    %c0_87 = arith.constant 0 : index
    %c64 = arith.constant 64 : index
    %70 = vector.load %arg13[%c0_87, %c64] : memref<3x344xbf16, #tpu.memory_space<vmem>>, vector<3x256xbf16>
    %c57 = arith.constant 57 : index
    %c0_88 = arith.constant 0 : index
    %71 = vector.load %arg14[%c57, %c0_88] : memref<75x256xbf16, #tpu.memory_space<vmem>>, vector<3x256xbf16>
    tpu.vector_store %arg14[%c57, %c0_88], %70 {strides = array<i32>} : memref<75x256xbf16, #tpu.memory_space<vmem>>, vector<3x256xbf16>,
    %c0_89 = arith.constant 0 : index
    %c80 = arith.constant 80 : index
    %72 = vector.load %arg13[%c0_89, %c80] : memref<3x344xbf16, #tpu.memory_space<vmem>>, vector<3x256xbf16>
    %c60_90 = arith.constant 60 : index
    %c0_91 = arith.constant 0 : index
    %73 = vector.load %arg14[%c60_90, %c0_91] : memref<75x256xbf16, #tpu.memory_space<vmem>>, vector<3x256xbf16>
    tpu.vector_store %arg14[%c60_90, %c0_91], %72 {strides = array<i32>} : memref<75x256xbf16, #tpu.memory_space<vmem>>, vector<3x256xbf16>,
    %c0_92 = arith.constant 0 : index
    %c81 = arith.constant 81 : index
    %74 = vector.load %arg13[%c0_92, %c81] : memref<3x344xbf16, #tpu.memory_space<vmem>>, vector<3x256xbf16>
    %c63_93 = arith.constant 63 : index
    %c0_94 = arith.constant 0 : index
    %75 = vector.load %arg14[%c63_93, %c0_94] : memref<75x256xbf16, #tpu.memory_space<vmem>>, vector<3x256xbf16>
    tpu.vector_store %arg14[%c63_93, %c0_94], %74 {strides = array<i32>} : memref<75x256xbf16, #tpu.memory_space<vmem>>, vector<3x256xbf16>,
    %c0_95 = arith.constant 0 : index
    %c82_96 = arith.constant 82 : index
    %76 = vector.load %arg13[%c0_95, %c82_96] : memref<3x344xbf16, #tpu.memory_space<vmem>>, vector<3x256xbf16>
    %c66 = arith.constant 66 : index
    %c0_97 = arith.constant 0 : index
    %77 = vector.load %arg14[%c66, %c0_97] : memref<75x256xbf16, #tpu.memory_space<vmem>>, vector<3x256xbf16>
    tpu.vector_store %arg14[%c66, %c0_97], %76 {strides = array<i32>} : memref<75x256xbf16, #tpu.memory_space<vmem>>, vector<3x256xbf16>,
    %c0_98 = arith.constant 0 : index
    %c83 = arith.constant 83 : index
    %78 = vector.load %arg13[%c0_98, %c83] : memref<3x344xbf16, #tpu.memory_space<vmem>>, vector<3x256xbf16>
    %c69 = arith.constant 69 : index
    %c0_99 = arith.constant 0 : index
    %79 = vector.load %arg14[%c69, %c0_99] : memref<75x256xbf16, #tpu.memory_space<vmem>>, vector<3x256xbf16>
    tpu.vector_store %arg14[%c69, %c0_99], %78 {strides = array<i32>} : memref<75x256xbf16, #tpu.memory_space<vmem>>, vector<3x256xbf16>,
    %c0_100 = arith.constant 0 : index
    %c84 = arith.constant 84 : index
    %80 = vector.load %arg13[%c0_100, %c84] : memref<3x344xbf16, #tpu.memory_space<vmem>>, vector<3x256xbf16>
    %c72 = arith.constant 72 : index
    %c0_101 = arith.constant 0 : index
    %81 = vector.load %arg14[%c72, %c0_101] : memref<75x256xbf16, #tpu.memory_space<vmem>>, vector<3x256xbf16>
    tpu.vector_store %arg14[%c72, %c0_101], %80 {strides = array<i32>} : memref<75x256xbf16, #tpu.memory_space<vmem>>, vector<3x256xbf16>,
    %c0_102 = arith.constant 0 : index
    %c0_103 = arith.constant 0 : index
    %82 = vector.load %arg6[%c0_102, %c0_103] : memref<16x75xbf16, #tpu.memory_space<vmem>>, vector<16x75xbf16>
    %c0_104 = arith.constant 0 : index
    %c0_105 = arith.constant 0 : index
    %83 = vector.load %arg14[%c0_104, %c0_105] : memref<75x256xbf16, #tpu.memory_space<vmem>>, vector<75x256xbf16>
    %cst_106 = arith.constant dense<0.000000e+00> : vector<16x256xf32>
    %84 = tpu.matmul %82, %83, %cst_106 {dimension_numbers = #tpu.dot_dimension_numbers<[1], [0], [0], [1], [0, 0, 1, 1], [], []>} : vector<16x75xbf16>, vector<75x256xbf16>, vector<16x256xf32> -> vector<16x256xf32>
    %c0_107 = arith.constant 0 : index
    %c0_108 = arith.constant 0 : index
    %85 = vector.load %arg7[%c0_107, %c0_108] : memref<16x1xf32, #tpu.memory_space<vmem>>, vector<16x1xf32>
    %86 = vector.broadcast %85 : vector<16x1xf32> to vector<16x256xf32>
    %87 = arith.addf %84, %86 : vector<16x256xf32>
    %cst_109 = arith.constant 0.000000e+00 : f32
    %88 = vector.broadcast %cst_109 : f32 to vector<16x256xf32>
    %89 = arith.cmpf oge, %87, %88 : vector<16x256xf32>
    %c0_110 = arith.constant 0 : index
    %c0_111 = arith.constant 0 : index
    %90 = memref.load %arg2[%c0_110, %c0_111] : memref<3x2xf32, #tpu.memory_space<smem>>
    %c0_112 = arith.constant 0 : index
    %c1_113 = arith.constant 1 : index
    %91 = memref.load %arg2[%c0_112, %c1_113] : memref<3x2xf32, #tpu.memory_space<smem>>
    %92 = vector.broadcast %90 : f32 to vector<16x256xf32>
    %93 = vector.broadcast %91 : f32 to vector<16x256xf32>
    %94 = arith.select %89, %92, %93 : vector<16x256xi1>, vector<16x256xf32>
    %95 = arith.mulf %87, %94 : vector<16x256xf32>
    %c0_114 = arith.constant 0 : index
    %c0_115 = arith.constant 0 : index
    %96 = vector.load %arg8[%c0_114, %c0_115] : memref<8x16xf32, #tpu.memory_space<vmem>>, vector<8x16xf32>
    %cst_116 = arith.constant dense<0.000000e+00> : vector<8x256xf32>
    %97 = tpu.matmul %96, %95, %cst_116 {dimension_numbers = #tpu.dot_dimension_numbers<[1], [0], [0], [1], [0, 0, 1, 1], [], []>} : vector<8x16xf32>, vector<16x256xf32>, vector<8x256xf32> -> vector<8x256xf32>
    %c0_117 = arith.constant 0 : index
    %c0_118 = arith.constant 0 : index
    %98 = vector.load %arg9[%c0_117, %c0_118] : memref<8x1xf32, #tpu.memory_space<vmem>>, vector<8x1xf32>
    %99 = vector.broadcast %98 : vector<8x1xf32> to vector<8x256xf32>
    %100 = arith.addf %97, %99 : vector<8x256xf32>
    %cst_119 = arith.constant 0.000000e+00 : f32
    %101 = vector.broadcast %cst_119 : f32 to vector<8x256xf32>
    %102 = arith.cmpf oge, %100, %101 : vector<8x256xf32>
    %c1_120 = arith.constant 1 : index
    %c0_121 = arith.constant 0 : index
    %103 = memref.load %arg2[%c1_120, %c0_121] : memref<3x2xf32, #tpu.memory_space<smem>>
    %c1_122 = arith.constant 1 : index
    %c1_123 = arith.constant 1 : index
    %104 = memref.load %arg2[%c1_122, %c1_123] : memref<3x2xf32, #tpu.memory_space<smem>>
    %105 = vector.broadcast %103 : f32 to vector<8x256xf32>
    %106 = vector.broadcast %104 : f32 to vector<8x256xf32>
    %107 = arith.select %102, %105, %106 : vector<8x256xi1>, vector<8x256xf32>
    %108 = arith.mulf %100, %107 : vector<8x256xf32>
    %c0_124 = arith.constant 0 : index
    %c0_125 = arith.constant 0 : index
    %109 = vector.load %arg10[%c0_124, %c0_125] : memref<16x8xf32, #tpu.memory_space<vmem>>, vector<16x8xf32>
    %cst_126 = arith.constant dense<0.000000e+00> : vector<16x256xf32>
    %110 = tpu.matmul %109, %108, %cst_126 {dimension_numbers = #tpu.dot_dimension_numbers<[1], [0], [0], [1], [0, 0, 1, 1], [], []>} : vector<16x8xf32>, vector<8x256xf32>, vector<16x256xf32> -> vector<16x256xf32>
    %c0_127 = arith.constant 0 : index
    %c0_128 = arith.constant 0 : index
    %111 = vector.load %arg11[%c0_127, %c0_128] : memref<16x1xf32, #tpu.memory_space<vmem>>, vector<16x1xf32>
    %112 = vector.broadcast %111 : vector<16x1xf32> to vector<16x256xf32>
    %113 = arith.addf %110, %112 : vector<16x256xf32>
    %cst_129 = arith.constant 0.000000e+00 : f32
    %114 = vector.broadcast %cst_129 : f32 to vector<16x256xf32>
    %115 = arith.cmpf oge, %113, %114 : vector<16x256xf32>
    %c2_130 = arith.constant 2 : index
    %c0_131 = arith.constant 0 : index
    %116 = memref.load %arg2[%c2_130, %c0_131] : memref<3x2xf32, #tpu.memory_space<smem>>
    %c2_132 = arith.constant 2 : index
    %c1_133 = arith.constant 1 : index
    %117 = memref.load %arg2[%c2_132, %c1_133] : memref<3x2xf32, #tpu.memory_space<smem>>
    %118 = vector.broadcast %116 : f32 to vector<16x256xf32>
    %119 = vector.broadcast %117 : f32 to vector<16x256xf32>
    %120 = arith.select %115, %118, %119 : vector<16x256xi1>, vector<16x256xf32>
    %121 = arith.mulf %113, %120 : vector<16x256xf32>
    %122 = arith.truncf %121 : vector<16x256xf32> to vector<16x256xbf16>
    %c0_134 = arith.constant 0 : index
    %c0_135 = arith.constant 0 : index
    %c0_136 = arith.constant 0 : index
    %c0_137 = arith.constant 0 : index
    %123 = vector.load %arg12[%c0_134, %c0_135, %c0_136, %c0_137] : memref<1x1x16x256xbf16, #tpu.memory_space<vmem>>, vector<1x1x16x256xbf16>
    %124 = vector.shape_cast %123 : vector<1x1x16x256xbf16> to vector<16x256xbf16>
    %125 = vector.shape_cast %122 : vector<16x256xbf16> to vector<1x1x16x256xbf16>
    tpu.vector_store %arg12[%c0_134, %c0_135, %c0_136, %c0_137], %125 {strides = array<i32>} : memref<1x1x16x256xbf16, #tpu.memory_space<vmem>>, vector<1x1x16x256xbf16>,
    return
  }
  func.func @transform_0(%arg0: i32, %arg1: i32) -> (i32, i32) {
    %c0_i32 = arith.constant 0 : i32
    %c0_i32_0 = arith.constant 0 : i32
    %c0_i32_1 = arith.constant 0 : i32
    return %c0_i32, %c0_i32_0 : i32, i32
  }
  func.func @transform_1(%arg0: i32, %arg1: i32) -> (i32, i32, i32, i32) {
    %c1_i32 = arith.constant 1 : i32
    %0 = arith.subi %arg1, %c1_i32 : i32
    %c0_i32 = arith.constant 0 : i32
    %1 = arith.maxsi %0, %c0_i32 : i32
    %c0_i32_0 = arith.constant 0 : i32
    %c0_i32_1 = arith.constant 0 : i32
    %c0_i32_2 = arith.constant 0 : i32
    return %arg0, %c0_i32_0, %1, %c0_i32_1 : i32, i32, i32, i32
  }
  func.func @transform_2(%arg0: i32, %arg1: i32) -> (i32, i32, i32, i32) {
    %c0_i32 = arith.constant 0 : i32
    %c0_i32_0 = arith.constant 0 : i32
    %c0_i32_1 = arith.constant 0 : i32
    return %arg0, %c0_i32, %arg1, %c0_i32_0 : i32, i32, i32, i32
  }
  func.func @transform_3(%arg0: i32, %arg1: i32) -> (i32, i32, i32, i32) {
    %c1_i32 = arith.constant 1 : i32
    %0 = arith.addi %arg1, %c1_i32 : i32
    %c1_i32_0 = arith.constant 1 : i32
    %1 = arith.minsi %0, %c1_i32_0 : i32
    %c0_i32 = arith.constant 0 : i32
    %c0_i32_1 = arith.constant 0 : i32
    %c0_i32_2 = arith.constant 0 : i32
    return %arg0, %c0_i32, %1, %c0_i32_1 : i32, i32, i32, i32
  }
  func.func @transform_4(%arg0: i32, %arg1: i32) -> (i32, i32) {
    %c0_i32 = arith.constant 0 : i32
    %c0_i32_0 = arith.constant 0 : i32
    %c0_i32_1 = arith.constant 0 : i32
    return %c0_i32, %c0_i32_0 : i32, i32
  }
  func.func @transform_5(%arg0: i32, %arg1: i32) -> (i32, i32) {
    %c0_i32 = arith.constant 0 : i32
    %c0_i32_0 = arith.constant 0 : i32
    %c0_i32_1 = arith.constant 0 : i32
    return %c0_i32, %c0_i32_0 : i32, i32
  }
  func.func @transform_6(%arg0: i32, %arg1: i32) -> (i32, i32) {
    %c0_i32 = arith.constant 0 : i32
    %c0_i32_0 = arith.constant 0 : i32
    %c0_i32_1 = arith.constant 0 : i32
    return %c0_i32, %c0_i32_0 : i32, i32
  }
  func.func @transform_7(%arg0: i32, %arg1: i32) -> (i32, i32) {
    %c0_i32 = arith.constant 0 : i32
    %c0_i32_0 = arith.constant 0 : i32
    %c0_i32_1 = arith.constant 0 : i32
    return %c0_i32, %c0_i32_0 : i32, i32
  }
  func.func @transform_8(%arg0: i32, %arg1: i32) -> (i32, i32) {
    %c0_i32 = arith.constant 0 : i32
    %c0_i32_0 = arith.constant 0 : i32
    %c0_i32_1 = arith.constant 0 : i32
    return %c0_i32, %c0_i32_0 : i32, i32
  }
  func.func @transform_9(%arg0: i32, %arg1: i32) -> (i32, i32) {
    %c0_i32 = arith.constant 0 : i32
    %c0_i32_0 = arith.constant 0 : i32
    %c0_i32_1 = arith.constant 0 : i32
    return %c0_i32, %c0_i32_0 : i32, i32
  }
  func.func @transform_10(%arg0: i32, %arg1: i32) -> (i32, i32, i32, i32) {
    %c0_i32 = arith.constant 0 : i32
    %c0_i32_0 = arith.constant 0 : i32
    %c0_i32_1 = arith.constant 0 : i32
    return %arg0, %arg1, %c0_i32, %c0_i32_0 : i32, i32, i32, i32
  }
}

module attributes {stable_mosaic.version = 11 : i64} {
  func.func @conv_tile_kernel(%arg0: i32, %arg1: i32, %arg2: memref<1x1x16x256xbf16, #tpu.memory_space<vmem>>, %arg3: memref<1x1x16x256xbf16, #tpu.memory_space<vmem>>, %arg4: memref<1x1x16x256xbf16, #tpu.memory_space<vmem>>, %arg5: memref<64x400xbf16, #tpu.memory_space<vmem>>, %arg6: memref<64x1xf32, #tpu.memory_space<vmem>>, %arg7: memref<1x1x64x256xbf16, #tpu.memory_space<vmem>>, %arg8: memref<16x344xbf16, #tpu.memory_space<vmem>>, %arg9: memref<400x256xbf16, #tpu.memory_space<vmem>>) attributes {dimension_semantics = [#tpu.dimension_semantics<parallel>, #tpu.dimension_semantics<parallel>], iteration_bounds = array<i64: 2, 2>, scalar_prefetch = 0 : i64, scratch_operands = 2 : i64, tpu.core_type = #tpu.core_type<tc>, window_params = [{transform_indices = @transform_0, window_bounds = array<i64: 1, 1, 16, 256>}, {transform_indices = @transform_1, window_bounds = array<i64: 1, 1, 16, 256>}, {transform_indices = @transform_2, window_bounds = array<i64: 1, 1, 16, 256>}, {pipeline_mode = #tpu.pipeline_mode<synchronous>, transform_indices = @transform_3, window_bounds = array<i64: 64, 400>}, {pipeline_mode = #tpu.pipeline_mode<synchronous>, transform_indices = @transform_4, window_bounds = array<i64: 64, 1>}, {transform_indices = @transform_5, window_bounds = array<i64: 1, 1, 64, 256>}]} {
    %cst = arith.constant 0.000000e+00 : bf16
    %0 = vector.broadcast %cst : bf16 to vector<16x344xbf16>
    %c0 = arith.constant 0 : index
    %c0_0 = arith.constant 0 : index
    %1 = vector.load %arg8[%c0, %c0_0] : memref<16x344xbf16, #tpu.memory_space<vmem>>, vector<16x344xbf16>
    tpu.vector_store %arg8[%c0, %c0_0], %0 {strides = array<i32>} : memref<16x344xbf16, #tpu.memory_space<vmem>>, vector<16x344xbf16>,
    %c0_i32 = arith.constant 0 : i32
    %2 = arith.cmpi sgt, %arg1, %c0_i32 : i32
    %3 = arith.extui %2 : i1 to i32
    %c0_i32_1 = arith.constant 0 : i32
    %4 = arith.cmpi ne, %3, %c0_i32_1 : i32
    scf.if %4 {
      %c0_108 = arith.constant 0 : index
      %c0_109 = arith.constant 0 : index
      %c0_110 = arith.constant 0 : index
      %c120_111 = arith.constant 120 : index
      %92 = vector.load %arg2[%c0_108, %c0_109, %c0_110, %c120_111] : memref<1x1x16x256xbf16, #tpu.memory_space<vmem>>, vector<1x1x16x16xbf16>
      %93 = vector.shape_cast %92 : vector<1x1x16x16xbf16> to vector<16x16xbf16>
      %c0_112 = arith.constant 0 : index
      %c2_113 = arith.constant 2 : index
      %94 = vector.load %arg8[%c0_112, %c2_113] : memref<16x344xbf16, #tpu.memory_space<vmem>>, vector<16x16xbf16>
      tpu.vector_store %arg8[%c0_112, %c2_113], %93 {strides = array<i32>} : memref<16x344xbf16, #tpu.memory_space<vmem>>, vector<16x16xbf16>,
      %c0_114 = arith.constant 0 : index
      %c0_115 = arith.constant 0 : index
      %c0_116 = arith.constant 0 : index
      %c140_117 = arith.constant 140 : index
      %95 = vector.load %arg2[%c0_114, %c0_115, %c0_116, %c140_117] : memref<1x1x16x256xbf16, #tpu.memory_space<vmem>>, vector<1x1x16x16xbf16>
      %96 = vector.shape_cast %95 : vector<1x1x16x16xbf16> to vector<16x16xbf16>
      %c0_118 = arith.constant 0 : index
      %c22_119 = arith.constant 22 : index
      %97 = vector.load %arg8[%c0_118, %c22_119] : memref<16x344xbf16, #tpu.memory_space<vmem>>, vector<16x16xbf16>
      tpu.vector_store %arg8[%c0_118, %c22_119], %96 {strides = array<i32>} : memref<16x344xbf16, #tpu.memory_space<vmem>>, vector<16x16xbf16>,
    } else {
    }
    %c0_2 = arith.constant 0 : index
    %c0_3 = arith.constant 0 : index
    %c0_4 = arith.constant 0 : index
    %c0_5 = arith.constant 0 : index
    %5 = vector.load %arg3[%c0_2, %c0_3, %c0_4, %c0_5] : memref<1x1x16x256xbf16, #tpu.memory_space<vmem>>, vector<1x1x16x16xbf16>
    %6 = vector.shape_cast %5 : vector<1x1x16x16xbf16> to vector<16x16xbf16>
    %c0_6 = arith.constant 0 : index
    %c42 = arith.constant 42 : index
    %7 = vector.load %arg8[%c0_6, %c42] : memref<16x344xbf16, #tpu.memory_space<vmem>>, vector<16x16xbf16>
    tpu.vector_store %arg8[%c0_6, %c42], %6 {strides = array<i32>} : memref<16x344xbf16, #tpu.memory_space<vmem>>, vector<16x16xbf16>,
    %c0_7 = arith.constant 0 : index
    %c0_8 = arith.constant 0 : index
    %c0_9 = arith.constant 0 : index
    %c20 = arith.constant 20 : index
    %8 = vector.load %arg3[%c0_7, %c0_8, %c0_9, %c20] : memref<1x1x16x256xbf16, #tpu.memory_space<vmem>>, vector<1x1x16x16xbf16>
    %9 = vector.shape_cast %8 : vector<1x1x16x16xbf16> to vector<16x16xbf16>
    %c0_10 = arith.constant 0 : index
    %c62 = arith.constant 62 : index
    %10 = vector.load %arg8[%c0_10, %c62] : memref<16x344xbf16, #tpu.memory_space<vmem>>, vector<16x16xbf16>
    tpu.vector_store %arg8[%c0_10, %c62], %9 {strides = array<i32>} : memref<16x344xbf16, #tpu.memory_space<vmem>>, vector<16x16xbf16>,
    %c0_11 = arith.constant 0 : index
    %c0_12 = arith.constant 0 : index
    %c0_13 = arith.constant 0 : index
    %c40 = arith.constant 40 : index
    %11 = vector.load %arg3[%c0_11, %c0_12, %c0_13, %c40] : memref<1x1x16x256xbf16, #tpu.memory_space<vmem>>, vector<1x1x16x16xbf16>
    %12 = vector.shape_cast %11 : vector<1x1x16x16xbf16> to vector<16x16xbf16>
    %c0_14 = arith.constant 0 : index
    %c82 = arith.constant 82 : index
    %13 = vector.load %arg8[%c0_14, %c82] : memref<16x344xbf16, #tpu.memory_space<vmem>>, vector<16x16xbf16>
    tpu.vector_store %arg8[%c0_14, %c82], %12 {strides = array<i32>} : memref<16x344xbf16, #tpu.memory_space<vmem>>, vector<16x16xbf16>,
    %c0_15 = arith.constant 0 : index
    %c0_16 = arith.constant 0 : index
    %c0_17 = arith.constant 0 : index
    %c60 = arith.constant 60 : index
    %14 = vector.load %arg3[%c0_15, %c0_16, %c0_17, %c60] : memref<1x1x16x256xbf16, #tpu.memory_space<vmem>>, vector<1x1x16x16xbf16>
    %15 = vector.shape_cast %14 : vector<1x1x16x16xbf16> to vector<16x16xbf16>
    %c0_18 = arith.constant 0 : index
    %c102 = arith.constant 102 : index
    %16 = vector.load %arg8[%c0_18, %c102] : memref<16x344xbf16, #tpu.memory_space<vmem>>, vector<16x16xbf16>
    tpu.vector_store %arg8[%c0_18, %c102], %15 {strides = array<i32>} : memref<16x344xbf16, #tpu.memory_space<vmem>>, vector<16x16xbf16>,
    %c0_19 = arith.constant 0 : index
    %c0_20 = arith.constant 0 : index
    %c0_21 = arith.constant 0 : index
    %c80 = arith.constant 80 : index
    %17 = vector.load %arg3[%c0_19, %c0_20, %c0_21, %c80] : memref<1x1x16x256xbf16, #tpu.memory_space<vmem>>, vector<1x1x16x16xbf16>
    %18 = vector.shape_cast %17 : vector<1x1x16x16xbf16> to vector<16x16xbf16>
    %c0_22 = arith.constant 0 : index
    %c122 = arith.constant 122 : index
    %19 = vector.load %arg8[%c0_22, %c122] : memref<16x344xbf16, #tpu.memory_space<vmem>>, vector<16x16xbf16>
    tpu.vector_store %arg8[%c0_22, %c122], %18 {strides = array<i32>} : memref<16x344xbf16, #tpu.memory_space<vmem>>, vector<16x16xbf16>,
    %c0_23 = arith.constant 0 : index
    %c0_24 = arith.constant 0 : index
    %c0_25 = arith.constant 0 : index
    %c100 = arith.constant 100 : index
    %20 = vector.load %arg3[%c0_23, %c0_24, %c0_25, %c100] : memref<1x1x16x256xbf16, #tpu.memory_space<vmem>>, vector<1x1x16x16xbf16>
    %21 = vector.shape_cast %20 : vector<1x1x16x16xbf16> to vector<16x16xbf16>
    %c0_26 = arith.constant 0 : index
    %c142 = arith.constant 142 : index
    %22 = vector.load %arg8[%c0_26, %c142] : memref<16x344xbf16, #tpu.memory_space<vmem>>, vector<16x16xbf16>
    tpu.vector_store %arg8[%c0_26, %c142], %21 {strides = array<i32>} : memref<16x344xbf16, #tpu.memory_space<vmem>>, vector<16x16xbf16>,
    %c0_27 = arith.constant 0 : index
    %c0_28 = arith.constant 0 : index
    %c0_29 = arith.constant 0 : index
    %c120 = arith.constant 120 : index
    %23 = vector.load %arg3[%c0_27, %c0_28, %c0_29, %c120] : memref<1x1x16x256xbf16, #tpu.memory_space<vmem>>, vector<1x1x16x16xbf16>
    %24 = vector.shape_cast %23 : vector<1x1x16x16xbf16> to vector<16x16xbf16>
    %c0_30 = arith.constant 0 : index
    %c162 = arith.constant 162 : index
    %25 = vector.load %arg8[%c0_30, %c162] : memref<16x344xbf16, #tpu.memory_space<vmem>>, vector<16x16xbf16>
    tpu.vector_store %arg8[%c0_30, %c162], %24 {strides = array<i32>} : memref<16x344xbf16, #tpu.memory_space<vmem>>, vector<16x16xbf16>,
    %c0_31 = arith.constant 0 : index
    %c0_32 = arith.constant 0 : index
    %c0_33 = arith.constant 0 : index
    %c140 = arith.constant 140 : index
    %26 = vector.load %arg3[%c0_31, %c0_32, %c0_33, %c140] : memref<1x1x16x256xbf16, #tpu.memory_space<vmem>>, vector<1x1x16x16xbf16>
    %27 = vector.shape_cast %26 : vector<1x1x16x16xbf16> to vector<16x16xbf16>
    %c0_34 = arith.constant 0 : index
    %c182 = arith.constant 182 : index
    %28 = vector.load %arg8[%c0_34, %c182] : memref<16x344xbf16, #tpu.memory_space<vmem>>, vector<16x16xbf16>
    tpu.vector_store %arg8[%c0_34, %c182], %27 {strides = array<i32>} : memref<16x344xbf16, #tpu.memory_space<vmem>>, vector<16x16xbf16>,
    %c1_i32 = arith.constant 1 : i32
    %29 = arith.cmpi slt, %arg1, %c1_i32 : i32
    %30 = arith.extui %29 : i1 to i32
    %c0_i32_35 = arith.constant 0 : i32
    %31 = arith.cmpi ne, %30, %c0_i32_35 : i32
    scf.if %31 {
      %c0_108 = arith.constant 0 : index
      %c0_109 = arith.constant 0 : index
      %c0_110 = arith.constant 0 : index
      %c0_111 = arith.constant 0 : index
      %92 = vector.load %arg4[%c0_108, %c0_109, %c0_110, %c0_111] : memref<1x1x16x256xbf16, #tpu.memory_space<vmem>>, vector<1x1x16x16xbf16>
      %93 = vector.shape_cast %92 : vector<1x1x16x16xbf16> to vector<16x16xbf16>
      %c0_112 = arith.constant 0 : index
      %c202 = arith.constant 202 : index
      %94 = vector.load %arg8[%c0_112, %c202] : memref<16x344xbf16, #tpu.memory_space<vmem>>, vector<16x16xbf16>
      tpu.vector_store %arg8[%c0_112, %c202], %93 {strides = array<i32>} : memref<16x344xbf16, #tpu.memory_space<vmem>>, vector<16x16xbf16>,
      %c0_113 = arith.constant 0 : index
      %c0_114 = arith.constant 0 : index
      %c0_115 = arith.constant 0 : index
      %c20_116 = arith.constant 20 : index
      %95 = vector.load %arg4[%c0_113, %c0_114, %c0_115, %c20_116] : memref<1x1x16x256xbf16, #tpu.memory_space<vmem>>, vector<1x1x16x16xbf16>
      %96 = vector.shape_cast %95 : vector<1x1x16x16xbf16> to vector<16x16xbf16>
      %c0_117 = arith.constant 0 : index
      %c222 = arith.constant 222 : index
      %97 = vector.load %arg8[%c0_117, %c222] : memref<16x344xbf16, #tpu.memory_space<vmem>>, vector<16x16xbf16>
      tpu.vector_store %arg8[%c0_117, %c222], %96 {strides = array<i32>} : memref<16x344xbf16, #tpu.memory_space<vmem>>, vector<16x16xbf16>,
    } else {
    }
    %c0_36 = arith.constant 0 : index
    %c0_37 = arith.constant 0 : index
    %32 = vector.load %arg8[%c0_36, %c0_37] : memref<16x344xbf16, #tpu.memory_space<vmem>>, vector<16x256xbf16>
    %c0_38 = arith.constant 0 : index
    %c0_39 = arith.constant 0 : index
    %33 = vector.load %arg9[%c0_38, %c0_39] : memref<400x256xbf16, #tpu.memory_space<vmem>>, vector<16x256xbf16>
    tpu.vector_store %arg9[%c0_38, %c0_39], %32 {strides = array<i32>} : memref<400x256xbf16, #tpu.memory_space<vmem>>, vector<16x256xbf16>,
    %c0_40 = arith.constant 0 : index
    %c1 = arith.constant 1 : index
    %34 = vector.load %arg8[%c0_40, %c1] : memref<16x344xbf16, #tpu.memory_space<vmem>>, vector<16x256xbf16>
    %c16 = arith.constant 16 : index
    %c0_41 = arith.constant 0 : index
    %35 = vector.load %arg9[%c16, %c0_41] : memref<400x256xbf16, #tpu.memory_space<vmem>>, vector<16x256xbf16>
    tpu.vector_store %arg9[%c16, %c0_41], %34 {strides = array<i32>} : memref<400x256xbf16, #tpu.memory_space<vmem>>, vector<16x256xbf16>,
    %c0_42 = arith.constant 0 : index
    %c2 = arith.constant 2 : index
    %36 = vector.load %arg8[%c0_42, %c2] : memref<16x344xbf16, #tpu.memory_space<vmem>>, vector<16x256xbf16>
    %c32 = arith.constant 32 : index
    %c0_43 = arith.constant 0 : index
    %37 = vector.load %arg9[%c32, %c0_43] : memref<400x256xbf16, #tpu.memory_space<vmem>>, vector<16x256xbf16>
    tpu.vector_store %arg9[%c32, %c0_43], %36 {strides = array<i32>} : memref<400x256xbf16, #tpu.memory_space<vmem>>, vector<16x256xbf16>,
    %c0_44 = arith.constant 0 : index
    %c3 = arith.constant 3 : index
    %38 = vector.load %arg8[%c0_44, %c3] : memref<16x344xbf16, #tpu.memory_space<vmem>>, vector<16x256xbf16>
    %c48 = arith.constant 48 : index
    %c0_45 = arith.constant 0 : index
    %39 = vector.load %arg9[%c48, %c0_45] : memref<400x256xbf16, #tpu.memory_space<vmem>>, vector<16x256xbf16>
    tpu.vector_store %arg9[%c48, %c0_45], %38 {strides = array<i32>} : memref<400x256xbf16, #tpu.memory_space<vmem>>, vector<16x256xbf16>,
    %c0_46 = arith.constant 0 : index
    %c4 = arith.constant 4 : index
    %40 = vector.load %arg8[%c0_46, %c4] : memref<16x344xbf16, #tpu.memory_space<vmem>>, vector<16x256xbf16>
    %c64 = arith.constant 64 : index
    %c0_47 = arith.constant 0 : index
    %41 = vector.load %arg9[%c64, %c0_47] : memref<400x256xbf16, #tpu.memory_space<vmem>>, vector<16x256xbf16>
    tpu.vector_store %arg9[%c64, %c0_47], %40 {strides = array<i32>} : memref<400x256xbf16, #tpu.memory_space<vmem>>, vector<16x256xbf16>,
    %c0_48 = arith.constant 0 : index
    %c20_49 = arith.constant 20 : index
    %42 = vector.load %arg8[%c0_48, %c20_49] : memref<16x344xbf16, #tpu.memory_space<vmem>>, vector<16x256xbf16>
    %c80_50 = arith.constant 80 : index
    %c0_51 = arith.constant 0 : index
    %43 = vector.load %arg9[%c80_50, %c0_51] : memref<400x256xbf16, #tpu.memory_space<vmem>>, vector<16x256xbf16>
    tpu.vector_store %arg9[%c80_50, %c0_51], %42 {strides = array<i32>} : memref<400x256xbf16, #tpu.memory_space<vmem>>, vector<16x256xbf16>,
    %c0_52 = arith.constant 0 : index
    %c21 = arith.constant 21 : index
    %44 = vector.load %arg8[%c0_52, %c21] : memref<16x344xbf16, #tpu.memory_space<vmem>>, vector<16x256xbf16>
    %c96 = arith.constant 96 : index
    %c0_53 = arith.constant 0 : index
    %45 = vector.load %arg9[%c96, %c0_53] : memref<400x256xbf16, #tpu.memory_space<vmem>>, vector<16x256xbf16>
    tpu.vector_store %arg9[%c96, %c0_53], %44 {strides = array<i32>} : memref<400x256xbf16, #tpu.memory_space<vmem>>, vector<16x256xbf16>,
    %c0_54 = arith.constant 0 : index
    %c22 = arith.constant 22 : index
    %46 = vector.load %arg8[%c0_54, %c22] : memref<16x344xbf16, #tpu.memory_space<vmem>>, vector<16x256xbf16>
    %c112 = arith.constant 112 : index
    %c0_55 = arith.constant 0 : index
    %47 = vector.load %arg9[%c112, %c0_55] : memref<400x256xbf16, #tpu.memory_space<vmem>>, vector<16x256xbf16>
    tpu.vector_store %arg9[%c112, %c0_55], %46 {strides = array<i32>} : memref<400x256xbf16, #tpu.memory_space<vmem>>, vector<16x256xbf16>,
    %c0_56 = arith.constant 0 : index
    %c23 = arith.constant 23 : index
    %48 = vector.load %arg8[%c0_56, %c23] : memref<16x344xbf16, #tpu.memory_space<vmem>>, vector<16x256xbf16>
    %c128 = arith.constant 128 : index
    %c0_57 = arith.constant 0 : index
    %49 = vector.load %arg9[%c128, %c0_57] : memref<400x256xbf16, #tpu.memory_space<vmem>>, vector<16x256xbf16>
    tpu.vector_store %arg9[%c128, %c0_57], %48 {strides = array<i32>} : memref<400x256xbf16, #tpu.memory_space<vmem>>, vector<16x256xbf16>,
    %c0_58 = arith.constant 0 : index
    %c24 = arith.constant 24 : index
    %50 = vector.load %arg8[%c0_58, %c24] : memref<16x344xbf16, #tpu.memory_space<vmem>>, vector<16x256xbf16>
    %c144 = arith.constant 144 : index
    %c0_59 = arith.constant 0 : index
    %51 = vector.load %arg9[%c144, %c0_59] : memref<400x256xbf16, #tpu.memory_space<vmem>>, vector<16x256xbf16>
    tpu.vector_store %arg9[%c144, %c0_59], %50 {strides = array<i32>} : memref<400x256xbf16, #tpu.memory_space<vmem>>, vector<16x256xbf16>,
    %c0_60 = arith.constant 0 : index
    %c40_61 = arith.constant 40 : index
    %52 = vector.load %arg8[%c0_60, %c40_61] : memref<16x344xbf16, #tpu.memory_space<vmem>>, vector<16x256xbf16>
    %c160 = arith.constant 160 : index
    %c0_62 = arith.constant 0 : index
    %53 = vector.load %arg9[%c160, %c0_62] : memref<400x256xbf16, #tpu.memory_space<vmem>>, vector<16x256xbf16>
    tpu.vector_store %arg9[%c160, %c0_62], %52 {strides = array<i32>} : memref<400x256xbf16, #tpu.memory_space<vmem>>, vector<16x256xbf16>,
    %c0_63 = arith.constant 0 : index
    %c41 = arith.constant 41 : index
    %54 = vector.load %arg8[%c0_63, %c41] : memref<16x344xbf16, #tpu.memory_space<vmem>>, vector<16x256xbf16>
    %c176 = arith.constant 176 : index
    %c0_64 = arith.constant 0 : index
    %55 = vector.load %arg9[%c176, %c0_64] : memref<400x256xbf16, #tpu.memory_space<vmem>>, vector<16x256xbf16>
    tpu.vector_store %arg9[%c176, %c0_64], %54 {strides = array<i32>} : memref<400x256xbf16, #tpu.memory_space<vmem>>, vector<16x256xbf16>,
    %c0_65 = arith.constant 0 : index
    %c42_66 = arith.constant 42 : index
    %56 = vector.load %arg8[%c0_65, %c42_66] : memref<16x344xbf16, #tpu.memory_space<vmem>>, vector<16x256xbf16>
    %c192 = arith.constant 192 : index
    %c0_67 = arith.constant 0 : index
    %57 = vector.load %arg9[%c192, %c0_67] : memref<400x256xbf16, #tpu.memory_space<vmem>>, vector<16x256xbf16>
    tpu.vector_store %arg9[%c192, %c0_67], %56 {strides = array<i32>} : memref<400x256xbf16, #tpu.memory_space<vmem>>, vector<16x256xbf16>,
    %c0_68 = arith.constant 0 : index
    %c43 = arith.constant 43 : index
    %58 = vector.load %arg8[%c0_68, %c43] : memref<16x344xbf16, #tpu.memory_space<vmem>>, vector<16x256xbf16>
    %c208 = arith.constant 208 : index
    %c0_69 = arith.constant 0 : index
    %59 = vector.load %arg9[%c208, %c0_69] : memref<400x256xbf16, #tpu.memory_space<vmem>>, vector<16x256xbf16>
    tpu.vector_store %arg9[%c208, %c0_69], %58 {strides = array<i32>} : memref<400x256xbf16, #tpu.memory_space<vmem>>, vector<16x256xbf16>,
    %c0_70 = arith.constant 0 : index
    %c44 = arith.constant 44 : index
    %60 = vector.load %arg8[%c0_70, %c44] : memref<16x344xbf16, #tpu.memory_space<vmem>>, vector<16x256xbf16>
    %c224 = arith.constant 224 : index
    %c0_71 = arith.constant 0 : index
    %61 = vector.load %arg9[%c224, %c0_71] : memref<400x256xbf16, #tpu.memory_space<vmem>>, vector<16x256xbf16>
    tpu.vector_store %arg9[%c224, %c0_71], %60 {strides = array<i32>} : memref<400x256xbf16, #tpu.memory_space<vmem>>, vector<16x256xbf16>,
    %c0_72 = arith.constant 0 : index
    %c60_73 = arith.constant 60 : index
    %62 = vector.load %arg8[%c0_72, %c60_73] : memref<16x344xbf16, #tpu.memory_space<vmem>>, vector<16x256xbf16>
    %c240 = arith.constant 240 : index
    %c0_74 = arith.constant 0 : index
    %63 = vector.load %arg9[%c240, %c0_74] : memref<400x256xbf16, #tpu.memory_space<vmem>>, vector<16x256xbf16>
    tpu.vector_store %arg9[%c240, %c0_74], %62 {strides = array<i32>} : memref<400x256xbf16, #tpu.memory_space<vmem>>, vector<16x256xbf16>,
    %c0_75 = arith.constant 0 : index
    %c61 = arith.constant 61 : index
    %64 = vector.load %arg8[%c0_75, %c61] : memref<16x344xbf16, #tpu.memory_space<vmem>>, vector<16x256xbf16>
    %c256 = arith.constant 256 : index
    %c0_76 = arith.constant 0 : index
    %65 = vector.load %arg9[%c256, %c0_76] : memref<400x256xbf16, #tpu.memory_space<vmem>>, vector<16x256xbf16>
    tpu.vector_store %arg9[%c256, %c0_76], %64 {strides = array<i32>} : memref<400x256xbf16, #tpu.memory_space<vmem>>, vector<16x256xbf16>,
    %c0_77 = arith.constant 0 : index
    %c62_78 = arith.constant 62 : index
    %66 = vector.load %arg8[%c0_77, %c62_78] : memref<16x344xbf16, #tpu.memory_space<vmem>>, vector<16x256xbf16>
    %c272 = arith.constant 272 : index
    %c0_79 = arith.constant 0 : index
    %67 = vector.load %arg9[%c272, %c0_79] : memref<400x256xbf16, #tpu.memory_space<vmem>>, vector<16x256xbf16>
    tpu.vector_store %arg9[%c272, %c0_79], %66 {strides = array<i32>} : memref<400x256xbf16, #tpu.memory_space<vmem>>, vector<16x256xbf16>,
    %c0_80 = arith.constant 0 : index
    %c63 = arith.constant 63 : index
    %68 = vector.load %arg8[%c0_80, %c63] : memref<16x344xbf16, #tpu.memory_space<vmem>>, vector<16x256xbf16>
    %c288 = arith.constant 288 : index
    %c0_81 = arith.constant 0 : index
    %69 = vector.load %arg9[%c288, %c0_81] : memref<400x256xbf16, #tpu.memory_space<vmem>>, vector<16x256xbf16>
    tpu.vector_store %arg9[%c288, %c0_81], %68 {strides = array<i32>} : memref<400x256xbf16, #tpu.memory_space<vmem>>, vector<16x256xbf16>,
    %c0_82 = arith.constant 0 : index
    %c64_83 = arith.constant 64 : index
    %70 = vector.load %arg8[%c0_82, %c64_83] : memref<16x344xbf16, #tpu.memory_space<vmem>>, vector<16x256xbf16>
    %c304 = arith.constant 304 : index
    %c0_84 = arith.constant 0 : index
    %71 = vector.load %arg9[%c304, %c0_84] : memref<400x256xbf16, #tpu.memory_space<vmem>>, vector<16x256xbf16>
    tpu.vector_store %arg9[%c304, %c0_84], %70 {strides = array<i32>} : memref<400x256xbf16, #tpu.memory_space<vmem>>, vector<16x256xbf16>,
    %c0_85 = arith.constant 0 : index
    %c80_86 = arith.constant 80 : index
    %72 = vector.load %arg8[%c0_85, %c80_86] : memref<16x344xbf16, #tpu.memory_space<vmem>>, vector<16x256xbf16>
    %c320 = arith.constant 320 : index
    %c0_87 = arith.constant 0 : index
    %73 = vector.load %arg9[%c320, %c0_87] : memref<400x256xbf16, #tpu.memory_space<vmem>>, vector<16x256xbf16>
    tpu.vector_store %arg9[%c320, %c0_87], %72 {strides = array<i32>} : memref<400x256xbf16, #tpu.memory_space<vmem>>, vector<16x256xbf16>,
    %c0_88 = arith.constant 0 : index
    %c81 = arith.constant 81 : index
    %74 = vector.load %arg8[%c0_88, %c81] : memref<16x344xbf16, #tpu.memory_space<vmem>>, vector<16x256xbf16>
    %c336 = arith.constant 336 : index
    %c0_89 = arith.constant 0 : index
    %75 = vector.load %arg9[%c336, %c0_89] : memref<400x256xbf16, #tpu.memory_space<vmem>>, vector<16x256xbf16>
    tpu.vector_store %arg9[%c336, %c0_89], %74 {strides = array<i32>} : memref<400x256xbf16, #tpu.memory_space<vmem>>, vector<16x256xbf16>,
    %c0_90 = arith.constant 0 : index
    %c82_91 = arith.constant 82 : index
    %76 = vector.load %arg8[%c0_90, %c82_91] : memref<16x344xbf16, #tpu.memory_space<vmem>>, vector<16x256xbf16>
    %c352 = arith.constant 352 : index
    %c0_92 = arith.constant 0 : index
    %77 = vector.load %arg9[%c352, %c0_92] : memref<400x256xbf16, #tpu.memory_space<vmem>>, vector<16x256xbf16>
    tpu.vector_store %arg9[%c352, %c0_92], %76 {strides = array<i32>} : memref<400x256xbf16, #tpu.memory_space<vmem>>, vector<16x256xbf16>,
    %c0_93 = arith.constant 0 : index
    %c83 = arith.constant 83 : index
    %78 = vector.load %arg8[%c0_93, %c83] : memref<16x344xbf16, #tpu.memory_space<vmem>>, vector<16x256xbf16>
    %c368 = arith.constant 368 : index
    %c0_94 = arith.constant 0 : index
    %79 = vector.load %arg9[%c368, %c0_94] : memref<400x256xbf16, #tpu.memory_space<vmem>>, vector<16x256xbf16>
    tpu.vector_store %arg9[%c368, %c0_94], %78 {strides = array<i32>} : memref<400x256xbf16, #tpu.memory_space<vmem>>, vector<16x256xbf16>,
    %c0_95 = arith.constant 0 : index
    %c84 = arith.constant 84 : index
    %80 = vector.load %arg8[%c0_95, %c84] : memref<16x344xbf16, #tpu.memory_space<vmem>>, vector<16x256xbf16>
    %c384 = arith.constant 384 : index
    %c0_96 = arith.constant 0 : index
    %81 = vector.load %arg9[%c384, %c0_96] : memref<400x256xbf16, #tpu.memory_space<vmem>>, vector<16x256xbf16>
    tpu.vector_store %arg9[%c384, %c0_96], %80 {strides = array<i32>} : memref<400x256xbf16, #tpu.memory_space<vmem>>, vector<16x256xbf16>,
    %c0_97 = arith.constant 0 : index
    %c0_98 = arith.constant 0 : index
    %82 = vector.load %arg5[%c0_97, %c0_98] : memref<64x400xbf16, #tpu.memory_space<vmem>>, vector<64x400xbf16>
    %c0_99 = arith.constant 0 : index
    %c0_100 = arith.constant 0 : index
    %83 = vector.load %arg9[%c0_99, %c0_100] : memref<400x256xbf16, #tpu.memory_space<vmem>>, vector<400x256xbf16>
    %cst_101 = arith.constant dense<0.000000e+00> : vector<64x256xf32>
    %84 = tpu.matmul %82, %83, %cst_101 {dimension_numbers = #tpu.dot_dimension_numbers<[1], [0], [0], [1], [0, 0, 1, 1], [], []>} : vector<64x400xbf16>, vector<400x256xbf16>, vector<64x256xf32> -> vector<64x256xf32>
    %c0_102 = arith.constant 0 : index
    %c0_103 = arith.constant 0 : index
    %85 = vector.load %arg6[%c0_102, %c0_103] : memref<64x1xf32, #tpu.memory_space<vmem>>, vector<64x1xf32>
    %86 = vector.broadcast %85 : vector<64x1xf32> to vector<64x256xf32>
    %87 = arith.addf %84, %86 : vector<64x256xf32>
    %88 = arith.truncf %87 : vector<64x256xf32> to vector<64x256xbf16>
    %c0_104 = arith.constant 0 : index
    %c0_105 = arith.constant 0 : index
    %c0_106 = arith.constant 0 : index
    %c0_107 = arith.constant 0 : index
    %89 = vector.load %arg7[%c0_104, %c0_105, %c0_106, %c0_107] : memref<1x1x64x256xbf16, #tpu.memory_space<vmem>>, vector<1x1x64x256xbf16>
    %90 = vector.shape_cast %89 : vector<1x1x64x256xbf16> to vector<64x256xbf16>
    %91 = vector.shape_cast %88 : vector<64x256xbf16> to vector<1x1x64x256xbf16>
    tpu.vector_store %arg7[%c0_104, %c0_105, %c0_106, %c0_107], %91 {strides = array<i32>} : memref<1x1x64x256xbf16, #tpu.memory_space<vmem>>, vector<1x1x64x256xbf16>,
    return
  }
  func.func @transform_0(%arg0: i32, %arg1: i32) -> (i32, i32, i32, i32) {
    %c1_i32 = arith.constant 1 : i32
    %0 = arith.subi %arg1, %c1_i32 : i32
    %c0_i32 = arith.constant 0 : i32
    %1 = arith.maxsi %0, %c0_i32 : i32
    %c0_i32_0 = arith.constant 0 : i32
    %c0_i32_1 = arith.constant 0 : i32
    %c0_i32_2 = arith.constant 0 : i32
    return %arg0, %1, %c0_i32_0, %c0_i32_1 : i32, i32, i32, i32
  }
  func.func @transform_1(%arg0: i32, %arg1: i32) -> (i32, i32, i32, i32) {
    %c0_i32 = arith.constant 0 : i32
    %c0_i32_0 = arith.constant 0 : i32
    %c0_i32_1 = arith.constant 0 : i32
    return %arg0, %arg1, %c0_i32, %c0_i32_0 : i32, i32, i32, i32
  }
  func.func @transform_2(%arg0: i32, %arg1: i32) -> (i32, i32, i32, i32) {
    %c1_i32 = arith.constant 1 : i32
    %0 = arith.addi %arg1, %c1_i32 : i32
    %c1_i32_0 = arith.constant 1 : i32
    %1 = arith.minsi %0, %c1_i32_0 : i32
    %c0_i32 = arith.constant 0 : i32
    %c0_i32_1 = arith.constant 0 : i32
    %c0_i32_2 = arith.constant 0 : i32
    return %arg0, %1, %c0_i32, %c0_i32_1 : i32, i32, i32, i32
  }
  func.func @transform_3(%arg0: i32, %arg1: i32) -> (i32, i32) {
    %c0_i32 = arith.constant 0 : i32
    %c0_i32_0 = arith.constant 0 : i32
    %c0_i32_1 = arith.constant 0 : i32
    return %c0_i32, %c0_i32_0 : i32, i32
  }
  func.func @transform_4(%arg0: i32, %arg1: i32) -> (i32, i32) {
    %c0_i32 = arith.constant 0 : i32
    %c0_i32_0 = arith.constant 0 : i32
    %c0_i32_1 = arith.constant 0 : i32
    return %c0_i32, %c0_i32_0 : i32, i32
  }
  func.func @transform_5(%arg0: i32, %arg1: i32) -> (i32, i32, i32, i32) {
    %c0_i32 = arith.constant 0 : i32
    %c0_i32_0 = arith.constant 0 : i32
    %c0_i32_1 = arith.constant 0 : i32
    return %arg0, %arg1, %c0_i32, %c0_i32_0 : i32, i32, i32, i32
  }
}

module attributes {stable_mosaic.version = 11 : i64} {
  func.func @conv_tile_kernel(%arg0: i32, %arg1: i32, %arg2: memref<1x1x64x256xbf16, #tpu.memory_space<vmem>>, %arg3: memref<1x1x64x256xbf16, #tpu.memory_space<vmem>>, %arg4: memref<1x1x64x256xbf16, #tpu.memory_space<vmem>>, %arg5: memref<48x576xbf16, #tpu.memory_space<vmem>>, %arg6: memref<48x1xf32, #tpu.memory_space<vmem>>, %arg7: memref<1x1x48x256xf32, #tpu.memory_space<vmem>>, %arg8: memref<64x300xbf16, #tpu.memory_space<vmem>>, %arg9: memref<576x256xbf16, #tpu.memory_space<vmem>>) attributes {dimension_semantics = [#tpu.dimension_semantics<parallel>, #tpu.dimension_semantics<parallel>], iteration_bounds = array<i64: 2, 2>, scalar_prefetch = 0 : i64, scratch_operands = 2 : i64, tpu.core_type = #tpu.core_type<tc>, window_params = [{transform_indices = @transform_0, window_bounds = array<i64: 1, 1, 64, 256>}, {transform_indices = @transform_1, window_bounds = array<i64: 1, 1, 64, 256>}, {transform_indices = @transform_2, window_bounds = array<i64: 1, 1, 64, 256>}, {pipeline_mode = #tpu.pipeline_mode<synchronous>, transform_indices = @transform_3, window_bounds = array<i64: 48, 576>}, {pipeline_mode = #tpu.pipeline_mode<synchronous>, transform_indices = @transform_4, window_bounds = array<i64: 48, 1>}, {transform_indices = @transform_5, window_bounds = array<i64: 1, 1, 48, 256>}]} {
    %cst = arith.constant 0.000000e+00 : bf16
    %0 = vector.broadcast %cst : bf16 to vector<64x300xbf16>
    %c0 = arith.constant 0 : index
    %c0_0 = arith.constant 0 : index
    %1 = vector.load %arg8[%c0, %c0_0] : memref<64x300xbf16, #tpu.memory_space<vmem>>, vector<64x300xbf16>
    tpu.vector_store %arg8[%c0, %c0_0], %0 {strides = array<i32>} : memref<64x300xbf16, #tpu.memory_space<vmem>>, vector<64x300xbf16>,
    %c0_i32 = arith.constant 0 : i32
    %2 = arith.cmpi sgt, %arg1, %c0_i32 : i32
    %3 = arith.extui %2 : i1 to i32
    %c0_i32_1 = arith.constant 0 : i32
    %4 = arith.cmpi ne, %3, %c0_i32_1 : i32
    scf.if %4 {
      %c0_70 = arith.constant 0 : index
      %c0_71 = arith.constant 0 : index
      %c0_72 = arith.constant 0 : index
      %c140_73 = arith.constant 140 : index
      %59 = vector.load %arg2[%c0_70, %c0_71, %c0_72, %c140_73] : memref<1x1x64x256xbf16, #tpu.memory_space<vmem>>, vector<1x1x64x16xbf16>
      %60 = vector.shape_cast %59 : vector<1x1x64x16xbf16> to vector<64x16xbf16>
      %c0_74 = arith.constant 0 : index
      %c1_75 = arith.constant 1 : index
      %61 = vector.load %arg8[%c0_74, %c1_75] : memref<64x300xbf16, #tpu.memory_space<vmem>>, vector<64x16xbf16>
      tpu.vector_store %arg8[%c0_74, %c1_75], %60 {strides = array<i32>} : memref<64x300xbf16, #tpu.memory_space<vmem>>, vector<64x16xbf16>,
    } else {
    }
    %c0_2 = arith.constant 0 : index
    %c0_3 = arith.constant 0 : index
    %c0_4 = arith.constant 0 : index
    %c0_5 = arith.constant 0 : index
    %5 = vector.load %arg3[%c0_2, %c0_3, %c0_4, %c0_5] : memref<1x1x64x256xbf16, #tpu.memory_space<vmem>>, vector<1x1x64x16xbf16>
    %6 = vector.shape_cast %5 : vector<1x1x64x16xbf16> to vector<64x16xbf16>
    %c0_6 = arith.constant 0 : index
    %c19 = arith.constant 19 : index
    %7 = vector.load %arg8[%c0_6, %c19] : memref<64x300xbf16, #tpu.memory_space<vmem>>, vector<64x16xbf16>
    tpu.vector_store %arg8[%c0_6, %c19], %6 {strides = array<i32>} : memref<64x300xbf16, #tpu.memory_space<vmem>>, vector<64x16xbf16>,
    %c0_7 = arith.constant 0 : index
    %c0_8 = arith.constant 0 : index
    %c0_9 = arith.constant 0 : index
    %c20 = arith.constant 20 : index
    %8 = vector.load %arg3[%c0_7, %c0_8, %c0_9, %c20] : memref<1x1x64x256xbf16, #tpu.memory_space<vmem>>, vector<1x1x64x16xbf16>
    %9 = vector.shape_cast %8 : vector<1x1x64x16xbf16> to vector<64x16xbf16>
    %c0_10 = arith.constant 0 : index
    %c37 = arith.constant 37 : index
    %10 = vector.load %arg8[%c0_10, %c37] : memref<64x300xbf16, #tpu.memory_space<vmem>>, vector<64x16xbf16>
    tpu.vector_store %arg8[%c0_10, %c37], %9 {strides = array<i32>} : memref<64x300xbf16, #tpu.memory_space<vmem>>, vector<64x16xbf16>,
    %c0_11 = arith.constant 0 : index
    %c0_12 = arith.constant 0 : index
    %c0_13 = arith.constant 0 : index
    %c40 = arith.constant 40 : index
    %11 = vector.load %arg3[%c0_11, %c0_12, %c0_13, %c40] : memref<1x1x64x256xbf16, #tpu.memory_space<vmem>>, vector<1x1x64x16xbf16>
    %12 = vector.shape_cast %11 : vector<1x1x64x16xbf16> to vector<64x16xbf16>
    %c0_14 = arith.constant 0 : index
    %c55 = arith.constant 55 : index
    %13 = vector.load %arg8[%c0_14, %c55] : memref<64x300xbf16, #tpu.memory_space<vmem>>, vector<64x16xbf16>
    tpu.vector_store %arg8[%c0_14, %c55], %12 {strides = array<i32>} : memref<64x300xbf16, #tpu.memory_space<vmem>>, vector<64x16xbf16>,
    %c0_15 = arith.constant 0 : index
    %c0_16 = arith.constant 0 : index
    %c0_17 = arith.constant 0 : index
    %c60 = arith.constant 60 : index
    %14 = vector.load %arg3[%c0_15, %c0_16, %c0_17, %c60] : memref<1x1x64x256xbf16, #tpu.memory_space<vmem>>, vector<1x1x64x16xbf16>
    %15 = vector.shape_cast %14 : vector<1x1x64x16xbf16> to vector<64x16xbf16>
    %c0_18 = arith.constant 0 : index
    %c73 = arith.constant 73 : index
    %16 = vector.load %arg8[%c0_18, %c73] : memref<64x300xbf16, #tpu.memory_space<vmem>>, vector<64x16xbf16>
    tpu.vector_store %arg8[%c0_18, %c73], %15 {strides = array<i32>} : memref<64x300xbf16, #tpu.memory_space<vmem>>, vector<64x16xbf16>,
    %c0_19 = arith.constant 0 : index
    %c0_20 = arith.constant 0 : index
    %c0_21 = arith.constant 0 : index
    %c80 = arith.constant 80 : index
    %17 = vector.load %arg3[%c0_19, %c0_20, %c0_21, %c80] : memref<1x1x64x256xbf16, #tpu.memory_space<vmem>>, vector<1x1x64x16xbf16>
    %18 = vector.shape_cast %17 : vector<1x1x64x16xbf16> to vector<64x16xbf16>
    %c0_22 = arith.constant 0 : index
    %c91 = arith.constant 91 : index
    %19 = vector.load %arg8[%c0_22, %c91] : memref<64x300xbf16, #tpu.memory_space<vmem>>, vector<64x16xbf16>
    tpu.vector_store %arg8[%c0_22, %c91], %18 {strides = array<i32>} : memref<64x300xbf16, #tpu.memory_space<vmem>>, vector<64x16xbf16>,
    %c0_23 = arith.constant 0 : index
    %c0_24 = arith.constant 0 : index
    %c0_25 = arith.constant 0 : index
    %c100 = arith.constant 100 : index
    %20 = vector.load %arg3[%c0_23, %c0_24, %c0_25, %c100] : memref<1x1x64x256xbf16, #tpu.memory_space<vmem>>, vector<1x1x64x16xbf16>
    %21 = vector.shape_cast %20 : vector<1x1x64x16xbf16> to vector<64x16xbf16>
    %c0_26 = arith.constant 0 : index
    %c109 = arith.constant 109 : index
    %22 = vector.load %arg8[%c0_26, %c109] : memref<64x300xbf16, #tpu.memory_space<vmem>>, vector<64x16xbf16>
    tpu.vector_store %arg8[%c0_26, %c109], %21 {strides = array<i32>} : memref<64x300xbf16, #tpu.memory_space<vmem>>, vector<64x16xbf16>,
    %c0_27 = arith.constant 0 : index
    %c0_28 = arith.constant 0 : index
    %c0_29 = arith.constant 0 : index
    %c120 = arith.constant 120 : index
    %23 = vector.load %arg3[%c0_27, %c0_28, %c0_29, %c120] : memref<1x1x64x256xbf16, #tpu.memory_space<vmem>>, vector<1x1x64x16xbf16>
    %24 = vector.shape_cast %23 : vector<1x1x64x16xbf16> to vector<64x16xbf16>
    %c0_30 = arith.constant 0 : index
    %c127 = arith.constant 127 : index
    %25 = vector.load %arg8[%c0_30, %c127] : memref<64x300xbf16, #tpu.memory_space<vmem>>, vector<64x16xbf16>
    tpu.vector_store %arg8[%c0_30, %c127], %24 {strides = array<i32>} : memref<64x300xbf16, #tpu.memory_space<vmem>>, vector<64x16xbf16>,
    %c0_31 = arith.constant 0 : index
    %c0_32 = arith.constant 0 : index
    %c0_33 = arith.constant 0 : index
    %c140 = arith.constant 140 : index
    %26 = vector.load %arg3[%c0_31, %c0_32, %c0_33, %c140] : memref<1x1x64x256xbf16, #tpu.memory_space<vmem>>, vector<1x1x64x16xbf16>
    %27 = vector.shape_cast %26 : vector<1x1x64x16xbf16> to vector<64x16xbf16>
    %c0_34 = arith.constant 0 : index
    %c145 = arith.constant 145 : index
    %28 = vector.load %arg8[%c0_34, %c145] : memref<64x300xbf16, #tpu.memory_space<vmem>>, vector<64x16xbf16>
    tpu.vector_store %arg8[%c0_34, %c145], %27 {strides = array<i32>} : memref<64x300xbf16, #tpu.memory_space<vmem>>, vector<64x16xbf16>,
    %c1_i32 = arith.constant 1 : i32
    %29 = arith.cmpi slt, %arg1, %c1_i32 : i32
    %30 = arith.extui %29 : i1 to i32
    %c0_i32_35 = arith.constant 0 : i32
    %31 = arith.cmpi ne, %30, %c0_i32_35 : i32
    scf.if %31 {
      %c0_70 = arith.constant 0 : index
      %c0_71 = arith.constant 0 : index
      %c0_72 = arith.constant 0 : index
      %c0_73 = arith.constant 0 : index
      %59 = vector.load %arg4[%c0_70, %c0_71, %c0_72, %c0_73] : memref<1x1x64x256xbf16, #tpu.memory_space<vmem>>, vector<1x1x64x16xbf16>
      %60 = vector.shape_cast %59 : vector<1x1x64x16xbf16> to vector<64x16xbf16>
      %c0_74 = arith.constant 0 : index
      %c163 = arith.constant 163 : index
      %61 = vector.load %arg8[%c0_74, %c163] : memref<64x300xbf16, #tpu.memory_space<vmem>>, vector<64x16xbf16>
      tpu.vector_store %arg8[%c0_74, %c163], %60 {strides = array<i32>} : memref<64x300xbf16, #tpu.memory_space<vmem>>, vector<64x16xbf16>,
    } else {
    }
    %c0_36 = arith.constant 0 : index
    %c0_37 = arith.constant 0 : index
    %32 = vector.load %arg8[%c0_36, %c0_37] : memref<64x300xbf16, #tpu.memory_space<vmem>>, vector<64x256xbf16>
    %c0_38 = arith.constant 0 : index
    %c0_39 = arith.constant 0 : index
    %33 = vector.load %arg9[%c0_38, %c0_39] : memref<576x256xbf16, #tpu.memory_space<vmem>>, vector<64x256xbf16>
    tpu.vector_store %arg9[%c0_38, %c0_39], %32 {strides = array<i32>} : memref<576x256xbf16, #tpu.memory_space<vmem>>, vector<64x256xbf16>,
    %c0_40 = arith.constant 0 : index
    %c1 = arith.constant 1 : index
    %34 = vector.load %arg8[%c0_40, %c1] : memref<64x300xbf16, #tpu.memory_space<vmem>>, vector<64x256xbf16>
    %c64 = arith.constant 64 : index
    %c0_41 = arith.constant 0 : index
    %35 = vector.load %arg9[%c64, %c0_41] : memref<576x256xbf16, #tpu.memory_space<vmem>>, vector<64x256xbf16>
    tpu.vector_store %arg9[%c64, %c0_41], %34 {strides = array<i32>} : memref<576x256xbf16, #tpu.memory_space<vmem>>, vector<64x256xbf16>,
    %c0_42 = arith.constant 0 : index
    %c2 = arith.constant 2 : index
    %36 = vector.load %arg8[%c0_42, %c2] : memref<64x300xbf16, #tpu.memory_space<vmem>>, vector<64x256xbf16>
    %c128 = arith.constant 128 : index
    %c0_43 = arith.constant 0 : index
    %37 = vector.load %arg9[%c128, %c0_43] : memref<576x256xbf16, #tpu.memory_space<vmem>>, vector<64x256xbf16>
    tpu.vector_store %arg9[%c128, %c0_43], %36 {strides = array<i32>} : memref<576x256xbf16, #tpu.memory_space<vmem>>, vector<64x256xbf16>,
    %c0_44 = arith.constant 0 : index
    %c18 = arith.constant 18 : index
    %38 = vector.load %arg8[%c0_44, %c18] : memref<64x300xbf16, #tpu.memory_space<vmem>>, vector<64x256xbf16>
    %c192 = arith.constant 192 : index
    %c0_45 = arith.constant 0 : index
    %39 = vector.load %arg9[%c192, %c0_45] : memref<576x256xbf16, #tpu.memory_space<vmem>>, vector<64x256xbf16>
    tpu.vector_store %arg9[%c192, %c0_45], %38 {strides = array<i32>} : memref<576x256xbf16, #tpu.memory_space<vmem>>, vector<64x256xbf16>,
    %c0_46 = arith.constant 0 : index
    %c19_47 = arith.constant 19 : index
    %40 = vector.load %arg8[%c0_46, %c19_47] : memref<64x300xbf16, #tpu.memory_space<vmem>>, vector<64x256xbf16>
    %c256 = arith.constant 256 : index
    %c0_48 = arith.constant 0 : index
    %41 = vector.load %arg9[%c256, %c0_48] : memref<576x256xbf16, #tpu.memory_space<vmem>>, vector<64x256xbf16>
    tpu.vector_store %arg9[%c256, %c0_48], %40 {strides = array<i32>} : memref<576x256xbf16, #tpu.memory_space<vmem>>, vector<64x256xbf16>,
    %c0_49 = arith.constant 0 : index
    %c20_50 = arith.constant 20 : index
    %42 = vector.load %arg8[%c0_49, %c20_50] : memref<64x300xbf16, #tpu.memory_space<vmem>>, vector<64x256xbf16>
    %c320 = arith.constant 320 : index
    %c0_51 = arith.constant 0 : index
    %43 = vector.load %arg9[%c320, %c0_51] : memref<576x256xbf16, #tpu.memory_space<vmem>>, vector<64x256xbf16>
    tpu.vector_store %arg9[%c320, %c0_51], %42 {strides = array<i32>} : memref<576x256xbf16, #tpu.memory_space<vmem>>, vector<64x256xbf16>,
    %c0_52 = arith.constant 0 : index
    %c36 = arith.constant 36 : index
    %44 = vector.load %arg8[%c0_52, %c36] : memref<64x300xbf16, #tpu.memory_space<vmem>>, vector<64x256xbf16>
    %c384 = arith.constant 384 : index
    %c0_53 = arith.constant 0 : index
    %45 = vector.load %arg9[%c384, %c0_53] : memref<576x256xbf16, #tpu.memory_space<vmem>>, vector<64x256xbf16>
    tpu.vector_store %arg9[%c384, %c0_53], %44 {strides = array<i32>} : memref<576x256xbf16, #tpu.memory_space<vmem>>, vector<64x256xbf16>,
    %c0_54 = arith.constant 0 : index
    %c37_55 = arith.constant 37 : index
    %46 = vector.load %arg8[%c0_54, %c37_55] : memref<64x300xbf16, #tpu.memory_space<vmem>>, vector<64x256xbf16>
    %c448 = arith.constant 448 : index
    %c0_56 = arith.constant 0 : index
    %47 = vector.load %arg9[%c448, %c0_56] : memref<576x256xbf16, #tpu.memory_space<vmem>>, vector<64x256xbf16>
    tpu.vector_store %arg9[%c448, %c0_56], %46 {strides = array<i32>} : memref<576x256xbf16, #tpu.memory_space<vmem>>, vector<64x256xbf16>,
    %c0_57 = arith.constant 0 : index
    %c38 = arith.constant 38 : index
    %48 = vector.load %arg8[%c0_57, %c38] : memref<64x300xbf16, #tpu.memory_space<vmem>>, vector<64x256xbf16>
    %c512 = arith.constant 512 : index
    %c0_58 = arith.constant 0 : index
    %49 = vector.load %arg9[%c512, %c0_58] : memref<576x256xbf16, #tpu.memory_space<vmem>>, vector<64x256xbf16>
    tpu.vector_store %arg9[%c512, %c0_58], %48 {strides = array<i32>} : memref<576x256xbf16, #tpu.memory_space<vmem>>, vector<64x256xbf16>,
    %c0_59 = arith.constant 0 : index
    %c0_60 = arith.constant 0 : index
    %50 = vector.load %arg5[%c0_59, %c0_60] : memref<48x576xbf16, #tpu.memory_space<vmem>>, vector<48x576xbf16>
    %c0_61 = arith.constant 0 : index
    %c0_62 = arith.constant 0 : index
    %51 = vector.load %arg9[%c0_61, %c0_62] : memref<576x256xbf16, #tpu.memory_space<vmem>>, vector<576x256xbf16>
    %cst_63 = arith.constant dense<0.000000e+00> : vector<48x256xf32>
    %52 = tpu.matmul %50, %51, %cst_63 {dimension_numbers = #tpu.dot_dimension_numbers<[1], [0], [0], [1], [0, 0, 1, 1], [], []>} : vector<48x576xbf16>, vector<576x256xbf16>, vector<48x256xf32> -> vector<48x256xf32>
    %c0_64 = arith.constant 0 : index
    %c0_65 = arith.constant 0 : index
    %53 = vector.load %arg6[%c0_64, %c0_65] : memref<48x1xf32, #tpu.memory_space<vmem>>, vector<48x1xf32>
    %54 = vector.broadcast %53 : vector<48x1xf32> to vector<48x256xf32>
    %55 = arith.addf %52, %54 : vector<48x256xf32>
    %c0_66 = arith.constant 0 : index
    %c0_67 = arith.constant 0 : index
    %c0_68 = arith.constant 0 : index
    %c0_69 = arith.constant 0 : index
    %56 = vector.load %arg7[%c0_66, %c0_67, %c0_68, %c0_69] : memref<1x1x48x256xf32, #tpu.memory_space<vmem>>, vector<1x1x48x256xf32>
    %57 = vector.shape_cast %56 : vector<1x1x48x256xf32> to vector<48x256xf32>
    %58 = vector.shape_cast %55 : vector<48x256xf32> to vector<1x1x48x256xf32>
    tpu.vector_store %arg7[%c0_66, %c0_67, %c0_68, %c0_69], %58 {strides = array<i32>} : memref<1x1x48x256xf32, #tpu.memory_space<vmem>>, vector<1x1x48x256xf32>,
    return
  }
  func.func @transform_0(%arg0: i32, %arg1: i32) -> (i32, i32, i32, i32) {
    %c1_i32 = arith.constant 1 : i32
    %0 = arith.subi %arg1, %c1_i32 : i32
    %c0_i32 = arith.constant 0 : i32
    %1 = arith.maxsi %0, %c0_i32 : i32
    %c0_i32_0 = arith.constant 0 : i32
    %c0_i32_1 = arith.constant 0 : i32
    %c0_i32_2 = arith.constant 0 : i32
    return %arg0, %1, %c0_i32_0, %c0_i32_1 : i32, i32, i32, i32
  }
  func.func @transform_1(%arg0: i32, %arg1: i32) -> (i32, i32, i32, i32) {
    %c0_i32 = arith.constant 0 : i32
    %c0_i32_0 = arith.constant 0 : i32
    %c0_i32_1 = arith.constant 0 : i32
    return %arg0, %arg1, %c0_i32, %c0_i32_0 : i32, i32, i32, i32
  }
  func.func @transform_2(%arg0: i32, %arg1: i32) -> (i32, i32, i32, i32) {
    %c1_i32 = arith.constant 1 : i32
    %0 = arith.addi %arg1, %c1_i32 : i32
    %c1_i32_0 = arith.constant 1 : i32
    %1 = arith.minsi %0, %c1_i32_0 : i32
    %c0_i32 = arith.constant 0 : i32
    %c0_i32_1 = arith.constant 0 : i32
    %c0_i32_2 = arith.constant 0 : i32
    return %arg0, %1, %c0_i32, %c0_i32_1 : i32, i32, i32, i32
  }
  func.func @transform_3(%arg0: i32, %arg1: i32) -> (i32, i32) {
    %c0_i32 = arith.constant 0 : i32
    %c0_i32_0 = arith.constant 0 : i32
    %c0_i32_1 = arith.constant 0 : i32
    return %c0_i32, %c0_i32_0 : i32, i32
  }
  func.func @transform_4(%arg0: i32, %arg1: i32) -> (i32, i32) {
    %c0_i32 = arith.constant 0 : i32
    %c0_i32_0 = arith.constant 0 : i32
    %c0_i32_1 = arith.constant 0 : i32
    return %c0_i32, %c0_i32_0 : i32, i32
  }
  func.func @transform_5(%arg0: i32, %arg1: i32) -> (i32, i32, i32, i32) {
    %c0_i32 = arith.constant 0 : i32
    %c0_i32_0 = arith.constant 0 : i32
    %c0_i32_1 = arith.constant 0 : i32
    return %arg0, %arg1, %c0_i32, %c0_i32_0 : i32, i32, i32, i32
  }
}

</mosaic_0001>

<llo_original>
// kernel: tile.13
$region0: #{tile.13}
  #allocation0 [shape = 's32[1]{0}', space=sflag, size = 0x4, scoped, tag = 'scoped memory for tile.13']
  %s0 = inlined_call_operand.vmem [shape: f32[16], index: 0, kind: input, shape index: {}]
  %s1 = inlined_call_operand.vmem [shape: f32[4,16], index: 1, kind: output, shape index: {}]
  // Predicated region
  $region2: #{tile.13} parent=0 // pred_check
    _
  $region3: #{tile.13} parent=0 // pred_check_branch
    %3 = sbr.rel (0) target = $region5
  $region4: #{tile.13} parent=0 // pred_region
    _
  $region5: #{tile.13} parent=0 // pred_fallthru
    _
  %v4 = vld [vmem:[%s0] ss:$0 sm:$0xff]
  %5 = vst [vmem:[%s1] sm:$0xf] %v4

// kernel: tile.0
$region0: #{tile.0}
  %s0 = inlined_call_operand.vmem [shape: f32[4,16], index: 0, kind: input, shape index: {}]
  %s1 = inlined_call_operand.vmem [shape: f32[64,1], index: 1, kind: output, shape index: {}]
  $region1: #{tile.0} parent=0
    #allocation0 [shape = 'u8[4096]{0}', space=vmem, size = 0x1000, scoped, tag = 'scoped mem for input reshape']
    %s3 = sshllo.u32 0, 4
    %v4 = vld [vmem:[%s0] sm:%s3]
    %5 = vst [vmem:[#allocation0] sm:%s3] %v4
    %v6 = vld [vmem:[#allocation0] sm:$0xf]
    %vm7 = vcmask 7168
    %8 = vst.msk [vmem:[%s1] ss:$16 sm:$0x3] %vm7, %v6
    %9 = vst.msk [vmem:[%s1] ss:$16 sm:$0xc] %vm7, %v6
    %v10 = vld [vmem:[#allocation0] sm:$0xf]
    %11 = vrot.lane.b32.xlu0 %v10, 127
    %v12 = vpop.permute.xlu0 %11
    %vm13 = vcmask 7168
    %s14 = scalar_lea.vmem %s1, 1
    %15 = vst.msk [vmem:[%s14] ss:$16 sm:$0x3] %vm13, %v12
    %s16 = scalar_lea.vmem %s1, 1
    %17 = vst.msk [vmem:[%s16] ss:$16 sm:$0xc] %vm13, %v12
    %v18 = vld [vmem:[#allocation0] sm:$0xf]
    %19 = vrot.lane.b32.xlu0 %v18, 126
    %v20 = vpop.permute.xlu0 %19
    %vm21 = vcmask 7168
    %s22 = scalar_lea.vmem %s1, 2
    %23 = vst.msk [vmem:[%s22] ss:$16 sm:$0x3] %vm21, %v20
    %s24 = scalar_lea.vmem %s1, 2
    %25 = vst.msk [vmem:[%s24] ss:$16 sm:$0xc] %vm21, %v20
    %v26 = vld [vmem:[#allocation0] sm:$0xf]
    %27 = vrot.lane.b32.xlu0 %v26, 125
    %v28 = vpop.permute.xlu0 %27
    %vm29 = vcmask 7168
    %s30 = scalar_lea.vmem %s1, 3
    %31 = vst.msk [vmem:[%s30] ss:$16 sm:$0x3] %vm29, %v28
    %s32 = scalar_lea.vmem %s1, 3
    %33 = vst.msk [vmem:[%s32] ss:$16 sm:$0xc] %vm29, %v28
    %v34 = vld [vmem:[#allocation0] sm:$0xf]
    %35 = vrot.lane.b32.xlu0 %v34, 124
    %v36 = vpop.permute.xlu0 %35
    %vm37 = vcmask 7168
    %s38 = scalar_lea.vmem %s1, 4
    %39 = vst.msk [vmem:[%s38] ss:$16 sm:$0x3] %vm37, %v36
    %s40 = scalar_lea.vmem %s1, 4
    %41 = vst.msk [vmem:[%s40] ss:$16 sm:$0xc] %vm37, %v36
    %v42 = vld [vmem:[#allocation0] sm:$0xf]
    %43 = vrot.lane.b32.xlu0 %v42, 123
    %v44 = vpop.permute.xlu0 %43
    %vm45 = vcmask 7168
    %s46 = scalar_lea.vmem %s1, 5
    %47 = vst.msk [vmem:[%s46] ss:$16 sm:$0x3] %vm45, %v44
    %s48 = scalar_lea.vmem %s1, 5
    %49 = vst.msk [vmem:[%s48] ss:$16 sm:$0xc] %vm45, %v44
    %v50 = vld [vmem:[#allocation0] sm:$0xf]
    %51 = vrot.lane.b32.xlu0 %v50, 122
    %v52 = vpop.permute.xlu0 %51
    %vm53 = vcmask 7168
    %s54 = scalar_lea.vmem %s1, 6
    %55 = vst.msk [vmem:[%s54] ss:$16 sm:$0x3] %vm53, %v52
    %s56 = scalar_lea.vmem %s1, 6
    %57 = vst.msk [vmem:[%s56] ss:$16 sm:$0xc] %vm53, %v52
    %v58 = vld [vmem:[#allocation0] sm:$0xf]
    %59 = vrot.lane.b32.xlu0 %v58, 121
    %v60 = vpop.permute.xlu0 %59
    %vm61 = vcmask 7168
    %s62 = scalar_lea.vmem %s1, 7
    %63 = vst.msk [vmem:[%s62] ss:$16 sm:$0x3] %vm61, %v60
    %s64 = scalar_lea.vmem %s1, 7
    %65 = vst.msk [vmem:[%s64] ss:$16 sm:$0xc] %vm61, %v60
    %v66 = vld [vmem:[#allocation0] sm:$0xf]
    %67 = vrot.lane.b32.xlu0 %v66, 120
    %v68 = vpop.permute.xlu0 %67
    %vm69 = vcmask 7168
    %s70 = scalar_lea.vmem %s1, 8
    %71 = vst.msk [vmem:[%s70] ss:$16 sm:$0x3] %vm69, %v68
    %s72 = scalar_lea.vmem %s1, 8
    %73 = vst.msk [vmem:[%s72] ss:$16 sm:$0xc] %vm69, %v68
    %v74 = vld [vmem:[#allocation0] sm:$0xf]
    %75 = vrot.lane.b32.xlu0 %v74, 119
    %v76 = vpop.permute.xlu0 %75
    %vm77 = vcmask 7168
    %s78 = scalar_lea.vmem %s1, 9
    %79 = vst.msk [vmem:[%s78] ss:$16 sm:$0x3] %vm77, %v76
    %s80 = scalar_lea.vmem %s1, 9
    %81 = vst.msk [vmem:[%s80] ss:$16 sm:$0xc] %vm77, %v76
    %v82 = vld [vmem:[#allocation0] sm:$0xf]
    %83 = vrot.lane.b32.xlu0 %v82, 118
    %v84 = vpop.permute.xlu0 %83
    %vm85 = vcmask 7168
    %s86 = scalar_lea.vmem %s1, 10
    %87 = vst.msk [vmem:[%s86] ss:$16 sm:$0x3] %vm85, %v84
    %s88 = scalar_lea.vmem %s1, 10
    %89 = vst.msk [vmem:[%s88] ss:$16 sm:$0xc] %vm85, %v84
    %v90 = vld [vmem:[#allocation0] sm:$0xf]
    %91 = vrot.lane.b32.xlu0 %v90, 117
    %v92 = vpop.permute.xlu0 %91
    %vm93 = vcmask 7168
    %s94 = scalar_lea.vmem %s1, 11
    %95 = vst.msk [vmem:[%s94] ss:$16 sm:$0x3] %vm93, %v92
    %s96 = scalar_lea.vmem %s1, 11
    %97 = vst.msk [vmem:[%s96] ss:$16 sm:$0xc] %vm93, %v92
    %v98 = vld [vmem:[#allocation0] sm:$0xf]
    %99 = vrot.lane.b32.xlu0 %v98, 116
    %v100 = vpop.permute.xlu0 %99
    %vm101 = vcmask 7168
    %s102 = scalar_lea.vmem %s1, 12
    %103 = vst.msk [vmem:[%s102] ss:$16 sm:$0x3] %vm101, %v100
    %s104 = scalar_lea.vmem %s1, 12
    %105 = vst.msk [vmem:[%s104] ss:$16 sm:$0xc] %vm101, %v100
    %v106 = vld [vmem:[#allocation0] sm:$0xf]
    %107 = vrot.lane.b32.xlu0 %v106, 115
    %v108 = vpop.permute.xlu0 %107
    %vm109 = vcmask 7168
    %s110 = scalar_lea.vmem %s1, 13
    %111 = vst.msk [vmem:[%s110] ss:$16 sm:$0x3] %vm109, %v108
    %s112 = scalar_lea.vmem %s1, 13
    %113 = vst.msk [vmem:[%s112] ss:$16 sm:$0xc] %vm109, %v108
    %v114 = vld [vmem:[#allocation0] sm:$0xf]
    %115 = vrot.lane.b32.xlu0 %v114, 114
    %v116 = vpop.permute.xlu0 %115
    %vm117 = vcmask 7168
    %s118 = scalar_lea.vmem %s1, 14
    %119 = vst.msk [vmem:[%s118] ss:$16 sm:$0x3] %vm117, %v116
    %s120 = scalar_lea.vmem %s1, 14
    %121 = vst.msk [vmem:[%s120] ss:$16 sm:$0xc] %vm117, %v116
    %v122 = vld [vmem:[#allocation0] sm:$0xf]
    %123 = vrot.lane.b32.xlu0 %v122, 113
    %v124 = vpop.permute.xlu0 %123
    %vm125 = vcmask 7168
    %s126 = scalar_lea.vmem %s1, 15
    %127 = vst.msk [vmem:[%s126] ss:$16 sm:$0x3] %vm125, %v124
    %s128 = scalar_lea.vmem %s1, 15
    %129 = vst.msk [vmem:[%s128] ss:$16 sm:$0xc] %vm125, %v124

// kernel: fsrcnn_forward_pallas.3
$region0: #{fsrcnn_forward_pallas.3}
  #allocation0 [shape = 'u32[]', space=smem, size = 0x4, offset = 0x4, fixed_abs, tag = 'smem constant byte address 0x4 - core index']
  #allocation1 [shape = 'u32[144,128]{1,0:T(1,128)}', space=vmem, size = 0x12000, scoped, tag = 'internal scratch']
  #allocation2 [shape = 'bf16[3,344]{1,0:T(4,128)(2,1)}', space=vmem, size = 0xc00, scoped, tag = 'scratch operand']
  #allocation3 [shape = 'bf16[75,256]{1,0:T(8,128)(2,1)}', space=vmem, size = 0xa000, scoped, tag = 'scratch operand']
  %s0 = inlined_call_operand.vmem [shape: f32[3,2], index: 0, kind: input, shape index: {}]
  %s1 = inlined_call_operand.vmem [shape: bf16[2,3,16,16], index: 1, kind: input, shape index: {}, may-alias: {1,2,3}]
  %s2 = inlined_call_operand.vmem [shape: bf16[2,3,16,16], index: 2, kind: input, shape index: {}, may-alias: {1,2,3}]
  %s3 = inlined_call_operand.vmem [shape: bf16[2,3,16,16], index: 3, kind: input, shape index: {}, may-alias: {1,2,3}]
  %s4 = inlined_call_operand.vmem [shape: bf16[16,75], index: 4, kind: input, shape index: {}]
  %s5 = inlined_call_operand.vmem [shape: f32[16,1], index: 5, kind: input, shape index: {}]
  %s6 = inlined_call_operand.hbm [shape: f32[8,16], index: 6, kind: input, shape index: {}]
  %s7 = inlined_call_operand.vmem [shape: f32[8,1], index: 7, kind: input, shape index: {}]
  %s8 = inlined_call_operand.vmem [shape: f32[16,8], index: 8, kind: input, shape index: {}]
  %s9 = inlined_call_operand.vmem [shape: f32[16,1], index: 9, kind: input, shape index: {}]
  %s10 = inlined_call_operand.vmem [shape: bf16[2,2,16,256], index: 10, kind: output, shape index: {}]
  %s11 = sld [smem:[#allocation0]]
  $region212: #{fsrcnn_forward_pallas.3} parent=0
    _
  %s13 = ssub.s32 1, %s11
  %s14 = scalar_select 0, %s13, %s11
  $region1: #{fsrcnn_forward_pallas.3} parent=0
    #allocation4 [shape = 'u8[2048]{0}', space=smem, size = 0x800, scoped, tag = 'input window, operand 0, single buffered']
    #allocation5 [shape = 's32[2]{0}', space=sflag, size = 0x8, scoped, tag = 'scoped memory for fsrcnn_forward_pallas.3']
    #allocation6 [shape = 's32[2]{0}', space=sflag, size = 0x8, scoped, tag = 'scoped memory for fsrcnn_forward_pallas.3']
    #allocation7 [shape = 'u8[12288]{0}', space=vmem, size = 0x3000, scoped, tag = 'input window, operand 1']
    #allocation8 [shape = 'u8[12288]{0}', space=vmem, size = 0x3000, scoped, tag = 'input window, operand 2']
    #allocation9 [shape = 'u8[12288]{0}', space=vmem, size = 0x3000, scoped, tag = 'input window, operand 3']
    #allocation10 [shape = 'u8[4096]{0}', space=vmem, size = 0x1000, scoped, tag = 'input window, operand 6, single buffered']
    %15 = vsyncpa [#allocation6], 0
    %16 = vsyncpa [#allocation5], 0
    loop: start=0, step=1, limit=6
    $region2: #{fsrcnn_forward_pallas.3} parent=1 // loop_pre_header
      _
    $region3: #{fsrcnn_forward_pallas.3} parent=1 // loop_header
      %s18 = sphi 0, %s22
      %p19 = scmp.ge.s32.totalorder %s18, 6
      %s25 = sphi 0, %s37
      %s26 = sphi 0, %s33
      %s27 = sphi 0, %s25
      %s28 = sphi 0, %s26
      %s29 = sphi 0, %s27
      %s30 = sphi 0, %s28
      %s38 = sphi 0, %s38
      %s40 = sphi 0, %s38
      %s41 = sphi 0, %s40
      %s55 = sphi 0, %s41
      %s69 = sphi 0, %s71
      %s72 = sphi 0, %s69
      %s73 = sphi 0, %s72
      %s89 = sphi 0, %s73
      %s97 = sphi 0, %s99
      %s100 = sphi 0, %s97
      %s101 = sphi 0, %s100
      %s117 = sphi 0, %s101
      %s131 = sphi 0, %s133
      %s134 = sphi 0, %s131
      %s135 = sphi 0, %s134
      %s151 = sphi 0, %s135
      %s155 = sphi 0, %s155
      %s157 = sphi 0, %s155
      %s158 = sphi 0, %s157
      %s172 = sphi 0, %s158
      %s176 = sphi 0, %s176
      %s178 = sphi 0, %s176
      %s179 = sphi 0, %s178
      %s193 = sphi 0, %s179
      %s197 = sphi 0, %s197
      %s199 = sphi 0, %s197
      %s200 = sphi 0, %s199
      %s214 = sphi 0, %s200
      %s218 = sphi 0, %s218
      %s220 = sphi 0, %s218
      %s221 = sphi 0, %s220
      %s235 = sphi 0, %s221
      %s239 = sphi 0, %s239
      %s241 = sphi 0, %s239
      %s242 = sphi 0, %s241
      %s256 = sphi 0, %s242
      %s260 = sphi 0, %s260
      %s262 = sphi 0, %s260
      %s263 = sphi 0, %s262
      %s277 = sphi 0, %s263
      %s285 = sphi 0, %s287
      %s288 = sphi 0, %s285
      %s289 = sphi 0, %s288
      %s305 = sphi 0, %s289
    $region4: #{fsrcnn_forward_pallas.3} parent=1 // loop_header_branch
      %21 = sbr.rel (%p19) target = $region8
    $region5: #{fsrcnn_forward_pallas.3} parent=1 // loop_body
      %s23 = ssub.s32 %s18, 1
      %s24 = ssub.s32 %s18, 2
      %s31 = sadd.s32 1, %s26
      %p32 = scmp.ge.s32.totalorder %s31, 2
      %s33 = scalar_select %p32, 0, %s31
      %s34 = sadd.s32 1, %s25
      %s35 = scalar_select %p32, %s34, %s25
      %p36 = scmp.ge.s32.totalorder %s35, 2
      %s37 = scalar_select %p36, 0, %s35
      %s39 = sadd.s32 %s38, 1
      %p42 = scmp.eq.s32.totalorder %s18, 3
      %p43 = scmp.ne.s32.totalorder %s38, %s40
      %p44 = scmp.eq.s32.totalorder %s18, 0
      %p45 = por %p43, %p44
      %p46 = scmp.ne.s32.totalorder %s38, %s40
      %p47 = scmp.eq.s32.totalorder %s23, 3
      %p48 = por %p46, %p47
      %p49 = scmp.ne.s32.totalorder %s40, %s41
      %p50 = scmp.eq.s32.totalorder %s23, 0
      %p51 = por %p49, %p50
      %p52 = scmp.ne.s32.totalorder %s40, %s41
      %p53 = scmp.eq.s32.totalorder %s24, 3
      %p54 = por %p52, %p53
      %p56 = scmp.ne.s32.totalorder %s41, %s55
      %p57 = scmp.eq.s32.totalorder %s24, 0
      %p58 = por %p56, %p57
      %s59 = ssub.s32 %s26, 1
      %p60 = scmp.gt.s32.totalorder %s59, 0
      %s61 = scalar_select %p60, %s59, 0
      %s62 = ssub.s32 %s33, 1
      %p63 = scmp.gt.s32.totalorder %s62, 0
      %s64 = scalar_select %p63, %s62, 0
      %s65 = ssub.s32 %s25, %s37
      %s66 = ssub.s32 %s61, %s64
      %s67 = sor.u32 %s65, %s66
      %p68 = scmp.eq.s32.totalorder %s67, 0
      %s70 = sadd.s32 %s69, 1
      %s71 = scalar_select %p68, %s69, %s70
      %p74 = pneg %p68
      %p75 = scmp.eq.s32.totalorder %s18, 3
      %p76 = por %p74, %p75
      %p77 = scmp.ne.s32.totalorder %s69, %s72
      %p78 = scmp.eq.s32.totalorder %s18, 0
      %p79 = por %p77, %p78
      %p80 = scmp.ne.s32.totalorder %s69, %s72
      %p81 = scmp.eq.s32.totalorder %s23, 3
      %p82 = por %p80, %p81
      %p83 = scmp.ne.s32.totalorder %s72, %s73
      %p84 = scmp.eq.s32.totalorder %s23, 0
      %p85 = por %p83, %p84
      %p86 = scmp.ne.s32.totalorder %s72, %s73
      %p87 = scmp.eq.s32.totalorder %s24, 3
      %p88 = por %p86, %p87
      %p90 = scmp.ne.s32.totalorder %s73, %s89
      %p91 = scmp.eq.s32.totalorder %s24, 0
      %p92 = por %p90, %p91
      %s93 = ssub.s32 %s25, %s37
      %s94 = ssub.s32 %s26, %s33
      %s95 = sor.u32 %s93, %s94
      %p96 = scmp.eq.s32.totalorder %s95, 0
      %s98 = sadd.s32 %s97, 1
      %s99 = scalar_select %p96, %s97, %s98
      %p102 = pneg %p96
      %p103 = scmp.eq.s32.totalorder %s18, 3
      %p104 = por %p102, %p103
      %p105 = scmp.ne.s32.totalorder %s97, %s100
      %p106 = scmp.eq.s32.totalorder %s18, 0
      %p107 = por %p105, %p106
      %p108 = scmp.ne.s32.totalorder %s97, %s100
      %p109 = scmp.eq.s32.totalorder %s23, 3
      %p110 = por %p108, %p109
      %p111 = scmp.ne.s32.totalorder %s100, %s101
      %p112 = scmp.eq.s32.totalorder %s23, 0
      %p113 = por %p111, %p112
      %p114 = scmp.ne.s32.totalorder %s100, %s101
      %p115 = scmp.eq.s32.totalorder %s24, 3
      %p116 = por %p114, %p115
      %p118 = scmp.ne.s32.totalorder %s101, %s117
      %p119 = scmp.eq.s32.totalorder %s24, 0
      %p120 = por %p118, %p119
      %s121 = sadd.s32 %s26, 1
      %p122 = scmp.lt.s32.totalorder %s121, 1
      %s123 = scalar_select %p122, %s121, 1
      %s124 = sadd.s32 %s33, 1
      %p125 = scmp.lt.s32.totalorder %s124, 1
      %s126 = scalar_select %p125, %s124, 1
      %s127 = ssub.s32 %s25, %s37
      %s128 = ssub.s32 %s123, %s126
      %s129 = sor.u32 %s127, %s128
      %p130 = scmp.eq.s32.totalorder %s129, 0
      %s132 = sadd.s32 %s131, 1
      %s133 = scalar_select %p130, %s131, %s132
      %p136 = pneg %p130
      %p137 = scmp.eq.s32.totalorder %s18, 3
      %p138 = por %p136, %p137
      %p139 = scmp.ne.s32.totalorder %s131, %s134
      %p140 = scmp.eq.s32.totalorder %s18, 0
      %p141 = por %p139, %p140
      %p142 = scmp.ne.s32.totalorder %s131, %s134
      %p143 = scmp.eq.s32.totalorder %s23, 3
      %p144 = por %p142, %p143
      %p145 = scmp.ne.s32.totalorder %s134, %s135
      %p146 = scmp.eq.s32.totalorder %s23, 0
      %p147 = por %p145, %p146
      %p148 = scmp.ne.s32.totalorder %s134, %s135
      %p149 = scmp.eq.s32.totalorder %s24, 3
      %p150 = por %p148, %p149
      %p152 = scmp.ne.s32.totalorder %s135, %s151
      %p153 = scmp.eq.s32.totalorder %s24, 0
      %p154 = por %p152, %p153
      %s156 = sadd.s32 %s155, 1
      %p159 = scmp.eq.s32.totalorder %s18, 3
      %p160 = scmp.ne.s32.totalorder %s155, %s157
      %p161 = scmp.eq.s32.totalorder %s18, 0
      %p162 = por %p160, %p161
      %p163 = scmp.ne.s32.totalorder %s155, %s157
      %p164 = scmp.eq.s32.totalorder %s23, 3
      %p165 = por %p163, %p164
      %p166 = scmp.ne.s32.totalorder %s157, %s158
      %p167 = scmp.eq.s32.totalorder %s23, 0
      %p168 = por %p166, %p167
      %p169 = scmp.ne.s32.totalorder %s157, %s158
      %p170 = scmp.eq.s32.totalorder %s24, 3
      %p171 = por %p169, %p170
      %p173 = scmp.ne.s32.totalorder %s158, %s172
      %p174 = scmp.eq.s32.totalorder %s24, 0
      %p175 = por %p173, %p174
      %s177 = sadd.s32 %s176, 1
      %p180 = scmp.eq.s32.totalorder %s18, 3
      %p181 = scmp.ne.s32.totalorder %s176, %s178
      %p182 = scmp.eq.s32.totalorder %s18, 0
      %p183 = por %p181, %p182
      %p184 = scmp.ne.s32.totalorder %s176, %s178
      %p185 = scmp.eq.s32.totalorder %s23, 3
      %p186 = por %p184, %p185
      %p187 = scmp.ne.s32.totalorder %s178, %s179
      %p188 = scmp.eq.s32.totalorder %s23, 0
      %p189 = por %p187, %p188
      %p190 = scmp.ne.s32.totalorder %s178, %s179
      %p191 = scmp.eq.s32.totalorder %s24, 3
      %p192 = por %p190, %p191
      %p194 = scmp.ne.s32.totalorder %s179, %s193
      %p195 = scmp.eq.s32.totalorder %s24, 0
      %p196 = por %p194, %p195
      %s198 = sadd.s32 %s197, 1
      %p201 = scmp.eq.s32.totalorder %s18, 3
      %p202 = scmp.ne.s32.totalorder %s197, %s199
      %p203 = scmp.eq.s32.totalorder %s18, 0
      %p204 = por %p202, %p203
      %p205 = scmp.ne.s32.totalorder %s197, %s199
      %p206 = scmp.eq.s32.totalorder %s23, 3
      %p207 = por %p205, %p206
      %p208 = scmp.ne.s32.totalorder %s199, %s200
      %p209 = scmp.eq.s32.totalorder %s23, 0
      %p210 = por %p208, %p209
      %p211 = scmp.ne.s32.totalorder %s199, %s200
      %p212 = scmp.eq.s32.totalorder %s24, 3
      %p213 = por %p211, %p212
      %p215 = scmp.ne.s32.totalorder %s200, %s214
      %p216 = scmp.eq.s32.totalorder %s24, 0
      %p217 = por %p215, %p216
      %s219 = sadd.s32 %s218, 1
      %p222 = scmp.eq.s32.totalorder %s18, 3
      %p223 = scmp.ne.s32.totalorder %s218, %s220
      %p224 = scmp.eq.s32.totalorder %s18, 0
      %p225 = por %p223, %p224
      %p226 = scmp.ne.s32.totalorder %s218, %s220
      %p227 = scmp.eq.s32.totalorder %s23, 3
      %p228 = por %p226, %p227
      %p229 = scmp.ne.s32.totalorder %s220, %s221
      %p230 = scmp.eq.s32.totalorder %s23, 0
      %p231 = por %p229, %p230
      %p232 = scmp.ne.s32.totalorder %s220, %s221
      %p233 = scmp.eq.s32.totalorder %s24, 3
      %p234 = por %p232, %p233
      %p236 = scmp.ne.s32.totalorder %s221, %s235
      %p237 = scmp.eq.s32.totalorder %s24, 0
      %p238 = por %p236, %p237
      %s240 = sadd.s32 %s239, 1
      %p243 = scmp.eq.s32.totalorder %s18, 3
      %p244 = scmp.ne.s32.totalorder %s239, %s241
      %p245 = scmp.eq.s32.totalorder %s18, 0
      %p246 = por %p244, %p245
      %p247 = scmp.ne.s32.totalorder %s239, %s241
      %p248 = scmp.eq.s32.totalorder %s23, 3
      %p249 = por %p247, %p248
      %p250 = scmp.ne.s32.totalorder %s241, %s242
      %p251 = scmp.eq.s32.totalorder %s23, 0
      %p252 = por %p250, %p251
      %p253 = scmp.ne.s32.totalorder %s241, %s242
      %p254 = scmp.eq.s32.totalorder %s24, 3
      %p255 = por %p253, %p254
      %p257 = scmp.ne.s32.totalorder %s242, %s256
      %p258 = scmp.eq.s32.totalorder %s24, 0
      %p259 = por %p257, %p258
      %s261 = sadd.s32 %s260, 1
      %p264 = scmp.eq.s32.totalorder %s18, 3
      %p265 = scmp.ne.s32.totalorder %s260, %s262
      %p266 = scmp.eq.s32.totalorder %s18, 0
      %p267 = por %p265, %p266
      %p268 = scmp.ne.s32.totalorder %s260, %s262
      %p269 = scmp.eq.s32.totalorder %s23, 3
      %p270 = por %p268, %p269
      %p271 = scmp.ne.s32.totalorder %s262, %s263
      %p272 = scmp.eq.s32.totalorder %s23, 0
      %p273 = por %p271, %p272
      %p274 = scmp.ne.s32.totalorder %s262, %s263
      %p275 = scmp.eq.s32.totalorder %s24, 3
      %p276 = por %p274, %p275
      %p278 = scmp.ne.s32.totalorder %s263, %s277
      %p279 = scmp.eq.s32.totalorder %s24, 0
      %p280 = por %p278, %p279
      %s281 = ssub.s32 %s25, %s37
      %s282 = ssub.s32 %s26, %s33
      %s283 = sor.u32 %s281, %s282
      %p284 = scmp.eq.s32.totalorder %s283, 0
      %s286 = sadd.s32 %s285, 1
      %s287 = scalar_select %p284, %s285, %s286
      %p290 = pneg %p284
      %p291 = scmp.eq.s32.totalorder %s18, 3
      %p292 = por %p290, %p291
      %p293 = scmp.ne.s32.totalorder %s285, %s288
      %p294 = scmp.eq.s32.totalorder %s18, 0
      %p295 = por %p293, %p294
      %p296 = scmp.ne.s32.totalorder %s285, %s288
      %p297 = scmp.eq.s32.totalorder %s23, 3
      %p298 = por %p296, %p297
      %p299 = scmp.ne.s32.totalorder %s288, %s289
      %p300 = scmp.eq.s32.totalorder %s23, 0
      %p301 = por %p299, %p300
      %p302 = scmp.ne.s32.totalorder %s288, %s289
      %p303 = scmp.eq.s32.totalorder %s24, 3
      %p304 = por %p302, %p303
      %p306 = scmp.ne.s32.totalorder %s289, %s305
      %p307 = scmp.eq.s32.totalorder %s24, 0
      %p308 = por %p306, %p307
      %p309 = scmp.le.s32.totalorder 1, %s18
      %p310 = scmp.lt.s32.totalorder %s18, 5
      %p311 = pnand %p309, %p310
      %p312 = pneg %p311
      // Predicated region
      $region9: #{fsrcnn_forward_pallas.3} parent=5 // pred_check
        _
      $region10: #{fsrcnn_forward_pallas.3} parent=5 // pred_check_branch
        %314 = sbr.rel (%p311) target = $region12
      $region11: #{fsrcnn_forward_pallas.3} parent=5 // pred_region
        %s315 = ssub.s32 %s18, 1
        // Predicated region
        $region13: #{fsrcnn_forward_pallas.3} parent=11 // pred_check
          %p316 = pneg %p51
        $region14: #{fsrcnn_forward_pallas.3} parent=11 // pred_check_branch
          %318 = sbr.rel (%p316) target = $region16
        $region15: #{fsrcnn_forward_pallas.3} parent=11 // pred_region
          %s320 = ssub.s32 64, 64
          %321 = vsyncadd [#allocation6], %s320
          %s323 = sshll.u32 %s0, 4
          %s324 = int_to_ptr.vmem [resolvable:$true] %s323
          %326 = dma.vmem_to_smem %s324, 64, [#allocation4], [#allocation6]
        $region16: #{fsrcnn_forward_pallas.3} parent=11 // pred_fallthru
          _
        // Predicated region
        $region17: #{fsrcnn_forward_pallas.3} parent=11 // pred_check
          %p327 = pneg %p168
        $region18: #{fsrcnn_forward_pallas.3} parent=11 // pred_check_branch
          %329 = sbr.rel (%p327) target = $region20
        $region19: #{fsrcnn_forward_pallas.3} parent=11 // pred_region
          _
        $region20: #{fsrcnn_forward_pallas.3} parent=11 // pred_fallthru
          _
        // Predicated region
        $region21: #{fsrcnn_forward_pallas.3} parent=11 // pred_check
          %p330 = pneg %p189
        $region22: #{fsrcnn_forward_pallas.3} parent=11 // pred_check_branch
          %332 = sbr.rel (%p330) target = $region24
        $region23: #{fsrcnn_forward_pallas.3} parent=11 // pred_region
          _
        $region24: #{fsrcnn_forward_pallas.3} parent=11 // pred_fallthru
          _
        // Predicated region
        $region25: #{fsrcnn_forward_pallas.3} parent=11 // pred_check
          %p333 = pneg %p210
        $region26: #{fsrcnn_forward_pallas.3} parent=11 // pred_check_branch
          %335 = sbr.rel (%p333) target = $region28
        $region27: #{fsrcnn_forward_pallas.3} parent=11 // pred_region
          %s337 = ssub.s32 128, 128
          %338 = vsyncadd [#allocation5], %s337
          %s340 = sshll.u32 [#allocation10], 4
          %s341 = int_to_ptr.vmem [resolvable:$true] %s340
          %343 = dma.hbm_to_vmem [thread:$0]  %s6, 128, %s341, [#allocation5]
        $region28: #{fsrcnn_forward_pallas.3} parent=11 // pred_fallthru
          _
        // Predicated region
        $region29: #{fsrcnn_forward_pallas.3} parent=11 // pred_check
          %p344 = pneg %p231
        $region30: #{fsrcnn_forward_pallas.3} parent=11 // pred_check_branch
          %346 = sbr.rel (%p344) target = $region32
        $region31: #{fsrcnn_forward_pallas.3} parent=11 // pred_region
          _
        $region32: #{fsrcnn_forward_pallas.3} parent=11 // pred_fallthru
          _
        // Predicated region
        $region33: #{fsrcnn_forward_pallas.3} parent=11 // pred_check
          %p347 = pneg %p252
        $region34: #{fsrcnn_forward_pallas.3} parent=11 // pred_check_branch
          %349 = sbr.rel (%p347) target = $region36
        $region35: #{fsrcnn_forward_pallas.3} parent=11 // pred_region
          _
        $region36: #{fsrcnn_forward_pallas.3} parent=11 // pred_fallthru
          _
        // Predicated region
        $region37: #{fsrcnn_forward_pallas.3} parent=11 // pred_check
          %p350 = pneg %p273
        $region38: #{fsrcnn_forward_pallas.3} parent=11 // pred_check_branch
          %352 = sbr.rel (%p350) target = $region40
        $region39: #{fsrcnn_forward_pallas.3} parent=11 // pred_region
          _
        $region40: #{fsrcnn_forward_pallas.3} parent=11 // pred_fallthru
          _
      $region12: #{fsrcnn_forward_pallas.3} parent=5 // pred_fallthru
        _
      %p353 = scmp.lt.s32.totalorder %s18, 4
      // Predicated region
      $region41: #{fsrcnn_forward_pallas.3} parent=5 // pred_check
        %p354 = pneg %p353
      $region42: #{fsrcnn_forward_pallas.3} parent=5 // pred_check_branch
        %356 = sbr.rel (%p354) target = $region44
      $region43: #{fsrcnn_forward_pallas.3} parent=5 // pred_region
        // Predicated region
        $region45: #{fsrcnn_forward_pallas.3} parent=43 // pred_check
          %p357 = pneg %p79
        $region46: #{fsrcnn_forward_pallas.3} parent=43 // pred_check_branch
          %359 = sbr.rel (%p357) target = $region48
        $region47: #{fsrcnn_forward_pallas.3} parent=43 // pred_region
          %s360 = sand.u32 %s69, 1
          %s361 = sand.u32 %s69, 1
          %s362 = smul.addr %s361, 12
          %s363 = scalar_lea.vmem [#allocation7], %s362
          %s364 = ssub.s32 %s26, 1
          %p365 = scmp.gt.s32.totalorder %s364, 0
          %s366 = scalar_select %p365, %s364, 0
          %s367 = smul.addr %s25, 6
          %s368 = sadd.s32 %s366, %s367
          %s369 = smul.addr %s368, 4
          %s370 = scalar_lea.vmem %s1, %s369
          // Predicated region
          $region49: #{fsrcnn_forward_pallas.3} parent=47 // pred_check
            _
          $region50: #{fsrcnn_forward_pallas.3} parent=47 // pred_check_branch
            %372 = sbr.rel (0) target = $region52
          $region51: #{fsrcnn_forward_pallas.3} parent=47 // pred_region
            // Predicated region
            $region53: #{fsrcnn_forward_pallas.3} parent=51 // pred_check
              _
            $region54: #{fsrcnn_forward_pallas.3} parent=51 // pred_check_branch
              %374 = sbr.rel target = $region56
            $region55: #{fsrcnn_forward_pallas.3} parent=51 // pred_region
              // Predicated region
              $region68: #{fsrcnn_forward_pallas.3} parent=55 // pred_check
                _
              $region69: #{fsrcnn_forward_pallas.3} parent=55 // pred_check_branch
                %393 = sbr.rel (0) target = $region71
              $region70: #{fsrcnn_forward_pallas.3} parent=55 // pred_region
                loop: start=0, step=1, limit=1
                $region72: #{fsrcnn_forward_pallas.3} parent=70 // loop_pre_header
                  _
                $region73: #{fsrcnn_forward_pallas.3} parent=70 // loop_header
                  %s395 = sphi 0, %s399
                  %p396 = scmp.ge.s32.totalorder %s395, 1
                  %s400 = sphi %s370, %s370
                  %s401 = sphi %s363, %s363
                $region74: #{fsrcnn_forward_pallas.3} parent=70 // loop_header_branch
                  %398 = sbr.rel (%p396) target = $region78
                $region75: #{fsrcnn_forward_pallas.3} parent=70 // loop_body
                  _
                $region76: #{fsrcnn_forward_pallas.3} parent=70 // loop_footer
                  %s399 = sadd.s32 1, %s395
                $region77: #{fsrcnn_forward_pallas.3} parent=70 // loop_footer_branch
                  %394 = sbr.rel target = $region73
                $region78: #{fsrcnn_forward_pallas.3} parent=70 // loop_exit
                  _
                loop: start=0, step=1, limit=1
                $region79: #{fsrcnn_forward_pallas.3} parent=70 // loop_pre_header
                  _
                $region80: #{fsrcnn_forward_pallas.3} parent=70 // loop_header
                  %s404 = sphi 0, %s408
                  %p405 = scmp.ge.s32.totalorder %s404, 1
                  %s409 = sphi %s370, %s370
                  %s410 = sphi %s363, %s363
                $region81: #{fsrcnn_forward_pallas.3} parent=70 // loop_header_branch
                  %407 = sbr.rel (%p405) target = $region85
                $region82: #{fsrcnn_forward_pallas.3} parent=70 // loop_body
                  %v411 = vld [vmem:[%s409] sm:$0xf]
                  %412 = vst [vmem:[%s410] sm:$0xf] %v411
                  %v413 = vld [vmem:[%s409 + $0x8] sm:$0xf]
                  %414 = vst [vmem:[%s410 + $0x4] sm:$0xf] %v413
                  %v415 = vld [vmem:[%s409 + $0x10] sm:$0xf]
                  %416 = vst [vmem:[%s410 + $0x8] sm:$0xf] %v415
                $region83: #{fsrcnn_forward_pallas.3} parent=70 // loop_footer
                  %s408 = sadd.s32 1, %s404
                $region84: #{fsrcnn_forward_pallas.3} parent=70 // loop_footer_branch
                  %403 = sbr.rel target = $region80
                $region85: #{fsrcnn_forward_pallas.3} parent=70 // loop_exit
                  _
              $region71: #{fsrcnn_forward_pallas.3} parent=55 // pred_fallthru
                _
            $region56: #{fsrcnn_forward_pallas.3} parent=51 // pred_fallthru
              _
            // Predicated region
            $region57: #{fsrcnn_forward_pallas.3} parent=51 // pred_check
              _
            $region58: #{fsrcnn_forward_pallas.3} parent=51 // pred_check_branch
              %376 = sbr.rel (0) target = $region60
            $region59: #{fsrcnn_forward_pallas.3} parent=51 // pred_region
              loop: start=0, step=1, limit=1
              $region61: #{fsrcnn_forward_pallas.3} parent=59 // loop_pre_header
                _
              $region62: #{fsrcnn_forward_pallas.3} parent=59 // loop_header
                %s379 = sphi 0, %s383
                %p380 = scmp.ge.s32.totalorder %s379, 1
                %s384 = sphi %s370, %s370
                %s385 = sphi %s363, %s363
              $region63: #{fsrcnn_forward_pallas.3} parent=59 // loop_header_branch
                %382 = sbr.rel (%p380) target = $region67
              $region64: #{fsrcnn_forward_pallas.3} parent=59 // loop_body
                %v386 = vld [vmem:[%s384] sm:$0xf]
                %387 = vst [vmem:[%s385] sm:$0xf] %v386
                %v388 = vld [vmem:[%s384 + $0x8] sm:$0xf]
                %389 = vst [vmem:[%s385 + $0x4] sm:$0xf] %v388
                %v390 = vld [vmem:[%s384 + $0x10] sm:$0xf]
                %391 = vst [vmem:[%s385 + $0x8] sm:$0xf] %v390
              $region65: #{fsrcnn_forward_pallas.3} parent=59 // loop_footer
                %s383 = sadd.s32 1, %s379
              $region66: #{fsrcnn_forward_pallas.3} parent=59 // loop_footer_branch
                %378 = sbr.rel target = $region62
              $region67: #{fsrcnn_forward_pallas.3} parent=59 // loop_exit
                _
            $region60: #{fsrcnn_forward_pallas.3} parent=51 // pred_fallthru
              _
          $region52: #{fsrcnn_forward_pallas.3} parent=47 // pred_fallthru
            _
          %417 = vnop
        $region48: #{fsrcnn_forward_pallas.3} parent=43 // pred_fallthru
          _
        // Predicated region
        $region86: #{fsrcnn_forward_pallas.3} parent=43 // pred_check
          %p418 = pneg %p107
        $region87: #{fsrcnn_forward_pallas.3} parent=43 // pred_check_branch
          %420 = sbr.rel (%p418) target = $region89
        $region88: #{fsrcnn_forward_pallas.3} parent=43 // pred_region
          %s421 = sand.u32 %s97, 1
          %s422 = sand.u32 %s97, 1
          %s423 = smul.addr %s422, 12
          %s424 = scalar_lea.vmem [#allocation8], %s423
          %s425 = smul.addr %s25, 6
          %s426 = sadd.s32 %s26, %s425
          %s427 = smul.addr %s426, 4
          %s428 = scalar_lea.vmem %s2, %s427
          // Predicated region
          $region90: #{fsrcnn_forward_pallas.3} parent=88 // pred_check
            _
          $region91: #{fsrcnn_forward_pallas.3} parent=88 // pred_check_branch
            %430 = sbr.rel (0) target = $region93
          $region92: #{fsrcnn_forward_pallas.3} parent=88 // pred_region
            // Predicated region
            $region94: #{fsrcnn_forward_pallas.3} parent=92 // pred_check
              _
            $region95: #{fsrcnn_forward_pallas.3} parent=92 // pred_check_branch
              %432 = sbr.rel target = $region97
            $region96: #{fsrcnn_forward_pallas.3} parent=92 // pred_region
              // Predicated region
              $region109: #{fsrcnn_forward_pallas.3} parent=96 // pred_check
                _
              $region110: #{fsrcnn_forward_pallas.3} parent=96 // pred_check_branch
                %451 = sbr.rel (0) target = $region112
              $region111: #{fsrcnn_forward_pallas.3} parent=96 // pred_region
                loop: start=0, step=1, limit=1
                $region113: #{fsrcnn_forward_pallas.3} parent=111 // loop_pre_header
                  _
                $region114: #{fsrcnn_forward_pallas.3} parent=111 // loop_header
                  %s453 = sphi 0, %s457
                  %p454 = scmp.ge.s32.totalorder %s453, 1
                  %s458 = sphi %s428, %s428
                  %s459 = sphi %s424, %s424
                $region115: #{fsrcnn_forward_pallas.3} parent=111 // loop_header_branch
                  %456 = sbr.rel (%p454) target = $region119
                $region116: #{fsrcnn_forward_pallas.3} parent=111 // loop_body
                  _
                $region117: #{fsrcnn_forward_pallas.3} parent=111 // loop_footer
                  %s457 = sadd.s32 1, %s453
                $region118: #{fsrcnn_forward_pallas.3} parent=111 // loop_footer_branch
                  %452 = sbr.rel target = $region114
                $region119: #{fsrcnn_forward_pallas.3} parent=111 // loop_exit
                  _
                loop: start=0, step=1, limit=1
                $region120: #{fsrcnn_forward_pallas.3} parent=111 // loop_pre_header
                  _
                $region121: #{fsrcnn_forward_pallas.3} parent=111 // loop_header
                  %s462 = sphi 0, %s466
                  %p463 = scmp.ge.s32.totalorder %s462, 1
                  %s467 = sphi %s428, %s428
                  %s468 = sphi %s424, %s424
                $region122: #{fsrcnn_forward_pallas.3} parent=111 // loop_header_branch
                  %465 = sbr.rel (%p463) target = $region126
                $region123: #{fsrcnn_forward_pallas.3} parent=111 // loop_body
                  %v469 = vld [vmem:[%s467] sm:$0xf]
                  %470 = vst [vmem:[%s468] sm:$0xf] %v469
                  %v471 = vld [vmem:[%s467 + $0x8] sm:$0xf]
                  %472 = vst [vmem:[%s468 + $0x4] sm:$0xf] %v471
                  %v473 = vld [vmem:[%s467 + $0x10] sm:$0xf]
                  %474 = vst [vmem:[%s468 + $0x8] sm:$0xf] %v473
                $region124: #{fsrcnn_forward_pallas.3} parent=111 // loop_footer
                  %s466 = sadd.s32 1, %s462
                $region125: #{fsrcnn_forward_pallas.3} parent=111 // loop_footer_branch
                  %461 = sbr.rel target = $region121
                $region126: #{fsrcnn_forward_pallas.3} parent=111 // loop_exit
                  _
              $region112: #{fsrcnn_forward_pallas.3} parent=96 // pred_fallthru
                _
            $region97: #{fsrcnn_forward_pallas.3} parent=92 // pred_fallthru
              _
            // Predicated region
            $region98: #{fsrcnn_forward_pallas.3} parent=92 // pred_check
              _
            $region99: #{fsrcnn_forward_pallas.3} parent=92 // pred_check_branch
              %434 = sbr.rel (0) target = $region101
            $region100: #{fsrcnn_forward_pallas.3} parent=92 // pred_region
              loop: start=0, step=1, limit=1
              $region102: #{fsrcnn_forward_pallas.3} parent=100 // loop_pre_header
                _
              $region103: #{fsrcnn_forward_pallas.3} parent=100 // loop_header
                %s437 = sphi 0, %s441
                %p438 = scmp.ge.s32.totalorder %s437, 1
                %s442 = sphi %s428, %s428
                %s443 = sphi %s424, %s424
              $region104: #{fsrcnn_forward_pallas.3} parent=100 // loop_header_branch
                %440 = sbr.rel (%p438) target = $region108
              $region105: #{fsrcnn_forward_pallas.3} parent=100 // loop_body
                %v444 = vld [vmem:[%s442] sm:$0xf]
                %445 = vst [vmem:[%s443] sm:$0xf] %v444
                %v446 = vld [vmem:[%s442 + $0x8] sm:$0xf]
                %447 = vst [vmem:[%s443 + $0x4] sm:$0xf] %v446
                %v448 = vld [vmem:[%s442 + $0x10] sm:$0xf]
                %449 = vst [vmem:[%s443 + $0x8] sm:$0xf] %v448
              $region106: #{fsrcnn_forward_pallas.3} parent=100 // loop_footer
                %s441 = sadd.s32 1, %s437
              $region107: #{fsrcnn_forward_pallas.3} parent=100 // loop_footer_branch
                %436 = sbr.rel target = $region103
              $region108: #{fsrcnn_forward_pallas.3} parent=100 // loop_exit
                _
            $region101: #{fsrcnn_forward_pallas.3} parent=92 // pred_fallthru
              _
          $region93: #{fsrcnn_forward_pallas.3} parent=88 // pred_fallthru
            _
          %475 = vnop
        $region89: #{fsrcnn_forward_pallas.3} parent=43 // pred_fallthru
          _
        // Predicated region
        $region127: #{fsrcnn_forward_pallas.3} parent=43 // pred_check
          %p476 = pneg %p141
        $region128: #{fsrcnn_forward_pallas.3} parent=43 // pred_check_branch
          %478 = sbr.rel (%p476) target = $region130
        $region129: #{fsrcnn_forward_pallas.3} parent=43 // pred_region
          %s479 = sand.u32 %s131, 1
          %s480 = sand.u32 %s131, 1
          %s481 = smul.addr %s480, 12
          %s482 = scalar_lea.vmem [#allocation9], %s481
          %s483 = sadd.s32 %s26, 1
          %p484 = scmp.lt.s32.totalorder %s483, 1
          %s485 = scalar_select %p484, %s483, 1
          %s486 = smul.addr %s25, 6
          %s487 = sadd.s32 %s485, %s486
          %s488 = smul.addr %s487, 4
          %s489 = scalar_lea.vmem %s3, %s488
          // Predicated region
          $region131: #{fsrcnn_forward_pallas.3} parent=129 // pred_check
            _
          $region132: #{fsrcnn_forward_pallas.3} parent=129 // pred_check_branch
            %491 = sbr.rel (0) target = $region134
          $region133: #{fsrcnn_forward_pallas.3} parent=129 // pred_region
            // Predicated region
            $region135: #{fsrcnn_forward_pallas.3} parent=133 // pred_check
              _
            $region136: #{fsrcnn_forward_pallas.3} parent=133 // pred_check_branch
              %493 = sbr.rel target = $region138
            $region137: #{fsrcnn_forward_pallas.3} parent=133 // pred_region
              // Predicated region
              $region150: #{fsrcnn_forward_pallas.3} parent=137 // pred_check
                _
              $region151: #{fsrcnn_forward_pallas.3} parent=137 // pred_check_branch
                %512 = sbr.rel (0) target = $region153
              $region152: #{fsrcnn_forward_pallas.3} parent=137 // pred_region
                loop: start=0, step=1, limit=1
                $region154: #{fsrcnn_forward_pallas.3} parent=152 // loop_pre_header
                  _
                $region155: #{fsrcnn_forward_pallas.3} parent=152 // loop_header
                  %s514 = sphi 0, %s518
                  %p515 = scmp.ge.s32.totalorder %s514, 1
                  %s519 = sphi %s489, %s489
                  %s520 = sphi %s482, %s482
                $region156: #{fsrcnn_forward_pallas.3} parent=152 // loop_header_branch
                  %517 = sbr.rel (%p515) target = $region160
                $region157: #{fsrcnn_forward_pallas.3} parent=152 // loop_body
                  _
                $region158: #{fsrcnn_forward_pallas.3} parent=152 // loop_footer
                  %s518 = sadd.s32 1, %s514
                $region159: #{fsrcnn_forward_pallas.3} parent=152 // loop_footer_branch
                  %513 = sbr.rel target = $region155
                $region160: #{fsrcnn_forward_pallas.3} parent=152 // loop_exit
                  _
                loop: start=0, step=1, limit=1
                $region161: #{fsrcnn_forward_pallas.3} parent=152 // loop_pre_header
                  _
                $region162: #{fsrcnn_forward_pallas.3} parent=152 // loop_header
                  %s523 = sphi 0, %s527
                  %p524 = scmp.ge.s32.totalorder %s523, 1
                  %s528 = sphi %s489, %s489
                  %s529 = sphi %s482, %s482
                $region163: #{fsrcnn_forward_pallas.3} parent=152 // loop_header_branch
                  %526 = sbr.rel (%p524) target = $region167
                $region164: #{fsrcnn_forward_pallas.3} parent=152 // loop_body
                  %v530 = vld [vmem:[%s528] sm:$0xf]
                  %531 = vst [vmem:[%s529] sm:$0xf] %v530
                  %v532 = vld [vmem:[%s528 + $0x8] sm:$0xf]
                  %533 = vst [vmem:[%s529 + $0x4] sm:$0xf] %v532
                  %v534 = vld [vmem:[%s528 + $0x10] sm:$0xf]
                  %535 = vst [vmem:[%s529 + $0x8] sm:$0xf] %v534
                $region165: #{fsrcnn_forward_pallas.3} parent=152 // loop_footer
                  %s527 = sadd.s32 1, %s523
                $region166: #{fsrcnn_forward_pallas.3} parent=152 // loop_footer_branch
                  %522 = sbr.rel target = $region162
                $region167: #{fsrcnn_forward_pallas.3} parent=152 // loop_exit
                  _
              $region153: #{fsrcnn_forward_pallas.3} parent=137 // pred_fallthru
                _
            $region138: #{fsrcnn_forward_pallas.3} parent=133 // pred_fallthru
              _
            // Predicated region
            $region139: #{fsrcnn_forward_pallas.3} parent=133 // pred_check
              _
            $region140: #{fsrcnn_forward_pallas.3} parent=133 // pred_check_branch
              %495 = sbr.rel (0) target = $region142
            $region141: #{fsrcnn_forward_pallas.3} parent=133 // pred_region
              loop: start=0, step=1, limit=1
              $region143: #{fsrcnn_forward_pallas.3} parent=141 // loop_pre_header
                _
              $region144: #{fsrcnn_forward_pallas.3} parent=141 // loop_header
                %s498 = sphi 0, %s502
                %p499 = scmp.ge.s32.totalorder %s498, 1
                %s503 = sphi %s489, %s489
                %s504 = sphi %s482, %s482
              $region145: #{fsrcnn_forward_pallas.3} parent=141 // loop_header_branch
                %501 = sbr.rel (%p499) target = $region149
              $region146: #{fsrcnn_forward_pallas.3} parent=141 // loop_body
                %v505 = vld [vmem:[%s503] sm:$0xf]
                %506 = vst [vmem:[%s504] sm:$0xf] %v505
                %v507 = vld [vmem:[%s503 + $0x8] sm:$0xf]
                %508 = vst [vmem:[%s504 + $0x4] sm:$0xf] %v507
                %v509 = vld [vmem:[%s503 + $0x10] sm:$0xf]
                %510 = vst [vmem:[%s504 + $0x8] sm:$0xf] %v509
              $region147: #{fsrcnn_forward_pallas.3} parent=141 // loop_footer
                %s502 = sadd.s32 1, %s498
              $region148: #{fsrcnn_forward_pallas.3} parent=141 // loop_footer_branch
                %497 = sbr.rel target = $region144
              $region149: #{fsrcnn_forward_pallas.3} parent=141 // loop_exit
                _
            $region142: #{fsrcnn_forward_pallas.3} parent=133 // pred_fallthru
              _
          $region134: #{fsrcnn_forward_pallas.3} parent=129 // pred_fallthru
            _
          %536 = vnop
        $region130: #{fsrcnn_forward_pallas.3} parent=43 // pred_fallthru
          _
      $region44: #{fsrcnn_forward_pallas.3} parent=5 // pred_fallthru
        _
      %p537 = scmp.le.s32.totalorder 1, %s18
      %p538 = scmp.lt.s32.totalorder %s18, 5
      %p539 = pnand %p537, %p538
      %p540 = pneg %p539
      // Predicated region
      $region168: #{fsrcnn_forward_pallas.3} parent=5 // pred_check
        _
      $region169: #{fsrcnn_forward_pallas.3} parent=5 // pred_check_branch
        %542 = sbr.rel (%p539) target = $region171
      $region170: #{fsrcnn_forward_pallas.3} parent=5 // pred_region
        %s543 = ssub.s32 %s18, 1
        // Predicated region
        $region172: #{fsrcnn_forward_pallas.3} parent=170 // pred_check
          %p544 = pneg %p51
        $region173: #{fsrcnn_forward_pallas.3} parent=170 // pred_check_branch
          %546 = sbr.rel (%p544) target = $region175
        $region174: #{fsrcnn_forward_pallas.3} parent=170 // pred_region
          %547 = dma.done [#allocation6], 64
        $region175: #{fsrcnn_forward_pallas.3} parent=170 // pred_fallthru
          _
        %s548 = sand.u32 %s72, 1
        %s549 = sand.u32 %s72, 1
        %s550 = smul.addr %s549, 12
        %s551 = scalar_lea.vmem [#allocation7], %s550
        // Predicated region
        $region176: #{fsrcnn_forward_pallas.3} parent=170 // pred_check
          %p552 = pneg %p85
        $region177: #{fsrcnn_forward_pallas.3} parent=170 // pred_check_branch
          %554 = sbr.rel (%p552) target = $region179
        $region178: #{fsrcnn_forward_pallas.3} parent=170 // pred_region
          _
        $region179: #{fsrcnn_forward_pallas.3} parent=170 // pred_fallthru
          _
        %s555 = sand.u32 %s100, 1
        %s556 = sand.u32 %s100, 1
        %s557 = smul.addr %s556, 12
        %s558 = scalar_lea.vmem [#allocation8], %s557
        // Predicated region
        $region180: #{fsrcnn_forward_pallas.3} parent=170 // pred_check
          %p559 = pneg %p113
        $region181: #{fsrcnn_forward_pallas.3} parent=170 // pred_check_branch
          %561 = sbr.rel (%p559) target = $region183
        $region182: #{fsrcnn_forward_pallas.3} parent=170 // pred_region
          _
        $region183: #{fsrcnn_forward_pallas.3} parent=170 // pred_fallthru
          _
        %s562 = sand.u32 %s134, 1
        %s563 = sand.u32 %s134, 1
        %s564 = smul.addr %s563, 12
        %s565 = scalar_lea.vmem [#allocation9], %s564
        // Predicated region
        $region184: #{fsrcnn_forward_pallas.3} parent=170 // pred_check
          %p566 = pneg %p147
        $region185: #{fsrcnn_forward_pallas.3} parent=170 // pred_check_branch
          %568 = sbr.rel (%p566) target = $region187
        $region186: #{fsrcnn_forward_pallas.3} parent=170 // pred_region
          _
        $region187: #{fsrcnn_forward_pallas.3} parent=170 // pred_fallthru
          _
        // Predicated region
        $region188: #{fsrcnn_forward_pallas.3} parent=170 // pred_check
          %p569 = pneg %p210
        $region189: #{fsrcnn_forward_pallas.3} parent=170 // pred_check_branch
          %571 = sbr.rel (%p569) target = $region191
        $region190: #{fsrcnn_forward_pallas.3} parent=170 // pred_region
          %572 = dma.done [#allocation5], 128
        $region191: #{fsrcnn_forward_pallas.3} parent=170 // pred_fallthru
          _
        %573 = sfence
        %p574 = pneg %p51
        %p575 = pneg %p48
        %s576 = sand.u32 %s72, 1
        %s577 = sand.u32 %s72, 1
        %s578 = smul.addr %s577, 12
        %s579 = scalar_lea.vmem [#allocation7], %s578
        %p580 = pneg %p85
        %p581 = pneg %p82
        %s582 = sand.u32 %s100, 1
        %s583 = sand.u32 %s100, 1
        %s584 = smul.addr %s583, 12
        %s585 = scalar_lea.vmem [#allocation8], %s584
        %p586 = pneg %p113
        %p587 = pneg %p110
        %s588 = sand.u32 %s134, 1
        %s589 = sand.u32 %s134, 1
        %s590 = smul.addr %s589, 12
        %s591 = scalar_lea.vmem [#allocation9], %s590
        %p592 = pneg %p147
        %p593 = pneg %p144
        %p594 = pneg %p168
        %p595 = pneg %p165
        %p596 = pneg %p189
        %p597 = pneg %p186
        %p598 = pneg %p210
        %p599 = pneg %p207
        %p600 = pneg %p231
        %p601 = pneg %p228
        %p602 = pneg %p252
        %p603 = pneg %p249
        %p604 = pneg %p273
        %p605 = pneg %p270
        %p606 = pneg %p301
        %p607 = pneg %p298
        %p608 = scmp.lt.s32.totalorder %s27, 1
        %s609 = scalar_select %p608, %s27, 1
        %p610 = scmp.lt.s32.totalorder %s28, 1
        %s611 = scalar_select %p610, %s28, 1
        %s612 = smul.addr %s611, 4
        %s613 = smul.addr %s609, 8
        %s614 = sadd.s32 %s612, %s613
        %s615 = smul.addr %s614, 4
        %s616 = scalar_lea.vmem %s10, %s615
        %s617 = ssub.s32 %s28, 1
        %p618 = scmp.gt.s32.totalorder %s617, 0
        %s619 = scalar_select %p618, %s617, 0
        %s620 = sadd.s32 %s28, 1
        %p621 = scmp.lt.s32.totalorder %s620, 1
        %s622 = scalar_select %p621, %s620, 1
        %p623 = scmp.lt.s32.totalorder %s27, 1
        %s624 = scalar_select %p623, %s27, 1
        %p625 = scmp.lt.s32.totalorder %s28, 1
        %s626 = scalar_select %p625, %s28, 1
        %s627 = smul.addr %s626, 4
        %s628 = smul.addr %s624, 8
        %s629 = sadd.s32 %s627, %s628
        %s630 = smul.addr %s629, 4
        %s631 = scalar_lea.vmem %s10, %s630
        %vm633 = vcmask 1041408
        %vm634 = vsmask.f32 1280
        %vm635 = vmand %vm633, %vm634
        %vm636 = vcmask 1043458
        %vm637 = vsmask.f32 3328
        %vm638 = vmand %vm636, %vm637
        %vm639 = vmor %vm638, %vm635
        %vm640 = vcmask 717828
        %vm641 = vsmask.f32 5376
        %vm642 = vmand %vm640, %vm641
        %vm643 = vmor %vm642, %vm639
        %v644 = vld [vmem:[#allocation2] sm:$0x3f]
        %v645 = vsel %vm643, 0, %v644
        %646 = vst [vmem:[#allocation2] sm:$0x3f] %v645
        %p647 = scmp.gt.s32.totalorder %s28, 0
        // Predicated region
        $region192: #{fsrcnn_forward_pallas.3} parent=170 // pred_check
          %p648 = pneg %p647
        $region193: #{fsrcnn_forward_pallas.3} parent=170 // pred_check_branch
          %650 = sbr.rel (%p648) target = $region195
        $region194: #{fsrcnn_forward_pallas.3} parent=170 // pred_region
          %v651 = vld [vmem:[%s551] sm:$0x8]
          %v652 = vld [vmem:[%s551 + $0x4] sm:$0x8]
          %v653 = vld [vmem:[%s551 + $0x8] sm:$0x8]
          %v658 = vunpack.c.l.s4 1983009808
          %v659 = vunpack.c.0.s8 %v658
          %v660 = vlaneseq
          %v661 = vshrl.u32 %v660, 7
          %v662 = vsub.s32 %v659, %v661
          %v663 = vrot.slane %v651, %v662
          %v664 = vcombine.high %v663, %v663
          %v666 = vunpack.c.l.s4 1983009808
          %v667 = vunpack.c.0.s8 %v666
          %v668 = vlaneseq
          %v669 = vshrl.u32 %v668, 7
          %v670 = vsub.s32 %v667, %v669
          %v671 = vrot.slane %v652, %v670
          %v672 = vcombine.high %v671, %v671
          %v674 = vunpack.c.l.s4 1983009808
          %v675 = vunpack.c.0.s8 %v674
          %v676 = vlaneseq
          %v677 = vshrl.u32 %v676, 7
          %v678 = vsub.s32 %v675, %v677
          %v679 = vrot.slane %v653, %v678
          %v680 = vcombine.high %v679, %v679
          %v682 = vunpack.c.l.s4 1983009808
          %v683 = vunpack.c.0.s8 %v682
          %v684 = vlaneseq
          %v685 = vshrl.u32 %v684, 7
          %v686 = vsub.s32 %v683, %v685
          %v687 = vrot.slane %v664, %v686
          %v689 = vunpack.c.l.s4 1983009808
          %v690 = vunpack.c.0.s8 %v689
          %v691 = vlaneseq
          %v692 = vshrl.u32 %v691, 7
          %v693 = vsub.s32 %v690, %v692
          %v694 = vrot.slane %v672, %v693
          %v696 = vunpack.c.l.s4 1983009808
          %v697 = vunpack.c.0.s8 %v696
          %v698 = vlaneseq
          %v699 = vshrl.u32 %v698, 7
          %v700 = vsub.s32 %v697, %v699
          %v701 = vrot.slane %v680, %v700
          %v702 = vunpack.c.l.b16 %v687
          %v703 = vunpack.c.l.b16 %v694
          %v704 = vunpack.c.l.b16 %v701
          %v705 = vrot.slane %v702, 2
          %v706 = vrot.slane %v703, 1
          %vm707 = vcmask 1041409
          %v708 = vsel %vm707, %v706, %v705
          %vm709 = vcmask 1042434
          %v710 = vsel %vm709, %v704, %v708
          %v711 = vpack.c.b16 %v710, %v710
          %v713 = vunpack.c.l.s4 1983009808
          %v714 = vunpack.c.0.s8 %v713
          %v715 = vlaneseq
          %v716 = vshrl.u32 %v715, 7
          %v717 = vsub.s32 %v714, %v716
          %v718 = vrot.slane %v711, %v717
          %719 = vrot.lane.b32.xlu0 %v718, 2
          %v720 = vpop.permute.xlu0 %719
          %vm722 = vcmask 140304
          %vm723 = vmand %vm722, %vm634
          %v724 = vld [vmem:[#allocation2] sm:$0x3]
          %v725 = vsel %vm723, %v720, %v724
          %726 = vst [vmem:[#allocation2] sm:$0x3] %v725
          %v727 = vld [vmem:[%s551] sm:$0x8]
          %v728 = vld [vmem:[%s551 + $0x4] sm:$0x8]
          %v729 = vld [vmem:[%s551 + $0x8] sm:$0x8]
          %v734 = vunpack.c.l.s4 1983009808
          %v735 = vunpack.c.0.s8 %v734
          %v736 = vlaneseq
          %v737 = vshrl.u32 %v736, 7
          %v738 = vsub.s32 %v735, %v737
          %v739 = vrot.slane %v727, %v738
          %v740 = vcombine.high %v739, %v739
          %v742 = vunpack.c.l.s4 1983009808
          %v743 = vunpack.c.0.s8 %v742
          %v744 = vlaneseq
          %v745 = vshrl.u32 %v744, 7
          %v746 = vsub.s32 %v743, %v745
          %v747 = vrot.slane %v728, %v746
          %v748 = vcombine.high %v747, %v747
          %v750 = vunpack.c.l.s4 1983009808
          %v751 = vunpack.c.0.s8 %v750
          %v752 = vlaneseq
          %v753 = vshrl.u32 %v752, 7
          %v754 = vsub.s32 %v751, %v753
          %v755 = vrot.slane %v729, %v754
          %v756 = vcombine.high %v755, %v755
          %v758 = vunpack.c.l.s4 1983009808
          %v759 = vunpack.c.0.s8 %v758
          %v760 = vlaneseq
          %v761 = vshrl.u32 %v760, 7
          %v762 = vsub.s32 %v759, %v761
          %v763 = vrot.slane %v740, %v762
          %v765 = vunpack.c.l.s4 1983009808
          %v766 = vunpack.c.0.s8 %v765
          %v767 = vlaneseq
          %v768 = vshrl.u32 %v767, 7
          %v769 = vsub.s32 %v766, %v768
          %v770 = vrot.slane %v748, %v769
          %v772 = vunpack.c.l.s4 1983009808
          %v773 = vunpack.c.0.s8 %v772
          %v774 = vlaneseq
          %v775 = vshrl.u32 %v774, 7
          %v776 = vsub.s32 %v773, %v775
          %v777 = vrot.slane %v756, %v776
          %v778 = vunpack.c.l.b16 %v763
          %v779 = vunpack.c.l.b16 %v770
          %v780 = vunpack.c.l.b16 %v777
          %v781 = vrot.slane %v778, 3
          %v782 = vrot.slane %v779, 2
          %v783 = vsel %vm707, %v782, %v781
          %v784 = vrot.slane %v780, 1
          %v785 = vsel %vm709, %v784, %v783
          %v786 = vpack.c.b16 %v785, %v785
          %v788 = vunpack.c.l.s4 1983009808
          %v789 = vunpack.c.0.s8 %v788
          %v790 = vlaneseq
          %v791 = vshrl.u32 %v790, 7
          %v792 = vsub.s32 %v789, %v791
          %v793 = vrot.slane %v786, %v792
          %794 = vrot.lane.b32.xlu0 %v793, 22
          %v795 = vpop.permute.xlu0 %794
          %vm797 = vcmask 304304
          %vm798 = vmand %vm797, %vm634
          %v799 = vld [vmem:[#allocation2] sm:$0x3]
          %v800 = vsel %vm798, %v795, %v799
          %801 = vst [vmem:[#allocation2] sm:$0x3] %v800
        $region195: #{fsrcnn_forward_pallas.3} parent=170 // pred_fallthru
          _
        %v802 = vld [vmem:[%s558] sm:$0x1]
        %v803 = vld [vmem:[%s558 + $0x4] sm:$0x1]
        %v804 = vld [vmem:[%s558 + $0x8] sm:$0x1]
        %v809 = vunpack.c.l.s4 1983009808
        %v810 = vunpack.c.0.s8 %v809
        %v811 = vlaneseq
        %v812 = vshrl.u32 %v811, 7
        %v813 = vsub.s32 %v810, %v812
        %v814 = vrot.slane %v802, %v813
        %v816 = vunpack.c.l.s4 1983009808
        %v817 = vunpack.c.0.s8 %v816
        %v818 = vlaneseq
        %v819 = vshrl.u32 %v818, 7
        %v820 = vsub.s32 %v817, %v819
        %v821 = vrot.slane %v803, %v820
        %v823 = vunpack.c.l.s4 1983009808
        %v824 = vunpack.c.0.s8 %v823
        %v825 = vlaneseq
        %v826 = vshrl.u32 %v825, 7
        %v827 = vsub.s32 %v824, %v826
        %v828 = vrot.slane %v804, %v827
        %v830 = vunpack.c.l.s4 1983009808
        %v831 = vunpack.c.0.s8 %v830
        %v832 = vlaneseq
        %v833 = vshrl.u32 %v832, 7
        %v834 = vsub.s32 %v831, %v833
        %v835 = vrot.slane %v814, %v834
        %v837 = vunpack.c.l.s4 1983009808
        %v838 = vunpack.c.0.s8 %v837
        %v839 = vlaneseq
        %v840 = vshrl.u32 %v839, 7
        %v841 = vsub.s32 %v838, %v840
        %v842 = vrot.slane %v821, %v841
        %v844 = vunpack.c.l.s4 1983009808
        %v845 = vunpack.c.0.s8 %v844
        %v846 = vlaneseq
        %v847 = vshrl.u32 %v846, 7
        %v848 = vsub.s32 %v845, %v847
        %v849 = vrot.slane %v828, %v848
        %v850 = vunpack.c.l.b16 %v835
        %v851 = vunpack.c.l.b16 %v842
        %v852 = vunpack.c.l.b16 %v849
        %v853 = vrot.slane %v851, 7
        %vm854 = vcmask 1041409
        %v855 = vsel %vm854, %v853, %v850
        %v856 = vrot.slane %v852, 6
        %vm857 = vcmask 1042434
        %v858 = vsel %vm857, %v856, %v855
        %v859 = vpack.c.b16 %v858, %v858
        %v861 = vunpack.c.l.s4 1983009808
        %v862 = vunpack.c.0.s8 %v861
        %v863 = vlaneseq
        %v864 = vshrl.u32 %v863, 7
        %v865 = vsub.s32 %v862, %v864
        %v866 = vrot.slane %v859, %v865
        %867 = vrot.lane.b32.xlu0 %v866, 42
        %v868 = vpop.permute.xlu0 %867
        %vm870 = vcmask 468304
        %vm871 = vmand %vm870, %vm634
        %v872 = vld [vmem:[#allocation2] sm:$0x3]
        %v873 = vsel %vm871, %v868, %v872
        %874 = vst [vmem:[#allocation2] sm:$0x3] %v873
        %v875 = vld [vmem:[%s558] sm:$0x1]
        %v876 = vld [vmem:[%s558 + $0x4] sm:$0x1]
        %v877 = vld [vmem:[%s558 + $0x8] sm:$0x1]
        %v882 = vunpack.c.l.s4 1983009808
        %v883 = vunpack.c.0.s8 %v882
        %v884 = vlaneseq
        %v885 = vshrl.u32 %v884, 7
        %v886 = vsub.s32 %v883, %v885
        %v887 = vrot.slane %v875, %v886
        %v889 = vunpack.c.l.s4 1983009808
        %v890 = vunpack.c.0.s8 %v889
        %v891 = vlaneseq
        %v892 = vshrl.u32 %v891, 7
        %v893 = vsub.s32 %v890, %v892
        %v894 = vrot.slane %v876, %v893
        %v896 = vunpack.c.l.s4 1983009808
        %v897 = vunpack.c.0.s8 %v896
        %v898 = vlaneseq
        %v899 = vshrl.u32 %v898, 7
        %v900 = vsub.s32 %v897, %v899
        %v901 = vrot.slane %v877, %v900
        %v903 = vunpack.c.l.s4 1983009808
        %v904 = vunpack.c.0.s8 %v903
        %v905 = vlaneseq
        %v906 = vshrl.u32 %v905, 7
        %v907 = vsub.s32 %v904, %v906
        %v908 = vrot.slane %v887, %v907
        %v910 = vunpack.c.l.s4 1983009808
        %v911 = vunpack.c.0.s8 %v910
        %v912 = vlaneseq
        %v913 = vshrl.u32 %v912, 7
        %v914 = vsub.s32 %v911, %v913
        %v915 = vrot.slane %v894, %v914
        %v917 = vunpack.c.l.s4 1983009808
        %v918 = vunpack.c.0.s8 %v917
        %v919 = vlaneseq
        %v920 = vshrl.u32 %v919, 7
        %v921 = vsub.s32 %v918, %v920
        %v922 = vrot.slane %v901, %v921
        %v923 = vunpack.c.l.b16 %v908
        %v924 = vunpack.c.l.b16 %v915
        %v925 = vunpack.c.l.b16 %v922
        %v926 = vrot.slane %v923, 1
        %v927 = vsel %vm854, %v924, %v926
        %v928 = vrot.slane %v925, 7
        %v929 = vsel %vm857, %v928, %v927
        %v930 = vpack.c.b16 %v929, %v929
        %v932 = vunpack.c.l.s4 1983009808
        %v933 = vunpack.c.0.s8 %v932
        %v934 = vlaneseq
        %v935 = vshrl.u32 %v934, 7
        %v936 = vsub.s32 %v933, %v935
        %v937 = vrot.slane %v930, %v936
        %938 = vrot.lane.b32.xlu0 %v937, 62
        %v939 = vpop.permute.xlu0 %938
        %vm941 = vcmask 632304
        %vm942 = vmand %vm941, %vm634
        %v943 = vld [vmem:[#allocation2] sm:$0x3]
        %v944 = vsel %vm942, %v939, %v943
        %945 = vst [vmem:[#allocation2] sm:$0x3] %v944
        %v946 = vld [vmem:[%s558] sm:$0x2]
        %v947 = vld [vmem:[%s558 + $0x4] sm:$0x2]
        %v948 = vld [vmem:[%s558 + $0x8] sm:$0x2]
        %v953 = vunpack.c.l.s4 1983009808
        %v954 = vunpack.c.0.s8 %v953
        %v955 = vlaneseq
        %v956 = vshrl.u32 %v955, 7
        %v957 = vsub.s32 %v954, %v956
        %v958 = vrot.slane %v946, %v957
        %v960 = vunpack.c.l.s4 1983009808
        %v961 = vunpack.c.0.s8 %v960
        %v962 = vlaneseq
        %v963 = vshrl.u32 %v962, 7
        %v964 = vsub.s32 %v961, %v963
        %v965 = vrot.slane %v947, %v964
        %v967 = vunpack.c.l.s4 1983009808
        %v968 = vunpack.c.0.s8 %v967
        %v969 = vlaneseq
        %v970 = vshrl.u32 %v969, 7
        %v971 = vsub.s32 %v968, %v970
        %v972 = vrot.slane %v948, %v971
        %v974 = vunpack.c.l.s4 1983009808
        %v975 = vunpack.c.0.s8 %v974
        %v976 = vlaneseq
        %v977 = vshrl.u32 %v976, 7
        %v978 = vsub.s32 %v975, %v977
        %v979 = vrot.slane %v958, %v978
        %v981 = vunpack.c.l.s4 1983009808
        %v982 = vunpack.c.0.s8 %v981
        %v983 = vlaneseq
        %v984 = vshrl.u32 %v983, 7
        %v985 = vsub.s32 %v982, %v984
        %v986 = vrot.slane %v965, %v985
        %v988 = vunpack.c.l.s4 1983009808
        %v989 = vunpack.c.0.s8 %v988
        %v990 = vlaneseq
        %v991 = vshrl.u32 %v990, 7
        %v992 = vsub.s32 %v989, %v991
        %v993 = vrot.slane %v972, %v992
        %v994 = vunpack.c.l.b16 %v979
        %v995 = vunpack.c.l.b16 %v986
        %v996 = vunpack.c.l.b16 %v993
        %v997 = vrot.slane %v994, 2
        %v998 = vrot.slane %v995, 1
        %v999 = vsel %vm854, %v998, %v997
        %v1000 = vsel %vm857, %v996, %v999
        %v1001 = vpack.c.b16 %v1000, %v1000
        %v1003 = vunpack.c.l.s4 1983009808
        %v1004 = vunpack.c.0.s8 %v1003
        %v1005 = vlaneseq
        %v1006 = vshrl.u32 %v1005, 7
        %v1007 = vsub.s32 %v1004, %v1006
        %v1008 = vrot.slane %v1001, %v1007
        %1009 = vrot.lane.b32.xlu0 %v1008, 82
        %v1010 = vpop.permute.xlu0 %1009
        %vm1012 = vcmask 796304
        %vm1013 = vmand %vm1012, %vm634
        %v1014 = vld [vmem:[#allocation2] sm:$0x3]
        %v1015 = vsel %vm1013, %v1010, %v1014
        %1016 = vst [vmem:[#allocation2] sm:$0x3] %v1015
        %v1017 = vld [vmem:[%s558] sm:$0x2]
        %v1018 = vld [vmem:[%s558 + $0x4] sm:$0x2]
        %v1019 = vld [vmem:[%s558 + $0x8] sm:$0x2]
        %v1024 = vunpack.c.l.s4 1983009808
        %v1025 = vunpack.c.0.s8 %v1024
        %v1026 = vlaneseq
        %v1027 = vshrl.u32 %v1026, 7
        %v1028 = vsub.s32 %v1025, %v1027
        %v1029 = vrot.slane %v1017, %v1028
        %v1031 = vunpack.c.l.s4 1983009808
        %v1032 = vunpack.c.0.s8 %v1031
        %v1033 = vlaneseq
        %v1034 = vshrl.u32 %v1033, 7
        %v1035 = vsub.s32 %v1032, %v1034
        %v1036 = vrot.slane %v1018, %v1035
        %v1038 = vunpack.c.l.s4 1983009808
        %v1039 = vunpack.c.0.s8 %v1038
        %v1040 = vlaneseq
        %v1041 = vshrl.u32 %v1040, 7
        %v1042 = vsub.s32 %v1039, %v1041
        %v1043 = vrot.slane %v1019, %v1042
        %v1045 = vunpack.c.l.s4 1983009808
        %v1046 = vunpack.c.0.s8 %v1045
        %v1047 = vlaneseq
        %v1048 = vshrl.u32 %v1047, 7
        %v1049 = vsub.s32 %v1046, %v1048
        %v1050 = vrot.slane %v1029, %v1049
        %v1052 = vunpack.c.l.s4 1983009808
        %v1053 = vunpack.c.0.s8 %v1052
        %v1054 = vlaneseq
        %v1055 = vshrl.u32 %v1054, 7
        %v1056 = vsub.s32 %v1053, %v1055
        %v1057 = vrot.slane %v1036, %v1056
        %v1059 = vunpack.c.l.s4 1983009808
        %v1060 = vunpack.c.0.s8 %v1059
        %v1061 = vlaneseq
        %v1062 = vshrl.u32 %v1061, 7
        %v1063 = vsub.s32 %v1060, %v1062
        %v1064 = vrot.slane %v1043, %v1063
        %v1065 = vunpack.c.l.b16 %v1050
        %v1066 = vunpack.c.l.b16 %v1057
        %v1067 = vunpack.c.l.b16 %v1064
        %v1068 = vrot.slane %v1065, 3
        %v1069 = vrot.slane %v1066, 2
        %v1070 = vsel %vm854, %v1069, %v1068
        %v1071 = vrot.slane %v1067, 1
        %v1072 = vsel %vm857, %v1071, %v1070
        %v1073 = vpack.c.b16 %v1072, %v1072
        %v1075 = vunpack.c.l.s4 1983009808
        %v1076 = vunpack.c.0.s8 %v1075
        %v1077 = vlaneseq
        %v1078 = vshrl.u32 %v1077, 7
        %v1079 = vsub.s32 %v1076, %v1078
        %v1080 = vrot.slane %v1073, %v1079
        %1081 = vrot.lane.b32.xlu0 %v1080, 102
        %v1082 = vpop.permute.xlu0 %1081
        %vm1084 = vcmask 960304
        %vm1085 = vmand %vm1084, %vm634
        %v1086 = vld [vmem:[#allocation2] sm:$0x3]
        %v1087 = vsel %vm1085, %v1082, %v1086
        %1088 = vst [vmem:[#allocation2] sm:$0x3] %v1087
        %v1089 = vld [vmem:[%s558] sm:$0x4]
        %v1090 = vld [vmem:[%s558 + $0x4] sm:$0x4]
        %v1091 = vld [vmem:[%s558 + $0x8] sm:$0x4]
        %v1096 = vunpack.c.l.s4 1983009808
        %v1097 = vunpack.c.0.s8 %v1096
        %v1098 = vlaneseq
        %v1099 = vshrl.u32 %v1098, 7
        %v1100 = vsub.s32 %v1097, %v1099
        %v1101 = vrot.slane %v1089, %v1100
        %v1102 = vcombine.high %v1101, %v1101
        %v1104 = vunpack.c.l.s4 1983009808
        %v1105 = vunpack.c.0.s8 %v1104
        %v1106 = vlaneseq
        %v1107 = vshrl.u32 %v1106, 7
        %v1108 = vsub.s32 %v1105, %v1107
        %v1109 = vrot.slane %v1090, %v1108
        %v1110 = vcombine.high %v1109, %v1109
        %v1112 = vunpack.c.l.s4 1983009808
        %v1113 = vunpack.c.0.s8 %v1112
        %v1114 = vlaneseq
        %v1115 = vshrl.u32 %v1114, 7
        %v1116 = vsub.s32 %v1113, %v1115
        %v1117 = vrot.slane %v1091, %v1116
        %v1118 = vcombine.high %v1117, %v1117
        %v1120 = vunpack.c.l.s4 1983009808
        %v1121 = vunpack.c.0.s8 %v1120
        %v1122 = vlaneseq
        %v1123 = vshrl.u32 %v1122, 7
        %v1124 = vsub.s32 %v1121, %v1123
        %v1125 = vrot.slane %v1102, %v1124
        %v1127 = vunpack.c.l.s4 1983009808
        %v1128 = vunpack.c.0.s8 %v1127
        %v1129 = vlaneseq
        %v1130 = vshrl.u32 %v1129, 7
        %v1131 = vsub.s32 %v1128, %v1130
        %v1132 = vrot.slane %v1110, %v1131
        %v1134 = vunpack.c.l.s4 1983009808
        %v1135 = vunpack.c.0.s8 %v1134
        %v1136 = vlaneseq
        %v1137 = vshrl.u32 %v1136, 7
        %v1138 = vsub.s32 %v1135, %v1137
        %v1139 = vrot.slane %v1118, %v1138
        %v1140 = vunpack.c.l.b16 %v1125
        %v1141 = vunpack.c.l.b16 %v1132
        %v1142 = vunpack.c.l.b16 %v1139
        %v1143 = vrot.slane %v1141, 7
        %v1144 = vsel %vm854, %v1143, %v1140
        %v1145 = vrot.slane %v1142, 6
        %v1146 = vsel %vm857, %v1145, %v1144
        %v1147 = vpack.c.b16 %v1146, %v1146
        %v1149 = vunpack.c.l.s4 1983009808
        %v1150 = vunpack.c.0.s8 %v1149
        %v1151 = vlaneseq
        %v1152 = vshrl.u32 %v1151, 7
        %v1153 = vsub.s32 %v1150, %v1152
        %v1154 = vrot.slane %v1147, %v1153
        %1155 = vrot.lane.b32.xlu0 %v1154, 122
        %v1156 = vpop.permute.xlu0 %1155
        %v1157 = vrot.slane %v1156, 6
        %vm1158 = vcmask 998400
        %v1159 = vsel %vm1158, %v1157, %v1156
        %vm1161 = vcmask 1042384
        %vm1162 = vmand %vm1161, %vm634
        %vm1163 = vcmask 76802
        %vm1164 = vmand %vm1163, %vm637
        %vm1165 = vmor %vm1164, %vm1162
        %v1166 = vld [vmem:[#allocation2] sm:$0xf]
        %v1167 = vsel %vm1165, %v1159, %v1166
        %1168 = vst [vmem:[#allocation2] sm:$0xf] %v1167
        %v1169 = vld [vmem:[%s558] sm:$0x4]
        %v1170 = vld [vmem:[%s558 + $0x4] sm:$0x4]
        %v1171 = vld [vmem:[%s558 + $0x8] sm:$0x4]
        %v1176 = vunpack.c.l.s4 1983009808
        %v1177 = vunpack.c.0.s8 %v1176
        %v1178 = vlaneseq
        %v1179 = vshrl.u32 %v1178, 7
        %v1180 = vsub.s32 %v1177, %v1179
        %v1181 = vrot.slane %v1169, %v1180
        %v1182 = vcombine.high %v1181, %v1181
        %v1184 = vunpack.c.l.s4 1983009808
        %v1185 = vunpack.c.0.s8 %v1184
        %v1186 = vlaneseq
        %v1187 = vshrl.u32 %v1186, 7
        %v1188 = vsub.s32 %v1185, %v1187
        %v1189 = vrot.slane %v1170, %v1188
        %v1190 = vcombine.high %v1189, %v1189
        %v1192 = vunpack.c.l.s4 1983009808
        %v1193 = vunpack.c.0.s8 %v1192
        %v1194 = vlaneseq
        %v1195 = vshrl.u32 %v1194, 7
        %v1196 = vsub.s32 %v1193, %v1195
        %v1197 = vrot.slane %v1171, %v1196
        %v1198 = vcombine.high %v1197, %v1197
        %v1200 = vunpack.c.l.s4 1983009808
        %v1201 = vunpack.c.0.s8 %v1200
        %v1202 = vlaneseq
        %v1203 = vshrl.u32 %v1202, 7
        %v1204 = vsub.s32 %v1201, %v1203
        %v1205 = vrot.slane %v1182, %v1204
        %v1207 = vunpack.c.l.s4 1983009808
        %v1208 = vunpack.c.0.s8 %v1207
        %v1209 = vlaneseq
        %v1210 = vshrl.u32 %v1209, 7
        %v1211 = vsub.s32 %v1208, %v1210
        %v1212 = vrot.slane %v1190, %v1211
        %v1214 = vunpack.c.l.s4 1983009808
        %v1215 = vunpack.c.0.s8 %v1214
        %v1216 = vlaneseq
        %v1217 = vshrl.u32 %v1216, 7
        %v1218 = vsub.s32 %v1215, %v1217
        %v1219 = vrot.slane %v1198, %v1218
        %v1220 = vunpack.c.l.b16 %v1205
        %v1221 = vunpack.c.l.b16 %v1212
        %v1222 = vunpack.c.l.b16 %v1219
        %v1223 = vrot.slane %v1220, 1
        %v1224 = vsel %vm854, %v1221, %v1223
        %v1225 = vrot.slane %v1222, 7
        %v1226 = vsel %vm857, %v1225, %v1224
        %v1227 = vpack.c.b16 %v1226, %v1226
        %v1229 = vunpack.c.l.s4 1983009808
        %v1230 = vunpack.c.0.s8 %v1229
        %v1231 = vlaneseq
        %v1232 = vshrl.u32 %v1231, 7
        %v1233 = vsub.s32 %v1230, %v1232
        %v1234 = vrot.slane %v1227, %v1233
        %1235 = vrot.lane.b32.xlu0 %v1234, 14
        %v1236 = vpop.permute.xlu0 %1235
        %vm1238 = vcmask 238704
        %vm1239 = vmand %vm1238, %vm634
        %v1240 = vld [vmem:[#allocation2 + $0x2] sm:$0x3]
        %v1241 = vsel %vm1239, %v1236, %v1240
        %1242 = vst [vmem:[#allocation2 + $0x2] sm:$0x3] %v1241
        %v1243 = vld [vmem:[%s558] sm:$0x8]
        %v1244 = vld [vmem:[%s558 + $0x4] sm:$0x8]
        %v1245 = vld [vmem:[%s558 + $0x8] sm:$0x8]
        %v1250 = vunpack.c.l.s4 1983009808
        %v1251 = vunpack.c.0.s8 %v1250
        %v1252 = vlaneseq
        %v1253 = vshrl.u32 %v1252, 7
        %v1254 = vsub.s32 %v1251, %v1253
        %v1255 = vrot.slane %v1243, %v1254
        %v1256 = vcombine.high %v1255, %v1255
        %v1258 = vunpack.c.l.s4 1983009808
        %v1259 = vunpack.c.0.s8 %v1258
        %v1260 = vlaneseq
        %v1261 = vshrl.u32 %v1260, 7
        %v1262 = vsub.s32 %v1259, %v1261
        %v1263 = vrot.slane %v1244, %v1262
        %v1264 = vcombine.high %v1263, %v1263
        %v1266 = vunpack.c.l.s4 1983009808
        %v1267 = vunpack.c.0.s8 %v1266
        %v1268 = vlaneseq
        %v1269 = vshrl.u32 %v1268, 7
        %v1270 = vsub.s32 %v1267, %v1269
        %v1271 = vrot.slane %v1245, %v1270
        %v1272 = vcombine.high %v1271, %v1271
        %v1274 = vunpack.c.l.s4 1983009808
        %v1275 = vunpack.c.0.s8 %v1274
        %v1276 = vlaneseq
        %v1277 = vshrl.u32 %v1276, 7
        %v1278 = vsub.s32 %v1275, %v1277
        %v1279 = vrot.slane %v1256, %v1278
        %v1281 = vunpack.c.l.s4 1983009808
        %v1282 = vunpack.c.0.s8 %v1281
        %v1283 = vlaneseq
        %v1284 = vshrl.u32 %v1283, 7
        %v1285 = vsub.s32 %v1282, %v1284
        %v1286 = vrot.slane %v1264, %v1285
        %v1288 = vunpack.c.l.s4 1983009808
        %v1289 = vunpack.c.0.s8 %v1288
        %v1290 = vlaneseq
        %v1291 = vshrl.u32 %v1290, 7
        %v1292 = vsub.s32 %v1289, %v1291
        %v1293 = vrot.slane %v1272, %v1292
        %v1294 = vunpack.c.l.b16 %v1279
        %v1295 = vunpack.c.l.b16 %v1286
        %v1296 = vunpack.c.l.b16 %v1293
        %v1297 = vrot.slane %v1294, 2
        %v1298 = vrot.slane %v1295, 1
        %v1299 = vsel %vm854, %v1298, %v1297
        %v1300 = vsel %vm857, %v1296, %v1299
        %v1301 = vpack.c.b16 %v1300, %v1300
        %v1303 = vunpack.c.l.s4 1983009808
        %v1304 = vunpack.c.0.s8 %v1303
        %v1305 = vlaneseq
        %v1306 = vshrl.u32 %v1305, 7
        %v1307 = vsub.s32 %v1304, %v1306
        %v1308 = vrot.slane %v1301, %v1307
        %1309 = vrot.lane.b32.xlu0 %v1308, 34
        %v1310 = vpop.permute.xlu0 %1309
        %vm1312 = vcmask 402704
        %vm1313 = vmand %vm1312, %vm634
        %v1314 = vld [vmem:[#allocation2 + $0x2] sm:$0x3]
        %v1315 = vsel %vm1313, %v1310, %v1314
        %1316 = vst [vmem:[#allocation2 + $0x2] sm:$0x3] %v1315
        %v1317 = vld [vmem:[%s558] sm:$0x8]
        %v1318 = vld [vmem:[%s558 + $0x4] sm:$0x8]
        %v1319 = vld [vmem:[%s558 + $0x8] sm:$0x8]
        %v1324 = vunpack.c.l.s4 1983009808
        %v1325 = vunpack.c.0.s8 %v1324
        %v1326 = vlaneseq
        %v1327 = vshrl.u32 %v1326, 7
        %v1328 = vsub.s32 %v1325, %v1327
        %v1329 = vrot.slane %v1317, %v1328
        %v1330 = vcombine.high %v1329, %v1329
        %v1332 = vunpack.c.l.s4 1983009808
        %v1333 = vunpack.c.0.s8 %v1332
        %v1334 = vlaneseq
        %v1335 = vshrl.u32 %v1334, 7
        %v1336 = vsub.s32 %v1333, %v1335
        %v1337 = vrot.slane %v1318, %v1336
        %v1338 = vcombine.high %v1337, %v1337
        %v1340 = vunpack.c.l.s4 1983009808
        %v1341 = vunpack.c.0.s8 %v1340
        %v1342 = vlaneseq
        %v1343 = vshrl.u32 %v1342, 7
        %v1344 = vsub.s32 %v1341, %v1343
        %v1345 = vrot.slane %v1319, %v1344
        %v1346 = vcombine.high %v1345, %v1345
        %v1348 = vunpack.c.l.s4 1983009808
        %v1349 = vunpack.c.0.s8 %v1348
        %v1350 = vlaneseq
        %v1351 = vshrl.u32 %v1350, 7
        %v1352 = vsub.s32 %v1349, %v1351
        %v1353 = vrot.slane %v1330, %v1352
        %v1355 = vunpack.c.l.s4 1983009808
        %v1356 = vunpack.c.0.s8 %v1355
        %v1357 = vlaneseq
        %v1358 = vshrl.u32 %v1357, 7
        %v1359 = vsub.s32 %v1356, %v1358
        %v1360 = vrot.slane %v1338, %v1359
        %v1362 = vunpack.c.l.s4 1983009808
        %v1363 = vunpack.c.0.s8 %v1362
        %v1364 = vlaneseq
        %v1365 = vshrl.u32 %v1364, 7
        %v1366 = vsub.s32 %v1363, %v1365
        %v1367 = vrot.slane %v1346, %v1366
        %v1368 = vunpack.c.l.b16 %v1353
        %v1369 = vunpack.c.l.b16 %v1360
        %v1370 = vunpack.c.l.b16 %v1367
        %v1371 = vrot.slane %v1368, 3
        %v1372 = vrot.slane %v1369, 2
        %v1373 = vsel %vm854, %v1372, %v1371
        %v1374 = vrot.slane %v1370, 1
        %v1375 = vsel %vm857, %v1374, %v1373
        %v1376 = vpack.c.b16 %v1375, %v1375
        %v1378 = vunpack.c.l.s4 1983009808
        %v1379 = vunpack.c.0.s8 %v1378
        %v1380 = vlaneseq
        %v1381 = vshrl.u32 %v1380, 7
        %v1382 = vsub.s32 %v1379, %v1381
        %v1383 = vrot.slane %v1376, %v1382
        %1384 = vrot.lane.b32.xlu0 %v1383, 54
        %v1385 = vpop.permute.xlu0 %1384
        %vm1387 = vcmask 566704
        %vm1388 = vmand %vm1387, %vm634
        %v1389 = vld [vmem:[#allocation2 + $0x2] sm:$0x3]
        %v1390 = vsel %vm1388, %v1385, %v1389
        %1391 = vst [vmem:[#allocation2 + $0x2] sm:$0x3] %v1390
        %p1392 = scmp.lt.s32.totalorder %s28, 1
        // Predicated region
        $region196: #{fsrcnn_forward_pallas.3} parent=170 // pred_check
          %p1393 = pneg %p1392
        $region197: #{fsrcnn_forward_pallas.3} parent=170 // pred_check_branch
          %1395 = sbr.rel (%p1393) target = $region199
        $region198: #{fsrcnn_forward_pallas.3} parent=170 // pred_region
          %v1396 = vld [vmem:[%s565] sm:$0x1]
          %v1397 = vld [vmem:[%s565 + $0x4] sm:$0x1]
          %v1398 = vld [vmem:[%s565 + $0x8] sm:$0x1]
          %v1403 = vunpack.c.l.s4 1983009808
          %v1404 = vunpack.c.0.s8 %v1403
          %v1405 = vlaneseq
          %v1406 = vshrl.u32 %v1405, 7
          %v1407 = vsub.s32 %v1404, %v1406
          %v1408 = vrot.slane %v1396, %v1407
          %v1410 = vunpack.c.l.s4 1983009808
          %v1411 = vunpack.c.0.s8 %v1410
          %v1412 = vlaneseq
          %v1413 = vshrl.u32 %v1412, 7
          %v1414 = vsub.s32 %v1411, %v1413
          %v1415 = vrot.slane %v1397, %v1414
          %v1417 = vunpack.c.l.s4 1983009808
          %v1418 = vunpack.c.0.s8 %v1417
          %v1419 = vlaneseq
          %v1420 = vshrl.u32 %v1419, 7
          %v1421 = vsub.s32 %v1418, %v1420
          %v1422 = vrot.slane %v1398, %v1421
          %v1424 = vunpack.c.l.s4 1983009808
          %v1425 = vunpack.c.0.s8 %v1424
          %v1426 = vlaneseq
          %v1427 = vshrl.u32 %v1426, 7
          %v1428 = vsub.s32 %v1425, %v1427
          %v1429 = vrot.slane %v1408, %v1428
          %v1431 = vunpack.c.l.s4 1983009808
          %v1432 = vunpack.c.0.s8 %v1431
          %v1433 = vlaneseq
          %v1434 = vshrl.u32 %v1433, 7
          %v1435 = vsub.s32 %v1432, %v1434
          %v1436 = vrot.slane %v1415, %v1435
          %v1438 = vunpack.c.l.s4 1983009808
          %v1439 = vunpack.c.0.s8 %v1438
          %v1440 = vlaneseq
          %v1441 = vshrl.u32 %v1440, 7
          %v1442 = vsub.s32 %v1439, %v1441
          %v1443 = vrot.slane %v1422, %v1442
          %v1444 = vunpack.c.l.b16 %v1429
          %v1445 = vunpack.c.l.b16 %v1436
          %v1446 = vunpack.c.l.b16 %v1443
          %v1447 = vrot.slane %v1445, 7
          %v1448 = vsel %vm854, %v1447, %v1444
          %v1449 = vrot.slane %v1446, 6
          %v1450 = vsel %vm857, %v1449, %v1448
          %v1451 = vpack.c.b16 %v1450, %v1450
          %v1453 = vunpack.c.l.s4 1983009808
          %v1454 = vunpack.c.0.s8 %v1453
          %v1455 = vlaneseq
          %v1456 = vshrl.u32 %v1455, 7
          %v1457 = vsub.s32 %v1454, %v1456
          %v1458 = vrot.slane %v1451, %v1457
          %1459 = vrot.lane.b32.xlu0 %v1458, 74
          %v1460 = vpop.permute.xlu0 %1459
          %vm1462 = vcmask 730704
          %vm1463 = vmand %vm1462, %vm634
          %v1464 = vld [vmem:[#allocation2 + $0x2] sm:$0x3]
          %v1465 = vsel %vm1463, %v1460, %v1464
          %1466 = vst [vmem:[#allocation2 + $0x2] sm:$0x3] %v1465
          %v1467 = vld [vmem:[%s565] sm:$0x1]
          %v1468 = vld [vmem:[%s565 + $0x4] sm:$0x1]
          %v1469 = vld [vmem:[%s565 + $0x8] sm:$0x1]
          %v1474 = vunpack.c.l.s4 1983009808
          %v1475 = vunpack.c.0.s8 %v1474
          %v1476 = vlaneseq
          %v1477 = vshrl.u32 %v1476, 7
          %v1478 = vsub.s32 %v1475, %v1477
          %v1479 = vrot.slane %v1467, %v1478
          %v1481 = vunpack.c.l.s4 1983009808
          %v1482 = vunpack.c.0.s8 %v1481
          %v1483 = vlaneseq
          %v1484 = vshrl.u32 %v1483, 7
          %v1485 = vsub.s32 %v1482, %v1484
          %v1486 = vrot.slane %v1468, %v1485
          %v1488 = vunpack.c.l.s4 1983009808
          %v1489 = vunpack.c.0.s8 %v1488
          %v1490 = vlaneseq
          %v1491 = vshrl.u32 %v1490, 7
          %v1492 = vsub.s32 %v1489, %v1491
          %v1493 = vrot.slane %v1469, %v1492
          %v1495 = vunpack.c.l.s4 1983009808
          %v1496 = vunpack.c.0.s8 %v1495
          %v1497 = vlaneseq
          %v1498 = vshrl.u32 %v1497, 7
          %v1499 = vsub.s32 %v1496, %v1498
          %v1500 = vrot.slane %v1479, %v1499
          %v1502 = vunpack.c.l.s4 1983009808
          %v1503 = vunpack.c.0.s8 %v1502
          %v1504 = vlaneseq
          %v1505 = vshrl.u32 %v1504, 7
          %v1506 = vsub.s32 %v1503, %v1505
          %v1507 = vrot.slane %v1486, %v1506
          %v1509 = vunpack.c.l.s4 1983009808
          %v1510 = vunpack.c.0.s8 %v1509
          %v1511 = vlaneseq
          %v1512 = vshrl.u32 %v1511, 7
          %v1513 = vsub.s32 %v1510, %v1512
          %v1514 = vrot.slane %v1493, %v1513
          %v1515 = vunpack.c.l.b16 %v1500
          %v1516 = vunpack.c.l.b16 %v1507
          %v1517 = vunpack.c.l.b16 %v1514
          %v1518 = vrot.slane %v1515, 1
          %v1519 = vsel %vm854, %v1516, %v1518
          %v1520 = vrot.slane %v1517, 7
          %v1521 = vsel %vm857, %v1520, %v1519
          %v1522 = vpack.c.b16 %v1521, %v1521
          %v1524 = vunpack.c.l.s4 1983009808
          %v1525 = vunpack.c.0.s8 %v1524
          %v1526 = vlaneseq
          %v1527 = vshrl.u32 %v1526, 7
          %v1528 = vsub.s32 %v1525, %v1527
          %v1529 = vrot.slane %v1522, %v1528
          %1530 = vrot.lane.b32.xlu0 %v1529, 94
          %v1531 = vpop.permute.xlu0 %1530
          %vm1533 = vcmask 894704
          %vm1534 = vmand %vm1533, %vm634
          %v1535 = vld [vmem:[#allocation2 + $0x2] sm:$0x3]
          %v1536 = vsel %vm1534, %v1531, %v1535
          %1537 = vst [vmem:[#allocation2 + $0x2] sm:$0x3] %v1536
        $region199: #{fsrcnn_forward_pallas.3} parent=170 // pred_fallthru
          _
        %v1538 = vld [vmem:[#allocation2] sm:$0xf]
        %v1541 = vunpack.c.l.s4 1983009808
        %v1542 = vunpack.c.0.s8 %v1541
        %v1543 = vlaneseq
        %v1544 = vshrl.u32 %v1543, 7
        %v1545 = vsub.s32 %v1542, %v1544
        %v1546 = vrot.slane %v1538, %v1545
        %vm1548 = vcmask 1045508
        %vm1549 = vmand %vm1548, %vm641
        %vm1550 = vmor %vm1549, %vm635
        %v1551 = vld [vmem:[#allocation3] sm:$0x33]
        %v1552 = vsel %vm1550, %v1546, %v1551
        %1553 = vst [vmem:[#allocation3] sm:$0x33] %v1552
        %v1554 = vld [vmem:[#allocation2] sm:$0x3f]
        %v1556 = vcombine.high %v1554, %v1554
        %v1558 = vunpack.c.l.s4 1983009808
        %v1559 = vunpack.c.0.s8 %v1558
        %v1560 = vlaneseq
        %v1561 = vshrl.u32 %v1560, 7
        %v1562 = vsub.s32 %v1559, %v1561
        %v1563 = vrot.slane %v1554, %v1562
        %v1565 = vunpack.c.l.s4 1983009808
        %v1566 = vunpack.c.0.s8 %v1565
        %v1567 = vlaneseq
        %v1568 = vshrl.u32 %v1567, 7
        %v1569 = vsub.s32 %v1566, %v1568
        %v1570 = vrot.slane %v1556, %v1569
        %v1572 = vshrl.u32 %v1563, 16
        %v1574 = vrot.slane %v1572, 6
        %v1575 = vshll.u32 %v1563, 16
        %v1577 = vrot.slane %v1575, 7
        %v1578 = vor.u32 %v1574, %v1577
        %v1580 = vshrl.u32 %v1570, 16
        %v1582 = vrot.slane %v1580, 6
        %v1583 = vshll.u32 %v1570, 16
        %v1585 = vrot.slane %v1583, 7
        %v1586 = vor.u32 %v1582, %v1585
        %1587 = vrot.lane.b32.xlu0 %v1578, 127
        %v1588 = vpop.permute.xlu0 %1587
        %1589 = vrot.lane.b32.xlu0 %v1586, 127
        %v1590 = vpop.permute.xlu0 %1589
        %v1591 = vrot.slane %v1588, 4
        %v1592 = vrot.slane %v1590, 4
        %vm1593 = vcmask 1043456
        %v1594 = vsel %vm1593, %v1591, %v1592
        %vm1595 = vcmask 1039360
        %v1596 = vsel %vm1595, %v1588, %v1594
        %vm1598 = vcmask 1042433
        %vm1599 = vsmask.f32 7942
        %vm1600 = vmand %vm1598, %vm1599
        %vm1601 = vcmask 1046533
        %vm1602 = vsmask.f32 7958
        %vm1603 = vmand %vm1601, %vm1602
        %vm1604 = vmor %vm1603, %vm1600
        %v1605 = vld [vmem:[#allocation3] sm:$0x66]
        %v1606 = vsel %vm1604, %v1596, %v1605
        %1607 = vst [vmem:[#allocation3] sm:$0x66] %v1606
        %v1608 = vld [vmem:[#allocation2] sm:$0x3f]
        %v1610 = vcombine.high %v1608, %v1608
        %v1612 = vunpack.c.l.s4 1983009808
        %v1613 = vunpack.c.0.s8 %v1612
        %v1614 = vlaneseq
        %v1615 = vshrl.u32 %v1614, 7
        %v1616 = vsub.s32 %v1613, %v1615
        %v1617 = vrot.slane %v1608, %v1616
        %v1619 = vunpack.c.l.s4 1983009808
        %v1620 = vunpack.c.0.s8 %v1619
        %v1621 = vlaneseq
        %v1622 = vshrl.u32 %v1621, 7
        %v1623 = vsub.s32 %v1620, %v1622
        %v1624 = vrot.slane %v1610, %v1623
        %v1625 = vrot.slane %v1617, 5
        %v1626 = vrot.slane %v1624, 5
        %v1627 = vrot.slane %v1625, 4
        %v1628 = vrot.slane %v1626, 4
        %1629 = vrot.lane.b32.xlu0 %v1625, 126
        %v1630 = vpop.permute.xlu0 %1629
        %1631 = vrot.lane.b32.xlu0 %v1626, 126
        %v1632 = vpop.permute.xlu0 %1631
        %1633 = vrot.lane.b32.xlu0 %v1627, 126
        %v1634 = vpop.permute.xlu0 %1633
        %1635 = vrot.lane.b32.xlu0 %v1628, 126
        %v1636 = vpop.permute.xlu0 %1635
        %v1637 = vrot.slane %v1630, 4
        %v1638 = vrot.slane %v1632, 4
        %v1639 = vrot.slane %v1634, 4
        %v1640 = vrot.slane %v1636, 4
        %v1641 = vsel %vm1593, %v1637, %v1638
        %vm1642 = vcmask 1031168
        %v1643 = vsel %vm1642, %v1630, %v1641
        %v1644 = vsel %vm1593, %v1639, %v1640
        %v1645 = vsel %vm1642, %v1634, %v1644
        %1648 = vst [vmem:[#allocation3] sm:$0x88] %v1643
        %vm1649 = vcmask 1040384
        %vm1650 = vsmask.f32 256
        %vm1651 = vmand %vm1649, %vm1650
        %vm1652 = vcmask 1044484
        %vm1653 = vsmask.f32 4352
        %vm1654 = vmand %vm1652, %vm1653
        %vm1655 = vmor %vm1654, %vm1651
        %v1656 = vld [vmem:[#allocation3 + $0x8] sm:$0x11]
        %v1657 = vsel %vm1655, %v1645, %v1656
        %1658 = vst [vmem:[#allocation3 + $0x8] sm:$0x11] %v1657
        %v1659 = vld [vmem:[#allocation2] sm:$0x3f]
        %v1661 = vcombine.high %v1659, %v1659
        %v1663 = vunpack.c.l.s4 1983009808
        %v1664 = vunpack.c.0.s8 %v1663
        %v1665 = vlaneseq
        %v1666 = vshrl.u32 %v1665, 7
        %v1667 = vsub.s32 %v1664, %v1666
        %v1668 = vrot.slane %v1659, %v1667
        %v1670 = vunpack.c.l.s4 1983009808
        %v1671 = vunpack.c.0.s8 %v1670
        %v1672 = vlaneseq
        %v1673 = vshrl.u32 %v1672, 7
        %v1674 = vsub.s32 %v1671, %v1673
        %v1675 = vrot.slane %v1661, %v1674
        %v1677 = vshrl.u32 %v1668, 16
        %v1679 = vrot.slane %v1677, 7
        %v1680 = vshll.u32 %v1668, 16
        %v1682 = vor.u32 %v1679, %v1680
        %v1684 = vshrl.u32 %v1675, 16
        %v1686 = vrot.slane %v1684, 7
        %v1687 = vshll.u32 %v1675, 16
        %v1689 = vor.u32 %v1686, %v1687
        %1690 = vrot.lane.b32.xlu0 %v1682, 125
        %v1691 = vpop.permute.xlu0 %1690
        %1692 = vrot.lane.b32.xlu0 %v1689, 125
        %v1693 = vpop.permute.xlu0 %1692
        %v1694 = vrot.slane %v1691, 4
        %v1695 = vrot.slane %v1693, 4
        %v1696 = vsel %vm1593, %v1694, %v1695
        %vm1697 = vcmask 1022976
        %v1698 = vsel %vm1697, %v1691, %v1696
        %vm1700 = vsmask.f32 7938
        %vm1701 = vmand %vm633, %vm1700
        %vm1702 = vsmask.f32 7954
        %vm1703 = vmand %vm1548, %vm1702
        %vm1704 = vmor %vm1703, %vm1701
        %v1705 = vld [vmem:[#allocation3 + $0x8] sm:$0x33]
        %v1706 = vsel %vm1704, %v1698, %v1705
        %1707 = vst [vmem:[#allocation3 + $0x8] sm:$0x33] %v1706
        %v1708 = vld [vmem:[#allocation2] sm:$0x3f]
        %v1710 = vcombine.low %v1708, %v1708
        %v1712 = vunpack.c.l.s4 1983009808
        %v1713 = vunpack.c.0.s8 %v1712
        %v1714 = vlaneseq
        %v1715 = vshrl.u32 %v1714, 7
        %v1716 = vsub.s32 %v1713, %v1715
        %v1717 = vrot.slane %v1710, %v1716
        %v1719 = vunpack.c.l.s4 1983009808
        %v1720 = vunpack.c.0.s8 %v1719
        %v1721 = vlaneseq
        %v1722 = vshrl.u32 %v1721, 7
        %v1723 = vsub.s32 %v1720, %v1722
        %v1724 = vrot.slane %v1708, %v1723
        %1725 = vrot.lane.b32.xlu0 %v1717, 124
        %v1726 = vpop.permute.xlu0 %1725
        %1727 = vrot.lane.b32.xlu0 %v1724, 124
        %v1728 = vpop.permute.xlu0 %1727
        %v1729 = vrot.slane %v1726, 4
        %v1730 = vrot.slane %v1728, 4
        %v1731 = vsel %vm1593, %v1729, %v1730
        %vm1732 = vcmask 1014784
        %v1733 = vsel %vm1732, %v1726, %v1731
        %vm1735 = vcmask 1047558
        %vm1736 = vsmask.f32 7424
        %vm1737 = vmand %vm1735, %vm1736
        %vm1738 = vmor %vm1737, %vm638
        %v1739 = vld [vmem:[#allocation3 + $0x8] sm:$0xcc]
        %v1740 = vsel %vm1738, %v1733, %v1739
        %1741 = vst [vmem:[#allocation3 + $0x8] sm:$0xcc] %v1740
        %v1742 = vld [vmem:[#allocation2] sm:$0x3f]
        %v1744 = vcombine.high %v1742, %v1742
        %v1746 = vunpack.c.l.s4 1983009808
        %v1747 = vunpack.c.0.s8 %v1746
        %v1748 = vlaneseq
        %v1749 = vshrl.u32 %v1748, 7
        %v1750 = vsub.s32 %v1747, %v1749
        %v1751 = vrot.slane %v1742, %v1750
        %v1753 = vunpack.c.l.s4 1983009808
        %v1754 = vunpack.c.0.s8 %v1753
        %v1755 = vlaneseq
        %v1756 = vshrl.u32 %v1755, 7
        %v1757 = vsub.s32 %v1754, %v1756
        %v1758 = vrot.slane %v1744, %v1757
        %v1760 = vshll.u32 %v1751, 16
        %v1762 = vrot.slane %v1760, 5
        %v1764 = vshll.u32 %v1758, 16
        %v1766 = vrot.slane %v1764, 5
        %v1767 = vshrl.u32 %v1751, 16
        %v1769 = vrot.slane %v1767, 4
        %v1770 = vor.u32 %v1769, %v1762
        %v1771 = vrot.slane %v1770, 4
        %v1772 = vshrl.u32 %v1758, 16
        %v1774 = vrot.slane %v1772, 4
        %v1775 = vor.u32 %v1774, %v1766
        %v1776 = vrot.slane %v1775, 4
        %1777 = vrot.lane.b32.xlu0 %v1762, 108
        %v1778 = vpop.permute.xlu0 %1777
        %1779 = vrot.lane.b32.xlu0 %v1766, 108
        %v1780 = vpop.permute.xlu0 %1779
        %1781 = vrot.lane.b32.xlu0 %v1771, 108
        %v1782 = vpop.permute.xlu0 %1781
        %1783 = vrot.lane.b32.xlu0 %v1776, 108
        %v1784 = vpop.permute.xlu0 %1783
        %v1785 = vrot.slane %v1778, 4
        %v1786 = vrot.slane %v1780, 4
        %v1787 = vrot.slane %v1782, 4
        %v1788 = vrot.slane %v1784, 4
        %v1789 = vsel %vm1593, %v1785, %v1786
        %vm1790 = vcmask 883712
        %v1791 = vsel %vm1790, %v1778, %v1789
        %v1792 = vsel %vm1593, %v1787, %v1788
        %v1793 = vsel %vm1790, %v1782, %v1792
        %vm1796 = vcmask 1043459
        %vm1797 = vsmask.f32 7950
        %vm1798 = vmand %vm1796, %vm1797
        %vm1799 = vcmask 1047559
        %vm1800 = vsmask.f32 7966
        %vm1801 = vmand %vm1799, %vm1800
        %vm1802 = vmor %vm1801, %vm1798
        %v1803 = vld [vmem:[#allocation3 + $0x8] sm:$0x88]
        %v1804 = vsel %vm1802, %v1791, %v1803
        %1805 = vst [vmem:[#allocation3 + $0x8] sm:$0x88] %v1804
        %1806 = vst [vmem:[#allocation3 + $0x10] sm:$0x11] %v1793
        %v1807 = vld [vmem:[#allocation2] sm:$0x3f]
        %v1809 = vcombine.high %v1807, %v1807
        %v1811 = vunpack.c.l.s4 1983009808
        %v1812 = vunpack.c.0.s8 %v1811
        %v1813 = vlaneseq
        %v1814 = vshrl.u32 %v1813, 7
        %v1815 = vsub.s32 %v1812, %v1814
        %v1816 = vrot.slane %v1807, %v1815
        %v1818 = vunpack.c.l.s4 1983009808
        %v1819 = vunpack.c.0.s8 %v1818
        %v1820 = vlaneseq
        %v1821 = vshrl.u32 %v1820, 7
        %v1822 = vsub.s32 %v1819, %v1821
        %v1823 = vrot.slane %v1809, %v1822
        %v1824 = vrot.slane %v1816, 7
        %v1825 = vrot.slane %v1823, 7
        %1826 = vrot.lane.b32.xlu0 %v1824, 107
        %v1827 = vpop.permute.xlu0 %1826
        %1828 = vrot.lane.b32.xlu0 %v1825, 107
        %v1829 = vpop.permute.xlu0 %1828
        %v1830 = vrot.slane %v1827, 4
        %v1831 = vrot.slane %v1829, 4
        %v1832 = vsel %vm1593, %v1830, %v1831
        %vm1833 = vcmask 875520
        %v1834 = vsel %vm1833, %v1827, %v1832
        %vm1836 = vsmask.f32 2304
        %vm1837 = vmand %vm1598, %vm1836
        %vm1838 = vsmask.f32 6400
        %vm1839 = vmand %vm1601, %vm1838
        %vm1840 = vmor %vm1839, %vm1837
        %v1841 = vld [vmem:[#allocation3 + $0x10] sm:$0x66]
        %v1842 = vsel %vm1840, %v1834, %v1841
        %1843 = vst [vmem:[#allocation3 + $0x10] sm:$0x66] %v1842
        %v1844 = vld [vmem:[#allocation2] sm:$0x3f]
        %v1846 = vcombine.high %v1844, %v1844
        %v1848 = vunpack.c.l.s4 1983009808
        %v1849 = vunpack.c.0.s8 %v1848
        %v1850 = vlaneseq
        %v1851 = vshrl.u32 %v1850, 7
        %v1852 = vsub.s32 %v1849, %v1851
        %v1853 = vrot.slane %v1844, %v1852
        %v1855 = vunpack.c.l.s4 1983009808
        %v1856 = vunpack.c.0.s8 %v1855
        %v1857 = vlaneseq
        %v1858 = vshrl.u32 %v1857, 7
        %v1859 = vsub.s32 %v1856, %v1858
        %v1860 = vrot.slane %v1846, %v1859
        %v1862 = vshrl.u32 %v1853, 16
        %v1864 = vrot.slane %v1862, 5
        %v1865 = vshll.u32 %v1853, 16
        %v1867 = vrot.slane %v1865, 6
        %v1868 = vor.u32 %v1864, %v1867
        %v1870 = vshrl.u32 %v1860, 16
        %v1872 = vrot.slane %v1870, 5
        %v1873 = vshll.u32 %v1860, 16
        %v1875 = vrot.slane %v1873, 6
        %v1876 = vor.u32 %v1872, %v1875
        %1877 = vrot.lane.b32.xlu0 %v1868, 106
        %v1878 = vpop.permute.xlu0 %1877
        %1879 = vrot.lane.b32.xlu0 %v1876, 106
        %v1880 = vpop.permute.xlu0 %1879
        %v1881 = vrot.slane %v1878, 4
        %v1882 = vrot.slane %v1880, 4
        %v1883 = vsel %vm1593, %v1881, %v1882
        %vm1884 = vcmask 867328
        %v1885 = vsel %vm1884, %v1878, %v1883
        %vm1887 = vsmask.f32 7946
        %vm1888 = vmand %vm636, %vm1887
        %vm1889 = vsmask.f32 7962
        %vm1890 = vmand %vm1735, %vm1889
        %vm1891 = vmor %vm1890, %vm1888
        %v1892 = vld [vmem:[#allocation3 + $0x10] sm:$0xcc]
        %v1893 = vsel %vm1891, %v1885, %v1892
        %1894 = vst [vmem:[#allocation3 + $0x10] sm:$0xcc] %v1893
        %v1895 = vld [vmem:[#allocation2] sm:$0x3f]
        %v1897 = vcombine.high %v1895, %v1895
        %v1899 = vunpack.c.l.s4 1983009808
        %v1900 = vunpack.c.0.s8 %v1899
        %v1901 = vlaneseq
        %v1902 = vshrl.u32 %v1901, 7
        %v1903 = vsub.s32 %v1900, %v1902
        %v1904 = vrot.slane %v1895, %v1903
        %v1906 = vunpack.c.l.s4 1983009808
        %v1907 = vunpack.c.0.s8 %v1906
        %v1908 = vlaneseq
        %v1909 = vshrl.u32 %v1908, 7
        %v1910 = vsub.s32 %v1907, %v1909
        %v1911 = vrot.slane %v1897, %v1910
        %1912 = vrot.lane.b32.xlu0 %v1904, 105
        %v1913 = vpop.permute.xlu0 %1912
        %1914 = vrot.lane.b32.xlu0 %v1911, 105
        %v1915 = vpop.permute.xlu0 %1914
        %v1916 = vrot.slane %v1913, 4
        %v1917 = vrot.slane %v1915, 4
        %v1918 = vsel %vm1593, %v1916, %v1917
        %vm1919 = vcmask 859136
        %v1920 = vsel %vm1919, %v1913, %v1918
        %v1922 = vld [vmem:[#allocation3 + $0x18] sm:$0x33]
        %v1923 = vsel %vm1550, %v1920, %v1922
        %1924 = vst [vmem:[#allocation3 + $0x18] sm:$0x33] %v1923
        %v1925 = vld [vmem:[#allocation2] sm:$0x3f]
        %v1927 = vcombine.high %v1925, %v1925
        %v1929 = vunpack.c.l.s4 1983009808
        %v1930 = vunpack.c.0.s8 %v1929
        %v1931 = vlaneseq
        %v1932 = vshrl.u32 %v1931, 7
        %v1933 = vsub.s32 %v1930, %v1932
        %v1934 = vrot.slane %v1925, %v1933
        %v1936 = vunpack.c.l.s4 1983009808
        %v1937 = vunpack.c.0.s8 %v1936
        %v1938 = vlaneseq
        %v1939 = vshrl.u32 %v1938, 7
        %v1940 = vsub.s32 %v1937, %v1939
        %v1941 = vrot.slane %v1927, %v1940
        %v1943 = vshrl.u32 %v1934, 16
        %v1945 = vrot.slane %v1943, 6
        %v1946 = vshll.u32 %v1934, 16
        %v1948 = vrot.slane %v1946, 7
        %v1949 = vor.u32 %v1945, %v1948
        %v1951 = vshrl.u32 %v1941, 16
        %v1953 = vrot.slane %v1951, 6
        %v1954 = vshll.u32 %v1941, 16
        %v1956 = vrot.slane %v1954, 7
        %v1957 = vor.u32 %v1953, %v1956
        %1958 = vrot.lane.b32.xlu0 %v1949, 104
        %v1959 = vpop.permute.xlu0 %1958
        %1960 = vrot.lane.b32.xlu0 %v1957, 104
        %v1961 = vpop.permute.xlu0 %1960
        %v1962 = vrot.slane %v1959, 4
        %v1963 = vrot.slane %v1961, 4
        %v1964 = vsel %vm1593, %v1962, %v1963
        %vm1965 = vcmask 850944
        %v1966 = vsel %vm1965, %v1959, %v1964
        %v1968 = vld [vmem:[#allocation3 + $0x18] sm:$0x66]
        %v1969 = vsel %vm1604, %v1966, %v1968
        %1970 = vst [vmem:[#allocation3 + $0x18] sm:$0x66] %v1969
        %v1971 = vld [vmem:[#allocation2] sm:$0x3f]
        %v1973 = vcombine.high %v1971, %v1971
        %v1975 = vunpack.c.l.s4 1983009808
        %v1976 = vunpack.c.0.s8 %v1975
        %v1977 = vlaneseq
        %v1978 = vshrl.u32 %v1977, 7
        %v1979 = vsub.s32 %v1976, %v1978
        %v1980 = vrot.slane %v1971, %v1979
        %v1982 = vunpack.c.l.s4 1983009808
        %v1983 = vunpack.c.0.s8 %v1982
        %v1984 = vlaneseq
        %v1985 = vshrl.u32 %v1984, 7
        %v1986 = vsub.s32 %v1983, %v1985
        %v1987 = vrot.slane %v1973, %v1986
        %v1988 = vrot.slane %v1980, 5
        %v1989 = vrot.slane %v1987, 5
        %v1990 = vrot.slane %v1988, 4
        %v1991 = vrot.slane %v1989, 4
        %1992 = vrot.lane.b32.xlu0 %v1988, 88
        %v1993 = vpop.permute.xlu0 %1992
        %1994 = vrot.lane.b32.xlu0 %v1989, 88
        %v1995 = vpop.permute.xlu0 %1994
        %1996 = vrot.lane.b32.xlu0 %v1990, 88
        %v1997 = vpop.permute.xlu0 %1996
        %1998 = vrot.lane.b32.xlu0 %v1991, 88
        %v1999 = vpop.permute.xlu0 %1998
        %v2000 = vrot.slane %v1993, 4
        %v2001 = vrot.slane %v1995, 4
        %v2002 = vrot.slane %v1997, 4
        %v2003 = vrot.slane %v1999, 4
        %v2004 = vsel %vm1593, %v2000, %v2001
        %vm2005 = vcmask 719872
        %v2006 = vsel %vm2005, %v1993, %v2004
        %v2007 = vsel %vm1593, %v2002, %v2003
        %v2008 = vsel %vm2005, %v1997, %v2007
        %2011 = vst [vmem:[#allocation3 + $0x18] sm:$0x88] %v2006
        %v2012 = vld [vmem:[#allocation3 + $0x20] sm:$0x11]
        %v2013 = vsel %vm1655, %v2008, %v2012
        %2014 = vst [vmem:[#allocation3 + $0x20] sm:$0x11] %v2013
        %v2015 = vld [vmem:[#allocation2] sm:$0x3f]
        %v2017 = vcombine.high %v2015, %v2015
        %v2019 = vunpack.c.l.s4 1983009808
        %v2020 = vunpack.c.0.s8 %v2019
        %v2021 = vlaneseq
        %v2022 = vshrl.u32 %v2021, 7
        %v2023 = vsub.s32 %v2020, %v2022
        %v2024 = vrot.slane %v2015, %v2023
        %v2026 = vunpack.c.l.s4 1983009808
        %v2027 = vunpack.c.0.s8 %v2026
        %v2028 = vlaneseq
        %v2029 = vshrl.u32 %v2028, 7
        %v2030 = vsub.s32 %v2027, %v2029
        %v2031 = vrot.slane %v2017, %v2030
        %v2033 = vshrl.u32 %v2024, 16
        %v2035 = vrot.slane %v2033, 7
        %v2036 = vshll.u32 %v2024, 16
        %v2038 = vor.u32 %v2035, %v2036
        %v2040 = vshrl.u32 %v2031, 16
        %v2042 = vrot.slane %v2040, 7
        %v2043 = vshll.u32 %v2031, 16
        %v2045 = vor.u32 %v2042, %v2043
        %2046 = vrot.lane.b32.xlu0 %v2038, 87
        %v2047 = vpop.permute.xlu0 %2046
        %2048 = vrot.lane.b32.xlu0 %v2045, 87
        %v2049 = vpop.permute.xlu0 %2048
        %v2050 = vrot.slane %v2047, 4
        %v2051 = vrot.slane %v2049, 4
        %v2052 = vsel %vm1593, %v2050, %v2051
        %vm2053 = vcmask 711680
        %v2054 = vsel %vm2053, %v2047, %v2052
        %v2056 = vld [vmem:[#allocation3 + $0x20] sm:$0x33]
        %v2057 = vsel %vm1704, %v2054, %v2056
        %2058 = vst [vmem:[#allocation3 + $0x20] sm:$0x33] %v2057
        %v2059 = vld [vmem:[#allocation2] sm:$0x3f]
        %v2061 = vcombine.low %v2059, %v2059
        %v2063 = vunpack.c.l.s4 1983009808
        %v2064 = vunpack.c.0.s8 %v2063
        %v2065 = vlaneseq
        %v2066 = vshrl.u32 %v2065, 7
        %v2067 = vsub.s32 %v2064, %v2066
        %v2068 = vrot.slane %v2061, %v2067
        %v2070 = vunpack.c.l.s4 1983009808
        %v2071 = vunpack.c.0.s8 %v2070
        %v2072 = vlaneseq
        %v2073 = vshrl.u32 %v2072, 7
        %v2074 = vsub.s32 %v2071, %v2073
        %v2075 = vrot.slane %v2059, %v2074
        %2076 = vrot.lane.b32.xlu0 %v2068, 86
        %v2077 = vpop.permute.xlu0 %2076
        %2078 = vrot.lane.b32.xlu0 %v2075, 86
        %v2079 = vpop.permute.xlu0 %2078
        %v2080 = vrot.slane %v2077, 4
        %v2081 = vrot.slane %v2079, 4
        %v2082 = vsel %vm1593, %v2080, %v2081
        %vm2083 = vcmask 703488
        %v2084 = vsel %vm2083, %v2077, %v2082
        %v2086 = vld [vmem:[#allocation3 + $0x20] sm:$0xcc]
        %v2087 = vsel %vm1738, %v2084, %v2086
        %2088 = vst [vmem:[#allocation3 + $0x20] sm:$0xcc] %v2087
        %v2089 = vld [vmem:[#allocation2] sm:$0x3f]
        %v2091 = vcombine.high %v2089, %v2089
        %v2093 = vunpack.c.l.s4 1983009808
        %v2094 = vunpack.c.0.s8 %v2093
        %v2095 = vlaneseq
        %v2096 = vshrl.u32 %v2095, 7
        %v2097 = vsub.s32 %v2094, %v2096
        %v2098 = vrot.slane %v2089, %v2097
        %v2100 = vunpack.c.l.s4 1983009808
        %v2101 = vunpack.c.0.s8 %v2100
        %v2102 = vlaneseq
        %v2103 = vshrl.u32 %v2102, 7
        %v2104 = vsub.s32 %v2101, %v2103
        %v2105 = vrot.slane %v2091, %v2104
        %v2107 = vshll.u32 %v2098, 16
        %v2109 = vrot.slane %v2107, 5
        %v2111 = vshll.u32 %v2105, 16
        %v2113 = vrot.slane %v2111, 5
        %v2114 = vshrl.u32 %v2098, 16
        %v2116 = vrot.slane %v2114, 4
        %v2117 = vor.u32 %v2116, %v2109
        %v2118 = vrot.slane %v2117, 4
        %v2119 = vshrl.u32 %v2105, 16
        %v2121 = vrot.slane %v2119, 4
        %v2122 = vor.u32 %v2121, %v2113
        %v2123 = vrot.slane %v2122, 4
        %2124 = vrot.lane.b32.xlu0 %v2109, 85
        %v2125 = vpop.permute.xlu0 %2124
        %2126 = vrot.lane.b32.xlu0 %v2113, 85
        %v2127 = vpop.permute.xlu0 %2126
        %2128 = vrot.lane.b32.xlu0 %v2118, 85
        %v2129 = vpop.permute.xlu0 %2128
        %2130 = vrot.lane.b32.xlu0 %v2123, 85
        %v2131 = vpop.permute.xlu0 %2130
        %v2132 = vrot.slane %v2125, 4
        %v2133 = vrot.slane %v2127, 4
        %v2134 = vrot.slane %v2129, 4
        %v2135 = vrot.slane %v2131, 4
        %v2136 = vsel %vm1593, %v2132, %v2133
        %vm2137 = vcmask 695296
        %v2138 = vsel %vm2137, %v2125, %v2136
        %v2139 = vsel %vm1593, %v2134, %v2135
        %v2140 = vsel %vm2137, %v2129, %v2139
        %v2143 = vld [vmem:[#allocation3 + $0x20] sm:$0x88]
        %v2144 = vsel %vm1802, %v2138, %v2143
        %2145 = vst [vmem:[#allocation3 + $0x20] sm:$0x88] %v2144
        %2146 = vst [vmem:[#allocation3 + $0x28] sm:$0x11] %v2140
        %v2147 = vld [vmem:[#allocation2] sm:$0x3f]
        %v2149 = vcombine.high %v2147, %v2147
        %v2151 = vunpack.c.l.s4 1983009808
        %v2152 = vunpack.c.0.s8 %v2151
        %v2153 = vlaneseq
        %v2154 = vshrl.u32 %v2153, 7
        %v2155 = vsub.s32 %v2152, %v2154
        %v2156 = vrot.slane %v2147, %v2155
        %v2158 = vunpack.c.l.s4 1983009808
        %v2159 = vunpack.c.0.s8 %v2158
        %v2160 = vlaneseq
        %v2161 = vshrl.u32 %v2160, 7
        %v2162 = vsub.s32 %v2159, %v2161
        %v2163 = vrot.slane %v2149, %v2162
        %v2164 = vrot.slane %v2156, 7
        %v2165 = vrot.slane %v2163, 7
        %2166 = vrot.lane.b32.xlu0 %v2164, 84
        %v2167 = vpop.permute.xlu0 %2166
        %2168 = vrot.lane.b32.xlu0 %v2165, 84
        %v2169 = vpop.permute.xlu0 %2168
        %v2170 = vrot.slane %v2167, 4
        %v2171 = vrot.slane %v2169, 4
        %v2172 = vsel %vm1593, %v2170, %v2171
        %vm2173 = vcmask 687104
        %v2174 = vsel %vm2173, %v2167, %v2172
        %v2176 = vld [vmem:[#allocation3 + $0x28] sm:$0x66]
        %v2177 = vsel %vm1840, %v2174, %v2176
        %2178 = vst [vmem:[#allocation3 + $0x28] sm:$0x66] %v2177
        %v2179 = vld [vmem:[#allocation2] sm:$0x3f]
        %v2181 = vcombine.high %v2179, %v2179
        %v2183 = vunpack.c.l.s4 1983009808
        %v2184 = vunpack.c.0.s8 %v2183
        %v2185 = vlaneseq
        %v2186 = vshrl.u32 %v2185, 7
        %v2187 = vsub.s32 %v2184, %v2186
        %v2188 = vrot.slane %v2179, %v2187
        %v2190 = vunpack.c.l.s4 1983009808
        %v2191 = vunpack.c.0.s8 %v2190
        %v2192 = vlaneseq
        %v2193 = vshrl.u32 %v2192, 7
        %v2194 = vsub.s32 %v2191, %v2193
        %v2195 = vrot.slane %v2181, %v2194
        %v2197 = vshrl.u32 %v2188, 16
        %v2199 = vrot.slane %v2197, 5
        %v2200 = vshll.u32 %v2188, 16
        %v2202 = vrot.slane %v2200, 6
        %v2203 = vor.u32 %v2199, %v2202
        %v2205 = vshrl.u32 %v2195, 16
        %v2207 = vrot.slane %v2205, 5
        %v2208 = vshll.u32 %v2195, 16
        %v2210 = vrot.slane %v2208, 6
        %v2211 = vor.u32 %v2207, %v2210
        %2212 = vrot.lane.b32.xlu0 %v2203, 68
        %v2213 = vpop.permute.xlu0 %2212
        %2214 = vrot.lane.b32.xlu0 %v2211, 68
        %v2215 = vpop.permute.xlu0 %2214
        %v2216 = vrot.slane %v2213, 4
        %v2217 = vrot.slane %v2215, 4
        %v2218 = vsel %vm1593, %v2216, %v2217
        %vm2219 = vcmask 556032
        %v2220 = vsel %vm2219, %v2213, %v2218
        %v2222 = vld [vmem:[#allocation3 + $0x28] sm:$0xcc]
        %v2223 = vsel %vm1891, %v2220, %v2222
        %2224 = vst [vmem:[#allocation3 + $0x28] sm:$0xcc] %v2223
        %v2225 = vld [vmem:[#allocation2] sm:$0x3f]
        %v2227 = vcombine.high %v2225, %v2225
        %v2229 = vunpack.c.l.s4 1983009808
        %v2230 = vunpack.c.0.s8 %v2229
        %v2231 = vlaneseq
        %v2232 = vshrl.u32 %v2231, 7
        %v2233 = vsub.s32 %v2230, %v2232
        %v2234 = vrot.slane %v2225, %v2233
        %v2236 = vunpack.c.l.s4 1983009808
        %v2237 = vunpack.c.0.s8 %v2236
        %v2238 = vlaneseq
        %v2239 = vshrl.u32 %v2238, 7
        %v2240 = vsub.s32 %v2237, %v2239
        %v2241 = vrot.slane %v2227, %v2240
        %2242 = vrot.lane.b32.xlu0 %v2234, 67
        %v2243 = vpop.permute.xlu0 %2242
        %2244 = vrot.lane.b32.xlu0 %v2241, 67
        %v2245 = vpop.permute.xlu0 %2244
        %v2246 = vrot.slane %v2243, 4
        %v2247 = vrot.slane %v2245, 4
        %v2248 = vsel %vm1593, %v2246, %v2247
        %vm2249 = vcmask 547840
        %v2250 = vsel %vm2249, %v2243, %v2248
        %v2252 = vld [vmem:[#allocation3 + $0x30] sm:$0x33]
        %v2253 = vsel %vm1550, %v2250, %v2252
        %2254 = vst [vmem:[#allocation3 + $0x30] sm:$0x33] %v2253
        %v2255 = vld [vmem:[#allocation2] sm:$0x3f]
        %v2257 = vcombine.high %v2255, %v2255
        %v2259 = vunpack.c.l.s4 1983009808
        %v2260 = vunpack.c.0.s8 %v2259
        %v2261 = vlaneseq
        %v2262 = vshrl.u32 %v2261, 7
        %v2263 = vsub.s32 %v2260, %v2262
        %v2264 = vrot.slane %v2255, %v2263
        %v2266 = vunpack.c.l.s4 1983009808
        %v2267 = vunpack.c.0.s8 %v2266
        %v2268 = vlaneseq
        %v2269 = vshrl.u32 %v2268, 7
        %v2270 = vsub.s32 %v2267, %v2269
        %v2271 = vrot.slane %v2257, %v2270
        %v2273 = vshrl.u32 %v2264, 16
        %v2275 = vrot.slane %v2273, 6
        %v2276 = vshll.u32 %v2264, 16
        %v2278 = vrot.slane %v2276, 7
        %v2279 = vor.u32 %v2275, %v2278
        %v2281 = vshrl.u32 %v2271, 16
        %v2283 = vrot.slane %v2281, 6
        %v2284 = vshll.u32 %v2271, 16
        %v2286 = vrot.slane %v2284, 7
        %v2287 = vor.u32 %v2283, %v2286
        %2288 = vrot.lane.b32.xlu0 %v2279, 66
        %v2289 = vpop.permute.xlu0 %2288
        %2290 = vrot.lane.b32.xlu0 %v2287, 66
        %v2291 = vpop.permute.xlu0 %2290
        %v2292 = vrot.slane %v2289, 4
        %v2293 = vrot.slane %v2291, 4
        %v2294 = vsel %vm1593, %v2292, %v2293
        %vm2295 = vcmask 539648
        %v2296 = vsel %vm2295, %v2289, %v2294
        %v2298 = vld [vmem:[#allocation3 + $0x30] sm:$0x66]
        %v2299 = vsel %vm1604, %v2296, %v2298
        %2300 = vst [vmem:[#allocation3 + $0x30] sm:$0x66] %v2299
        %v2301 = vld [vmem:[#allocation2] sm:$0x3f]
        %v2303 = vcombine.high %v2301, %v2301
        %v2305 = vunpack.c.l.s4 1983009808
        %v2306 = vunpack.c.0.s8 %v2305
        %v2307 = vlaneseq
        %v2308 = vshrl.u32 %v2307, 7
        %v2309 = vsub.s32 %v2306, %v2308
        %v2310 = vrot.slane %v2301, %v2309
        %v2312 = vunpack.c.l.s4 1983009808
        %v2313 = vunpack.c.0.s8 %v2312
        %v2314 = vlaneseq
        %v2315 = vshrl.u32 %v2314, 7
        %v2316 = vsub.s32 %v2313, %v2315
        %v2317 = vrot.slane %v2303, %v2316
        %v2318 = vrot.slane %v2310, 5
        %v2319 = vrot.slane %v2317, 5
        %v2320 = vrot.slane %v2318, 4
        %v2321 = vrot.slane %v2319, 4
        %2322 = vrot.lane.b32.xlu0 %v2318, 65
        %v2323 = vpop.permute.xlu0 %2322
        %2324 = vrot.lane.b32.xlu0 %v2319, 65
        %v2325 = vpop.permute.xlu0 %2324
        %2326 = vrot.lane.b32.xlu0 %v2320, 65
        %v2327 = vpop.permute.xlu0 %2326
        %2328 = vrot.lane.b32.xlu0 %v2321, 65
        %v2329 = vpop.permute.xlu0 %2328
        %v2330 = vrot.slane %v2323, 4
        %v2331 = vrot.slane %v2325, 4
        %v2332 = vrot.slane %v2327, 4
        %v2333 = vrot.slane %v2329, 4
        %v2334 = vsel %vm1593, %v2330, %v2331
        %vm2335 = vcmask 531456
        %v2336 = vsel %vm2335, %v2323, %v2334
        %v2337 = vsel %vm1593, %v2332, %v2333
        %v2338 = vsel %vm2335, %v2327, %v2337
        %2341 = vst [vmem:[#allocation3 + $0x30] sm:$0x88] %v2336
        %v2342 = vld [vmem:[#allocation3 + $0x38] sm:$0x11]
        %v2343 = vsel %vm1655, %v2338, %v2342
        %2344 = vst [vmem:[#allocation3 + $0x38] sm:$0x11] %v2343
        %v2345 = vld [vmem:[#allocation2] sm:$0x3f]
        %v2347 = vcombine.high %v2345, %v2345
        %v2349 = vunpack.c.l.s4 1983009808
        %v2350 = vunpack.c.0.s8 %v2349
        %v2351 = vlaneseq
        %v2352 = vshrl.u32 %v2351, 7
        %v2353 = vsub.s32 %v2350, %v2352
        %v2354 = vrot.slane %v2345, %v2353
        %v2356 = vunpack.c.l.s4 1983009808
        %v2357 = vunpack.c.0.s8 %v2356
        %v2358 = vlaneseq
        %v2359 = vshrl.u32 %v2358, 7
        %v2360 = vsub.s32 %v2357, %v2359
        %v2361 = vrot.slane %v2347, %v2360
        %v2363 = vshrl.u32 %v2354, 16
        %v2365 = vrot.slane %v2363, 7
        %v2366 = vshll.u32 %v2354, 16
        %v2368 = vor.u32 %v2365, %v2366
        %v2370 = vshrl.u32 %v2361, 16
        %v2372 = vrot.slane %v2370, 7
        %v2373 = vshll.u32 %v2361, 16
        %v2375 = vor.u32 %v2372, %v2373
        %2376 = vrot.lane.b32.xlu0 %v2368, 64
        %v2377 = vpop.permute.xlu0 %2376
        %2378 = vrot.lane.b32.xlu0 %v2375, 64
        %v2379 = vpop.permute.xlu0 %2378
        %v2380 = vrot.slane %v2377, 4
        %v2381 = vrot.slane %v2379, 4
        %v2382 = vsel %vm1593, %v2380, %v2381
        %vm2383 = vcmask 523264
        %v2384 = vsel %vm2383, %v2377, %v2382
        %v2386 = vld [vmem:[#allocation3 + $0x38] sm:$0x33]
        %v2387 = vsel %vm1704, %v2384, %v2386
        %2388 = vst [vmem:[#allocation3 + $0x38] sm:$0x33] %v2387
        %v2389 = vld [vmem:[#allocation2] sm:$0x3f]
        %v2391 = vcombine.low %v2389, %v2389
        %v2393 = vunpack.c.l.s4 1983009808
        %v2394 = vunpack.c.0.s8 %v2393
        %v2395 = vlaneseq
        %v2396 = vshrl.u32 %v2395, 7
        %v2397 = vsub.s32 %v2394, %v2396
        %v2398 = vrot.slane %v2391, %v2397
        %v2400 = vunpack.c.l.s4 1983009808
        %v2401 = vunpack.c.0.s8 %v2400
        %v2402 = vlaneseq
        %v2403 = vshrl.u32 %v2402, 7
        %v2404 = vsub.s32 %v2401, %v2403
        %v2405 = vrot.slane %v2389, %v2404
        %2406 = vrot.lane.b32.xlu0 %v2398, 48
        %v2407 = vpop.permute.xlu0 %2406
        %2408 = vrot.lane.b32.xlu0 %v2405, 48
        %v2409 = vpop.permute.xlu0 %2408
        %v2410 = vrot.slane %v2407, 4
        %v2411 = vrot.slane %v2409, 4
        %v2412 = vsel %vm1593, %v2410, %v2411
        %vm2413 = vcmask 392192
        %v2414 = vsel %vm2413, %v2407, %v2412
        %v2416 = vld [vmem:[#allocation3 + $0x38] sm:$0xcc]
        %v2417 = vsel %vm1738, %v2414, %v2416
        %2418 = vst [vmem:[#allocation3 + $0x38] sm:$0xcc] %v2417
        %v2419 = vld [vmem:[#allocation2] sm:$0x3f]
        %v2421 = vcombine.high %v2419, %v2419
        %v2423 = vunpack.c.l.s4 1983009808
        %v2424 = vunpack.c.0.s8 %v2423
        %v2425 = vlaneseq
        %v2426 = vshrl.u32 %v2425, 7
        %v2427 = vsub.s32 %v2424, %v2426
        %v2428 = vrot.slane %v2419, %v2427
        %v2430 = vunpack.c.l.s4 1983009808
        %v2431 = vunpack.c.0.s8 %v2430
        %v2432 = vlaneseq
        %v2433 = vshrl.u32 %v2432, 7
        %v2434 = vsub.s32 %v2431, %v2433
        %v2435 = vrot.slane %v2421, %v2434
        %v2437 = vshll.u32 %v2428, 16
        %v2439 = vrot.slane %v2437, 5
        %v2441 = vshll.u32 %v2435, 16
        %v2443 = vrot.slane %v2441, 5
        %v2444 = vshrl.u32 %v2428, 16
        %v2446 = vrot.slane %v2444, 4
        %v2447 = vor.u32 %v2446, %v2439
        %v2448 = vrot.slane %v2447, 4
        %v2449 = vshrl.u32 %v2435, 16
        %v2451 = vrot.slane %v2449, 4
        %v2452 = vor.u32 %v2451, %v2443
        %v2453 = vrot.slane %v2452, 4
        %2454 = vrot.lane.b32.xlu0 %v2439, 47
        %v2455 = vpop.permute.xlu0 %2454
        %2456 = vrot.lane.b32.xlu0 %v2443, 47
        %v2457 = vpop.permute.xlu0 %2456
        %2458 = vrot.lane.b32.xlu0 %v2448, 47
        %v2459 = vpop.permute.xlu0 %2458
        %2460 = vrot.lane.b32.xlu0 %v2453, 47
        %v2461 = vpop.permute.xlu0 %2460
        %v2462 = vrot.slane %v2455, 4
        %v2463 = vrot.slane %v2457, 4
        %v2464 = vrot.slane %v2459, 4
        %v2465 = vrot.slane %v2461, 4
        %v2466 = vsel %vm1593, %v2462, %v2463
        %vm2467 = vcmask 384000
        %v2468 = vsel %vm2467, %v2455, %v2466
        %v2469 = vsel %vm1593, %v2464, %v2465
        %v2470 = vsel %vm2467, %v2459, %v2469
        %v2473 = vld [vmem:[#allocation3 + $0x38] sm:$0x88]
        %v2474 = vsel %vm1802, %v2468, %v2473
        %2475 = vst [vmem:[#allocation3 + $0x38] sm:$0x88] %v2474
        %2476 = vst [vmem:[#allocation3 + $0x40] sm:$0x11] %v2470
        %v2477 = vld [vmem:[#allocation2] sm:$0x3f]
        %v2479 = vcombine.high %v2477, %v2477
        %v2481 = vunpack.c.l.s4 1983009808
        %v2482 = vunpack.c.0.s8 %v2481
        %v2483 = vlaneseq
        %v2484 = vshrl.u32 %v2483, 7
        %v2485 = vsub.s32 %v2482, %v2484
        %v2486 = vrot.slane %v2477, %v2485
        %v2488 = vunpack.c.l.s4 1983009808
        %v2489 = vunpack.c.0.s8 %v2488
        %v2490 = vlaneseq
        %v2491 = vshrl.u32 %v2490, 7
        %v2492 = vsub.s32 %v2489, %v2491
        %v2493 = vrot.slane %v2479, %v2492
        %v2494 = vrot.slane %v2486, 7
        %v2495 = vrot.slane %v2493, 7
        %2496 = vrot.lane.b32.xlu0 %v2494, 46
        %v2497 = vpop.permute.xlu0 %2496
        %2498 = vrot.lane.b32.xlu0 %v2495, 46
        %v2499 = vpop.permute.xlu0 %2498
        %v2500 = vrot.slane %v2497, 4
        %v2501 = vrot.slane %v2499, 4
        %v2502 = vsel %vm1593, %v2500, %v2501
        %vm2503 = vcmask 375808
        %v2504 = vsel %vm2503, %v2497, %v2502
        %v2506 = vld [vmem:[#allocation3 + $0x40] sm:$0x66]
        %v2507 = vsel %vm1840, %v2504, %v2506
        %2508 = vst [vmem:[#allocation3 + $0x40] sm:$0x66] %v2507
        %v2509 = vld [vmem:[#allocation2] sm:$0x3f]
        %v2511 = vcombine.high %v2509, %v2509
        %v2513 = vunpack.c.l.s4 1983009808
        %v2514 = vunpack.c.0.s8 %v2513
        %v2515 = vlaneseq
        %v2516 = vshrl.u32 %v2515, 7
        %v2517 = vsub.s32 %v2514, %v2516
        %v2518 = vrot.slane %v2509, %v2517
        %v2520 = vunpack.c.l.s4 1983009808
        %v2521 = vunpack.c.0.s8 %v2520
        %v2522 = vlaneseq
        %v2523 = vshrl.u32 %v2522, 7
        %v2524 = vsub.s32 %v2521, %v2523
        %v2525 = vrot.slane %v2511, %v2524
        %v2527 = vshrl.u32 %v2518, 16
        %v2529 = vrot.slane %v2527, 5
        %v2530 = vshll.u32 %v2518, 16
        %v2532 = vrot.slane %v2530, 6
        %v2533 = vor.u32 %v2529, %v2532
        %v2535 = vshrl.u32 %v2525, 16
        %v2537 = vrot.slane %v2535, 5
        %v2538 = vshll.u32 %v2525, 16
        %v2540 = vrot.slane %v2538, 6
        %v2541 = vor.u32 %v2537, %v2540
        %2542 = vrot.lane.b32.xlu0 %v2533, 45
        %v2543 = vpop.permute.xlu0 %2542
        %2544 = vrot.lane.b32.xlu0 %v2541, 45
        %v2545 = vpop.permute.xlu0 %2544
        %v2546 = vrot.slane %v2543, 4
        %v2547 = vrot.slane %v2545, 4
        %v2548 = vsel %vm1593, %v2546, %v2547
        %vm2549 = vcmask 367616
        %v2550 = vsel %vm2549, %v2543, %v2548
        %v2552 = vld [vmem:[#allocation3 + $0x40] sm:$0xcc]
        %v2553 = vsel %vm1891, %v2550, %v2552
        %2554 = vst [vmem:[#allocation3 + $0x40] sm:$0xcc] %v2553
        %v2555 = vld [vmem:[#allocation2] sm:$0x3f]
        %v2557 = vcombine.high %v2555, %v2555
        %v2559 = vunpack.c.l.s4 1983009808
        %v2560 = vunpack.c.0.s8 %v2559
        %v2561 = vlaneseq
        %v2562 = vshrl.u32 %v2561, 7
        %v2563 = vsub.s32 %v2560, %v2562
        %v2564 = vrot.slane %v2555, %v2563
        %v2566 = vunpack.c.l.s4 1983009808
        %v2567 = vunpack.c.0.s8 %v2566
        %v2568 = vlaneseq
        %v2569 = vshrl.u32 %v2568, 7
        %v2570 = vsub.s32 %v2567, %v2569
        %v2571 = vrot.slane %v2557, %v2570
        %2572 = vrot.lane.b32.xlu0 %v2564, 44
        %v2573 = vpop.permute.xlu0 %2572
        %2574 = vrot.lane.b32.xlu0 %v2571, 44
        %v2575 = vpop.permute.xlu0 %2574
        %v2576 = vrot.slane %v2573, 4
        %v2577 = vrot.slane %v2575, 4
        %v2578 = vsel %vm1593, %v2576, %v2577
        %vm2579 = vcmask 359424
        %v2580 = vsel %vm2579, %v2573, %v2578
        %v2582 = vld [vmem:[#allocation3 + $0x48] sm:$0x33]
        %v2583 = vsel %vm1550, %v2580, %v2582
        %2584 = vst [vmem:[#allocation3 + $0x48] sm:$0x33] %v2583
        %v2585 = vld [vmem:[%s4] sm:$0xf]
        %v2586 = vld [vmem:[%s4 + $0x4] sm:$0xf]
        %v2587 = vld [vmem:[#allocation3] sm:$0xff]
        %v2588 = vld [vmem:[#allocation3 + $0x8] sm:$0xff]
        %v2589 = vld [vmem:[#allocation3 + $0x10] sm:$0xff]
        %v2590 = vld [vmem:[#allocation3 + $0x18] sm:$0xff]
        %v2591 = vld [vmem:[#allocation3 + $0x20] sm:$0xff]
        %v2592 = vld [vmem:[#allocation3 + $0x28] sm:$0xff]
        %v2593 = vld [vmem:[#allocation3 + $0x30] sm:$0xff]
        %v2594 = vld [vmem:[#allocation3 + $0x38] sm:$0xff]
        %v2595 = vld [vmem:[#allocation3 + $0x40] sm:$0xff]
        %v2596 = vld [vmem:[#allocation3 + $0x48] sm:$0x33]
        %v2597 = vld [vmem:[%s5] sm:$0xff]
        %v2598 = vld [vmem:[%s5 + $0x8] sm:$0xff]
        %2600 = vset.pattern.permute.xlu0 0
        %2601 = vperm.xlu0 %2600, %v2597
        %v2602 = vpop.permute.xlu0 %2601
        %2605 = vset.pattern.permute.xlu0 0
        %2606 = vperm.xlu0 %2605, %v2598
        %v2607 = vpop.permute.xlu0 %2606
        %v2611 = vunpack.c.l.b16 %v2585
        %v2612 = vunpack.c.l.b16 %v2586
        %v2613 = vpack.c.b16 %v2612, %v2611
        %v2624 = vunpack.c.l.b16 %v2587
        %v2625 = vunpack.c.h.b16 %v2587
        %v2626 = vunpack.c.l.b16 %v2588
        %v2627 = vunpack.c.h.b16 %v2588
        %v2628 = vunpack.c.l.b16 %v2589
        %v2629 = vunpack.c.h.b16 %v2589
        %v2630 = vunpack.c.l.b16 %v2590
        %v2631 = vunpack.c.h.b16 %v2590
        %v2632 = vunpack.c.l.b16 %v2591
        %v2633 = vunpack.c.h.b16 %v2591
        %v2634 = vunpack.c.l.b16 %v2592
        %v2635 = vunpack.c.h.b16 %v2592
        %v2636 = vunpack.c.l.b16 %v2593
        %v2637 = vunpack.c.h.b16 %v2593
        %v2638 = vunpack.c.l.b16 %v2594
        %v2639 = vunpack.c.h.b16 %v2594
        %v2640 = vunpack.c.l.b16 %v2595
        %v2641 = vunpack.c.h.b16 %v2595
        %v2642 = vunpack.c.l.b16 %v2596
        %v2643 = vunpack.c.h.b16 %v2596
        %v2644 = vpack.c.b16 %v2626, %v2624
        %v2645 = vpack.c.b16 %v2627, %v2625
        %v2646 = vpack.c.b16 %v2630, %v2628
        %v2647 = vpack.c.b16 %v2631, %v2629
        %v2648 = vpack.c.b16 %v2634, %v2632
        %v2649 = vpack.c.b16 %v2635, %v2633
        %v2650 = vpack.c.b16 %v2638, %v2636
        %v2651 = vpack.c.b16 %v2639, %v2637
        %v2652 = vpack.c.b16 %v2642, %v2640
        %v2653 = vpack.c.b16 %v2643, %v2641
        %vm2662 = vcmask 613376
        %v2664 = vsel %vm2662, %v2613, 0
        %vm2666 = vcmask 1044480
        %vm2667 = vcmask 1045504
        %v2668 = vsel %vm2666, 4294967295, 65535
        %v2669 = vsel %vm2667, %v2668, 0
        %v2671 = vand.u32 %v2652, %v2669
        %v2674 = vand.u32 %v2653, %v2669
        %2676 = vmatprep.subr.bf16.mxu0 %v2645
        %2677 = vmatpush1.bf16.msra.mxu0 %v2644
        %2678 = vmatprep.subr.bf16.mxu0 %v2647
        %2679 = vmatpush1.bf16.msra.mxu0 %v2646
        %2680 = vmatprep.subr.bf16.mxu0 %v2649
        %2681 = vmatpush1.bf16.msra.mxu0 %v2648
        %2682 = vmatprep.subr.bf16.mxu0 %v2651
        %2683 = vmatpush1.bf16.msra.mxu0 %v2650
        %2684 = vmatprep.subr.bf16.mxu0 %v2674
        %2685 = vmatpush1.bf16.msra.mxu0 %v2671
        %2686 = vmatprep.subr.bf16.mxu0 0
        %2687 = vmatpush1.bf16.msra.mxu0 0
        %2688 = vmatprep.subr.bf16.mxu0 0
        %2689 = vmatpush1.bf16.msra.mxu0 0
        %2690 = vmatprep.subr.bf16.mxu0 0
        %2691 = vmatpush1.bf16.msra.mxu0 0
        %2692 = vmatprep.subr.bf16.mxu0 0
        %2693 = vmatpush1.bf16.msra.mxu0 0
        %2694 = vmatprep.subr.bf16.mxu0 0
        %2695 = vmatpush1.bf16.msra.mxu0 0
        %2696 = vmatprep.subr.bf16.mxu0 0
        %2697 = vmatpush1.bf16.msra.mxu0 0
        %2698 = vmatprep.subr.bf16.mxu0 0
        %2699 = vmatpush1.bf16.msra.mxu0 0
        %2700 = vmatprep.subr.bf16.mxu0 0
        %2701 = vmatpush1.bf16.msra.mxu0 0
        %2702 = vmatprep.subr.bf16.mxu0 0
        %2703 = vmatpush1.bf16.msra.mxu0 0
        %2704 = vmatprep.subr.bf16.mxu0 0
        %2705 = vmatpush1.bf16.msra.mxu0 0
        %2706 = vmatprep.subr.bf16.mxu0 0
        %2707 = vmatpush1.bf16.msra.mxu0 0
        %2708 = vmatprep.mubr.bf16.mxu0 0
        %2709 = vmatmul.mubr.bf16.gmra.mrb[0].mxu0 %v2664
        %v2710 = vpop.f32.mrb[0].mxu0
        %v2711 = vadd.f32 %v2602, %v2710
        %v2712 = vpop.f32.mrb[0].mxu0
        %v2713 = vadd.f32 %v2602, %v2712
        %v2714 = vpop.f32.mrb[0].mxu0
        %v2715 = vadd.f32 %v2607, %v2714
        %v2716 = vpop.f32.mrb[0].mxu0
        %v2717 = vadd.f32 %v2607, %v2716
        %2718 = vdwg.mxu0
        %vm2719 = vcmp.ge.f32.partialorder %v2711, 0.0
        %vm2720 = vcmp.ge.f32.partialorder %v2713, 0.0
        %vm2721 = vcmp.ge.f32.partialorder %v2715, 0.0
        %vm2722 = vcmp.ge.f32.partialorder %v2717, 0.0
        %s2723 = sld [smem:[#allocation4]]
        %s2724 = sld [smem:[#allocation4 + $0x1]]
        %v2725 = vstv %s2723
        %v2726 = vstv %s2724
        %v2727 = vsel %vm2719, %v2725, %v2726
        %v2728 = vsel %vm2720, %v2725, %v2726
        %v2729 = vsel %vm2721, %v2725, %v2726
        %v2730 = vsel %vm2722, %v2725, %v2726
        %v2731 = vmul.f32 %v2711, %v2727
        %v2732 = vmul.f32 %v2713, %v2728
        %v2733 = vmul.f32 %v2715, %v2729
        %v2734 = vmul.f32 %v2717, %v2730
        %v2735 = vld [vmem:[#allocation10] sm:$0xff]
        %v2736 = vld [vmem:[%s7] sm:$0xff]
        %2738 = vset.pattern.permute.xlu0 0
        %2739 = vperm.xlu0 %2738, %v2736
        %v2740 = vpop.permute.xlu0 %2739
        %vm2742 = vcmask 130048
        %v2744 = vsel %vm2742, %v2735, 0
        %2746 = vmatprep.subr.mxu0 %v2732
        %2747 = vmatpush1.msra.mxu0 %v2731
        %2748 = vmatprep.subr.mxu0 %v2734
        %2749 = vmatpush1.msra.mxu0 %v2733
        %2750 = vmatprep.subr.mxu0 0.0
        %2751 = vmatpush1.msra.mxu0 0.0
        %2752 = vmatprep.subr.mxu0 0.0
        %2753 = vmatpush1.msra.mxu0 0.0
        %2754 = vmatprep.subr.mxu0 0.0
        %2755 = vmatpush1.msra.mxu0 0.0
        %2756 = vmatprep.subr.mxu0 0.0
        %2757 = vmatpush1.msra.mxu0 0.0
        %2758 = vmatprep.subr.mxu0 0.0
        %2759 = vmatpush1.msra.mxu0 0.0
        %2760 = vmatprep.subr.mxu0 0.0
        %2761 = vmatpush1.msra.mxu0 0.0
        %2762 = vmatprep.subr.mxu0 0.0
        %2763 = vmatpush1.msra.mxu0 0.0
        %2764 = vmatprep.subr.mxu0 0.0
        %2765 = vmatpush1.msra.mxu0 0.0
        %2766 = vmatprep.subr.mxu0 0.0
        %2767 = vmatpush1.msra.mxu0 0.0
        %2768 = vmatprep.subr.mxu0 0.0
        %2769 = vmatpush1.msra.mxu0 0.0
        %2770 = vmatprep.subr.mxu0 0.0
        %2771 = vmatpush1.msra.mxu0 0.0
        %2772 = vmatprep.subr.mxu0 0.0
        %2773 = vmatpush1.msra.mxu0 0.0
        %2774 = vmatprep.subr.mxu0 0.0
        %2775 = vmatpush1.msra.mxu0 0.0
        %2776 = vmatprep.subr.mxu0 0.0
        %2777 = vmatpush1.msra.mxu0 0.0
        %2778 = vmatprep.subr.mxu0 0.0
        %2779 = vmatpush1.msra.mxu0 0.0
        %2780 = vmatprep.subr.mxu0 0.0
        %2781 = vmatpush1.msra.mxu0 0.0
        %2782 = vmatprep.subr.mxu0 0.0
        %2783 = vmatpush1.msra.mxu0 0.0
        %2784 = vmatprep.subr.mxu0 0.0
        %2785 = vmatpush1.msra.mxu0 0.0
        %2786 = vmatprep.subr.mxu0 0.0
        %2787 = vmatpush1.msra.mxu0 0.0
        %2788 = vmatprep.subr.mxu0 0.0
        %2789 = vmatpush1.msra.mxu0 0.0
        %2790 = vmatprep.subr.mxu0 0.0
        %2791 = vmatpush1.msra.mxu0 0.0
        %2792 = vmatprep.subr.mxu0 0.0
        %2793 = vmatpush1.msra.mxu0 0.0
        %2794 = vmatprep.subr.mxu0 0.0
        %2795 = vmatpush1.msra.mxu0 0.0
        %2796 = vmatprep.subr.mxu0 0.0
        %2797 = vmatpush1.msra.mxu0 0.0
        %2798 = vmatprep.subr.mxu0 0.0
        %2799 = vmatpush1.msra.mxu0 0.0
        %2800 = vmatprep.subr.mxu0 0.0
        %2801 = vmatpush1.msra.mxu0 0.0
        %2802 = vmatprep.subr.mxu0 0.0
        %2803 = vmatpush1.msra.mxu0 0.0
        %2804 = vmatprep.subr.mxu0 0.0
        %2805 = vmatpush1.msra.mxu0 0.0
        %2806 = vmatprep.subr.mxu0 0.0
        %2807 = vmatpush1.msra.mxu0 0.0
        %2808 = vmatprep.subr.mxu0 0.0
        %2809 = vmatpush1.msra.mxu0 0.0
        %2810 = vmatprep.mubr.f32.mxu0 0.0
        %2811 = vmatmul.mubr.f32.gmra.mrb[0].mxu0 %v2744
        %v2812 = vpop.f32.mrb[0].mxu0
        %v2813 = vadd.f32 %v2740, %v2812
        %v2814 = vpop.f32.mrb[0].mxu0
        %v2815 = vadd.f32 %v2740, %v2814
        %2816 = vdwg.mxu0
        %vm2817 = vcmp.ge.f32.partialorder %v2813, 0.0
        %vm2818 = vcmp.ge.f32.partialorder %v2815, 0.0
        %s2819 = sld [smem:[#allocation4 + $0x80]]
        %s2820 = sld [smem:[#allocation4 + $0x81]]
        %v2821 = vstv %s2819
        %v2822 = vstv %s2820
        %v2823 = vsel %vm2817, %v2821, %v2822
        %v2824 = vsel %vm2818, %v2821, %v2822
        %v2825 = vmul.f32 %v2813, %v2823
        %v2826 = vmul.f32 %v2815, %v2824
        %v2827 = vld [vmem:[%s8] sm:$0xff]
        %v2828 = vld [vmem:[%s8 + $0x8] sm:$0xff]
        %v2829 = vld [vmem:[%s9] sm:$0xff]
        %v2830 = vld [vmem:[%s9 + $0x8] sm:$0xff]
        %2832 = vset.pattern.permute.xlu0 0
        %2833 = vperm.xlu0 %2832, %v2829
        %v2834 = vpop.permute.xlu0 %2833
        %2837 = vset.pattern.permute.xlu0 0
        %2838 = vperm.xlu0 %2837, %v2830
        %v2839 = vpop.permute.xlu0 %2838
        %vm2841 = vcmask 64512
        %v2843 = vsel %vm2841, %v2827, 0
        %v2846 = vsel %vm2841, %v2828, 0
        %2848 = vmatprep.subr.mxu0 %v2826
        %2849 = vmatpush1.msra.mxu0 %v2825
        %2850 = vmatprep.subr.mxu0 0.0
        %2851 = vmatpush1.msra.mxu0 0.0
        %2852 = vmatprep.subr.mxu0 0.0
        %2853 = vmatpush1.msra.mxu0 0.0
        %2854 = vmatprep.subr.mxu0 0.0
        %2855 = vmatpush1.msra.mxu0 0.0
        %2856 = vmatprep.subr.mxu0 0.0
        %2857 = vmatpush1.msra.mxu0 0.0
        %2858 = vmatprep.subr.mxu0 0.0
        %2859 = vmatpush1.msra.mxu0 0.0
        %2860 = vmatprep.subr.mxu0 0.0
        %2861 = vmatpush1.msra.mxu0 0.0
        %2862 = vmatprep.subr.mxu0 0.0
        %2863 = vmatpush1.msra.mxu0 0.0
        %2864 = vmatprep.subr.mxu0 0.0
        %2865 = vmatpush1.msra.mxu0 0.0
        %2866 = vmatprep.subr.mxu0 0.0
        %2867 = vmatpush1.msra.mxu0 0.0
        %2868 = vmatprep.subr.mxu0 0.0
        %2869 = vmatpush1.msra.mxu0 0.0
        %2870 = vmatprep.subr.mxu0 0.0
        %2871 = vmatpush1.msra.mxu0 0.0
        %2872 = vmatprep.subr.mxu0 0.0
        %2873 = vmatpush1.msra.mxu0 0.0
        %2874 = vmatprep.subr.mxu0 0.0
        %2875 = vmatpush1.msra.mxu0 0.0
        %2876 = vmatprep.subr.mxu0 0.0
        %2877 = vmatpush1.msra.mxu0 0.0
        %2878 = vmatprep.subr.mxu0 0.0
        %2879 = vmatpush1.msra.mxu0 0.0
        %2880 = vmatprep.subr.mxu0 0.0
        %2881 = vmatpush1.msra.mxu0 0.0
        %2882 = vmatprep.subr.mxu0 0.0
        %2883 = vmatpush1.msra.mxu0 0.0
        %2884 = vmatprep.subr.mxu0 0.0
        %2885 = vmatpush1.msra.mxu0 0.0
        %2886 = vmatprep.subr.mxu0 0.0
        %2887 = vmatpush1.msra.mxu0 0.0
        %2888 = vmatprep.subr.mxu0 0.0
        %2889 = vmatpush1.msra.mxu0 0.0
        %2890 = vmatprep.subr.mxu0 0.0
        %2891 = vmatpush1.msra.mxu0 0.0
        %2892 = vmatprep.subr.mxu0 0.0
        %2893 = vmatpush1.msra.mxu0 0.0
        %2894 = vmatprep.subr.mxu0 0.0
        %2895 = vmatpush1.msra.mxu0 0.0
        %2896 = vmatprep.subr.mxu0 0.0
        %2897 = vmatpush1.msra.mxu0 0.0
        %2898 = vmatprep.subr.mxu0 0.0
        %2899 = vmatpush1.msra.mxu0 0.0
        %2900 = vmatprep.subr.mxu0 0.0
        %2901 = vmatpush1.msra.mxu0 0.0
        %2902 = vmatprep.subr.mxu0 0.0
        %2903 = vmatpush1.msra.mxu0 0.0
        %2904 = vmatprep.subr.mxu0 0.0
        %2905 = vmatpush1.msra.mxu0 0.0
        %2906 = vmatprep.subr.mxu0 0.0
        %2907 = vmatpush1.msra.mxu0 0.0
        %2908 = vmatprep.subr.mxu0 0.0
        %2909 = vmatpush1.msra.mxu0 0.0
        %2910 = vmatprep.subr.mxu0 0.0
        %2911 = vmatpush1.msra.mxu0 0.0
        %2912 = vmatprep.mubr.f32.mxu0 0.0
        %2913 = vmatmul.mubr.f32.gmra.mrb[0].mxu0 %v2843
        %v2914 = vpop.f32.mrb[0].mxu0
        %v2915 = vadd.f32 %v2834, %v2914
        %v2916 = vpop.f32.mrb[0].mxu0
        %v2917 = vadd.f32 %v2834, %v2916
        %2918 = vmatprep.mubr.f32.mxu0 0.0
        %2919 = vmatmul.mubr.f32.gmra.mrb[0].mxu0 %v2846
        %v2920 = vpop.f32.mrb[0].mxu0
        %v2921 = vadd.f32 %v2839, %v2920
        %v2922 = vpop.f32.mrb[0].mxu0
        %v2923 = vadd.f32 %v2839, %v2922
        %2924 = vdwg.mxu0
        %vm2925 = vcmp.ge.f32.partialorder %v2915, 0.0
        %vm2926 = vcmp.ge.f32.partialorder %v2917, 0.0
        %vm2927 = vcmp.ge.f32.partialorder %v2921, 0.0
        %vm2928 = vcmp.ge.f32.partialorder %v2923, 0.0
        %s2929 = sld [smem:[#allocation4 + $0x100]]
        %s2930 = sld [smem:[#allocation4 + $0x101]]
        %v2931 = vstv %s2929
        %v2932 = vstv %s2930
        %v2933 = vsel %vm2925, %v2931, %v2932
        %v2934 = vsel %vm2926, %v2931, %v2932
        %v2935 = vsel %vm2927, %v2931, %v2932
        %v2936 = vsel %vm2928, %v2931, %v2932
        %v2937 = vmul.f32 %v2915, %v2933
        %v2938 = vmul.f32 %v2917, %v2934
        %v2939 = vmul.f32 %v2921, %v2935
        %v2940 = vmul.f32 %v2923, %v2936
        %v2941 = vpack.c.bf16 %v2939, %v2937
        %v2942 = vpack.c.bf16 %v2940, %v2938
        %v2945 = vunpack.c.l.b16 %v2941
        %v2946 = vunpack.c.l.b16 %v2942
        %v2947 = vunpack.c.h.b16 %v2941
        %v2948 = vunpack.c.h.b16 %v2942
        %v2949 = vpack.c.b16 %v2946, %v2945
        %v2950 = vpack.c.b16 %v2948, %v2947
        %2953 = vst [vmem:[%s631] sm:$0xff] %v2949
        %2954 = vst [vmem:[%s631 + $0x8] sm:$0xff] %v2950
        %p2955 = scmp.lt.s32.totalorder %s27, 1
        %s2956 = scalar_select %p2955, %s27, 1
        %p2957 = scmp.lt.s32.totalorder %s28, 1
        %s2958 = scalar_select %p2957, %s28, 1
        %s2959 = smul.addr %s2958, 4
        %s2960 = smul.addr %s2956, 8
        %s2961 = sadd.s32 %s2959, %s2960
        %s2962 = smul.addr %s2961, 4
        %s2963 = scalar_lea.vmem %s10, %s2962
        // Predicated region
        $region200: #{fsrcnn_forward_pallas.3} parent=170 // pred_check
          %p2964 = pneg %p298
        $region201: #{fsrcnn_forward_pallas.3} parent=170 // pred_check_branch
          %2966 = sbr.rel (%p2964) target = $region203
        $region202: #{fsrcnn_forward_pallas.3} parent=170 // pred_region
          _
        $region203: #{fsrcnn_forward_pallas.3} parent=170 // pred_fallthru
          _
      $region171: #{fsrcnn_forward_pallas.3} parent=5 // pred_fallthru
        _
      %p2967 = scmp.le.s32.totalorder 2, %s18
      // Predicated region
      $region204: #{fsrcnn_forward_pallas.3} parent=5 // pred_check
        %p2968 = pneg %p2967
      $region205: #{fsrcnn_forward_pallas.3} parent=5 // pred_check_branch
        %2970 = sbr.rel (%p2968) target = $region207
      $region206: #{fsrcnn_forward_pallas.3} parent=5 // pred_region
        %s2971 = ssub.s32 %s18, 2
        // Predicated region
        $region208: #{fsrcnn_forward_pallas.3} parent=206 // pred_check
          %p2972 = pneg %p304
        $region209: #{fsrcnn_forward_pallas.3} parent=206 // pred_check_branch
          %2974 = sbr.rel (%p2972) target = $region211
        $region210: #{fsrcnn_forward_pallas.3} parent=206 // pred_region
          %p2975 = scmp.lt.s32.totalorder %s29, 1
          %s2976 = scalar_select %p2975, %s29, 1
          %p2977 = scmp.lt.s32.totalorder %s30, 1
          %s2978 = scalar_select %p2977, %s30, 1
          %s2979 = smul.addr %s2978, 4
          %s2980 = smul.addr %s2976, 8
          %s2981 = sadd.s32 %s2979, %s2980
          %s2982 = smul.addr %s2981, 4
          %s2983 = scalar_lea.vmem %s10, %s2982
        $region211: #{fsrcnn_forward_pallas.3} parent=206 // pred_fallthru
          _
      $region207: #{fsrcnn_forward_pallas.3} parent=5 // pred_fallthru
        _
    $region6: #{fsrcnn_forward_pallas.3} parent=1 // loop_footer
      %s22 = sadd.s32 1, %s18
    $region7: #{fsrcnn_forward_pallas.3} parent=1 // loop_footer_branch
      %17 = sbr.rel target = $region3
    $region8: #{fsrcnn_forward_pallas.3} parent=1 // loop_exit
      _
    %2984 = vsyncpa [#allocation5], 1
    %s2985 = scalar_lea.sflag [#allocation5], 1
    %2986 = vsyncpa %s2985, 1
    %2987 = vsyncpa [#allocation6], 1
    %s2988 = scalar_lea.sflag [#allocation6], 1
    %2989 = vsyncpa %s2988, 1

// kernel: fsrcnn_forward_pallas.4
$region0: #{fsrcnn_forward_pallas.4}
  #allocation0 [shape = 'u32[]', space=smem, size = 0x4, offset = 0x4, fixed_abs, tag = 'smem constant byte address 0x4 - core index']
  #allocation1 [shape = 'u32[144,128]{1,0:T(1,128)}', space=vmem, size = 0x12000, scoped, tag = 'internal scratch']
  #allocation2 [shape = 'bf16[16,344]{1,0:T(16,128)(2,1)}', space=vmem, size = 0x3000, scoped, tag = 'scratch operand']
  #allocation3 [shape = 'bf16[400,256]{1,0:T(16,128)(2,1)}', space=vmem, size = 0x32000, scoped, tag = 'scratch operand']
  %s0 = inlined_call_operand.vmem [shape: bf16[2,2,16,256], index: 0, kind: input, shape index: {}, may-alias: {0,1,2}]
  %s1 = inlined_call_operand.vmem [shape: bf16[2,2,16,256], index: 1, kind: input, shape index: {}, may-alias: {0,1,2}]
  %s2 = inlined_call_operand.vmem [shape: bf16[2,2,16,256], index: 2, kind: input, shape index: {}, may-alias: {0,1,2}]
  %s3 = inlined_call_operand.vmem [shape: bf16[64,400], index: 3, kind: input, shape index: {}]
  %s4 = inlined_call_operand.vmem [shape: f32[64,1], index: 4, kind: input, shape index: {}]
  %s5 = inlined_call_operand.vmem [shape: bf16[2,2,64,256], index: 5, kind: output, shape index: {}]
  %s6 = sld [smem:[#allocation0]]
  $region61: #{fsrcnn_forward_pallas.4} parent=0
    _
  %s8 = ssub.s32 1, %s6
  %s9 = scalar_select 0, %s8, %s6
  loop: start=0, step=1, limit=6
  $region2: #{fsrcnn_forward_pallas.4} parent=0 // loop_pre_header
    _
  $region3: #{fsrcnn_forward_pallas.4} parent=0 // loop_header
    %s11 = sphi 0, %s15
    %p12 = scmp.ge.s32.totalorder %s11, 6
    %s18 = sphi 0, %s30
    %s19 = sphi 0, %s26
    %s20 = sphi 0, %s18
    %s21 = sphi 0, %s19
    %s22 = sphi 0, %s20
    %s23 = sphi 0, %s21
    %s41 = sphi 0, %s43
    %s44 = sphi 0, %s41
    %s45 = sphi 0, %s44
    %s61 = sphi 0, %s45
    %s69 = sphi 0, %s71
    %s72 = sphi 0, %s69
    %s73 = sphi 0, %s72
    %s89 = sphi 0, %s73
    %s103 = sphi 0, %s105
    %s106 = sphi 0, %s103
    %s107 = sphi 0, %s106
    %s123 = sphi 0, %s107
    %s127 = sphi 0, %s127
    %s129 = sphi 0, %s127
    %s130 = sphi 0, %s129
    %s144 = sphi 0, %s130
    %s148 = sphi 0, %s148
    %s150 = sphi 0, %s148
    %s151 = sphi 0, %s150
    %s165 = sphi 0, %s151
    %s173 = sphi 0, %s175
    %s176 = sphi 0, %s173
    %s177 = sphi 0, %s176
    %s193 = sphi 0, %s177
  $region4: #{fsrcnn_forward_pallas.4} parent=0 // loop_header_branch
    %14 = sbr.rel (%p12) target = $region8
  $region5: #{fsrcnn_forward_pallas.4} parent=0 // loop_body
    %s16 = ssub.s32 %s11, 1
    %s17 = ssub.s32 %s11, 2
    %s24 = sadd.s32 1, %s19
    %p25 = scmp.ge.s32.totalorder %s24, 2
    %s26 = scalar_select %p25, 0, %s24
    %s27 = sadd.s32 1, %s18
    %s28 = scalar_select %p25, %s27, %s18
    %p29 = scmp.ge.s32.totalorder %s28, 2
    %s30 = scalar_select %p29, 0, %s28
    %s31 = ssub.s32 %s19, 1
    %p32 = scmp.gt.s32.totalorder %s31, 0
    %s33 = scalar_select %p32, %s31, 0
    %s34 = ssub.s32 %s26, 1
    %p35 = scmp.gt.s32.totalorder %s34, 0
    %s36 = scalar_select %p35, %s34, 0
    %s37 = ssub.s32 %s18, %s30
    %s38 = ssub.s32 %s33, %s36
    %s39 = sor.u32 %s37, %s38
    %p40 = scmp.eq.s32.totalorder %s39, 0
    %s42 = sadd.s32 %s41, 1
    %s43 = scalar_select %p40, %s41, %s42
    %p46 = pneg %p40
    %p47 = scmp.eq.s32.totalorder %s11, 3
    %p48 = por %p46, %p47
    %p49 = scmp.ne.s32.totalorder %s41, %s44
    %p50 = scmp.eq.s32.totalorder %s11, 0
    %p51 = por %p49, %p50
    %p52 = scmp.ne.s32.totalorder %s41, %s44
    %p53 = scmp.eq.s32.totalorder %s16, 3
    %p54 = por %p52, %p53
    %p55 = scmp.ne.s32.totalorder %s44, %s45
    %p56 = scmp.eq.s32.totalorder %s16, 0
    %p57 = por %p55, %p56
    %p58 = scmp.ne.s32.totalorder %s44, %s45
    %p59 = scmp.eq.s32.totalorder %s17, 3
    %p60 = por %p58, %p59
    %p62 = scmp.ne.s32.totalorder %s45, %s61
    %p63 = scmp.eq.s32.totalorder %s17, 0
    %p64 = por %p62, %p63
    %s65 = ssub.s32 %s18, %s30
    %s66 = ssub.s32 %s19, %s26
    %s67 = sor.u32 %s65, %s66
    %p68 = scmp.eq.s32.totalorder %s67, 0
    %s70 = sadd.s32 %s69, 1
    %s71 = scalar_select %p68, %s69, %s70
    %p74 = pneg %p68
    %p75 = scmp.eq.s32.totalorder %s11, 3
    %p76 = por %p74, %p75
    %p77 = scmp.ne.s32.totalorder %s69, %s72
    %p78 = scmp.eq.s32.totalorder %s11, 0
    %p79 = por %p77, %p78
    %p80 = scmp.ne.s32.totalorder %s69, %s72
    %p81 = scmp.eq.s32.totalorder %s16, 3
    %p82 = por %p80, %p81
    %p83 = scmp.ne.s32.totalorder %s72, %s73
    %p84 = scmp.eq.s32.totalorder %s16, 0
    %p85 = por %p83, %p84
    %p86 = scmp.ne.s32.totalorder %s72, %s73
    %p87 = scmp.eq.s32.totalorder %s17, 3
    %p88 = por %p86, %p87
    %p90 = scmp.ne.s32.totalorder %s73, %s89
    %p91 = scmp.eq.s32.totalorder %s17, 0
    %p92 = por %p90, %p91
    %s93 = sadd.s32 %s19, 1
    %p94 = scmp.lt.s32.totalorder %s93, 1
    %s95 = scalar_select %p94, %s93, 1
    %s96 = sadd.s32 %s26, 1
    %p97 = scmp.lt.s32.totalorder %s96, 1
    %s98 = scalar_select %p97, %s96, 1
    %s99 = ssub.s32 %s18, %s30
    %s100 = ssub.s32 %s95, %s98
    %s101 = sor.u32 %s99, %s100
    %p102 = scmp.eq.s32.totalorder %s101, 0
    %s104 = sadd.s32 %s103, 1
    %s105 = scalar_select %p102, %s103, %s104
    %p108 = pneg %p102
    %p109 = scmp.eq.s32.totalorder %s11, 3
    %p110 = por %p108, %p109
    %p111 = scmp.ne.s32.totalorder %s103, %s106
    %p112 = scmp.eq.s32.totalorder %s11, 0
    %p113 = por %p111, %p112
    %p114 = scmp.ne.s32.totalorder %s103, %s106
    %p115 = scmp.eq.s32.totalorder %s16, 3
    %p116 = por %p114, %p115
    %p117 = scmp.ne.s32.totalorder %s106, %s107
    %p118 = scmp.eq.s32.totalorder %s16, 0
    %p119 = por %p117, %p118
    %p120 = scmp.ne.s32.totalorder %s106, %s107
    %p121 = scmp.eq.s32.totalorder %s17, 3
    %p122 = por %p120, %p121
    %p124 = scmp.ne.s32.totalorder %s107, %s123
    %p125 = scmp.eq.s32.totalorder %s17, 0
    %p126 = por %p124, %p125
    %s128 = sadd.s32 %s127, 1
    %p131 = scmp.eq.s32.totalorder %s11, 3
    %p132 = scmp.ne.s32.totalorder %s127, %s129
    %p133 = scmp.eq.s32.totalorder %s11, 0
    %p134 = por %p132, %p133
    %p135 = scmp.ne.s32.totalorder %s127, %s129
    %p136 = scmp.eq.s32.totalorder %s16, 3
    %p137 = por %p135, %p136
    %p138 = scmp.ne.s32.totalorder %s129, %s130
    %p139 = scmp.eq.s32.totalorder %s16, 0
    %p140 = por %p138, %p139
    %p141 = scmp.ne.s32.totalorder %s129, %s130
    %p142 = scmp.eq.s32.totalorder %s17, 3
    %p143 = por %p141, %p142
    %p145 = scmp.ne.s32.totalorder %s130, %s144
    %p146 = scmp.eq.s32.totalorder %s17, 0
    %p147 = por %p145, %p146
    %s149 = sadd.s32 %s148, 1
    %p152 = scmp.eq.s32.totalorder %s11, 3
    %p153 = scmp.ne.s32.totalorder %s148, %s150
    %p154 = scmp.eq.s32.totalorder %s11, 0
    %p155 = por %p153, %p154
    %p156 = scmp.ne.s32.totalorder %s148, %s150
    %p157 = scmp.eq.s32.totalorder %s16, 3
    %p158 = por %p156, %p157
    %p159 = scmp.ne.s32.totalorder %s150, %s151
    %p160 = scmp.eq.s32.totalorder %s16, 0
    %p161 = por %p159, %p160
    %p162 = scmp.ne.s32.totalorder %s150, %s151
    %p163 = scmp.eq.s32.totalorder %s17, 3
    %p164 = por %p162, %p163
    %p166 = scmp.ne.s32.totalorder %s151, %s165
    %p167 = scmp.eq.s32.totalorder %s17, 0
    %p168 = por %p166, %p167
    %s169 = ssub.s32 %s18, %s30
    %s170 = ssub.s32 %s19, %s26
    %s171 = sor.u32 %s169, %s170
    %p172 = scmp.eq.s32.totalorder %s171, 0
    %s174 = sadd.s32 %s173, 1
    %s175 = scalar_select %p172, %s173, %s174
    %p178 = pneg %p172
    %p179 = scmp.eq.s32.totalorder %s11, 3
    %p180 = por %p178, %p179
    %p181 = scmp.ne.s32.totalorder %s173, %s176
    %p182 = scmp.eq.s32.totalorder %s11, 0
    %p183 = por %p181, %p182
    %p184 = scmp.ne.s32.totalorder %s173, %s176
    %p185 = scmp.eq.s32.totalorder %s16, 3
    %p186 = por %p184, %p185
    %p187 = scmp.ne.s32.totalorder %s176, %s177
    %p188 = scmp.eq.s32.totalorder %s16, 0
    %p189 = por %p187, %p188
    %p190 = scmp.ne.s32.totalorder %s176, %s177
    %p191 = scmp.eq.s32.totalorder %s17, 3
    %p192 = por %p190, %p191
    %p194 = scmp.ne.s32.totalorder %s177, %s193
    %p195 = scmp.eq.s32.totalorder %s17, 0
    %p196 = por %p194, %p195
    %p197 = scmp.le.s32.totalorder 1, %s11
    %p198 = scmp.lt.s32.totalorder %s11, 5
    %p199 = pnand %p197, %p198
    %p200 = pneg %p199
    // Predicated region
    $region9: #{fsrcnn_forward_pallas.4} parent=5 // pred_check
      _
    $region10: #{fsrcnn_forward_pallas.4} parent=5 // pred_check_branch
      %202 = sbr.rel (%p199) target = $region12
    $region11: #{fsrcnn_forward_pallas.4} parent=5 // pred_region
      %s203 = ssub.s32 %s11, 1
      // Predicated region
      $region13: #{fsrcnn_forward_pallas.4} parent=11 // pred_check
        %p204 = pneg %p140
      $region14: #{fsrcnn_forward_pallas.4} parent=11 // pred_check_branch
        %206 = sbr.rel (%p204) target = $region16
      $region15: #{fsrcnn_forward_pallas.4} parent=11 // pred_region
        _
      $region16: #{fsrcnn_forward_pallas.4} parent=11 // pred_fallthru
        _
      // Predicated region
      $region17: #{fsrcnn_forward_pallas.4} parent=11 // pred_check
        %p207 = pneg %p161
      $region18: #{fsrcnn_forward_pallas.4} parent=11 // pred_check_branch
        %209 = sbr.rel (%p207) target = $region20
      $region19: #{fsrcnn_forward_pallas.4} parent=11 // pred_region
        _
      $region20: #{fsrcnn_forward_pallas.4} parent=11 // pred_fallthru
        _
    $region12: #{fsrcnn_forward_pallas.4} parent=5 // pred_fallthru
      _
    %p210 = scmp.lt.s32.totalorder %s11, 4
    // Predicated region
    $region21: #{fsrcnn_forward_pallas.4} parent=5 // pred_check
      %p211 = pneg %p210
    $region22: #{fsrcnn_forward_pallas.4} parent=5 // pred_check_branch
      %213 = sbr.rel (%p211) target = $region24
    $region23: #{fsrcnn_forward_pallas.4} parent=5 // pred_region
      // Predicated region
      $region25: #{fsrcnn_forward_pallas.4} parent=23 // pred_check
        %p214 = pneg %p51
      $region26: #{fsrcnn_forward_pallas.4} parent=23 // pred_check_branch
        %216 = sbr.rel (%p214) target = $region28
      $region27: #{fsrcnn_forward_pallas.4} parent=23 // pred_region
        %s217 = ssub.s32 %s19, 1
        %p218 = scmp.gt.s32.totalorder %s217, 0
        %s219 = scalar_select %p218, %s217, 0
        %p220 = scmp.lt.s32.totalorder %s18, 1
        %s221 = scalar_select %p220, %s18, 1
        %p222 = scmp.lt.s32.totalorder %s219, 1
        %s223 = scalar_select %p222, %s219, 1
        %s224 = smul.addr %s223, 4
        %s225 = smul.addr %s221, 8
        %s226 = sadd.s32 %s224, %s225
        %s227 = smul.addr %s226, 4
        %s228 = scalar_lea.vmem %s0, %s227
        %s229 = ssub.s32 %s19, 1
        %p230 = scmp.gt.s32.totalorder %s229, 0
        %s231 = scalar_select %p230, %s229, 0
      $region28: #{fsrcnn_forward_pallas.4} parent=23 // pred_fallthru
        _
      // Predicated region
      $region29: #{fsrcnn_forward_pallas.4} parent=23 // pred_check
        %p232 = pneg %p79
      $region30: #{fsrcnn_forward_pallas.4} parent=23 // pred_check_branch
        %234 = sbr.rel (%p232) target = $region32
      $region31: #{fsrcnn_forward_pallas.4} parent=23 // pred_region
        %p235 = scmp.lt.s32.totalorder %s18, 1
        %s236 = scalar_select %p235, %s18, 1
        %p237 = scmp.lt.s32.totalorder %s19, 1
        %s238 = scalar_select %p237, %s19, 1
        %s239 = smul.addr %s238, 4
        %s240 = smul.addr %s236, 8
        %s241 = sadd.s32 %s239, %s240
        %s242 = smul.addr %s241, 4
        %s243 = scalar_lea.vmem %s1, %s242
      $region32: #{fsrcnn_forward_pallas.4} parent=23 // pred_fallthru
        _
      // Predicated region
      $region33: #{fsrcnn_forward_pallas.4} parent=23 // pred_check
        %p244 = pneg %p113
      $region34: #{fsrcnn_forward_pallas.4} parent=23 // pred_check_branch
        %246 = sbr.rel (%p244) target = $region36
      $region35: #{fsrcnn_forward_pallas.4} parent=23 // pred_region
        %s247 = sadd.s32 %s19, 1
        %p248 = scmp.lt.s32.totalorder %s247, 1
        %s249 = scalar_select %p248, %s247, 1
        %p250 = scmp.lt.s32.totalorder %s18, 1
        %s251 = scalar_select %p250, %s18, 1
        %p252 = scmp.lt.s32.totalorder %s249, 1
        %s253 = scalar_select %p252, %s249, 1
        %s254 = smul.addr %s253, 4
        %s255 = smul.addr %s251, 8
        %s256 = sadd.s32 %s254, %s255
        %s257 = smul.addr %s256, 4
        %s258 = scalar_lea.vmem %s2, %s257
        %s259 = sadd.s32 %s19, 1
        %p260 = scmp.lt.s32.totalorder %s259, 1
        %s261 = scalar_select %p260, %s259, 1
      $region36: #{fsrcnn_forward_pallas.4} parent=23 // pred_fallthru
        _
    $region24: #{fsrcnn_forward_pallas.4} parent=5 // pred_fallthru
      _
    %p262 = scmp.le.s32.totalorder 1, %s11
    %p263 = scmp.lt.s32.totalorder %s11, 5
    %p264 = pnand %p262, %p263
    %p265 = pneg %p264
    // Predicated region
    $region37: #{fsrcnn_forward_pallas.4} parent=5 // pred_check
      _
    $region38: #{fsrcnn_forward_pallas.4} parent=5 // pred_check_branch
      %267 = sbr.rel (%p264) target = $region40
    $region39: #{fsrcnn_forward_pallas.4} parent=5 // pred_region
      %s268 = ssub.s32 %s11, 1
      %s269 = ssub.s32 %s21, 1
      %p270 = scmp.gt.s32.totalorder %s269, 0
      %s271 = scalar_select %p270, %s269, 0
      %p272 = scmp.lt.s32.totalorder %s20, 1
      %s273 = scalar_select %p272, %s20, 1
      %p274 = scmp.lt.s32.totalorder %s271, 1
      %s275 = scalar_select %p274, %s271, 1
      %s276 = smul.addr %s275, 4
      %s277 = smul.addr %s273, 8
      %s278 = sadd.s32 %s276, %s277
      %s279 = smul.addr %s278, 4
      %s280 = scalar_lea.vmem %s0, %s279
      %p281 = pneg %p57
      %p282 = pneg %p54
      %p283 = scmp.lt.s32.totalorder %s20, 1
      %s284 = scalar_select %p283, %s20, 1
      %p285 = scmp.lt.s32.totalorder %s21, 1
      %s286 = scalar_select %p285, %s21, 1
      %s287 = smul.addr %s286, 4
      %s288 = smul.addr %s284, 8
      %s289 = sadd.s32 %s287, %s288
      %s290 = smul.addr %s289, 4
      %s291 = scalar_lea.vmem %s1, %s290
      %p292 = pneg %p85
      %p293 = pneg %p82
      %s294 = sadd.s32 %s21, 1
      %p295 = scmp.lt.s32.totalorder %s294, 1
      %s296 = scalar_select %p295, %s294, 1
      %p297 = scmp.lt.s32.totalorder %s20, 1
      %s298 = scalar_select %p297, %s20, 1
      %p299 = scmp.lt.s32.totalorder %s296, 1
      %s300 = scalar_select %p299, %s296, 1
      %s301 = smul.addr %s300, 4
      %s302 = smul.addr %s298, 8
      %s303 = sadd.s32 %s301, %s302
      %s304 = smul.addr %s303, 4
      %s305 = scalar_lea.vmem %s2, %s304
      %p306 = pneg %p119
      %p307 = pneg %p116
      %p308 = pneg %p140
      %p309 = pneg %p137
      %p310 = pneg %p161
      %p311 = pneg %p158
      %p312 = pneg %p189
      %p313 = pneg %p186
      %p314 = scmp.lt.s32.totalorder %s20, 1
      %s315 = scalar_select %p314, %s20, 1
      %p316 = scmp.lt.s32.totalorder %s21, 1
      %s317 = scalar_select %p316, %s21, 1
      %s318 = smul.addr %s317, 16
      %s319 = smul.addr %s315, 32
      %s320 = sadd.s32 %s318, %s319
      %s321 = smul.addr %s320, 4
      %s322 = scalar_lea.vmem %s5, %s321
      %s323 = ssub.s32 %s21, 1
      %p324 = scmp.gt.s32.totalorder %s323, 0
      %s325 = scalar_select %p324, %s323, 0
      %p326 = scmp.lt.s32.totalorder %s20, 1
      %s327 = scalar_select %p326, %s20, 1
      %p328 = scmp.lt.s32.totalorder %s325, 1
      %s329 = scalar_select %p328, %s325, 1
      %s330 = smul.addr %s329, 4
      %s331 = smul.addr %s327, 8
      %s332 = sadd.s32 %s330, %s331
      %s333 = smul.addr %s332, 4
      %s334 = scalar_lea.vmem %s0, %s333
      %s335 = ssub.s32 %s21, 1
      %p336 = scmp.gt.s32.totalorder %s335, 0
      %s337 = scalar_select %p336, %s335, 0
      %p338 = scmp.lt.s32.totalorder %s20, 1
      %s339 = scalar_select %p338, %s20, 1
      %p340 = scmp.lt.s32.totalorder %s21, 1
      %s341 = scalar_select %p340, %s21, 1
      %s342 = smul.addr %s341, 4
      %s343 = smul.addr %s339, 8
      %s344 = sadd.s32 %s342, %s343
      %s345 = smul.addr %s344, 4
      %s346 = scalar_lea.vmem %s1, %s345
      %s347 = sadd.s32 %s21, 1
      %p348 = scmp.lt.s32.totalorder %s347, 1
      %s349 = scalar_select %p348, %s347, 1
      %p350 = scmp.lt.s32.totalorder %s20, 1
      %s351 = scalar_select %p350, %s20, 1
      %p352 = scmp.lt.s32.totalorder %s349, 1
      %s353 = scalar_select %p352, %s349, 1
      %s354 = smul.addr %s353, 4
      %s355 = smul.addr %s351, 8
      %s356 = sadd.s32 %s354, %s355
      %s357 = smul.addr %s356, 4
      %s358 = scalar_lea.vmem %s2, %s357
      %s359 = sadd.s32 %s21, 1
      %p360 = scmp.lt.s32.totalorder %s359, 1
      %s361 = scalar_select %p360, %s359, 1
      %p362 = scmp.lt.s32.totalorder %s20, 1
      %s363 = scalar_select %p362, %s20, 1
      %p364 = scmp.lt.s32.totalorder %s21, 1
      %s365 = scalar_select %p364, %s21, 1
      %s366 = smul.addr %s365, 16
      %s367 = smul.addr %s363, 32
      %s368 = sadd.s32 %s366, %s367
      %s369 = smul.addr %s368, 4
      %s370 = scalar_lea.vmem %s5, %s369
      %372 = vst [vmem:[#allocation2] sm:$0xff] 0
      %373 = vst [vmem:[#allocation2 + $0x8] sm:$0xff] 0
      %vm374 = vcmask 719872
      %375 = vst.msk [vmem:[#allocation2 + $0x10] sm:$0xff] %vm374, 0
      %p376 = scmp.gt.s32.totalorder %s21, 0
      // Predicated region
      $region41: #{fsrcnn_forward_pallas.4} parent=39 // pred_check
        %p377 = pneg %p376
      $region42: #{fsrcnn_forward_pallas.4} parent=39 // pred_check_branch
        %379 = sbr.rel (%p377) target = $region44
      $region43: #{fsrcnn_forward_pallas.4} parent=39 // pred_region
        %v380 = vld [vmem:[%s334] sm:$0xff]
        %v381 = vld [vmem:[%s334 + $0x8] sm:$0xff]
        %v384 = vunpack.c.l.b16 %v380
        %v385 = vunpack.c.h.b16 %v380
        %v386 = vunpack.c.l.b16 %v381
        %v387 = vunpack.c.h.b16 %v381
        %v388 = vpack.c.b16 %v386, %v384
        %v389 = vpack.c.b16 %v387, %v385
        %390 = vrot.lane.b32.xlu0 %v388, 10
        %v391 = vpop.permute.xlu0 %390
        %392 = vrot.lane.b32.xlu0 %v389, 10
        %v393 = vpop.permute.xlu0 %392
        %vm394 = vcmask 80896
        %v395 = vsel %vm394, %v391, %v393
        %vm397 = vcmask 146448
        %398 = vst.msk [vmem:[#allocation2] sm:$0xff] %vm397, %v395
        %v399 = vld [vmem:[%s334 + $0x4] sm:$0xf]
        %v400 = vld [vmem:[%s334 + $0xc] sm:$0xf]
        %v403 = vunpack.c.l.b16 %v399
        %v404 = vunpack.c.l.b16 %v400
        %v405 = vpack.c.b16 %v404, %v403
        %406 = vrot.lane.b32.xlu0 %v405, 10
        %v407 = vpop.permute.xlu0 %406
        %vm409 = vcmask 310448
        %410 = vst.msk [vmem:[#allocation2] sm:$0xff] %vm409, %v407
      $region44: #{fsrcnn_forward_pallas.4} parent=39 // pred_fallthru
        _
      %v411 = vld [vmem:[%s346] sm:$0xf]
      %v412 = vld [vmem:[%s346 + $0x8] sm:$0xf]
      %v415 = vunpack.c.l.b16 %v411
      %v416 = vunpack.c.l.b16 %v412
      %v417 = vpack.c.b16 %v416, %v415
      %418 = vrot.lane.b32.xlu0 %v417, 42
      %v419 = vpop.permute.xlu0 %418
      %vm421 = vcmask 474448
      %422 = vst.msk [vmem:[#allocation2] sm:$0xff] %vm421, %v419
      %v423 = vld [vmem:[%s346] sm:$0xf]
      %v424 = vld [vmem:[%s346 + $0x8] sm:$0xf]
      %v427 = vunpack.c.l.b16 %v423
      %v428 = vunpack.c.l.b16 %v424
      %v429 = vpack.c.b16 %v428, %v427
      %430 = vrot.lane.b32.xlu0 %v429, 42
      %v431 = vpop.permute.xlu0 %430
      %vm433 = vcmask 638448
      %434 = vst.msk [vmem:[#allocation2] sm:$0xff] %vm433, %v431
      %v435 = vld [vmem:[%s346] sm:$0xf]
      %v436 = vld [vmem:[%s346 + $0x8] sm:$0xf]
      %v439 = vunpack.c.l.b16 %v435
      %v440 = vunpack.c.l.b16 %v436
      %v441 = vpack.c.b16 %v440, %v439
      %442 = vrot.lane.b32.xlu0 %v441, 42
      %v443 = vpop.permute.xlu0 %442
      %vm445 = vcmask 802448
      %446 = vst.msk [vmem:[#allocation2] sm:$0xff] %vm445, %v443
      %v447 = vld [vmem:[%s346] sm:$0xf]
      %v448 = vld [vmem:[%s346 + $0x8] sm:$0xf]
      %v451 = vunpack.c.l.b16 %v447
      %v452 = vunpack.c.l.b16 %v448
      %v453 = vpack.c.b16 %v452, %v451
      %454 = vrot.lane.b32.xlu0 %v453, 42
      %v455 = vpop.permute.xlu0 %454
      %vm457 = vcmask 966448
      %458 = vst.msk [vmem:[#allocation2] sm:$0xff] %vm457, %v455
      %v459 = vld [vmem:[%s346] sm:$0xf]
      %v460 = vld [vmem:[%s346 + $0x8] sm:$0xf]
      %v463 = vunpack.c.l.b16 %v459
      %v464 = vunpack.c.l.b16 %v460
      %v465 = vpack.c.b16 %v464, %v463
      %466 = vrot.lane.b32.xlu0 %v465, 42
      %v467 = vpop.permute.xlu0 %466
      %vm469 = vcmask 1048528
      %470 = vst.msk [vmem:[#allocation2] sm:$0xff] %vm469, %v467
      %vm471 = vcmask 80896
      %472 = vst.msk [vmem:[#allocation2 + $0x8] sm:$0xff] %vm471, %v467
      %v473 = vld [vmem:[%s346] sm:$0xf]
      %v474 = vld [vmem:[%s346 + $0x8] sm:$0xf]
      %v477 = vunpack.c.l.b16 %v473
      %v478 = vunpack.c.l.b16 %v474
      %v479 = vpack.c.b16 %v478, %v477
      %480 = vrot.lane.b32.xlu0 %v479, 42
      %v481 = vpop.permute.xlu0 %480
      %vm483 = vcmask 244848
      %484 = vst.msk [vmem:[#allocation2 + $0x8] sm:$0xff] %vm483, %v481
      %v485 = vld [vmem:[%s346] sm:$0xff]
      %v486 = vld [vmem:[%s346 + $0x8] sm:$0xff]
      %v489 = vunpack.c.l.b16 %v485
      %v490 = vunpack.c.h.b16 %v485
      %v491 = vunpack.c.l.b16 %v486
      %v492 = vunpack.c.h.b16 %v486
      %v493 = vpack.c.b16 %v491, %v489
      %v494 = vpack.c.b16 %v492, %v490
      %495 = vrot.lane.b32.xlu0 %v493, 42
      %v496 = vpop.permute.xlu0 %495
      %497 = vrot.lane.b32.xlu0 %v494, 42
      %v498 = vpop.permute.xlu0 %497
      %vm499 = vcmask 343040
      %v500 = vsel %vm499, %v496, %v498
      %vm502 = vcmask 408848
      %503 = vst.msk [vmem:[#allocation2 + $0x8] sm:$0xff] %vm502, %v500
      %v504 = vld [vmem:[%s346 + $0x4] sm:$0xf]
      %v505 = vld [vmem:[%s346 + $0xc] sm:$0xf]
      %v508 = vunpack.c.l.b16 %v504
      %v509 = vunpack.c.l.b16 %v505
      %v510 = vpack.c.b16 %v509, %v508
      %511 = vrot.lane.b32.xlu0 %v510, 42
      %v512 = vpop.permute.xlu0 %511
      %vm514 = vcmask 572848
      %515 = vst.msk [vmem:[#allocation2 + $0x8] sm:$0xff] %vm514, %v512
      %p516 = scmp.lt.s32.totalorder %s21, 1
      // Predicated region
      $region45: #{fsrcnn_forward_pallas.4} parent=39 // pred_check
        %p517 = pneg %p516
      $region46: #{fsrcnn_forward_pallas.4} parent=39 // pred_check_branch
        %519 = sbr.rel (%p517) target = $region48
      $region47: #{fsrcnn_forward_pallas.4} parent=39 // pred_region
        %v520 = vld [vmem:[%s358] sm:$0xf]
        %v521 = vld [vmem:[%s358 + $0x8] sm:$0xf]
        %v524 = vunpack.c.l.b16 %v520
        %v525 = vunpack.c.l.b16 %v521
        %v526 = vpack.c.b16 %v525, %v524
        %527 = vrot.lane.b32.xlu0 %v526, 74
        %v528 = vpop.permute.xlu0 %527
        %vm530 = vcmask 736848
        %531 = vst.msk [vmem:[#allocation2 + $0x8] sm:$0xff] %vm530, %v528
        %v532 = vld [vmem:[%s358] sm:$0xf]
        %v533 = vld [vmem:[%s358 + $0x8] sm:$0xf]
        %v536 = vunpack.c.l.b16 %v532
        %v537 = vunpack.c.l.b16 %v533
        %v538 = vpack.c.b16 %v537, %v536
        %539 = vrot.lane.b32.xlu0 %v538, 74
        %v540 = vpop.permute.xlu0 %539
        %vm542 = vcmask 900848
        %543 = vst.msk [vmem:[#allocation2 + $0x8] sm:$0xff] %vm542, %v540
      $region48: #{fsrcnn_forward_pallas.4} parent=39 // pred_fallthru
        _
      %v544 = vld [vmem:[#allocation2] sm:$0xff]
      %v545 = vld [vmem:[#allocation2 + $0x8] sm:$0xff]
      %546 = vst [vmem:[#allocation3] sm:$0xff] %v544
      %547 = vst [vmem:[#allocation3 + $0x8] sm:$0xff] %v545
      %v548 = vld [vmem:[#allocation2] sm:$0xff]
      %v549 = vld [vmem:[#allocation2 + $0x8] sm:$0xff]
      %v550 = vld [vmem:[#allocation2 + $0x10] sm:$0xff]
      %554 = vrot.lane.b32.xlu0 %v548, 127
      %v555 = vpop.permute.xlu0 %554
      %556 = vrot.lane.b32.xlu0 %v549, 127
      %v557 = vpop.permute.xlu0 %556
      %558 = vrot.lane.b32.xlu0 %v550, 127
      %v559 = vpop.permute.xlu0 %558
      %vm560 = vcmask 1039360
      %v561 = vsel %vm560, %v555, %v557
      %v562 = vsel %vm560, %v557, %v559
      %565 = vst [vmem:[#allocation3 + $0x10] sm:$0xff] %v561
      %566 = vst [vmem:[#allocation3 + $0x18] sm:$0xff] %v562
      %v567 = vld [vmem:[#allocation2] sm:$0xff]
      %v568 = vld [vmem:[#allocation2 + $0x8] sm:$0xff]
      %v569 = vld [vmem:[#allocation2 + $0x10] sm:$0xff]
      %573 = vrot.lane.b32.xlu0 %v567, 126
      %v574 = vpop.permute.xlu0 %573
      %575 = vrot.lane.b32.xlu0 %v568, 126
      %v576 = vpop.permute.xlu0 %575
      %577 = vrot.lane.b32.xlu0 %v569, 126
      %v578 = vpop.permute.xlu0 %577
      %vm579 = vcmask 1031168
      %v580 = vsel %vm579, %v574, %v576
      %v581 = vsel %vm579, %v576, %v578
      %584 = vst [vmem:[#allocation3 + $0x20] sm:$0xff] %v580
      %585 = vst [vmem:[#allocation3 + $0x28] sm:$0xff] %v581
      %v586 = vld [vmem:[#allocation2] sm:$0xff]
      %v587 = vld [vmem:[#allocation2 + $0x8] sm:$0xff]
      %v588 = vld [vmem:[#allocation2 + $0x10] sm:$0xff]
      %592 = vrot.lane.b32.xlu0 %v586, 125
      %v593 = vpop.permute.xlu0 %592
      %594 = vrot.lane.b32.xlu0 %v587, 125
      %v595 = vpop.permute.xlu0 %594
      %596 = vrot.lane.b32.xlu0 %v588, 125
      %v597 = vpop.permute.xlu0 %596
      %vm598 = vcmask 1022976
      %v599 = vsel %vm598, %v593, %v595
      %v600 = vsel %vm598, %v595, %v597
      %603 = vst [vmem:[#allocation3 + $0x30] sm:$0xff] %v599
      %604 = vst [vmem:[#allocation3 + $0x38] sm:$0xff] %v600
      %v605 = vld [vmem:[#allocation2] sm:$0xff]
      %v606 = vld [vmem:[#allocation2 + $0x8] sm:$0xff]
      %v607 = vld [vmem:[#allocation2 + $0x10] sm:$0xff]
      %611 = vrot.lane.b32.xlu0 %v605, 124
      %v612 = vpop.permute.xlu0 %611
      %613 = vrot.lane.b32.xlu0 %v606, 124
      %v614 = vpop.permute.xlu0 %613
      %615 = vrot.lane.b32.xlu0 %v607, 124
      %v616 = vpop.permute.xlu0 %615
      %vm617 = vcmask 1014784
      %v618 = vsel %vm617, %v612, %v614
      %v619 = vsel %vm617, %v614, %v616
      %622 = vst [vmem:[#allocation3 + $0x40] sm:$0xff] %v618
      %623 = vst [vmem:[#allocation3 + $0x48] sm:$0xff] %v619
      %v624 = vld [vmem:[#allocation2] sm:$0xff]
      %v625 = vld [vmem:[#allocation2 + $0x8] sm:$0xff]
      %v626 = vld [vmem:[#allocation2 + $0x10] sm:$0xff]
      %630 = vrot.lane.b32.xlu0 %v624, 108
      %v631 = vpop.permute.xlu0 %630
      %632 = vrot.lane.b32.xlu0 %v625, 108
      %v633 = vpop.permute.xlu0 %632
      %634 = vrot.lane.b32.xlu0 %v626, 108
      %v635 = vpop.permute.xlu0 %634
      %vm636 = vcmask 883712
      %v637 = vsel %vm636, %v631, %v633
      %v638 = vsel %vm636, %v633, %v635
      %641 = vst [vmem:[#allocation3 + $0x50] sm:$0xff] %v637
      %642 = vst [vmem:[#allocation3 + $0x58] sm:$0xff] %v638
      %v643 = vld [vmem:[#allocation2] sm:$0xff]
      %v644 = vld [vmem:[#allocation2 + $0x8] sm:$0xff]
      %v645 = vld [vmem:[#allocation2 + $0x10] sm:$0xff]
      %649 = vrot.lane.b32.xlu0 %v643, 107
      %v650 = vpop.permute.xlu0 %649
      %651 = vrot.lane.b32.xlu0 %v644, 107
      %v652 = vpop.permute.xlu0 %651
      %653 = vrot.lane.b32.xlu0 %v645, 107
      %v654 = vpop.permute.xlu0 %653
      %vm655 = vcmask 875520
      %v656 = vsel %vm655, %v650, %v652
      %v657 = vsel %vm655, %v652, %v654
      %660 = vst [vmem:[#allocation3 + $0x60] sm:$0xff] %v656
      %661 = vst [vmem:[#allocation3 + $0x68] sm:$0xff] %v657
      %v662 = vld [vmem:[#allocation2] sm:$0xff]
      %v663 = vld [vmem:[#allocation2 + $0x8] sm:$0xff]
      %v664 = vld [vmem:[#allocation2 + $0x10] sm:$0xff]
      %668 = vrot.lane.b32.xlu0 %v662, 106
      %v669 = vpop.permute.xlu0 %668
      %670 = vrot.lane.b32.xlu0 %v663, 106
      %v671 = vpop.permute.xlu0 %670
      %672 = vrot.lane.b32.xlu0 %v664, 106
      %v673 = vpop.permute.xlu0 %672
      %vm674 = vcmask 867328
      %v675 = vsel %vm674, %v669, %v671
      %v676 = vsel %vm674, %v671, %v673
      %679 = vst [vmem:[#allocation3 + $0x70] sm:$0xff] %v675
      %680 = vst [vmem:[#allocation3 + $0x78] sm:$0xff] %v676
      %v681 = vld [vmem:[#allocation2] sm:$0xff]
      %v682 = vld [vmem:[#allocation2 + $0x8] sm:$0xff]
      %v683 = vld [vmem:[#allocation2 + $0x10] sm:$0xff]
      %687 = vrot.lane.b32.xlu0 %v681, 105
      %v688 = vpop.permute.xlu0 %687
      %689 = vrot.lane.b32.xlu0 %v682, 105
      %v690 = vpop.permute.xlu0 %689
      %691 = vrot.lane.b32.xlu0 %v683, 105
      %v692 = vpop.permute.xlu0 %691
      %vm693 = vcmask 859136
      %v694 = vsel %vm693, %v688, %v690
      %v695 = vsel %vm693, %v690, %v692
      %698 = vst [vmem:[#allocation3 + $0x80] sm:$0xff] %v694
      %699 = vst [vmem:[#allocation3 + $0x88] sm:$0xff] %v695
      %v700 = vld [vmem:[#allocation2] sm:$0xff]
      %v701 = vld [vmem:[#allocation2 + $0x8] sm:$0xff]
      %v702 = vld [vmem:[#allocation2 + $0x10] sm:$0xff]
      %706 = vrot.lane.b32.xlu0 %v700, 104
      %v707 = vpop.permute.xlu0 %706
      %708 = vrot.lane.b32.xlu0 %v701, 104
      %v709 = vpop.permute.xlu0 %708
      %710 = vrot.lane.b32.xlu0 %v702, 104
      %v711 = vpop.permute.xlu0 %710
      %vm712 = vcmask 850944
      %v713 = vsel %vm712, %v707, %v709
      %v714 = vsel %vm712, %v709, %v711
      %717 = vst [vmem:[#allocation3 + $0x90] sm:$0xff] %v713
      %718 = vst [vmem:[#allocation3 + $0x98] sm:$0xff] %v714
      %v719 = vld [vmem:[#allocation2] sm:$0xff]
      %v720 = vld [vmem:[#allocation2 + $0x8] sm:$0xff]
      %v721 = vld [vmem:[#allocation2 + $0x10] sm:$0xff]
      %725 = vrot.lane.b32.xlu0 %v719, 88
      %v726 = vpop.permute.xlu0 %725
      %727 = vrot.lane.b32.xlu0 %v720, 88
      %v728 = vpop.permute.xlu0 %727
      %729 = vrot.lane.b32.xlu0 %v721, 88
      %v730 = vpop.permute.xlu0 %729
      %vm731 = vcmask 719872
      %v732 = vsel %vm731, %v726, %v728
      %v733 = vsel %vm731, %v728, %v730
      %736 = vst [vmem:[#allocation3 + $0xa0] sm:$0xff] %v732
      %737 = vst [vmem:[#allocation3 + $0xa8] sm:$0xff] %v733
      %v738 = vld [vmem:[#allocation2] sm:$0xff]
      %v739 = vld [vmem:[#allocation2 + $0x8] sm:$0xff]
      %v740 = vld [vmem:[#allocation2 + $0x10] sm:$0xff]
      %744 = vrot.lane.b32.xlu0 %v738, 87
      %v745 = vpop.permute.xlu0 %744
      %746 = vrot.lane.b32.xlu0 %v739, 87
      %v747 = vpop.permute.xlu0 %746
      %748 = vrot.lane.b32.xlu0 %v740, 87
      %v749 = vpop.permute.xlu0 %748
      %vm750 = vcmask 711680
      %v751 = vsel %vm750, %v745, %v747
      %v752 = vsel %vm750, %v747, %v749
      %755 = vst [vmem:[#allocation3 + $0xb0] sm:$0xff] %v751
      %756 = vst [vmem:[#allocation3 + $0xb8] sm:$0xff] %v752
      %v757 = vld [vmem:[#allocation2] sm:$0xff]
      %v758 = vld [vmem:[#allocation2 + $0x8] sm:$0xff]
      %v759 = vld [vmem:[#allocation2 + $0x10] sm:$0xff]
      %763 = vrot.lane.b32.xlu0 %v757, 86
      %v764 = vpop.permute.xlu0 %763
      %765 = vrot.lane.b32.xlu0 %v758, 86
      %v766 = vpop.permute.xlu0 %765
      %767 = vrot.lane.b32.xlu0 %v759, 86
      %v768 = vpop.permute.xlu0 %767
      %vm769 = vcmask 703488
      %v770 = vsel %vm769, %v764, %v766
      %v771 = vsel %vm769, %v766, %v768
      %774 = vst [vmem:[#allocation3 + $0xc0] sm:$0xff] %v770
      %775 = vst [vmem:[#allocation3 + $0xc8] sm:$0xff] %v771
      %v776 = vld [vmem:[#allocation2] sm:$0xff]
      %v777 = vld [vmem:[#allocation2 + $0x8] sm:$0xff]
      %v778 = vld [vmem:[#allocation2 + $0x10] sm:$0xff]
      %782 = vrot.lane.b32.xlu0 %v776, 85
      %v783 = vpop.permute.xlu0 %782
      %784 = vrot.lane.b32.xlu0 %v777, 85
      %v785 = vpop.permute.xlu0 %784
      %786 = vrot.lane.b32.xlu0 %v778, 85
      %v787 = vpop.permute.xlu0 %786
      %vm788 = vcmask 695296
      %v789 = vsel %vm788, %v783, %v785
      %v790 = vsel %vm788, %v785, %v787
      %793 = vst [vmem:[#allocation3 + $0xd0] sm:$0xff] %v789
      %794 = vst [vmem:[#allocation3 + $0xd8] sm:$0xff] %v790
      %v795 = vld [vmem:[#allocation2] sm:$0xff]
      %v796 = vld [vmem:[#allocation2 + $0x8] sm:$0xff]
      %v797 = vld [vmem:[#allocation2 + $0x10] sm:$0xff]
      %801 = vrot.lane.b32.xlu0 %v795, 84
      %v802 = vpop.permute.xlu0 %801
      %803 = vrot.lane.b32.xlu0 %v796, 84
      %v804 = vpop.permute.xlu0 %803
      %805 = vrot.lane.b32.xlu0 %v797, 84
      %v806 = vpop.permute.xlu0 %805
      %vm807 = vcmask 687104
      %v808 = vsel %vm807, %v802, %v804
      %v809 = vsel %vm807, %v804, %v806
      %812 = vst [vmem:[#allocation3 + $0xe0] sm:$0xff] %v808
      %813 = vst [vmem:[#allocation3 + $0xe8] sm:$0xff] %v809
      %v814 = vld [vmem:[#allocation2] sm:$0xff]
      %v815 = vld [vmem:[#allocation2 + $0x8] sm:$0xff]
      %v816 = vld [vmem:[#allocation2 + $0x10] sm:$0xff]
      %820 = vrot.lane.b32.xlu0 %v814, 68
      %v821 = vpop.permute.xlu0 %820
      %822 = vrot.lane.b32.xlu0 %v815, 68
      %v823 = vpop.permute.xlu0 %822
      %824 = vrot.lane.b32.xlu0 %v816, 68
      %v825 = vpop.permute.xlu0 %824
      %vm826 = vcmask 556032
      %v827 = vsel %vm826, %v821, %v823
      %v828 = vsel %vm826, %v823, %v825
      %831 = vst [vmem:[#allocation3 + $0xf0] sm:$0xff] %v827
      %832 = vst [vmem:[#allocation3 + $0xf8] sm:$0xff] %v828
      %v833 = vld [vmem:[#allocation2] sm:$0xff]
      %v834 = vld [vmem:[#allocation2 + $0x8] sm:$0xff]
      %v835 = vld [vmem:[#allocation2 + $0x10] sm:$0xff]
      %839 = vrot.lane.b32.xlu0 %v833, 67
      %v840 = vpop.permute.xlu0 %839
      %841 = vrot.lane.b32.xlu0 %v834, 67
      %v842 = vpop.permute.xlu0 %841
      %843 = vrot.lane.b32.xlu0 %v835, 67
      %v844 = vpop.permute.xlu0 %843
      %vm845 = vcmask 547840
      %v846 = vsel %vm845, %v840, %v842
      %v847 = vsel %vm845, %v842, %v844
      %850 = vst [vmem:[#allocation3 + $0x100] sm:$0xff] %v846
      %851 = vst [vmem:[#allocation3 + $0x108] sm:$0xff] %v847
      %v852 = vld [vmem:[#allocation2] sm:$0xff]
      %v853 = vld [vmem:[#allocation2 + $0x8] sm:$0xff]
      %v854 = vld [vmem:[#allocation2 + $0x10] sm:$0xff]
      %858 = vrot.lane.b32.xlu0 %v852, 66
      %v859 = vpop.permute.xlu0 %858
      %860 = vrot.lane.b32.xlu0 %v853, 66
      %v861 = vpop.permute.xlu0 %860
      %862 = vrot.lane.b32.xlu0 %v854, 66
      %v863 = vpop.permute.xlu0 %862
      %vm864 = vcmask 539648
      %v865 = vsel %vm864, %v859, %v861
      %v866 = vsel %vm864, %v861, %v863
      %869 = vst [vmem:[#allocation3 + $0x110] sm:$0xff] %v865
      %870 = vst [vmem:[#allocation3 + $0x118] sm:$0xff] %v866
      %v871 = vld [vmem:[#allocation2] sm:$0xff]
      %v872 = vld [vmem:[#allocation2 + $0x8] sm:$0xff]
      %v873 = vld [vmem:[#allocation2 + $0x10] sm:$0xff]
      %877 = vrot.lane.b32.xlu0 %v871, 65
      %v878 = vpop.permute.xlu0 %877
      %879 = vrot.lane.b32.xlu0 %v872, 65
      %v880 = vpop.permute.xlu0 %879
      %881 = vrot.lane.b32.xlu0 %v873, 65
      %v882 = vpop.permute.xlu0 %881
      %vm883 = vcmask 531456
      %v884 = vsel %vm883, %v878, %v880
      %v885 = vsel %vm883, %v880, %v882
      %888 = vst [vmem:[#allocation3 + $0x120] sm:$0xff] %v884
      %889 = vst [vmem:[#allocation3 + $0x128] sm:$0xff] %v885
      %v890 = vld [vmem:[#allocation2] sm:$0xff]
      %v891 = vld [vmem:[#allocation2 + $0x8] sm:$0xff]
      %v892 = vld [vmem:[#allocation2 + $0x10] sm:$0xff]
      %896 = vrot.lane.b32.xlu0 %v890, 64
      %v897 = vpop.permute.xlu0 %896
      %898 = vrot.lane.b32.xlu0 %v891, 64
      %v899 = vpop.permute.xlu0 %898
      %900 = vrot.lane.b32.xlu0 %v892, 64
      %v901 = vpop.permute.xlu0 %900
      %vm902 = vcmask 523264
      %v903 = vsel %vm902, %v897, %v899
      %v904 = vsel %vm902, %v899, %v901
      %907 = vst [vmem:[#allocation3 + $0x130] sm:$0xff] %v903
      %908 = vst [vmem:[#allocation3 + $0x138] sm:$0xff] %v904
      %v909 = vld [vmem:[#allocation2] sm:$0xff]
      %v910 = vld [vmem:[#allocation2 + $0x8] sm:$0xff]
      %v911 = vld [vmem:[#allocation2 + $0x10] sm:$0xff]
      %915 = vrot.lane.b32.xlu0 %v909, 48
      %v916 = vpop.permute.xlu0 %915
      %917 = vrot.lane.b32.xlu0 %v910, 48
      %v918 = vpop.permute.xlu0 %917
      %919 = vrot.lane.b32.xlu0 %v911, 48
      %v920 = vpop.permute.xlu0 %919
      %vm921 = vcmask 392192
      %v922 = vsel %vm921, %v916, %v918
      %v923 = vsel %vm921, %v918, %v920
      %926 = vst [vmem:[#allocation3 + $0x140] sm:$0xff] %v922
      %927 = vst [vmem:[#allocation3 + $0x148] sm:$0xff] %v923
      %v928 = vld [vmem:[#allocation2] sm:$0xff]
      %v929 = vld [vmem:[#allocation2 + $0x8] sm:$0xff]
      %v930 = vld [vmem:[#allocation2 + $0x10] sm:$0xff]
      %934 = vrot.lane.b32.xlu0 %v928, 47
      %v935 = vpop.permute.xlu0 %934
      %936 = vrot.lane.b32.xlu0 %v929, 47
      %v937 = vpop.permute.xlu0 %936
      %938 = vrot.lane.b32.xlu0 %v930, 47
      %v939 = vpop.permute.xlu0 %938
      %vm940 = vcmask 384000
      %v941 = vsel %vm940, %v935, %v937
      %v942 = vsel %vm940, %v937, %v939
      %945 = vst [vmem:[#allocation3 + $0x150] sm:$0xff] %v941
      %946 = vst [vmem:[#allocation3 + $0x158] sm:$0xff] %v942
      %v947 = vld [vmem:[#allocation2] sm:$0xff]
      %v948 = vld [vmem:[#allocation2 + $0x8] sm:$0xff]
      %v949 = vld [vmem:[#allocation2 + $0x10] sm:$0xff]
      %953 = vrot.lane.b32.xlu0 %v947, 46
      %v954 = vpop.permute.xlu0 %953
      %955 = vrot.lane.b32.xlu0 %v948, 46
      %v956 = vpop.permute.xlu0 %955
      %957 = vrot.lane.b32.xlu0 %v949, 46
      %v958 = vpop.permute.xlu0 %957
      %vm959 = vcmask 375808
      %v960 = vsel %vm959, %v954, %v956
      %v961 = vsel %vm959, %v956, %v958
      %964 = vst [vmem:[#allocation3 + $0x160] sm:$0xff] %v960
      %965 = vst [vmem:[#allocation3 + $0x168] sm:$0xff] %v961
      %v966 = vld [vmem:[#allocation2] sm:$0xff]
      %v967 = vld [vmem:[#allocation2 + $0x8] sm:$0xff]
      %v968 = vld [vmem:[#allocation2 + $0x10] sm:$0xff]
      %972 = vrot.lane.b32.xlu0 %v966, 45
      %v973 = vpop.permute.xlu0 %972
      %974 = vrot.lane.b32.xlu0 %v967, 45
      %v975 = vpop.permute.xlu0 %974
      %976 = vrot.lane.b32.xlu0 %v968, 45
      %v977 = vpop.permute.xlu0 %976
      %vm978 = vcmask 367616
      %v979 = vsel %vm978, %v973, %v975
      %v980 = vsel %vm978, %v975, %v977
      %983 = vst [vmem:[#allocation3 + $0x170] sm:$0xff] %v979
      %984 = vst [vmem:[#allocation3 + $0x178] sm:$0xff] %v980
      %v985 = vld [vmem:[#allocation2] sm:$0xff]
      %v986 = vld [vmem:[#allocation2 + $0x8] sm:$0xff]
      %v987 = vld [vmem:[#allocation2 + $0x10] sm:$0xff]
      %991 = vrot.lane.b32.xlu0 %v985, 44
      %v992 = vpop.permute.xlu0 %991
      %993 = vrot.lane.b32.xlu0 %v986, 44
      %v994 = vpop.permute.xlu0 %993
      %995 = vrot.lane.b32.xlu0 %v987, 44
      %v996 = vpop.permute.xlu0 %995
      %vm997 = vcmask 359424
      %v998 = vsel %vm997, %v992, %v994
      %v999 = vsel %vm997, %v994, %v996
      %1002 = vst [vmem:[#allocation3 + $0x180] sm:$0xff] %v998
      %1003 = vst [vmem:[#allocation3 + $0x188] sm:$0xff] %v999
      %v1004 = vld [vmem:[%s3] sm:$0xff]
      %v1005 = vld [vmem:[%s3 + $0x8] sm:$0xff]
      %v1006 = vld [vmem:[%s3 + $0x10] sm:$0xff]
      %v1007 = vld [vmem:[%s3 + $0x18] sm:$0xff]
      %v1008 = vld [vmem:[%s3 + $0x20] sm:$0xff]
      %v1009 = vld [vmem:[%s3 + $0x28] sm:$0xff]
      %v1010 = vld [vmem:[%s3 + $0x30] sm:$0xff]
      %v1011 = vld [vmem:[%s3 + $0x38] sm:$0xff]
      %v1012 = vld [vmem:[%s3 + $0x40] sm:$0xff]
      %v1013 = vld [vmem:[%s3 + $0x48] sm:$0xff]
      %v1014 = vld [vmem:[%s3 + $0x50] sm:$0xff]
      %v1015 = vld [vmem:[%s3 + $0x58] sm:$0xff]
      %v1016 = vld [vmem:[%s3 + $0x60] sm:$0xff]
      %v1017 = vld [vmem:[%s3 + $0x68] sm:$0xff]
      %v1018 = vld [vmem:[%s3 + $0x70] sm:$0xff]
      %v1019 = vld [vmem:[%s3 + $0x78] sm:$0xff]
      %v1020 = vld [vmem:[#allocation3] sm:$0xff]
      %v1021 = vld [vmem:[#allocation3 + $0x8] sm:$0xff]
      %v1022 = vld [vmem:[#allocation3 + $0x10] sm:$0xff]
      %v1023 = vld [vmem:[#allocation3 + $0x18] sm:$0xff]
      %v1024 = vld [vmem:[#allocation3 + $0x20] sm:$0xff]
      %v1025 = vld [vmem:[#allocation3 + $0x28] sm:$0xff]
      %v1026 = vld [vmem:[#allocation3 + $0x30] sm:$0xff]
      %v1027 = vld [vmem:[#allocation3 + $0x38] sm:$0xff]
      %v1028 = vld [vmem:[#allocation3 + $0x40] sm:$0xff]
      %v1029 = vld [vmem:[#allocation3 + $0x48] sm:$0xff]
      %v1030 = vld [vmem:[#allocation3 + $0x50] sm:$0xff]
      %v1031 = vld [vmem:[#allocation3 + $0x58] sm:$0xff]
      %v1032 = vld [vmem:[#allocation3 + $0x60] sm:$0xff]
      %v1033 = vld [vmem:[#allocation3 + $0x68] sm:$0xff]
      %v1034 = vld [vmem:[#allocation3 + $0x70] sm:$0xff]
      %v1035 = vld [vmem:[#allocation3 + $0x78] sm:$0xff]
      %v1036 = vld [vmem:[#allocation3 + $0x80] sm:$0xff]
      %v1037 = vld [vmem:[#allocation3 + $0x88] sm:$0xff]
      %v1038 = vld [vmem:[#allocation3 + $0x90] sm:$0xff]
      %v1039 = vld [vmem:[#allocation3 + $0x98] sm:$0xff]
      %v1040 = vld [vmem:[#allocation3 + $0xa0] sm:$0xff]
      %v1041 = vld [vmem:[#allocation3 + $0xa8] sm:$0xff]
      %v1042 = vld [vmem:[#allocation3 + $0xb0] sm:$0xff]
      %v1043 = vld [vmem:[#allocation3 + $0xb8] sm:$0xff]
      %v1044 = vld [vmem:[#allocation3 + $0xc0] sm:$0xff]
      %v1045 = vld [vmem:[#allocation3 + $0xc8] sm:$0xff]
      %v1046 = vld [vmem:[#allocation3 + $0xd0] sm:$0xff]
      %v1047 = vld [vmem:[#allocation3 + $0xd8] sm:$0xff]
      %v1048 = vld [vmem:[#allocation3 + $0xe0] sm:$0xff]
      %v1049 = vld [vmem:[#allocation3 + $0xe8] sm:$0xff]
      %v1050 = vld [vmem:[#allocation3 + $0xf0] sm:$0xff]
      %v1051 = vld [vmem:[#allocation3 + $0xf8] sm:$0xff]
      %v1052 = vld [vmem:[#allocation3 + $0x100] sm:$0xff]
      %v1053 = vld [vmem:[#allocation3 + $0x108] sm:$0xff]
      %v1054 = vld [vmem:[#allocation3 + $0x110] sm:$0xff]
      %v1055 = vld [vmem:[#allocation3 + $0x118] sm:$0xff]
      %v1056 = vld [vmem:[#allocation3 + $0x120] sm:$0xff]
      %v1057 = vld [vmem:[#allocation3 + $0x128] sm:$0xff]
      %v1058 = vld [vmem:[#allocation3 + $0x130] sm:$0xff]
      %v1059 = vld [vmem:[#allocation3 + $0x138] sm:$0xff]
      %v1060 = vld [vmem:[#allocation3 + $0x140] sm:$0xff]
      %v1061 = vld [vmem:[#allocation3 + $0x148] sm:$0xff]
      %v1062 = vld [vmem:[#allocation3 + $0x150] sm:$0xff]
      %v1063 = vld [vmem:[#allocation3 + $0x158] sm:$0xff]
      %v1064 = vld [vmem:[#allocation3 + $0x160] sm:$0xff]
      %v1065 = vld [vmem:[#allocation3 + $0x168] sm:$0xff]
      %v1066 = vld [vmem:[#allocation3 + $0x170] sm:$0xff]
      %v1067 = vld [vmem:[#allocation3 + $0x178] sm:$0xff]
      %v1068 = vld [vmem:[#allocation3 + $0x180] sm:$0xff]
      %v1069 = vld [vmem:[#allocation3 + $0x188] sm:$0xff]
      %v1070 = vld [vmem:[%s4] sm:$0xff]
      %v1071 = vld [vmem:[%s4 + $0x8] sm:$0xff]
      %v1072 = vld [vmem:[%s4 + $0x10] sm:$0xff]
      %v1073 = vld [vmem:[%s4 + $0x18] sm:$0xff]
      %v1074 = vld [vmem:[%s4 + $0x20] sm:$0xff]
      %v1075 = vld [vmem:[%s4 + $0x28] sm:$0xff]
      %v1076 = vld [vmem:[%s4 + $0x30] sm:$0xff]
      %v1077 = vld [vmem:[%s4 + $0x38] sm:$0xff]
      %1079 = vset.pattern.permute.xlu0 0
      %1080 = vperm.xlu0 %1079, %v1070
      %v1081 = vpop.permute.xlu0 %1080
      %1084 = vset.pattern.permute.xlu0 0
      %1085 = vperm.xlu0 %1084, %v1071
      %v1086 = vpop.permute.xlu0 %1085
      %1089 = vset.pattern.permute.xlu0 0
      %1090 = vperm.xlu0 %1089, %v1072
      %v1091 = vpop.permute.xlu0 %1090
      %1094 = vset.pattern.permute.xlu0 0
      %1095 = vperm.xlu0 %1094, %v1073
      %v1096 = vpop.permute.xlu0 %1095
      %1099 = vset.pattern.permute.xlu0 0
      %1100 = vperm.xlu0 %1099, %v1074
      %v1101 = vpop.permute.xlu0 %1100
      %1104 = vset.pattern.permute.xlu0 0
      %1105 = vperm.xlu0 %1104, %v1075
      %v1106 = vpop.permute.xlu0 %1105
      %1109 = vset.pattern.permute.xlu0 0
      %1110 = vperm.xlu0 %1109, %v1076
      %v1111 = vpop.permute.xlu0 %1110
      %1114 = vset.pattern.permute.xlu0 0
      %1115 = vperm.xlu0 %1114, %v1077
      %v1116 = vpop.permute.xlu0 %1115
      %v1134 = vunpack.c.l.b16 %v1004
      %v1135 = vunpack.c.h.b16 %v1004
      %v1136 = vunpack.c.l.b16 %v1005
      %v1137 = vunpack.c.h.b16 %v1005
      %v1138 = vunpack.c.l.b16 %v1006
      %v1139 = vunpack.c.h.b16 %v1006
      %v1140 = vunpack.c.l.b16 %v1007
      %v1141 = vunpack.c.h.b16 %v1007
      %v1142 = vunpack.c.l.b16 %v1008
      %v1143 = vunpack.c.h.b16 %v1008
      %v1144 = vunpack.c.l.b16 %v1009
      %v1145 = vunpack.c.h.b16 %v1009
      %v1146 = vunpack.c.l.b16 %v1010
      %v1147 = vunpack.c.h.b16 %v1010
      %v1148 = vunpack.c.l.b16 %v1011
      %v1149 = vunpack.c.h.b16 %v1011
      %v1150 = vunpack.c.l.b16 %v1012
      %v1151 = vunpack.c.h.b16 %v1012
      %v1152 = vunpack.c.l.b16 %v1013
      %v1153 = vunpack.c.h.b16 %v1013
      %v1154 = vunpack.c.l.b16 %v1014
      %v1155 = vunpack.c.h.b16 %v1014
      %v1156 = vunpack.c.l.b16 %v1015
      %v1157 = vunpack.c.h.b16 %v1015
      %v1158 = vunpack.c.l.b16 %v1016
      %v1159 = vunpack.c.h.b16 %v1016
      %v1160 = vunpack.c.l.b16 %v1017
      %v1161 = vunpack.c.h.b16 %v1017
      %v1162 = vunpack.c.l.b16 %v1018
      %v1163 = vunpack.c.h.b16 %v1018
      %v1164 = vunpack.c.l.b16 %v1019
      %v1165 = vunpack.c.h.b16 %v1019
      %v1166 = vpack.c.b16 %v1138, %v1134
      %v1167 = vpack.c.b16 %v1139, %v1135
      %v1168 = vpack.c.b16 %v1140, %v1136
      %v1169 = vpack.c.b16 %v1141, %v1137
      %v1170 = vpack.c.b16 %v1146, %v1142
      %v1171 = vpack.c.b16 %v1147, %v1143
      %v1172 = vpack.c.b16 %v1148, %v1144
      %v1173 = vpack.c.b16 %v1149, %v1145
      %v1174 = vpack.c.b16 %v1154, %v1150
      %v1175 = vpack.c.b16 %v1155, %v1151
      %v1176 = vpack.c.b16 %v1156, %v1152
      %v1177 = vpack.c.b16 %v1157, %v1153
      %v1178 = vpack.c.b16 %v1162, %v1158
      %v1179 = vpack.c.b16 %v1163, %v1159
      %v1180 = vpack.c.b16 %v1164, %v1160
      %v1181 = vpack.c.b16 %v1165, %v1161
      %vm1194 = vcmask 130048
      %v1196 = vsel %vm1194, %v1169, 0
      %v1199 = vsel %vm1194, %v1173, 0
      %v1202 = vsel %vm1194, %v1177, 0
      %v1205 = vsel %vm1194, %v1181, 0
      %1207 = vmatprep.subr.bf16.mxu0 %v1021
      %1208 = vmatpush1.bf16.msra.mxu0 %v1020
      %1209 = vmatprep.subr.bf16.mxu0 %v1023
      %1210 = vmatpush1.bf16.msra.mxu0 %v1022
      %1211 = vmatprep.subr.bf16.mxu0 %v1025
      %1212 = vmatpush1.bf16.msra.mxu0 %v1024
      %1213 = vmatprep.subr.bf16.mxu0 %v1027
      %1214 = vmatpush1.bf16.msra.mxu0 %v1026
      %1215 = vmatprep.subr.bf16.mxu0 %v1029
      %1216 = vmatpush1.bf16.msra.mxu0 %v1028
      %1217 = vmatprep.subr.bf16.mxu0 %v1031
      %1218 = vmatpush1.bf16.msra.mxu0 %v1030
      %1219 = vmatprep.subr.bf16.mxu0 %v1033
      %1220 = vmatpush1.bf16.msra.mxu0 %v1032
      %1221 = vmatprep.subr.bf16.mxu0 %v1035
      %1222 = vmatpush1.bf16.msra.mxu0 %v1034
      %1223 = vmatprep.subr.bf16.mxu0 %v1037
      %1224 = vmatpush1.bf16.msra.mxu0 %v1036
      %1225 = vmatprep.subr.bf16.mxu0 %v1039
      %1226 = vmatpush1.bf16.msra.mxu0 %v1038
      %1227 = vmatprep.subr.bf16.mxu0 %v1041
      %1228 = vmatpush1.bf16.msra.mxu0 %v1040
      %1229 = vmatprep.subr.bf16.mxu0 %v1043
      %1230 = vmatpush1.bf16.msra.mxu0 %v1042
      %1231 = vmatprep.subr.bf16.mxu0 %v1045
      %1232 = vmatpush1.bf16.msra.mxu0 %v1044
      %1233 = vmatprep.subr.bf16.mxu0 %v1047
      %1234 = vmatpush1.bf16.msra.mxu0 %v1046
      %1235 = vmatprep.subr.bf16.mxu0 %v1049
      %1236 = vmatpush1.bf16.msra.mxu0 %v1048
      %1237 = vmatprep.subr.bf16.mxu0 %v1051
      %1238 = vmatpush1.bf16.msra.mxu0 %v1050
      %1239 = vmatprep.mubr.bf16.mxu0 %v1167
      %1240 = vmatmul.mubr.bf16.gmra.mrb[0].mxu0 %v1166
      %v1241 = vpop.f32.mrb[0].mxu0
      %v1242 = vadd.f32 %v1081, %v1241
      %v1243 = vpop.f32.mrb[0].mxu0
      %v1244 = vadd.f32 %v1081, %v1243
      %v1245 = vpop.f32.mrb[0].mxu0
      %v1246 = vadd.f32 %v1086, %v1245
      %v1247 = vpop.f32.mrb[0].mxu0
      %v1248 = vadd.f32 %v1086, %v1247
      %1249 = vmatprep.mubr.bf16.mxu0 %v1171
      %1250 = vmatmul.mubr.bf16.gmra.mrb[0].mxu0 %v1170
      %v1251 = vpop.f32.mrb[0].mxu0
      %v1252 = vadd.f32 %v1091, %v1251
      %v1253 = vpop.f32.mrb[0].mxu0
      %v1254 = vadd.f32 %v1091, %v1253
      %v1255 = vpop.f32.mrb[0].mxu0
      %v1256 = vadd.f32 %v1096, %v1255
      %v1257 = vpop.f32.mrb[0].mxu0
      %v1258 = vadd.f32 %v1096, %v1257
      %1259 = vmatprep.mubr.bf16.mxu0 %v1175
      %1260 = vmatmul.mubr.bf16.gmra.mrb[0].mxu0 %v1174
      %v1261 = vpop.f32.mrb[0].mxu0
      %v1262 = vadd.f32 %v1101, %v1261
      %v1263 = vpop.f32.mrb[0].mxu0
      %v1264 = vadd.f32 %v1101, %v1263
      %v1265 = vpop.f32.mrb[0].mxu0
      %v1266 = vadd.f32 %v1106, %v1265
      %v1267 = vpop.f32.mrb[0].mxu0
      %v1268 = vadd.f32 %v1106, %v1267
      %1269 = vmatprep.mubr.bf16.mxu0 %v1179
      %1270 = vmatmul.mubr.bf16.gmra.mrb[0].mxu0 %v1178
      %v1271 = vpop.f32.mrb[0].mxu0
      %v1272 = vadd.f32 %v1111, %v1271
      %v1273 = vpop.f32.mrb[0].mxu0
      %v1274 = vadd.f32 %v1111, %v1273
      %v1275 = vpop.f32.mrb[0].mxu0
      %v1276 = vadd.f32 %v1116, %v1275
      %v1277 = vpop.f32.mrb[0].mxu0
      %v1278 = vadd.f32 %v1116, %v1277
      %1279 = vdwg.mxu0
      %1280 = vmatprep.subr.bf16.mxu0 %v1053
      %1281 = vmatpush1.bf16.msra.mxu0 %v1052
      %1282 = vmatprep.subr.bf16.mxu0 %v1055
      %1283 = vmatpush1.bf16.msra.mxu0 %v1054
      %1284 = vmatprep.subr.bf16.mxu0 %v1057
      %1285 = vmatpush1.bf16.msra.mxu0 %v1056
      %1286 = vmatprep.subr.bf16.mxu0 %v1059
      %1287 = vmatpush1.bf16.msra.mxu0 %v1058
      %1288 = vmatprep.subr.bf16.mxu0 %v1061
      %1289 = vmatpush1.bf16.msra.mxu0 %v1060
      %1290 = vmatprep.subr.bf16.mxu0 %v1063
      %1291 = vmatpush1.bf16.msra.mxu0 %v1062
      %1292 = vmatprep.subr.bf16.mxu0 %v1065
      %1293 = vmatpush1.bf16.msra.mxu0 %v1064
      %1294 = vmatprep.subr.bf16.mxu0 %v1067
      %1295 = vmatpush1.bf16.msra.mxu0 %v1066
      %1296 = vmatprep.subr.bf16.mxu0 %v1069
      %1297 = vmatpush1.bf16.msra.mxu0 %v1068
      %1298 = vmatprep.subr.bf16.mxu0 0
      %1299 = vmatpush1.bf16.msra.mxu0 0
      %1300 = vmatprep.subr.bf16.mxu0 0
      %1301 = vmatpush1.bf16.msra.mxu0 0
      %1302 = vmatprep.subr.bf16.mxu0 0
      %1303 = vmatpush1.bf16.msra.mxu0 0
      %1304 = vmatprep.subr.bf16.mxu0 0
      %1305 = vmatpush1.bf16.msra.mxu0 0
      %1306 = vmatprep.subr.bf16.mxu0 0
      %1307 = vmatpush1.bf16.msra.mxu0 0
      %1308 = vmatprep.subr.bf16.mxu0 0
      %1309 = vmatpush1.bf16.msra.mxu0 0
      %1310 = vmatprep.subr.bf16.mxu0 0
      %1311 = vmatpush1.bf16.msra.mxu0 0
      %1312 = vmatprep.mubr.bf16.mxu0 %v1196
      %1313 = vmatmul.mubr.bf16.gmra.mrb[0].mxu0 %v1168
      %v1314 = vpop.f32.mrb[0].mxu0
      %v1315 = vadd.f32 %v1242, %v1314
      %v1316 = vpop.f32.mrb[0].mxu0
      %v1317 = vadd.f32 %v1244, %v1316
      %v1318 = vpop.f32.mrb[0].mxu0
      %v1319 = vadd.f32 %v1246, %v1318
      %v1320 = vpop.f32.mrb[0].mxu0
      %v1321 = vadd.f32 %v1248, %v1320
      %1322 = vmatprep.mubr.bf16.mxu0 %v1199
      %1323 = vmatmul.mubr.bf16.gmra.mrb[0].mxu0 %v1172
      %v1324 = vpop.f32.mrb[0].mxu0
      %v1325 = vadd.f32 %v1252, %v1324
      %v1326 = vpop.f32.mrb[0].mxu0
      %v1327 = vadd.f32 %v1254, %v1326
      %v1328 = vpop.f32.mrb[0].mxu0
      %v1329 = vadd.f32 %v1256, %v1328
      %v1330 = vpop.f32.mrb[0].mxu0
      %v1331 = vadd.f32 %v1258, %v1330
      %1332 = vmatprep.mubr.bf16.mxu0 %v1202
      %1333 = vmatmul.mubr.bf16.gmra.mrb[0].mxu0 %v1176
      %v1334 = vpop.f32.mrb[0].mxu0
      %v1335 = vadd.f32 %v1262, %v1334
      %v1336 = vpop.f32.mrb[0].mxu0
      %v1337 = vadd.f32 %v1264, %v1336
      %v1338 = vpop.f32.mrb[0].mxu0
      %v1339 = vadd.f32 %v1266, %v1338
      %v1340 = vpop.f32.mrb[0].mxu0
      %v1341 = vadd.f32 %v1268, %v1340
      %1342 = vmatprep.mubr.bf16.mxu0 %v1205
      %1343 = vmatmul.mubr.bf16.gmra.mrb[0].mxu0 %v1180
      %v1344 = vpop.f32.mrb[0].mxu0
      %v1345 = vadd.f32 %v1272, %v1344
      %v1346 = vpop.f32.mrb[0].mxu0
      %v1347 = vadd.f32 %v1274, %v1346
      %v1348 = vpop.f32.mrb[0].mxu0
      %v1349 = vadd.f32 %v1276, %v1348
      %v1350 = vpop.f32.mrb[0].mxu0
      %v1351 = vadd.f32 %v1278, %v1350
      %1352 = vdwg.mxu0
      %v1353 = vpack.c.bf16 %v1319, %v1315
      %v1354 = vpack.c.bf16 %v1321, %v1317
      %v1355 = vpack.c.bf16 %v1329, %v1325
      %v1356 = vpack.c.bf16 %v1331, %v1327
      %v1357 = vpack.c.bf16 %v1339, %v1335
      %v1358 = vpack.c.bf16 %v1341, %v1337
      %v1359 = vpack.c.bf16 %v1349, %v1345
      %v1360 = vpack.c.bf16 %v1351, %v1347
      %v1369 = vunpack.c.l.b16 %v1353
      %v1370 = vunpack.c.l.b16 %v1354
      %v1371 = vunpack.c.h.b16 %v1353
      %v1372 = vunpack.c.h.b16 %v1354
      %v1373 = vunpack.c.l.b16 %v1355
      %v1374 = vunpack.c.l.b16 %v1356
      %v1375 = vunpack.c.h.b16 %v1355
      %v1376 = vunpack.c.h.b16 %v1356
      %v1377 = vunpack.c.l.b16 %v1357
      %v1378 = vunpack.c.l.b16 %v1358
      %v1379 = vunpack.c.h.b16 %v1357
      %v1380 = vunpack.c.h.b16 %v1358
      %v1381 = vunpack.c.l.b16 %v1359
      %v1382 = vunpack.c.l.b16 %v1360
      %v1383 = vunpack.c.h.b16 %v1359
      %v1384 = vunpack.c.h.b16 %v1360
      %v1385 = vpack.c.b16 %v1370, %v1369
      %v1386 = vpack.c.b16 %v1372, %v1371
      %v1387 = vpack.c.b16 %v1374, %v1373
      %v1388 = vpack.c.b16 %v1376, %v1375
      %v1389 = vpack.c.b16 %v1378, %v1377
      %v1390 = vpack.c.b16 %v1380, %v1379
      %v1391 = vpack.c.b16 %v1382, %v1381
      %v1392 = vpack.c.b16 %v1384, %v1383
      %1401 = vst [vmem:[%s370] sm:$0xff] %v1385
      %1402 = vst [vmem:[%s370 + $0x8] sm:$0xff] %v1386
      %1403 = vst [vmem:[%s370 + $0x10] sm:$0xff] %v1387
      %1404 = vst [vmem:[%s370 + $0x18] sm:$0xff] %v1388
      %1405 = vst [vmem:[%s370 + $0x20] sm:$0xff] %v1389
      %1406 = vst [vmem:[%s370 + $0x28] sm:$0xff] %v1390
      %1407 = vst [vmem:[%s370 + $0x30] sm:$0xff] %v1391
      %1408 = vst [vmem:[%s370 + $0x38] sm:$0xff] %v1392
      %p1409 = scmp.lt.s32.totalorder %s20, 1
      %s1410 = scalar_select %p1409, %s20, 1
      %p1411 = scmp.lt.s32.totalorder %s21, 1
      %s1412 = scalar_select %p1411, %s21, 1
      %s1413 = smul.addr %s1412, 16
      %s1414 = smul.addr %s1410, 32
      %s1415 = sadd.s32 %s1413, %s1414
      %s1416 = smul.addr %s1415, 4
      %s1417 = scalar_lea.vmem %s5, %s1416
      // Predicated region
      $region49: #{fsrcnn_forward_pallas.4} parent=39 // pred_check
        %p1418 = pneg %p186
      $region50: #{fsrcnn_forward_pallas.4} parent=39 // pred_check_branch
        %1420 = sbr.rel (%p1418) target = $region52
      $region51: #{fsrcnn_forward_pallas.4} parent=39 // pred_region
        _
      $region52: #{fsrcnn_forward_pallas.4} parent=39 // pred_fallthru
        _
    $region40: #{fsrcnn_forward_pallas.4} parent=5 // pred_fallthru
      _
    %p1421 = scmp.le.s32.totalorder 2, %s11
    // Predicated region
    $region53: #{fsrcnn_forward_pallas.4} parent=5 // pred_check
      %p1422 = pneg %p1421
    $region54: #{fsrcnn_forward_pallas.4} parent=5 // pred_check_branch
      %1424 = sbr.rel (%p1422) target = $region56
    $region55: #{fsrcnn_forward_pallas.4} parent=5 // pred_region
      %s1425 = ssub.s32 %s11, 2
      // Predicated region
      $region57: #{fsrcnn_forward_pallas.4} parent=55 // pred_check
        %p1426 = pneg %p192
      $region58: #{fsrcnn_forward_pallas.4} parent=55 // pred_check_branch
        %1428 = sbr.rel (%p1426) target = $region60
      $region59: #{fsrcnn_forward_pallas.4} parent=55 // pred_region
        %p1429 = scmp.lt.s32.totalorder %s22, 1
        %s1430 = scalar_select %p1429, %s22, 1
        %p1431 = scmp.lt.s32.totalorder %s23, 1
        %s1432 = scalar_select %p1431, %s23, 1
        %s1433 = smul.addr %s1432, 16
        %s1434 = smul.addr %s1430, 32
        %s1435 = sadd.s32 %s1433, %s1434
        %s1436 = smul.addr %s1435, 4
        %s1437 = scalar_lea.vmem %s5, %s1436
      $region60: #{fsrcnn_forward_pallas.4} parent=55 // pred_fallthru
        _
    $region56: #{fsrcnn_forward_pallas.4} parent=5 // pred_fallthru
      _
  $region6: #{fsrcnn_forward_pallas.4} parent=0 // loop_footer
    %s15 = sadd.s32 1, %s11
  $region7: #{fsrcnn_forward_pallas.4} parent=0 // loop_footer_branch
    %10 = sbr.rel target = $region3
  $region8: #{fsrcnn_forward_pallas.4} parent=0 // loop_exit
    _

// kernel: tile.18
$region0: #{tile.18}
  #allocation0 [shape = 's32[1]{0}', space=sflag, size = 0x4, scoped, tag = 'scoped memory for tile.18']
  %s0 = inlined_call_operand.vmem [shape: f32[3], index: 0, kind: input, shape index: {}]
  %s1 = inlined_call_operand.vmem [shape: f32[16,3], index: 1, kind: output, shape index: {}]
  // Predicated region
  $region2: #{tile.18} parent=0 // pred_check
    _
  $region3: #{tile.18} parent=0 // pred_check_branch
    %3 = sbr.rel (0) target = $region5
  $region4: #{tile.18} parent=0 // pred_region
    _
  $region5: #{tile.18} parent=0 // pred_fallthru
    _
  %v4 = vld [vmem:[%s0] ss:$0 sm:$0xff]
  %5 = vst [vmem:[%s1] sm:$0xff] %v4
  %s6 = scalar_lea.vmem %s1, 8
  %7 = vst [vmem:[%s6] sm:$0xff] %v4

// kernel: tile.1
$region0: #{tile.1}
  %s0 = inlined_call_operand.vmem [shape: f32[16,3], index: 0, kind: input, shape index: {}]
  %s1 = inlined_call_operand.vmem [shape: f32[48,1], index: 1, kind: output, shape index: {}]
  %v2 = vld [vmem:[%s0] sm:$0xff]
  %vm3 = vcmask 7168
  %4 = vst.msk [vmem:[%s1] ss:$3 sm:$0xff] %vm3, %v2
  %s5 = scalar_lea.vmem %s0, 8
  %v6 = vld [vmem:[%s5] sm:$0xff]
  %vm7 = vcmask 7168
  %s8 = scalar_lea.vmem %s1, 24
  %9 = vst.msk [vmem:[%s8] ss:$3 sm:$0xff] %vm7, %v6
  %v10 = vld.sshfl [vmem:[%s0] sm:$0xff pattern:$0xe3d2c1b0]
  %11 = vrot.lane.b32.xlu0 %v10, 127
  %v12 = vpop.permute.xlu0 %11
  %vm13 = vcmask 7168
  %s14 = scalar_lea.vmem %s1, 1
  %15 = vst.msk [vmem:[%s14] ss:$33 sm:$0x3] %vm13, %v12
  %s16 = scalar_lea.vmem %s1, 4294967234
  %17 = vst.msk [vmem:[%s16] ss:$33 sm:$0xc] %vm13, %v12
  %s18 = scalar_lea.vmem %s1, 4294967171
  %19 = vst.msk [vmem:[%s18] ss:$33 sm:$0x30] %vm13, %v12
  %s20 = scalar_lea.vmem %s1, 4294967108
  %21 = vst.msk [vmem:[%s20] ss:$33 sm:$0xc0] %vm13, %v12
  %s22 = scalar_lea.vmem %s0, 4
  %v23 = vld.sshfl [vmem:[%s22] sm:$0xff pattern:$0x654321b0]
  %24 = vrot.lane.b32.xlu0 %v23, 127
  %v25 = vpop.permute.xlu0 %24
  %vm26 = vcmask 7168
  %s27 = scalar_lea.vmem %s1, 13
  %28 = vst.msk [vmem:[%s27] ss:$33 sm:$0x3] %vm26, %v25
  %s29 = scalar_lea.vmem %s1, 10
  %30 = vst.msk [vmem:[%s29] ss:$3 sm:$0xfc] %vm26, %v25
  %v31 = vld.sshfl [vmem:[%s0] sm:$0xff pattern:$0x3d2c1b0a]
  %32 = vrot.lane.b32.xlu0 %v31, 126
  %v33 = vpop.permute.xlu0 %32
  %vm34 = vcmask 7168
  %s35 = scalar_lea.vmem %s1, 32
  %36 = vst.msk [vmem:[%s35] ss:$-30 sm:$0x3] %vm34, %v33
  %s37 = scalar_lea.vmem %s1, 95
  %38 = vst.msk [vmem:[%s37] ss:$-30 sm:$0xc] %vm34, %v33
  %s39 = scalar_lea.vmem %s1, 158
  %40 = vst.msk [vmem:[%s39] ss:$-30 sm:$0x30] %vm34, %v33
  %s41 = scalar_lea.vmem %s1, 221
  %42 = vst.msk [vmem:[%s41] ss:$-30 sm:$0xc0] %vm34, %v33
  %s43 = scalar_lea.vmem %s0, 4
  %v44 = vld.sshfl [vmem:[%s43] sm:$0xff pattern:$0x54321b0a]
  %45 = vrot.lane.b32.xlu0 %v44, 126
  %v46 = vpop.permute.xlu0 %45
  %vm47 = vcmask 7168
  %s48 = scalar_lea.vmem %s1, 44
  %49 = vst.msk [vmem:[%s48] ss:$-30 sm:$0x3] %vm47, %v46
  %s50 = scalar_lea.vmem %s1, 107
  %51 = vst.msk [vmem:[%s50] ss:$-30 sm:$0xc] %vm47, %v46
  %s52 = scalar_lea.vmem %s1, 8
  %53 = vst.msk [vmem:[%s52] ss:$3 sm:$0xf0] %vm47, %v46

// kernel: fsrcnn_forward_pallas.5
$region0: #{fsrcnn_forward_pallas.5}
  #allocation0 [shape = 'u32[]', space=smem, size = 0x4, offset = 0x4, fixed_abs, tag = 'smem constant byte address 0x4 - core index']
  #allocation1 [shape = 'u32[144,128]{1,0:T(1,128)}', space=vmem, size = 0x12000, scoped, tag = 'internal scratch']
  #allocation2 [shape = 'bf16[64,300]{1,0:T(16,128)(2,1)}', space=vmem, size = 0xc000, scoped, tag = 'scratch operand']
  #allocation3 [shape = 'bf16[576,256]{1,0:T(16,128)(2,1)}', space=vmem, size = 0x48000, scoped, tag = 'scratch operand']
  %s0 = inlined_call_operand.vmem [shape: bf16[2,2,64,256], index: 0, kind: input, shape index: {}, may-alias: {0,1,2}]
  %s1 = inlined_call_operand.vmem [shape: bf16[2,2,64,256], index: 1, kind: input, shape index: {}, may-alias: {0,1,2}]
  %s2 = inlined_call_operand.vmem [shape: bf16[2,2,64,256], index: 2, kind: input, shape index: {}, may-alias: {0,1,2}]
  %s3 = inlined_call_operand.vmem [shape: bf16[48,576], index: 3, kind: input, shape index: {}]
  %s4 = inlined_call_operand.vmem [shape: f32[48,1], index: 4, kind: input, shape index: {}]
  %s5 = inlined_call_operand.vmem [shape: f32[2,2,48,256], index: 5, kind: output, shape index: {}]
  %s6 = sld [smem:[#allocation0]]
  $region61: #{fsrcnn_forward_pallas.5} parent=0
    _
  %s8 = ssub.s32 1, %s6
  %s9 = scalar_select 0, %s8, %s6
  loop: start=0, step=1, limit=6
  $region2: #{fsrcnn_forward_pallas.5} parent=0 // loop_pre_header
    _
  $region3: #{fsrcnn_forward_pallas.5} parent=0 // loop_header
    %s11 = sphi 0, %s15
    %p12 = scmp.ge.s32.totalorder %s11, 6
    %s18 = sphi 0, %s30
    %s19 = sphi 0, %s26
    %s20 = sphi 0, %s18
    %s21 = sphi 0, %s19
    %s22 = sphi 0, %s20
    %s23 = sphi 0, %s21
    %s41 = sphi 0, %s43
    %s44 = sphi 0, %s41
    %s45 = sphi 0, %s44
    %s61 = sphi 0, %s45
    %s69 = sphi 0, %s71
    %s72 = sphi 0, %s69
    %s73 = sphi 0, %s72
    %s89 = sphi 0, %s73
    %s103 = sphi 0, %s105
    %s106 = sphi 0, %s103
    %s107 = sphi 0, %s106
    %s123 = sphi 0, %s107
    %s127 = sphi 0, %s127
    %s129 = sphi 0, %s127
    %s130 = sphi 0, %s129
    %s144 = sphi 0, %s130
    %s148 = sphi 0, %s148
    %s150 = sphi 0, %s148
    %s151 = sphi 0, %s150
    %s165 = sphi 0, %s151
    %s173 = sphi 0, %s175
    %s176 = sphi 0, %s173
    %s177 = sphi 0, %s176
    %s193 = sphi 0, %s177
  $region4: #{fsrcnn_forward_pallas.5} parent=0 // loop_header_branch
    %14 = sbr.rel (%p12) target = $region8
  $region5: #{fsrcnn_forward_pallas.5} parent=0 // loop_body
    %s16 = ssub.s32 %s11, 1
    %s17 = ssub.s32 %s11, 2
    %s24 = sadd.s32 1, %s19
    %p25 = scmp.ge.s32.totalorder %s24, 2
    %s26 = scalar_select %p25, 0, %s24
    %s27 = sadd.s32 1, %s18
    %s28 = scalar_select %p25, %s27, %s18
    %p29 = scmp.ge.s32.totalorder %s28, 2
    %s30 = scalar_select %p29, 0, %s28
    %s31 = ssub.s32 %s19, 1
    %p32 = scmp.gt.s32.totalorder %s31, 0
    %s33 = scalar_select %p32, %s31, 0
    %s34 = ssub.s32 %s26, 1
    %p35 = scmp.gt.s32.totalorder %s34, 0
    %s36 = scalar_select %p35, %s34, 0
    %s37 = ssub.s32 %s18, %s30
    %s38 = ssub.s32 %s33, %s36
    %s39 = sor.u32 %s37, %s38
    %p40 = scmp.eq.s32.totalorder %s39, 0
    %s42 = sadd.s32 %s41, 1
    %s43 = scalar_select %p40, %s41, %s42
    %p46 = pneg %p40
    %p47 = scmp.eq.s32.totalorder %s11, 3
    %p48 = por %p46, %p47
    %p49 = scmp.ne.s32.totalorder %s41, %s44
    %p50 = scmp.eq.s32.totalorder %s11, 0
    %p51 = por %p49, %p50
    %p52 = scmp.ne.s32.totalorder %s41, %s44
    %p53 = scmp.eq.s32.totalorder %s16, 3
    %p54 = por %p52, %p53
    %p55 = scmp.ne.s32.totalorder %s44, %s45
    %p56 = scmp.eq.s32.totalorder %s16, 0
    %p57 = por %p55, %p56
    %p58 = scmp.ne.s32.totalorder %s44, %s45
    %p59 = scmp.eq.s32.totalorder %s17, 3
    %p60 = por %p58, %p59
    %p62 = scmp.ne.s32.totalorder %s45, %s61
    %p63 = scmp.eq.s32.totalorder %s17, 0
    %p64 = por %p62, %p63
    %s65 = ssub.s32 %s18, %s30
    %s66 = ssub.s32 %s19, %s26
    %s67 = sor.u32 %s65, %s66
    %p68 = scmp.eq.s32.totalorder %s67, 0
    %s70 = sadd.s32 %s69, 1
    %s71 = scalar_select %p68, %s69, %s70
    %p74 = pneg %p68
    %p75 = scmp.eq.s32.totalorder %s11, 3
    %p76 = por %p74, %p75
    %p77 = scmp.ne.s32.totalorder %s69, %s72
    %p78 = scmp.eq.s32.totalorder %s11, 0
    %p79 = por %p77, %p78
    %p80 = scmp.ne.s32.totalorder %s69, %s72
    %p81 = scmp.eq.s32.totalorder %s16, 3
    %p82 = por %p80, %p81
    %p83 = scmp.ne.s32.totalorder %s72, %s73
    %p84 = scmp.eq.s32.totalorder %s16, 0
    %p85 = por %p83, %p84
    %p86 = scmp.ne.s32.totalorder %s72, %s73
    %p87 = scmp.eq.s32.totalorder %s17, 3
    %p88 = por %p86, %p87
    %p90 = scmp.ne.s32.totalorder %s73, %s89
    %p91 = scmp.eq.s32.totalorder %s17, 0
    %p92 = por %p90, %p91
    %s93 = sadd.s32 %s19, 1
    %p94 = scmp.lt.s32.totalorder %s93, 1
    %s95 = scalar_select %p94, %s93, 1
    %s96 = sadd.s32 %s26, 1
    %p97 = scmp.lt.s32.totalorder %s96, 1
    %s98 = scalar_select %p97, %s96, 1
    %s99 = ssub.s32 %s18, %s30
    %s100 = ssub.s32 %s95, %s98
    %s101 = sor.u32 %s99, %s100
    %p102 = scmp.eq.s32.totalorder %s101, 0
    %s104 = sadd.s32 %s103, 1
    %s105 = scalar_select %p102, %s103, %s104
    %p108 = pneg %p102
    %p109 = scmp.eq.s32.totalorder %s11, 3
    %p110 = por %p108, %p109
    %p111 = scmp.ne.s32.totalorder %s103, %s106
    %p112 = scmp.eq.s32.totalorder %s11, 0
    %p113 = por %p111, %p112
    %p114 = scmp.ne.s32.totalorder %s103, %s106
    %p115 = scmp.eq.s32.totalorder %s16, 3
    %p116 = por %p114, %p115
    %p117 = scmp.ne.s32.totalorder %s106, %s107
    %p118 = scmp.eq.s32.totalorder %s16, 0
    %p119 = por %p117, %p118
    %p120 = scmp.ne.s32.totalorder %s106, %s107
    %p121 = scmp.eq.s32.totalorder %s17, 3
    %p122 = por %p120, %p121
    %p124 = scmp.ne.s32.totalorder %s107, %s123
    %p125 = scmp.eq.s32.totalorder %s17, 0
    %p126 = por %p124, %p125
    %s128 = sadd.s32 %s127, 1
    %p131 = scmp.eq.s32.totalorder %s11, 3
    %p132 = scmp.ne.s32.totalorder %s127, %s129
    %p133 = scmp.eq.s32.totalorder %s11, 0
    %p134 = por %p132, %p133
    %p135 = scmp.ne.s32.totalorder %s127, %s129
    %p136 = scmp.eq.s32.totalorder %s16, 3
    %p137 = por %p135, %p136
    %p138 = scmp.ne.s32.totalorder %s129, %s130
    %p139 = scmp.eq.s32.totalorder %s16, 0
    %p140 = por %p138, %p139
    %p141 = scmp.ne.s32.totalorder %s129, %s130
    %p142 = scmp.eq.s32.totalorder %s17, 3
    %p143 = por %p141, %p142
    %p145 = scmp.ne.s32.totalorder %s130, %s144
    %p146 = scmp.eq.s32.totalorder %s17, 0
    %p147 = por %p145, %p146
    %s149 = sadd.s32 %s148, 1
    %p152 = scmp.eq.s32.totalorder %s11, 3
    %p153 = scmp.ne.s32.totalorder %s148, %s150
    %p154 = scmp.eq.s32.totalorder %s11, 0
    %p155 = por %p153, %p154
    %p156 = scmp.ne.s32.totalorder %s148, %s150
    %p157 = scmp.eq.s32.totalorder %s16, 3
    %p158 = por %p156, %p157
    %p159 = scmp.ne.s32.totalorder %s150, %s151
    %p160 = scmp.eq.s32.totalorder %s16, 0
    %p161 = por %p159, %p160
    %p162 = scmp.ne.s32.totalorder %s150, %s151
    %p163 = scmp.eq.s32.totalorder %s17, 3
    %p164 = por %p162, %p163
    %p166 = scmp.ne.s32.totalorder %s151, %s165
    %p167 = scmp.eq.s32.totalorder %s17, 0
    %p168 = por %p166, %p167
    %s169 = ssub.s32 %s18, %s30
    %s170 = ssub.s32 %s19, %s26
    %s171 = sor.u32 %s169, %s170
    %p172 = scmp.eq.s32.totalorder %s171, 0
    %s174 = sadd.s32 %s173, 1
    %s175 = scalar_select %p172, %s173, %s174
    %p178 = pneg %p172
    %p179 = scmp.eq.s32.totalorder %s11, 3
    %p180 = por %p178, %p179
    %p181 = scmp.ne.s32.totalorder %s173, %s176
    %p182 = scmp.eq.s32.totalorder %s11, 0
    %p183 = por %p181, %p182
    %p184 = scmp.ne.s32.totalorder %s173, %s176
    %p185 = scmp.eq.s32.totalorder %s16, 3
    %p186 = por %p184, %p185
    %p187 = scmp.ne.s32.totalorder %s176, %s177
    %p188 = scmp.eq.s32.totalorder %s16, 0
    %p189 = por %p187, %p188
    %p190 = scmp.ne.s32.totalorder %s176, %s177
    %p191 = scmp.eq.s32.totalorder %s17, 3
    %p192 = por %p190, %p191
    %p194 = scmp.ne.s32.totalorder %s177, %s193
    %p195 = scmp.eq.s32.totalorder %s17, 0
    %p196 = por %p194, %p195
    %p197 = scmp.le.s32.totalorder 1, %s11
    %p198 = scmp.lt.s32.totalorder %s11, 5
    %p199 = pnand %p197, %p198
    %p200 = pneg %p199
    // Predicated region
    $region9: #{fsrcnn_forward_pallas.5} parent=5 // pred_check
      _
    $region10: #{fsrcnn_forward_pallas.5} parent=5 // pred_check_branch
      %202 = sbr.rel (%p199) target = $region12
    $region11: #{fsrcnn_forward_pallas.5} parent=5 // pred_region
      %s203 = ssub.s32 %s11, 1
      // Predicated region
      $region13: #{fsrcnn_forward_pallas.5} parent=11 // pred_check
        %p204 = pneg %p140
      $region14: #{fsrcnn_forward_pallas.5} parent=11 // pred_check_branch
        %206 = sbr.rel (%p204) target = $region16
      $region15: #{fsrcnn_forward_pallas.5} parent=11 // pred_region
        _
      $region16: #{fsrcnn_forward_pallas.5} parent=11 // pred_fallthru
        _
      // Predicated region
      $region17: #{fsrcnn_forward_pallas.5} parent=11 // pred_check
        %p207 = pneg %p161
      $region18: #{fsrcnn_forward_pallas.5} parent=11 // pred_check_branch
        %209 = sbr.rel (%p207) target = $region20
      $region19: #{fsrcnn_forward_pallas.5} parent=11 // pred_region
        _
      $region20: #{fsrcnn_forward_pallas.5} parent=11 // pred_fallthru
        _
    $region12: #{fsrcnn_forward_pallas.5} parent=5 // pred_fallthru
      _
    %p210 = scmp.lt.s32.totalorder %s11, 4
    // Predicated region
    $region21: #{fsrcnn_forward_pallas.5} parent=5 // pred_check
      %p211 = pneg %p210
    $region22: #{fsrcnn_forward_pallas.5} parent=5 // pred_check_branch
      %213 = sbr.rel (%p211) target = $region24
    $region23: #{fsrcnn_forward_pallas.5} parent=5 // pred_region
      // Predicated region
      $region25: #{fsrcnn_forward_pallas.5} parent=23 // pred_check
        %p214 = pneg %p51
      $region26: #{fsrcnn_forward_pallas.5} parent=23 // pred_check_branch
        %216 = sbr.rel (%p214) target = $region28
      $region27: #{fsrcnn_forward_pallas.5} parent=23 // pred_region
        %s217 = ssub.s32 %s19, 1
        %p218 = scmp.gt.s32.totalorder %s217, 0
        %s219 = scalar_select %p218, %s217, 0
        %p220 = scmp.lt.s32.totalorder %s18, 1
        %s221 = scalar_select %p220, %s18, 1
        %p222 = scmp.lt.s32.totalorder %s219, 1
        %s223 = scalar_select %p222, %s219, 1
        %s224 = smul.addr %s223, 16
        %s225 = smul.addr %s221, 32
        %s226 = sadd.s32 %s224, %s225
        %s227 = smul.addr %s226, 4
        %s228 = scalar_lea.vmem %s0, %s227
        %s229 = ssub.s32 %s19, 1
        %p230 = scmp.gt.s32.totalorder %s229, 0
        %s231 = scalar_select %p230, %s229, 0
      $region28: #{fsrcnn_forward_pallas.5} parent=23 // pred_fallthru
        _
      // Predicated region
      $region29: #{fsrcnn_forward_pallas.5} parent=23 // pred_check
        %p232 = pneg %p79
      $region30: #{fsrcnn_forward_pallas.5} parent=23 // pred_check_branch
        %234 = sbr.rel (%p232) target = $region32
      $region31: #{fsrcnn_forward_pallas.5} parent=23 // pred_region
        %p235 = scmp.lt.s32.totalorder %s18, 1
        %s236 = scalar_select %p235, %s18, 1
        %p237 = scmp.lt.s32.totalorder %s19, 1
        %s238 = scalar_select %p237, %s19, 1
        %s239 = smul.addr %s238, 16
        %s240 = smul.addr %s236, 32
        %s241 = sadd.s32 %s239, %s240
        %s242 = smul.addr %s241, 4
        %s243 = scalar_lea.vmem %s1, %s242
      $region32: #{fsrcnn_forward_pallas.5} parent=23 // pred_fallthru
        _
      // Predicated region
      $region33: #{fsrcnn_forward_pallas.5} parent=23 // pred_check
        %p244 = pneg %p113
      $region34: #{fsrcnn_forward_pallas.5} parent=23 // pred_check_branch
        %246 = sbr.rel (%p244) target = $region36
      $region35: #{fsrcnn_forward_pallas.5} parent=23 // pred_region
        %s247 = sadd.s32 %s19, 1
        %p248 = scmp.lt.s32.totalorder %s247, 1
        %s249 = scalar_select %p248, %s247, 1
        %p250 = scmp.lt.s32.totalorder %s18, 1
        %s251 = scalar_select %p250, %s18, 1
        %p252 = scmp.lt.s32.totalorder %s249, 1
        %s253 = scalar_select %p252, %s249, 1
        %s254 = smul.addr %s253, 16
        %s255 = smul.addr %s251, 32
        %s256 = sadd.s32 %s254, %s255
        %s257 = smul.addr %s256, 4
        %s258 = scalar_lea.vmem %s2, %s257
        %s259 = sadd.s32 %s19, 1
        %p260 = scmp.lt.s32.totalorder %s259, 1
        %s261 = scalar_select %p260, %s259, 1
      $region36: #{fsrcnn_forward_pallas.5} parent=23 // pred_fallthru
        _
    $region24: #{fsrcnn_forward_pallas.5} parent=5 // pred_fallthru
      _
    %p262 = scmp.le.s32.totalorder 1, %s11
    %p263 = scmp.lt.s32.totalorder %s11, 5
    %p264 = pnand %p262, %p263
    %p265 = pneg %p264
    // Predicated region
    $region37: #{fsrcnn_forward_pallas.5} parent=5 // pred_check
      _
    $region38: #{fsrcnn_forward_pallas.5} parent=5 // pred_check_branch
      %267 = sbr.rel (%p264) target = $region40
    $region39: #{fsrcnn_forward_pallas.5} parent=5 // pred_region
      %s268 = ssub.s32 %s11, 1
      %s269 = ssub.s32 %s21, 1
      %p270 = scmp.gt.s32.totalorder %s269, 0
      %s271 = scalar_select %p270, %s269, 0
      %p272 = scmp.lt.s32.totalorder %s20, 1
      %s273 = scalar_select %p272, %s20, 1
      %p274 = scmp.lt.s32.totalorder %s271, 1
      %s275 = scalar_select %p274, %s271, 1
      %s276 = smul.addr %s275, 16
      %s277 = smul.addr %s273, 32
      %s278 = sadd.s32 %s276, %s277
      %s279 = smul.addr %s278, 4
      %s280 = scalar_lea.vmem %s0, %s279
      %p281 = pneg %p57
      %p282 = pneg %p54
      %p283 = scmp.lt.s32.totalorder %s20, 1
      %s284 = scalar_select %p283, %s20, 1
      %p285 = scmp.lt.s32.totalorder %s21, 1
      %s286 = scalar_select %p285, %s21, 1
      %s287 = smul.addr %s286, 16
      %s288 = smul.addr %s284, 32
      %s289 = sadd.s32 %s287, %s288
      %s290 = smul.addr %s289, 4
      %s291 = scalar_lea.vmem %s1, %s290
      %p292 = pneg %p85
      %p293 = pneg %p82
      %s294 = sadd.s32 %s21, 1
      %p295 = scmp.lt.s32.totalorder %s294, 1
      %s296 = scalar_select %p295, %s294, 1
      %p297 = scmp.lt.s32.totalorder %s20, 1
      %s298 = scalar_select %p297, %s20, 1
      %p299 = scmp.lt.s32.totalorder %s296, 1
      %s300 = scalar_select %p299, %s296, 1
      %s301 = smul.addr %s300, 16
      %s302 = smul.addr %s298, 32
      %s303 = sadd.s32 %s301, %s302
      %s304 = smul.addr %s303, 4
      %s305 = scalar_lea.vmem %s2, %s304
      %p306 = pneg %p119
      %p307 = pneg %p116
      %p308 = pneg %p140
      %p309 = pneg %p137
      %p310 = pneg %p161
      %p311 = pneg %p158
      %p312 = pneg %p189
      %p313 = pneg %p186
      %p314 = scmp.lt.s32.totalorder %s20, 1
      %s315 = scalar_select %p314, %s20, 1
      %p316 = scmp.lt.s32.totalorder %s21, 1
      %s317 = scalar_select %p316, %s21, 1
      %s318 = smul.addr %s317, 12
      %s319 = smul.addr %s315, 24
      %s320 = sadd.s32 %s318, %s319
      %s321 = smul.addr %s320, 8
      %s322 = scalar_lea.vmem %s5, %s321
      %s323 = ssub.s32 %s21, 1
      %p324 = scmp.gt.s32.totalorder %s323, 0
      %s325 = scalar_select %p324, %s323, 0
      %p326 = scmp.lt.s32.totalorder %s20, 1
      %s327 = scalar_select %p326, %s20, 1
      %p328 = scmp.lt.s32.totalorder %s325, 1
      %s329 = scalar_select %p328, %s325, 1
      %s330 = smul.addr %s329, 16
      %s331 = smul.addr %s327, 32
      %s332 = sadd.s32 %s330, %s331
      %s333 = smul.addr %s332, 4
      %s334 = scalar_lea.vmem %s0, %s333
      %s335 = ssub.s32 %s21, 1
      %p336 = scmp.gt.s32.totalorder %s335, 0
      %s337 = scalar_select %p336, %s335, 0
      %p338 = scmp.lt.s32.totalorder %s20, 1
      %s339 = scalar_select %p338, %s20, 1
      %p340 = scmp.lt.s32.totalorder %s21, 1
      %s341 = scalar_select %p340, %s21, 1
      %s342 = smul.addr %s341, 16
      %s343 = smul.addr %s339, 32
      %s344 = sadd.s32 %s342, %s343
      %s345 = smul.addr %s344, 4
      %s346 = scalar_lea.vmem %s1, %s345
      %s347 = sadd.s32 %s21, 1
      %p348 = scmp.lt.s32.totalorder %s347, 1
      %s349 = scalar_select %p348, %s347, 1
      %p350 = scmp.lt.s32.totalorder %s20, 1
      %s351 = scalar_select %p350, %s20, 1
      %p352 = scmp.lt.s32.totalorder %s349, 1
      %s353 = scalar_select %p352, %s349, 1
      %s354 = smul.addr %s353, 16
      %s355 = smul.addr %s351, 32
      %s356 = sadd.s32 %s354, %s355
      %s357 = smul.addr %s356, 4
      %s358 = scalar_lea.vmem %s2, %s357
      %s359 = sadd.s32 %s21, 1
      %p360 = scmp.lt.s32.totalorder %s359, 1
      %s361 = scalar_select %p360, %s359, 1
      %p362 = scmp.lt.s32.totalorder %s20, 1
      %s363 = scalar_select %p362, %s20, 1
      %p364 = scmp.lt.s32.totalorder %s21, 1
      %s365 = scalar_select %p364, %s21, 1
      %s366 = smul.addr %s365, 12
      %s367 = smul.addr %s363, 24
      %s368 = sadd.s32 %s366, %s367
      %s369 = smul.addr %s368, 8
      %s370 = scalar_lea.vmem %s5, %s369
      %372 = vst [vmem:[#allocation2] sm:$0xff] 0
      %373 = vst [vmem:[#allocation2 + $0x8] sm:$0xff] 0
      %vm374 = vcmask 359424
      %375 = vst.msk [vmem:[#allocation2 + $0x10] sm:$0xff] %vm374, 0
      %376 = vst [vmem:[#allocation2 + $0x18] sm:$0xff] 0
      %377 = vst [vmem:[#allocation2 + $0x20] sm:$0xff] 0
      %378 = vst.msk [vmem:[#allocation2 + $0x28] sm:$0xff] %vm374, 0
      %379 = vst [vmem:[#allocation2 + $0x30] sm:$0xff] 0
      %380 = vst [vmem:[#allocation2 + $0x38] sm:$0xff] 0
      %381 = vst.msk [vmem:[#allocation2 + $0x40] sm:$0xff] %vm374, 0
      %382 = vst [vmem:[#allocation2 + $0x48] sm:$0xff] 0
      %383 = vst [vmem:[#allocation2 + $0x50] sm:$0xff] 0
      %384 = vst.msk [vmem:[#allocation2 + $0x58] sm:$0xff] %vm374, 0
      %p385 = scmp.gt.s32.totalorder %s21, 0
      // Predicated region
      $region41: #{fsrcnn_forward_pallas.5} parent=39 // pred_check
        %p386 = pneg %p385
      $region42: #{fsrcnn_forward_pallas.5} parent=39 // pred_check_branch
        %388 = sbr.rel (%p386) target = $region44
      $region43: #{fsrcnn_forward_pallas.5} parent=39 // pred_region
        %v389 = vld [vmem:[%s334 + $0x4] sm:$0xf]
        %v390 = vld [vmem:[%s334 + $0xc] sm:$0xf]
        %v391 = vld [vmem:[%s334 + $0x14] sm:$0xf]
        %v392 = vld [vmem:[%s334 + $0x1c] sm:$0xf]
        %v393 = vld [vmem:[%s334 + $0x24] sm:$0xf]
        %v394 = vld [vmem:[%s334 + $0x2c] sm:$0xf]
        %v395 = vld [vmem:[%s334 + $0x34] sm:$0xf]
        %v396 = vld [vmem:[%s334 + $0x3c] sm:$0xf]
        %v405 = vunpack.c.l.b16 %v389
        %v406 = vunpack.c.l.b16 %v390
        %v407 = vunpack.c.l.b16 %v391
        %v408 = vunpack.c.l.b16 %v392
        %v409 = vunpack.c.l.b16 %v393
        %v410 = vunpack.c.l.b16 %v394
        %v411 = vunpack.c.l.b16 %v395
        %v412 = vunpack.c.l.b16 %v396
        %v413 = vpack.c.b16 %v406, %v405
        %v414 = vpack.c.b16 %v408, %v407
        %v415 = vpack.c.b16 %v410, %v409
        %v416 = vpack.c.b16 %v412, %v411
        %417 = vrot.lane.b32.xlu0 %v413, 117
        %v418 = vpop.permute.xlu0 %417
        %419 = vrot.lane.b32.xlu0 %v414, 117
        %v420 = vpop.permute.xlu0 %419
        %421 = vrot.lane.b32.xlu0 %v415, 117
        %v422 = vpop.permute.xlu0 %421
        %423 = vrot.lane.b32.xlu0 %v416, 117
        %v424 = vpop.permute.xlu0 %423
        %vm429 = vcmask 138248
        %430 = vst.msk [vmem:[#allocation2] sm:$0xff] %vm429, %v418
        %431 = vst.msk [vmem:[#allocation2 + $0x18] sm:$0xff] %vm429, %v420
        %432 = vst.msk [vmem:[#allocation2 + $0x30] sm:$0xff] %vm429, %v422
        %433 = vst.msk [vmem:[#allocation2 + $0x48] sm:$0xff] %vm429, %v424
      $region44: #{fsrcnn_forward_pallas.5} parent=39 // pred_fallthru
        _
      %v434 = vld [vmem:[%s346] sm:$0xf]
      %v435 = vld [vmem:[%s346 + $0x8] sm:$0xf]
      %v436 = vld [vmem:[%s346 + $0x10] sm:$0xf]
      %v437 = vld [vmem:[%s346 + $0x18] sm:$0xf]
      %v438 = vld [vmem:[%s346 + $0x20] sm:$0xf]
      %v439 = vld [vmem:[%s346 + $0x28] sm:$0xf]
      %v440 = vld [vmem:[%s346 + $0x30] sm:$0xf]
      %v441 = vld [vmem:[%s346 + $0x38] sm:$0xf]
      %v450 = vunpack.c.l.b16 %v434
      %v451 = vunpack.c.l.b16 %v435
      %v452 = vunpack.c.l.b16 %v436
      %v453 = vunpack.c.l.b16 %v437
      %v454 = vunpack.c.l.b16 %v438
      %v455 = vunpack.c.l.b16 %v439
      %v456 = vunpack.c.l.b16 %v440
      %v457 = vunpack.c.l.b16 %v441
      %v458 = vpack.c.b16 %v451, %v450
      %v459 = vpack.c.b16 %v453, %v452
      %v460 = vpack.c.b16 %v455, %v454
      %v461 = vpack.c.b16 %v457, %v456
      %462 = vrot.lane.b32.xlu0 %v458, 19
      %v463 = vpop.permute.xlu0 %462
      %464 = vrot.lane.b32.xlu0 %v459, 19
      %v465 = vpop.permute.xlu0 %464
      %466 = vrot.lane.b32.xlu0 %v460, 19
      %v467 = vpop.permute.xlu0 %466
      %468 = vrot.lane.b32.xlu0 %v461, 19
      %v469 = vpop.permute.xlu0 %468
      %vm474 = vcmask 285848
      %475 = vst.msk [vmem:[#allocation2] sm:$0xff] %vm474, %v463
      %476 = vst.msk [vmem:[#allocation2 + $0x18] sm:$0xff] %vm474, %v465
      %477 = vst.msk [vmem:[#allocation2 + $0x30] sm:$0xff] %vm474, %v467
      %478 = vst.msk [vmem:[#allocation2 + $0x48] sm:$0xff] %vm474, %v469
      %v479 = vld [vmem:[%s346] sm:$0xf]
      %v480 = vld [vmem:[%s346 + $0x8] sm:$0xf]
      %v481 = vld [vmem:[%s346 + $0x10] sm:$0xf]
      %v482 = vld [vmem:[%s346 + $0x18] sm:$0xf]
      %v483 = vld [vmem:[%s346 + $0x20] sm:$0xf]
      %v484 = vld [vmem:[%s346 + $0x28] sm:$0xf]
      %v485 = vld [vmem:[%s346 + $0x30] sm:$0xf]
      %v486 = vld [vmem:[%s346 + $0x38] sm:$0xf]
      %v495 = vunpack.c.l.b16 %v479
      %v496 = vunpack.c.l.b16 %v480
      %v497 = vunpack.c.l.b16 %v481
      %v498 = vunpack.c.l.b16 %v482
      %v499 = vunpack.c.l.b16 %v483
      %v500 = vunpack.c.l.b16 %v484
      %v501 = vunpack.c.l.b16 %v485
      %v502 = vunpack.c.l.b16 %v486
      %v503 = vpack.c.b16 %v496, %v495
      %v504 = vpack.c.b16 %v498, %v497
      %v505 = vpack.c.b16 %v500, %v499
      %v506 = vpack.c.b16 %v502, %v501
      %507 = vrot.lane.b32.xlu0 %v503, 17
      %v508 = vpop.permute.xlu0 %507
      %509 = vrot.lane.b32.xlu0 %v504, 17
      %v510 = vpop.permute.xlu0 %509
      %511 = vrot.lane.b32.xlu0 %v505, 17
      %v512 = vpop.permute.xlu0 %511
      %513 = vrot.lane.b32.xlu0 %v506, 17
      %v514 = vpop.permute.xlu0 %513
      %vm519 = vcmask 433448
      %520 = vst.msk [vmem:[#allocation2] sm:$0xff] %vm519, %v508
      %521 = vst.msk [vmem:[#allocation2 + $0x18] sm:$0xff] %vm519, %v510
      %522 = vst.msk [vmem:[#allocation2 + $0x30] sm:$0xff] %vm519, %v512
      %523 = vst.msk [vmem:[#allocation2 + $0x48] sm:$0xff] %vm519, %v514
      %v524 = vld [vmem:[%s346] sm:$0xf]
      %v525 = vld [vmem:[%s346 + $0x8] sm:$0xf]
      %v526 = vld [vmem:[%s346 + $0x10] sm:$0xf]
      %v527 = vld [vmem:[%s346 + $0x18] sm:$0xf]
      %v528 = vld [vmem:[%s346 + $0x20] sm:$0xf]
      %v529 = vld [vmem:[%s346 + $0x28] sm:$0xf]
      %v530 = vld [vmem:[%s346 + $0x30] sm:$0xf]
      %v531 = vld [vmem:[%s346 + $0x38] sm:$0xf]
      %v540 = vunpack.c.l.b16 %v524
      %v541 = vunpack.c.l.b16 %v525
      %v542 = vunpack.c.l.b16 %v526
      %v543 = vunpack.c.l.b16 %v527
      %v544 = vunpack.c.l.b16 %v528
      %v545 = vunpack.c.l.b16 %v529
      %v546 = vunpack.c.l.b16 %v530
      %v547 = vunpack.c.l.b16 %v531
      %v548 = vpack.c.b16 %v541, %v540
      %v549 = vpack.c.b16 %v543, %v542
      %v550 = vpack.c.b16 %v545, %v544
      %v551 = vpack.c.b16 %v547, %v546
      %552 = vrot.lane.b32.xlu0 %v548, 15
      %v553 = vpop.permute.xlu0 %552
      %554 = vrot.lane.b32.xlu0 %v549, 15
      %v555 = vpop.permute.xlu0 %554
      %556 = vrot.lane.b32.xlu0 %v550, 15
      %v557 = vpop.permute.xlu0 %556
      %558 = vrot.lane.b32.xlu0 %v551, 15
      %v559 = vpop.permute.xlu0 %558
      %vm564 = vcmask 581048
      %565 = vst.msk [vmem:[#allocation2] sm:$0xff] %vm564, %v553
      %566 = vst.msk [vmem:[#allocation2 + $0x18] sm:$0xff] %vm564, %v555
      %567 = vst.msk [vmem:[#allocation2 + $0x30] sm:$0xff] %vm564, %v557
      %568 = vst.msk [vmem:[#allocation2 + $0x48] sm:$0xff] %vm564, %v559
      %v569 = vld [vmem:[%s346] sm:$0xf]
      %v570 = vld [vmem:[%s346 + $0x8] sm:$0xf]
      %v571 = vld [vmem:[%s346 + $0x10] sm:$0xf]
      %v572 = vld [vmem:[%s346 + $0x18] sm:$0xf]
      %v573 = vld [vmem:[%s346 + $0x20] sm:$0xf]
      %v574 = vld [vmem:[%s346 + $0x28] sm:$0xf]
      %v575 = vld [vmem:[%s346 + $0x30] sm:$0xf]
      %v576 = vld [vmem:[%s346 + $0x38] sm:$0xf]
      %v585 = vunpack.c.l.b16 %v569
      %v586 = vunpack.c.l.b16 %v570
      %v587 = vunpack.c.l.b16 %v571
      %v588 = vunpack.c.l.b16 %v572
      %v589 = vunpack.c.l.b16 %v573
      %v590 = vunpack.c.l.b16 %v574
      %v591 = vunpack.c.l.b16 %v575
      %v592 = vunpack.c.l.b16 %v576
      %v593 = vpack.c.b16 %v586, %v585
      %v594 = vpack.c.b16 %v588, %v587
      %v595 = vpack.c.b16 %v590, %v589
      %v596 = vpack.c.b16 %v592, %v591
      %597 = vrot.lane.b32.xlu0 %v593, 13
      %v598 = vpop.permute.xlu0 %597
      %599 = vrot.lane.b32.xlu0 %v594, 13
      %v600 = vpop.permute.xlu0 %599
      %601 = vrot.lane.b32.xlu0 %v595, 13
      %v602 = vpop.permute.xlu0 %601
      %603 = vrot.lane.b32.xlu0 %v596, 13
      %v604 = vpop.permute.xlu0 %603
      %vm609 = vcmask 728648
      %610 = vst.msk [vmem:[#allocation2] sm:$0xff] %vm609, %v598
      %611 = vst.msk [vmem:[#allocation2 + $0x18] sm:$0xff] %vm609, %v600
      %612 = vst.msk [vmem:[#allocation2 + $0x30] sm:$0xff] %vm609, %v602
      %613 = vst.msk [vmem:[#allocation2 + $0x48] sm:$0xff] %vm609, %v604
      %v614 = vld [vmem:[%s346] sm:$0xf]
      %v615 = vld [vmem:[%s346 + $0x8] sm:$0xf]
      %v616 = vld [vmem:[%s346 + $0x10] sm:$0xf]
      %v617 = vld [vmem:[%s346 + $0x18] sm:$0xf]
      %v618 = vld [vmem:[%s346 + $0x20] sm:$0xf]
      %v619 = vld [vmem:[%s346 + $0x28] sm:$0xf]
      %v620 = vld [vmem:[%s346 + $0x30] sm:$0xf]
      %v621 = vld [vmem:[%s346 + $0x38] sm:$0xf]
      %v630 = vunpack.c.l.b16 %v614
      %v631 = vunpack.c.l.b16 %v615
      %v632 = vunpack.c.l.b16 %v616
      %v633 = vunpack.c.l.b16 %v617
      %v634 = vunpack.c.l.b16 %v618
      %v635 = vunpack.c.l.b16 %v619
      %v636 = vunpack.c.l.b16 %v620
      %v637 = vunpack.c.l.b16 %v621
      %v638 = vpack.c.b16 %v631, %v630
      %v639 = vpack.c.b16 %v633, %v632
      %v640 = vpack.c.b16 %v635, %v634
      %v641 = vpack.c.b16 %v637, %v636
      %642 = vrot.lane.b32.xlu0 %v638, 11
      %v643 = vpop.permute.xlu0 %642
      %644 = vrot.lane.b32.xlu0 %v639, 11
      %v645 = vpop.permute.xlu0 %644
      %646 = vrot.lane.b32.xlu0 %v640, 11
      %v647 = vpop.permute.xlu0 %646
      %648 = vrot.lane.b32.xlu0 %v641, 11
      %v649 = vpop.permute.xlu0 %648
      %vm654 = vcmask 876248
      %655 = vst.msk [vmem:[#allocation2] sm:$0xff] %vm654, %v643
      %656 = vst.msk [vmem:[#allocation2 + $0x18] sm:$0xff] %vm654, %v645
      %657 = vst.msk [vmem:[#allocation2 + $0x30] sm:$0xff] %vm654, %v647
      %658 = vst.msk [vmem:[#allocation2 + $0x48] sm:$0xff] %vm654, %v649
      %v659 = vld [vmem:[%s346] sm:$0xf]
      %v660 = vld [vmem:[%s346 + $0x8] sm:$0xf]
      %v661 = vld [vmem:[%s346 + $0x10] sm:$0xf]
      %v662 = vld [vmem:[%s346 + $0x18] sm:$0xf]
      %v663 = vld [vmem:[%s346 + $0x20] sm:$0xf]
      %v664 = vld [vmem:[%s346 + $0x28] sm:$0xf]
      %v665 = vld [vmem:[%s346 + $0x30] sm:$0xf]
      %v666 = vld [vmem:[%s346 + $0x38] sm:$0xf]
      %v675 = vunpack.c.l.b16 %v659
      %v676 = vunpack.c.l.b16 %v660
      %v677 = vunpack.c.l.b16 %v661
      %v678 = vunpack.c.l.b16 %v662
      %v679 = vunpack.c.l.b16 %v663
      %v680 = vunpack.c.l.b16 %v664
      %v681 = vunpack.c.l.b16 %v665
      %v682 = vunpack.c.l.b16 %v666
      %v683 = vpack.c.b16 %v676, %v675
      %v684 = vpack.c.b16 %v678, %v677
      %v685 = vpack.c.b16 %v680, %v679
      %v686 = vpack.c.b16 %v682, %v681
      %687 = vrot.lane.b32.xlu0 %v683, 9
      %v688 = vpop.permute.xlu0 %687
      %689 = vrot.lane.b32.xlu0 %v684, 9
      %v690 = vpop.permute.xlu0 %689
      %691 = vrot.lane.b32.xlu0 %v685, 9
      %v692 = vpop.permute.xlu0 %691
      %693 = vrot.lane.b32.xlu0 %v686, 9
      %v694 = vpop.permute.xlu0 %693
      %vm699 = vcmask 1023848
      %700 = vst.msk [vmem:[#allocation2] sm:$0xff] %vm699, %v688
      %701 = vst.msk [vmem:[#allocation2 + $0x18] sm:$0xff] %vm699, %v690
      %702 = vst.msk [vmem:[#allocation2 + $0x30] sm:$0xff] %vm699, %v692
      %703 = vst.msk [vmem:[#allocation2 + $0x48] sm:$0xff] %vm699, %v694
      %v704 = vld [vmem:[%s346] sm:$0xff]
      %v705 = vld [vmem:[%s346 + $0x8] sm:$0xff]
      %v706 = vld [vmem:[%s346 + $0x10] sm:$0xff]
      %v707 = vld [vmem:[%s346 + $0x18] sm:$0xff]
      %v708 = vld [vmem:[%s346 + $0x20] sm:$0xff]
      %v709 = vld [vmem:[%s346 + $0x28] sm:$0xff]
      %v710 = vld [vmem:[%s346 + $0x30] sm:$0xff]
      %v711 = vld [vmem:[%s346 + $0x38] sm:$0xff]
      %v720 = vunpack.c.l.b16 %v704
      %v721 = vunpack.c.h.b16 %v704
      %v722 = vunpack.c.l.b16 %v705
      %v723 = vunpack.c.h.b16 %v705
      %v724 = vunpack.c.l.b16 %v706
      %v725 = vunpack.c.h.b16 %v706
      %v726 = vunpack.c.l.b16 %v707
      %v727 = vunpack.c.h.b16 %v707
      %v728 = vunpack.c.l.b16 %v708
      %v729 = vunpack.c.h.b16 %v708
      %v730 = vunpack.c.l.b16 %v709
      %v731 = vunpack.c.h.b16 %v709
      %v732 = vunpack.c.l.b16 %v710
      %v733 = vunpack.c.h.b16 %v710
      %v734 = vunpack.c.l.b16 %v711
      %v735 = vunpack.c.h.b16 %v711
      %v736 = vpack.c.b16 %v722, %v720
      %v737 = vpack.c.b16 %v723, %v721
      %v738 = vpack.c.b16 %v726, %v724
      %v739 = vpack.c.b16 %v727, %v725
      %v740 = vpack.c.b16 %v730, %v728
      %v741 = vpack.c.b16 %v731, %v729
      %v742 = vpack.c.b16 %v734, %v732
      %v743 = vpack.c.b16 %v735, %v733
      %744 = vrot.lane.b32.xlu0 %v736, 7
      %v745 = vpop.permute.xlu0 %744
      %746 = vrot.lane.b32.xlu0 %v737, 7
      %v747 = vpop.permute.xlu0 %746
      %748 = vrot.lane.b32.xlu0 %v738, 7
      %v749 = vpop.permute.xlu0 %748
      %750 = vrot.lane.b32.xlu0 %v739, 7
      %v751 = vpop.permute.xlu0 %750
      %752 = vrot.lane.b32.xlu0 %v740, 7
      %v753 = vpop.permute.xlu0 %752
      %754 = vrot.lane.b32.xlu0 %v741, 7
      %v755 = vpop.permute.xlu0 %754
      %756 = vrot.lane.b32.xlu0 %v742, 7
      %v757 = vpop.permute.xlu0 %756
      %758 = vrot.lane.b32.xlu0 %v743, 7
      %v759 = vpop.permute.xlu0 %758
      %vm760 = vcmask 56320
      %v761 = vsel %vm760, %v745, %v747
      %v762 = vsel %vm760, %v749, %v751
      %v763 = vsel %vm760, %v753, %v755
      %v764 = vsel %vm760, %v757, %v759
      %vm773 = vcmask 1048568
      %774 = vst.msk [vmem:[#allocation2] sm:$0xff] %vm773, %v745
      %vm775 = vcmask 121856
      %776 = vst.msk [vmem:[#allocation2 + $0x8] sm:$0xff] %vm775, %v761
      %777 = vst.msk [vmem:[#allocation2 + $0x18] sm:$0xff] %vm773, %v749
      %778 = vst.msk [vmem:[#allocation2 + $0x20] sm:$0xff] %vm775, %v762
      %779 = vst.msk [vmem:[#allocation2 + $0x30] sm:$0xff] %vm773, %v753
      %780 = vst.msk [vmem:[#allocation2 + $0x38] sm:$0xff] %vm775, %v763
      %781 = vst.msk [vmem:[#allocation2 + $0x48] sm:$0xff] %vm773, %v757
      %782 = vst.msk [vmem:[#allocation2 + $0x50] sm:$0xff] %vm775, %v764
      %v783 = vld [vmem:[%s346 + $0x4] sm:$0xf]
      %v784 = vld [vmem:[%s346 + $0xc] sm:$0xf]
      %v785 = vld [vmem:[%s346 + $0x14] sm:$0xf]
      %v786 = vld [vmem:[%s346 + $0x1c] sm:$0xf]
      %v787 = vld [vmem:[%s346 + $0x24] sm:$0xf]
      %v788 = vld [vmem:[%s346 + $0x2c] sm:$0xf]
      %v789 = vld [vmem:[%s346 + $0x34] sm:$0xf]
      %v790 = vld [vmem:[%s346 + $0x3c] sm:$0xf]
      %v799 = vunpack.c.l.b16 %v783
      %v800 = vunpack.c.l.b16 %v784
      %v801 = vunpack.c.l.b16 %v785
      %v802 = vunpack.c.l.b16 %v786
      %v803 = vunpack.c.l.b16 %v787
      %v804 = vunpack.c.l.b16 %v788
      %v805 = vunpack.c.l.b16 %v789
      %v806 = vunpack.c.l.b16 %v790
      %v807 = vpack.c.b16 %v800, %v799
      %v808 = vpack.c.b16 %v802, %v801
      %v809 = vpack.c.b16 %v804, %v803
      %v810 = vpack.c.b16 %v806, %v805
      %811 = vrot.lane.b32.xlu0 %v807, 5
      %v812 = vpop.permute.xlu0 %811
      %813 = vrot.lane.b32.xlu0 %v808, 5
      %v814 = vpop.permute.xlu0 %813
      %815 = vrot.lane.b32.xlu0 %v809, 5
      %v816 = vpop.permute.xlu0 %815
      %817 = vrot.lane.b32.xlu0 %v810, 5
      %v818 = vpop.permute.xlu0 %817
      %vm823 = vcmask 269448
      %824 = vst.msk [vmem:[#allocation2 + $0x8] sm:$0xff] %vm823, %v812
      %825 = vst.msk [vmem:[#allocation2 + $0x20] sm:$0xff] %vm823, %v814
      %826 = vst.msk [vmem:[#allocation2 + $0x38] sm:$0xff] %vm823, %v816
      %827 = vst.msk [vmem:[#allocation2 + $0x50] sm:$0xff] %vm823, %v818
      %p828 = scmp.lt.s32.totalorder %s21, 1
      // Predicated region
      $region45: #{fsrcnn_forward_pallas.5} parent=39 // pred_check
        %p829 = pneg %p828
      $region46: #{fsrcnn_forward_pallas.5} parent=39 // pred_check_branch
        %831 = sbr.rel (%p829) target = $region48
      $region47: #{fsrcnn_forward_pallas.5} parent=39 // pred_region
        %v832 = vld [vmem:[%s358] sm:$0xf]
        %v833 = vld [vmem:[%s358 + $0x8] sm:$0xf]
        %v834 = vld [vmem:[%s358 + $0x10] sm:$0xf]
        %v835 = vld [vmem:[%s358 + $0x18] sm:$0xf]
        %v836 = vld [vmem:[%s358 + $0x20] sm:$0xf]
        %v837 = vld [vmem:[%s358 + $0x28] sm:$0xf]
        %v838 = vld [vmem:[%s358 + $0x30] sm:$0xf]
        %v839 = vld [vmem:[%s358 + $0x38] sm:$0xf]
        %v848 = vunpack.c.l.b16 %v832
        %v849 = vunpack.c.l.b16 %v833
        %v850 = vunpack.c.l.b16 %v834
        %v851 = vunpack.c.l.b16 %v835
        %v852 = vunpack.c.l.b16 %v836
        %v853 = vunpack.c.l.b16 %v837
        %v854 = vunpack.c.l.b16 %v838
        %v855 = vunpack.c.l.b16 %v839
        %v856 = vpack.c.b16 %v849, %v848
        %v857 = vpack.c.b16 %v851, %v850
        %v858 = vpack.c.b16 %v853, %v852
        %v859 = vpack.c.b16 %v855, %v854
        %860 = vrot.lane.b32.xlu0 %v856, 35
        %v861 = vpop.permute.xlu0 %860
        %862 = vrot.lane.b32.xlu0 %v857, 35
        %v863 = vpop.permute.xlu0 %862
        %864 = vrot.lane.b32.xlu0 %v858, 35
        %v865 = vpop.permute.xlu0 %864
        %866 = vrot.lane.b32.xlu0 %v859, 35
        %v867 = vpop.permute.xlu0 %866
        %vm872 = vcmask 417048
        %873 = vst.msk [vmem:[#allocation2 + $0x8] sm:$0xff] %vm872, %v861
        %874 = vst.msk [vmem:[#allocation2 + $0x20] sm:$0xff] %vm872, %v863
        %875 = vst.msk [vmem:[#allocation2 + $0x38] sm:$0xff] %vm872, %v865
        %876 = vst.msk [vmem:[#allocation2 + $0x50] sm:$0xff] %vm872, %v867
      $region48: #{fsrcnn_forward_pallas.5} parent=39 // pred_fallthru
        _
      %v877 = vld [vmem:[#allocation2] sm:$0xff]
      %v878 = vld [vmem:[#allocation2 + $0x8] sm:$0xff]
      %v879 = vld [vmem:[#allocation2 + $0x18] sm:$0xff]
      %v880 = vld [vmem:[#allocation2 + $0x20] sm:$0xff]
      %v881 = vld [vmem:[#allocation2 + $0x30] sm:$0xff]
      %v882 = vld [vmem:[#allocation2 + $0x38] sm:$0xff]
      %v883 = vld [vmem:[#allocation2 + $0x48] sm:$0xff]
      %v884 = vld [vmem:[#allocation2 + $0x50] sm:$0xff]
      %885 = vst [vmem:[#allocation3] sm:$0xff] %v877
      %886 = vst [vmem:[#allocation3 + $0x8] sm:$0xff] %v878
      %887 = vst [vmem:[#allocation3 + $0x10] sm:$0xff] %v879
      %888 = vst [vmem:[#allocation3 + $0x18] sm:$0xff] %v880
      %889 = vst [vmem:[#allocation3 + $0x20] sm:$0xff] %v881
      %890 = vst [vmem:[#allocation3 + $0x28] sm:$0xff] %v882
      %891 = vst [vmem:[#allocation3 + $0x30] sm:$0xff] %v883
      %892 = vst [vmem:[#allocation3 + $0x38] sm:$0xff] %v884
      %v893 = vld [vmem:[#allocation2] sm:$0xff]
      %v894 = vld [vmem:[#allocation2 + $0x8] sm:$0xff]
      %v895 = vld [vmem:[#allocation2 + $0x10] sm:$0xff]
      %v896 = vld [vmem:[#allocation2 + $0x18] sm:$0xff]
      %v897 = vld [vmem:[#allocation2 + $0x20] sm:$0xff]
      %v898 = vld [vmem:[#allocation2 + $0x28] sm:$0xff]
      %v899 = vld [vmem:[#allocation2 + $0x30] sm:$0xff]
      %v900 = vld [vmem:[#allocation2 + $0x38] sm:$0xff]
      %v901 = vld [vmem:[#allocation2 + $0x40] sm:$0xff]
      %v902 = vld [vmem:[#allocation2 + $0x48] sm:$0xff]
      %v903 = vld [vmem:[#allocation2 + $0x50] sm:$0xff]
      %v904 = vld [vmem:[#allocation2 + $0x58] sm:$0xff]
      %917 = vrot.lane.b32.xlu0 %v893, 127
      %v918 = vpop.permute.xlu0 %917
      %919 = vrot.lane.b32.xlu0 %v894, 127
      %v920 = vpop.permute.xlu0 %919
      %921 = vrot.lane.b32.xlu0 %v895, 127
      %v922 = vpop.permute.xlu0 %921
      %923 = vrot.lane.b32.xlu0 %v896, 127
      %v924 = vpop.permute.xlu0 %923
      %925 = vrot.lane.b32.xlu0 %v897, 127
      %v926 = vpop.permute.xlu0 %925
      %927 = vrot.lane.b32.xlu0 %v898, 127
      %v928 = vpop.permute.xlu0 %927
      %929 = vrot.lane.b32.xlu0 %v899, 127
      %v930 = vpop.permute.xlu0 %929
      %931 = vrot.lane.b32.xlu0 %v900, 127
      %v932 = vpop.permute.xlu0 %931
      %933 = vrot.lane.b32.xlu0 %v901, 127
      %v934 = vpop.permute.xlu0 %933
      %935 = vrot.lane.b32.xlu0 %v902, 127
      %v936 = vpop.permute.xlu0 %935
      %937 = vrot.lane.b32.xlu0 %v903, 127
      %v938 = vpop.permute.xlu0 %937
      %939 = vrot.lane.b32.xlu0 %v904, 127
      %v940 = vpop.permute.xlu0 %939
      %vm941 = vcmask 1039360
      %v942 = vsel %vm941, %v918, %v920
      %v943 = vsel %vm941, %v920, %v922
      %v944 = vsel %vm941, %v924, %v926
      %v945 = vsel %vm941, %v926, %v928
      %v946 = vsel %vm941, %v930, %v932
      %v947 = vsel %vm941, %v932, %v934
      %v948 = vsel %vm941, %v936, %v938
      %v949 = vsel %vm941, %v938, %v940
      %958 = vst [vmem:[#allocation3 + $0x40] sm:$0xff] %v942
      %959 = vst [vmem:[#allocation3 + $0x48] sm:$0xff] %v943
      %960 = vst [vmem:[#allocation3 + $0x50] sm:$0xff] %v944
      %961 = vst [vmem:[#allocation3 + $0x58] sm:$0xff] %v945
      %962 = vst [vmem:[#allocation3 + $0x60] sm:$0xff] %v946
      %963 = vst [vmem:[#allocation3 + $0x68] sm:$0xff] %v947
      %964 = vst [vmem:[#allocation3 + $0x70] sm:$0xff] %v948
      %965 = vst [vmem:[#allocation3 + $0x78] sm:$0xff] %v949
      %v966 = vld [vmem:[#allocation2] sm:$0xff]
      %v967 = vld [vmem:[#allocation2 + $0x8] sm:$0xff]
      %v968 = vld [vmem:[#allocation2 + $0x10] sm:$0xff]
      %v969 = vld [vmem:[#allocation2 + $0x18] sm:$0xff]
      %v970 = vld [vmem:[#allocation2 + $0x20] sm:$0xff]
      %v971 = vld [vmem:[#allocation2 + $0x28] sm:$0xff]
      %v972 = vld [vmem:[#allocation2 + $0x30] sm:$0xff]
      %v973 = vld [vmem:[#allocation2 + $0x38] sm:$0xff]
      %v974 = vld [vmem:[#allocation2 + $0x40] sm:$0xff]
      %v975 = vld [vmem:[#allocation2 + $0x48] sm:$0xff]
      %v976 = vld [vmem:[#allocation2 + $0x50] sm:$0xff]
      %v977 = vld [vmem:[#allocation2 + $0x58] sm:$0xff]
      %990 = vrot.lane.b32.xlu0 %v966, 126
      %v991 = vpop.permute.xlu0 %990
      %992 = vrot.lane.b32.xlu0 %v967, 126
      %v993 = vpop.permute.xlu0 %992
      %994 = vrot.lane.b32.xlu0 %v968, 126
      %v995 = vpop.permute.xlu0 %994
      %996 = vrot.lane.b32.xlu0 %v969, 126
      %v997 = vpop.permute.xlu0 %996
      %998 = vrot.lane.b32.xlu0 %v970, 126
      %v999 = vpop.permute.xlu0 %998
      %1000 = vrot.lane.b32.xlu0 %v971, 126
      %v1001 = vpop.permute.xlu0 %1000
      %1002 = vrot.lane.b32.xlu0 %v972, 126
      %v1003 = vpop.permute.xlu0 %1002
      %1004 = vrot.lane.b32.xlu0 %v973, 126
      %v1005 = vpop.permute.xlu0 %1004
      %1006 = vrot.lane.b32.xlu0 %v974, 126
      %v1007 = vpop.permute.xlu0 %1006
      %1008 = vrot.lane.b32.xlu0 %v975, 126
      %v1009 = vpop.permute.xlu0 %1008
      %1010 = vrot.lane.b32.xlu0 %v976, 126
      %v1011 = vpop.permute.xlu0 %1010
      %1012 = vrot.lane.b32.xlu0 %v977, 126
      %v1013 = vpop.permute.xlu0 %1012
      %vm1014 = vcmask 1031168
      %v1015 = vsel %vm1014, %v991, %v993
      %v1016 = vsel %vm1014, %v993, %v995
      %v1017 = vsel %vm1014, %v997, %v999
      %v1018 = vsel %vm1014, %v999, %v1001
      %v1019 = vsel %vm1014, %v1003, %v1005
      %v1020 = vsel %vm1014, %v1005, %v1007
      %v1021 = vsel %vm1014, %v1009, %v1011
      %v1022 = vsel %vm1014, %v1011, %v1013
      %1031 = vst [vmem:[#allocation3 + $0x80] sm:$0xff] %v1015
      %1032 = vst [vmem:[#allocation3 + $0x88] sm:$0xff] %v1016
      %1033 = vst [vmem:[#allocation3 + $0x90] sm:$0xff] %v1017
      %1034 = vst [vmem:[#allocation3 + $0x98] sm:$0xff] %v1018
      %1035 = vst [vmem:[#allocation3 + $0xa0] sm:$0xff] %v1019
      %1036 = vst [vmem:[#allocation3 + $0xa8] sm:$0xff] %v1020
      %1037 = vst [vmem:[#allocation3 + $0xb0] sm:$0xff] %v1021
      %1038 = vst [vmem:[#allocation3 + $0xb8] sm:$0xff] %v1022
      %v1039 = vld [vmem:[#allocation2] sm:$0xff]
      %v1040 = vld [vmem:[#allocation2 + $0x8] sm:$0xff]
      %v1041 = vld [vmem:[#allocation2 + $0x10] sm:$0xff]
      %v1042 = vld [vmem:[#allocation2 + $0x18] sm:$0xff]
      %v1043 = vld [vmem:[#allocation2 + $0x20] sm:$0xff]
      %v1044 = vld [vmem:[#allocation2 + $0x28] sm:$0xff]
      %v1045 = vld [vmem:[#allocation2 + $0x30] sm:$0xff]
      %v1046 = vld [vmem:[#allocation2 + $0x38] sm:$0xff]
      %v1047 = vld [vmem:[#allocation2 + $0x40] sm:$0xff]
      %v1048 = vld [vmem:[#allocation2 + $0x48] sm:$0xff]
      %v1049 = vld [vmem:[#allocation2 + $0x50] sm:$0xff]
      %v1050 = vld [vmem:[#allocation2 + $0x58] sm:$0xff]
      %1063 = vrot.lane.b32.xlu0 %v1039, 110
      %v1064 = vpop.permute.xlu0 %1063
      %1065 = vrot.lane.b32.xlu0 %v1040, 110
      %v1066 = vpop.permute.xlu0 %1065
      %1067 = vrot.lane.b32.xlu0 %v1041, 110
      %v1068 = vpop.permute.xlu0 %1067
      %1069 = vrot.lane.b32.xlu0 %v1042, 110
      %v1070 = vpop.permute.xlu0 %1069
      %1071 = vrot.lane.b32.xlu0 %v1043, 110
      %v1072 = vpop.permute.xlu0 %1071
      %1073 = vrot.lane.b32.xlu0 %v1044, 110
      %v1074 = vpop.permute.xlu0 %1073
      %1075 = vrot.lane.b32.xlu0 %v1045, 110
      %v1076 = vpop.permute.xlu0 %1075
      %1077 = vrot.lane.b32.xlu0 %v1046, 110
      %v1078 = vpop.permute.xlu0 %1077
      %1079 = vrot.lane.b32.xlu0 %v1047, 110
      %v1080 = vpop.permute.xlu0 %1079
      %1081 = vrot.lane.b32.xlu0 %v1048, 110
      %v1082 = vpop.permute.xlu0 %1081
      %1083 = vrot.lane.b32.xlu0 %v1049, 110
      %v1084 = vpop.permute.xlu0 %1083
      %1085 = vrot.lane.b32.xlu0 %v1050, 110
      %v1086 = vpop.permute.xlu0 %1085
      %vm1087 = vcmask 900096
      %v1088 = vsel %vm1087, %v1064, %v1066
      %v1089 = vsel %vm1087, %v1066, %v1068
      %v1090 = vsel %vm1087, %v1070, %v1072
      %v1091 = vsel %vm1087, %v1072, %v1074
      %v1092 = vsel %vm1087, %v1076, %v1078
      %v1093 = vsel %vm1087, %v1078, %v1080
      %v1094 = vsel %vm1087, %v1082, %v1084
      %v1095 = vsel %vm1087, %v1084, %v1086
      %1104 = vst [vmem:[#allocation3 + $0xc0] sm:$0xff] %v1088
      %1105 = vst [vmem:[#allocation3 + $0xc8] sm:$0xff] %v1089
      %1106 = vst [vmem:[#allocation3 + $0xd0] sm:$0xff] %v1090
      %1107 = vst [vmem:[#allocation3 + $0xd8] sm:$0xff] %v1091
      %1108 = vst [vmem:[#allocation3 + $0xe0] sm:$0xff] %v1092
      %1109 = vst [vmem:[#allocation3 + $0xe8] sm:$0xff] %v1093
      %1110 = vst [vmem:[#allocation3 + $0xf0] sm:$0xff] %v1094
      %1111 = vst [vmem:[#allocation3 + $0xf8] sm:$0xff] %v1095
      %v1112 = vld [vmem:[#allocation2] sm:$0xff]
      %v1113 = vld [vmem:[#allocation2 + $0x8] sm:$0xff]
      %v1114 = vld [vmem:[#allocation2 + $0x10] sm:$0xff]
      %v1115 = vld [vmem:[#allocation2 + $0x18] sm:$0xff]
      %v1116 = vld [vmem:[#allocation2 + $0x20] sm:$0xff]
      %v1117 = vld [vmem:[#allocation2 + $0x28] sm:$0xff]
      %v1118 = vld [vmem:[#allocation2 + $0x30] sm:$0xff]
      %v1119 = vld [vmem:[#allocation2 + $0x38] sm:$0xff]
      %v1120 = vld [vmem:[#allocation2 + $0x40] sm:$0xff]
      %v1121 = vld [vmem:[#allocation2 + $0x48] sm:$0xff]
      %v1122 = vld [vmem:[#allocation2 + $0x50] sm:$0xff]
      %v1123 = vld [vmem:[#allocation2 + $0x58] sm:$0xff]
      %1136 = vrot.lane.b32.xlu0 %v1112, 109
      %v1137 = vpop.permute.xlu0 %1136
      %1138 = vrot.lane.b32.xlu0 %v1113, 109
      %v1139 = vpop.permute.xlu0 %1138
      %1140 = vrot.lane.b32.xlu0 %v1114, 109
      %v1141 = vpop.permute.xlu0 %1140
      %1142 = vrot.lane.b32.xlu0 %v1115, 109
      %v1143 = vpop.permute.xlu0 %1142
      %1144 = vrot.lane.b32.xlu0 %v1116, 109
      %v1145 = vpop.permute.xlu0 %1144
      %1146 = vrot.lane.b32.xlu0 %v1117, 109
      %v1147 = vpop.permute.xlu0 %1146
      %1148 = vrot.lane.b32.xlu0 %v1118, 109
      %v1149 = vpop.permute.xlu0 %1148
      %1150 = vrot.lane.b32.xlu0 %v1119, 109
      %v1151 = vpop.permute.xlu0 %1150
      %1152 = vrot.lane.b32.xlu0 %v1120, 109
      %v1153 = vpop.permute.xlu0 %1152
      %1154 = vrot.lane.b32.xlu0 %v1121, 109
      %v1155 = vpop.permute.xlu0 %1154
      %1156 = vrot.lane.b32.xlu0 %v1122, 109
      %v1157 = vpop.permute.xlu0 %1156
      %1158 = vrot.lane.b32.xlu0 %v1123, 109
      %v1159 = vpop.permute.xlu0 %1158
      %vm1160 = vcmask 891904
      %v1161 = vsel %vm1160, %v1137, %v1139
      %v1162 = vsel %vm1160, %v1139, %v1141
      %v1163 = vsel %vm1160, %v1143, %v1145
      %v1164 = vsel %vm1160, %v1145, %v1147
      %v1165 = vsel %vm1160, %v1149, %v1151
      %v1166 = vsel %vm1160, %v1151, %v1153
      %v1167 = vsel %vm1160, %v1155, %v1157
      %v1168 = vsel %vm1160, %v1157, %v1159
      %1177 = vst [vmem:[#allocation3 + $0x100] sm:$0xff] %v1161
      %1178 = vst [vmem:[#allocation3 + $0x108] sm:$0xff] %v1162
      %1179 = vst [vmem:[#allocation3 + $0x110] sm:$0xff] %v1163
      %1180 = vst [vmem:[#allocation3 + $0x118] sm:$0xff] %v1164
      %1181 = vst [vmem:[#allocation3 + $0x120] sm:$0xff] %v1165
      %1182 = vst [vmem:[#allocation3 + $0x128] sm:$0xff] %v1166
      %1183 = vst [vmem:[#allocation3 + $0x130] sm:$0xff] %v1167
      %1184 = vst [vmem:[#allocation3 + $0x138] sm:$0xff] %v1168
      %v1185 = vld [vmem:[#allocation2] sm:$0xff]
      %v1186 = vld [vmem:[#allocation2 + $0x8] sm:$0xff]
      %v1187 = vld [vmem:[#allocation2 + $0x10] sm:$0xff]
      %v1188 = vld [vmem:[#allocation2 + $0x18] sm:$0xff]
      %v1189 = vld [vmem:[#allocation2 + $0x20] sm:$0xff]
      %v1190 = vld [vmem:[#allocation2 + $0x28] sm:$0xff]
      %v1191 = vld [vmem:[#allocation2 + $0x30] sm:$0xff]
      %v1192 = vld [vmem:[#allocation2 + $0x38] sm:$0xff]
      %v1193 = vld [vmem:[#allocation2 + $0x40] sm:$0xff]
      %v1194 = vld [vmem:[#allocation2 + $0x48] sm:$0xff]
      %v1195 = vld [vmem:[#allocation2 + $0x50] sm:$0xff]
      %v1196 = vld [vmem:[#allocation2 + $0x58] sm:$0xff]
      %1209 = vrot.lane.b32.xlu0 %v1185, 108
      %v1210 = vpop.permute.xlu0 %1209
      %1211 = vrot.lane.b32.xlu0 %v1186, 108
      %v1212 = vpop.permute.xlu0 %1211
      %1213 = vrot.lane.b32.xlu0 %v1187, 108
      %v1214 = vpop.permute.xlu0 %1213
      %1215 = vrot.lane.b32.xlu0 %v1188, 108
      %v1216 = vpop.permute.xlu0 %1215
      %1217 = vrot.lane.b32.xlu0 %v1189, 108
      %v1218 = vpop.permute.xlu0 %1217
      %1219 = vrot.lane.b32.xlu0 %v1190, 108
      %v1220 = vpop.permute.xlu0 %1219
      %1221 = vrot.lane.b32.xlu0 %v1191, 108
      %v1222 = vpop.permute.xlu0 %1221
      %1223 = vrot.lane.b32.xlu0 %v1192, 108
      %v1224 = vpop.permute.xlu0 %1223
      %1225 = vrot.lane.b32.xlu0 %v1193, 108
      %v1226 = vpop.permute.xlu0 %1225
      %1227 = vrot.lane.b32.xlu0 %v1194, 108
      %v1228 = vpop.permute.xlu0 %1227
      %1229 = vrot.lane.b32.xlu0 %v1195, 108
      %v1230 = vpop.permute.xlu0 %1229
      %1231 = vrot.lane.b32.xlu0 %v1196, 108
      %v1232 = vpop.permute.xlu0 %1231
      %vm1233 = vcmask 883712
      %v1234 = vsel %vm1233, %v1210, %v1212
      %v1235 = vsel %vm1233, %v1212, %v1214
      %v1236 = vsel %vm1233, %v1216, %v1218
      %v1237 = vsel %vm1233, %v1218, %v1220
      %v1238 = vsel %vm1233, %v1222, %v1224
      %v1239 = vsel %vm1233, %v1224, %v1226
      %v1240 = vsel %vm1233, %v1228, %v1230
      %v1241 = vsel %vm1233, %v1230, %v1232
      %1250 = vst [vmem:[#allocation3 + $0x140] sm:$0xff] %v1234
      %1251 = vst [vmem:[#allocation3 + $0x148] sm:$0xff] %v1235
      %1252 = vst [vmem:[#allocation3 + $0x150] sm:$0xff] %v1236
      %1253 = vst [vmem:[#allocation3 + $0x158] sm:$0xff] %v1237
      %1254 = vst [vmem:[#allocation3 + $0x160] sm:$0xff] %v1238
      %1255 = vst [vmem:[#allocation3 + $0x168] sm:$0xff] %v1239
      %1256 = vst [vmem:[#allocation3 + $0x170] sm:$0xff] %v1240
      %1257 = vst [vmem:[#allocation3 + $0x178] sm:$0xff] %v1241
      %v1258 = vld [vmem:[#allocation2] sm:$0xff]
      %v1259 = vld [vmem:[#allocation2 + $0x8] sm:$0xff]
      %v1260 = vld [vmem:[#allocation2 + $0x10] sm:$0xff]
      %v1261 = vld [vmem:[#allocation2 + $0x18] sm:$0xff]
      %v1262 = vld [vmem:[#allocation2 + $0x20] sm:$0xff]
      %v1263 = vld [vmem:[#allocation2 + $0x28] sm:$0xff]
      %v1264 = vld [vmem:[#allocation2 + $0x30] sm:$0xff]
      %v1265 = vld [vmem:[#allocation2 + $0x38] sm:$0xff]
      %v1266 = vld [vmem:[#allocation2 + $0x40] sm:$0xff]
      %v1267 = vld [vmem:[#allocation2 + $0x48] sm:$0xff]
      %v1268 = vld [vmem:[#allocation2 + $0x50] sm:$0xff]
      %v1269 = vld [vmem:[#allocation2 + $0x58] sm:$0xff]
      %1282 = vrot.lane.b32.xlu0 %v1258, 92
      %v1283 = vpop.permute.xlu0 %1282
      %1284 = vrot.lane.b32.xlu0 %v1259, 92
      %v1285 = vpop.permute.xlu0 %1284
      %1286 = vrot.lane.b32.xlu0 %v1260, 92
      %v1287 = vpop.permute.xlu0 %1286
      %1288 = vrot.lane.b32.xlu0 %v1261, 92
      %v1289 = vpop.permute.xlu0 %1288
      %1290 = vrot.lane.b32.xlu0 %v1262, 92
      %v1291 = vpop.permute.xlu0 %1290
      %1292 = vrot.lane.b32.xlu0 %v1263, 92
      %v1293 = vpop.permute.xlu0 %1292
      %1294 = vrot.lane.b32.xlu0 %v1264, 92
      %v1295 = vpop.permute.xlu0 %1294
      %1296 = vrot.lane.b32.xlu0 %v1265, 92
      %v1297 = vpop.permute.xlu0 %1296
      %1298 = vrot.lane.b32.xlu0 %v1266, 92
      %v1299 = vpop.permute.xlu0 %1298
      %1300 = vrot.lane.b32.xlu0 %v1267, 92
      %v1301 = vpop.permute.xlu0 %1300
      %1302 = vrot.lane.b32.xlu0 %v1268, 92
      %v1303 = vpop.permute.xlu0 %1302
      %1304 = vrot.lane.b32.xlu0 %v1269, 92
      %v1305 = vpop.permute.xlu0 %1304
      %vm1306 = vcmask 752640
      %v1307 = vsel %vm1306, %v1283, %v1285
      %v1308 = vsel %vm1306, %v1285, %v1287
      %v1309 = vsel %vm1306, %v1289, %v1291
      %v1310 = vsel %vm1306, %v1291, %v1293
      %v1311 = vsel %vm1306, %v1295, %v1297
      %v1312 = vsel %vm1306, %v1297, %v1299
      %v1313 = vsel %vm1306, %v1301, %v1303
      %v1314 = vsel %vm1306, %v1303, %v1305
      %1323 = vst [vmem:[#allocation3 + $0x180] sm:$0xff] %v1307
      %1324 = vst [vmem:[#allocation3 + $0x188] sm:$0xff] %v1308
      %1325 = vst [vmem:[#allocation3 + $0x190] sm:$0xff] %v1309
      %1326 = vst [vmem:[#allocation3 + $0x198] sm:$0xff] %v1310
      %1327 = vst [vmem:[#allocation3 + $0x1a0] sm:$0xff] %v1311
      %1328 = vst [vmem:[#allocation3 + $0x1a8] sm:$0xff] %v1312
      %1329 = vst [vmem:[#allocation3 + $0x1b0] sm:$0xff] %v1313
      %1330 = vst [vmem:[#allocation3 + $0x1b8] sm:$0xff] %v1314
      %v1331 = vld [vmem:[#allocation2] sm:$0xff]
      %v1332 = vld [vmem:[#allocation2 + $0x8] sm:$0xff]
      %v1333 = vld [vmem:[#allocation2 + $0x10] sm:$0xff]
      %v1334 = vld [vmem:[#allocation2 + $0x18] sm:$0xff]
      %v1335 = vld [vmem:[#allocation2 + $0x20] sm:$0xff]
      %v1336 = vld [vmem:[#allocation2 + $0x28] sm:$0xff]
      %v1337 = vld [vmem:[#allocation2 + $0x30] sm:$0xff]
      %v1338 = vld [vmem:[#allocation2 + $0x38] sm:$0xff]
      %v1339 = vld [vmem:[#allocation2 + $0x40] sm:$0xff]
      %v1340 = vld [vmem:[#allocation2 + $0x48] sm:$0xff]
      %v1341 = vld [vmem:[#allocation2 + $0x50] sm:$0xff]
      %v1342 = vld [vmem:[#allocation2 + $0x58] sm:$0xff]
      %1355 = vrot.lane.b32.xlu0 %v1331, 91
      %v1356 = vpop.permute.xlu0 %1355
      %1357 = vrot.lane.b32.xlu0 %v1332, 91
      %v1358 = vpop.permute.xlu0 %1357
      %1359 = vrot.lane.b32.xlu0 %v1333, 91
      %v1360 = vpop.permute.xlu0 %1359
      %1361 = vrot.lane.b32.xlu0 %v1334, 91
      %v1362 = vpop.permute.xlu0 %1361
      %1363 = vrot.lane.b32.xlu0 %v1335, 91
      %v1364 = vpop.permute.xlu0 %1363
      %1365 = vrot.lane.b32.xlu0 %v1336, 91
      %v1366 = vpop.permute.xlu0 %1365
      %1367 = vrot.lane.b32.xlu0 %v1337, 91
      %v1368 = vpop.permute.xlu0 %1367
      %1369 = vrot.lane.b32.xlu0 %v1338, 91
      %v1370 = vpop.permute.xlu0 %1369
      %1371 = vrot.lane.b32.xlu0 %v1339, 91
      %v1372 = vpop.permute.xlu0 %1371
      %1373 = vrot.lane.b32.xlu0 %v1340, 91
      %v1374 = vpop.permute.xlu0 %1373
      %1375 = vrot.lane.b32.xlu0 %v1341, 91
      %v1376 = vpop.permute.xlu0 %1375
      %1377 = vrot.lane.b32.xlu0 %v1342, 91
      %v1378 = vpop.permute.xlu0 %1377
      %vm1379 = vcmask 744448
      %v1380 = vsel %vm1379, %v1356, %v1358
      %v1381 = vsel %vm1379, %v1358, %v1360
      %v1382 = vsel %vm1379, %v1362, %v1364
      %v1383 = vsel %vm1379, %v1364, %v1366
      %v1384 = vsel %vm1379, %v1368, %v1370
      %v1385 = vsel %vm1379, %v1370, %v1372
      %v1386 = vsel %vm1379, %v1374, %v1376
      %v1387 = vsel %vm1379, %v1376, %v1378
      %1396 = vst [vmem:[#allocation3 + $0x1c0] sm:$0xff] %v1380
      %1397 = vst [vmem:[#allocation3 + $0x1c8] sm:$0xff] %v1381
      %1398 = vst [vmem:[#allocation3 + $0x1d0] sm:$0xff] %v1382
      %1399 = vst [vmem:[#allocation3 + $0x1d8] sm:$0xff] %v1383
      %1400 = vst [vmem:[#allocation3 + $0x1e0] sm:$0xff] %v1384
      %1401 = vst [vmem:[#allocation3 + $0x1e8] sm:$0xff] %v1385
      %1402 = vst [vmem:[#allocation3 + $0x1f0] sm:$0xff] %v1386
      %1403 = vst [vmem:[#allocation3 + $0x1f8] sm:$0xff] %v1387
      %v1404 = vld [vmem:[#allocation2] sm:$0xff]
      %v1405 = vld [vmem:[#allocation2 + $0x8] sm:$0xff]
      %v1406 = vld [vmem:[#allocation2 + $0x10] sm:$0xff]
      %v1407 = vld [vmem:[#allocation2 + $0x18] sm:$0xff]
      %v1408 = vld [vmem:[#allocation2 + $0x20] sm:$0xff]
      %v1409 = vld [vmem:[#allocation2 + $0x28] sm:$0xff]
      %v1410 = vld [vmem:[#allocation2 + $0x30] sm:$0xff]
      %v1411 = vld [vmem:[#allocation2 + $0x38] sm:$0xff]
      %v1412 = vld [vmem:[#allocation2 + $0x40] sm:$0xff]
      %v1413 = vld [vmem:[#allocation2 + $0x48] sm:$0xff]
      %v1414 = vld [vmem:[#allocation2 + $0x50] sm:$0xff]
      %v1415 = vld [vmem:[#allocation2 + $0x58] sm:$0xff]
      %1428 = vrot.lane.b32.xlu0 %v1404, 90
      %v1429 = vpop.permute.xlu0 %1428
      %1430 = vrot.lane.b32.xlu0 %v1405, 90
      %v1431 = vpop.permute.xlu0 %1430
      %1432 = vrot.lane.b32.xlu0 %v1406, 90
      %v1433 = vpop.permute.xlu0 %1432
      %1434 = vrot.lane.b32.xlu0 %v1407, 90
      %v1435 = vpop.permute.xlu0 %1434
      %1436 = vrot.lane.b32.xlu0 %v1408, 90
      %v1437 = vpop.permute.xlu0 %1436
      %1438 = vrot.lane.b32.xlu0 %v1409, 90
      %v1439 = vpop.permute.xlu0 %1438
      %1440 = vrot.lane.b32.xlu0 %v1410, 90
      %v1441 = vpop.permute.xlu0 %1440
      %1442 = vrot.lane.b32.xlu0 %v1411, 90
      %v1443 = vpop.permute.xlu0 %1442
      %1444 = vrot.lane.b32.xlu0 %v1412, 90
      %v1445 = vpop.permute.xlu0 %1444
      %1446 = vrot.lane.b32.xlu0 %v1413, 90
      %v1447 = vpop.permute.xlu0 %1446
      %1448 = vrot.lane.b32.xlu0 %v1414, 90
      %v1449 = vpop.permute.xlu0 %1448
      %1450 = vrot.lane.b32.xlu0 %v1415, 90
      %v1451 = vpop.permute.xlu0 %1450
      %vm1452 = vcmask 736256
      %v1453 = vsel %vm1452, %v1429, %v1431
      %v1454 = vsel %vm1452, %v1431, %v1433
      %v1455 = vsel %vm1452, %v1435, %v1437
      %v1456 = vsel %vm1452, %v1437, %v1439
      %v1457 = vsel %vm1452, %v1441, %v1443
      %v1458 = vsel %vm1452, %v1443, %v1445
      %v1459 = vsel %vm1452, %v1447, %v1449
      %v1460 = vsel %vm1452, %v1449, %v1451
      %1469 = vst [vmem:[#allocation3 + $0x200] sm:$0xff] %v1453
      %1470 = vst [vmem:[#allocation3 + $0x208] sm:$0xff] %v1454
      %1471 = vst [vmem:[#allocation3 + $0x210] sm:$0xff] %v1455
      %1472 = vst [vmem:[#allocation3 + $0x218] sm:$0xff] %v1456
      %1473 = vst [vmem:[#allocation3 + $0x220] sm:$0xff] %v1457
      %1474 = vst [vmem:[#allocation3 + $0x228] sm:$0xff] %v1458
      %1475 = vst [vmem:[#allocation3 + $0x230] sm:$0xff] %v1459
      %1476 = vst [vmem:[#allocation3 + $0x238] sm:$0xff] %v1460
      %v1477 = vld [vmem:[%s3] sm:$0xff]
      %v1478 = vld [vmem:[%s3 + $0x8] sm:$0xff]
      %v1479 = vld [vmem:[%s3 + $0x10] sm:$0xf]
      %v1480 = vld [vmem:[%s3 + $0x14] sm:$0xff]
      %v1481 = vld [vmem:[%s3 + $0x1c] sm:$0xff]
      %v1482 = vld [vmem:[%s3 + $0x24] sm:$0xf]
      %v1483 = vld [vmem:[%s3 + $0x28] sm:$0xff]
      %v1484 = vld [vmem:[%s3 + $0x30] sm:$0xff]
      %v1485 = vld [vmem:[%s3 + $0x38] sm:$0xf]
      %v1486 = vld [vmem:[%s3 + $0x3c] sm:$0xff]
      %v1487 = vld [vmem:[%s3 + $0x44] sm:$0xff]
      %v1488 = vld [vmem:[%s3 + $0x4c] sm:$0xf]
      %v1489 = vld [vmem:[%s3 + $0x50] sm:$0xff]
      %v1490 = vld [vmem:[%s3 + $0x58] sm:$0xff]
      %v1491 = vld [vmem:[%s3 + $0x60] sm:$0xf]
      %v1492 = vld [vmem:[%s3 + $0x64] sm:$0xff]
      %v1493 = vld [vmem:[%s3 + $0x6c] sm:$0xff]
      %v1494 = vld [vmem:[%s3 + $0x74] sm:$0xf]
      %v1495 = vld [vmem:[#allocation3] sm:$0xff]
      %v1496 = vld [vmem:[#allocation3 + $0x8] sm:$0xff]
      %v1497 = vld [vmem:[#allocation3 + $0x10] sm:$0xff]
      %v1498 = vld [vmem:[#allocation3 + $0x18] sm:$0xff]
      %v1499 = vld [vmem:[#allocation3 + $0x20] sm:$0xff]
      %v1500 = vld [vmem:[#allocation3 + $0x28] sm:$0xff]
      %v1501 = vld [vmem:[#allocation3 + $0x30] sm:$0xff]
      %v1502 = vld [vmem:[#allocation3 + $0x38] sm:$0xff]
      %v1503 = vld [vmem:[#allocation3 + $0x40] sm:$0xff]
      %v1504 = vld [vmem:[#allocation3 + $0x48] sm:$0xff]
      %v1505 = vld [vmem:[#allocation3 + $0x50] sm:$0xff]
      %v1506 = vld [vmem:[#allocation3 + $0x58] sm:$0xff]
      %v1507 = vld [vmem:[#allocation3 + $0x60] sm:$0xff]
      %v1508 = vld [vmem:[#allocation3 + $0x68] sm:$0xff]
      %v1509 = vld [vmem:[#allocation3 + $0x70] sm:$0xff]
      %v1510 = vld [vmem:[#allocation3 + $0x78] sm:$0xff]
      %v1511 = vld [vmem:[#allocation3 + $0x80] sm:$0xff]
      %v1512 = vld [vmem:[#allocation3 + $0x88] sm:$0xff]
      %v1513 = vld [vmem:[#allocation3 + $0x90] sm:$0xff]
      %v1514 = vld [vmem:[#allocation3 + $0x98] sm:$0xff]
      %v1515 = vld [vmem:[#allocation3 + $0xa0] sm:$0xff]
      %v1516 = vld [vmem:[#allocation3 + $0xa8] sm:$0xff]
      %v1517 = vld [vmem:[#allocation3 + $0xb0] sm:$0xff]
      %v1518 = vld [vmem:[#allocation3 + $0xb8] sm:$0xff]
      %v1519 = vld [vmem:[#allocation3 + $0xc0] sm:$0xff]
      %v1520 = vld [vmem:[#allocation3 + $0xc8] sm:$0xff]
      %v1521 = vld [vmem:[#allocation3 + $0xd0] sm:$0xff]
      %v1522 = vld [vmem:[#allocation3 + $0xd8] sm:$0xff]
      %v1523 = vld [vmem:[#allocation3 + $0xe0] sm:$0xff]
      %v1524 = vld [vmem:[#allocation3 + $0xe8] sm:$0xff]
      %v1525 = vld [vmem:[#allocation3 + $0xf0] sm:$0xff]
      %v1526 = vld [vmem:[#allocation3 + $0xf8] sm:$0xff]
      %v1527 = vld [vmem:[#allocation3 + $0x100] sm:$0xff]
      %v1528 = vld [vmem:[#allocation3 + $0x108] sm:$0xff]
      %v1529 = vld [vmem:[#allocation3 + $0x110] sm:$0xff]
      %v1530 = vld [vmem:[#allocation3 + $0x118] sm:$0xff]
      %v1531 = vld [vmem:[#allocation3 + $0x120] sm:$0xff]
      %v1532 = vld [vmem:[#allocation3 + $0x128] sm:$0xff]
      %v1533 = vld [vmem:[#allocation3 + $0x130] sm:$0xff]
      %v1534 = vld [vmem:[#allocation3 + $0x138] sm:$0xff]
      %v1535 = vld [vmem:[#allocation3 + $0x140] sm:$0xff]
      %v1536 = vld [vmem:[#allocation3 + $0x148] sm:$0xff]
      %v1537 = vld [vmem:[#allocation3 + $0x150] sm:$0xff]
      %v1538 = vld [vmem:[#allocation3 + $0x158] sm:$0xff]
      %v1539 = vld [vmem:[#allocation3 + $0x160] sm:$0xff]
      %v1540 = vld [vmem:[#allocation3 + $0x168] sm:$0xff]
      %v1541 = vld [vmem:[#allocation3 + $0x170] sm:$0xff]
      %v1542 = vld [vmem:[#allocation3 + $0x178] sm:$0xff]
      %v1543 = vld [vmem:[#allocation3 + $0x180] sm:$0xff]
      %v1544 = vld [vmem:[#allocation3 + $0x188] sm:$0xff]
      %v1545 = vld [vmem:[#allocation3 + $0x190] sm:$0xff]
      %v1546 = vld [vmem:[#allocation3 + $0x198] sm:$0xff]
      %v1547 = vld [vmem:[#allocation3 + $0x1a0] sm:$0xff]
      %v1548 = vld [vmem:[#allocation3 + $0x1a8] sm:$0xff]
      %v1549 = vld [vmem:[#allocation3 + $0x1b0] sm:$0xff]
      %v1550 = vld [vmem:[#allocation3 + $0x1b8] sm:$0xff]
      %v1551 = vld [vmem:[#allocation3 + $0x1c0] sm:$0xff]
      %v1552 = vld [vmem:[#allocation3 + $0x1c8] sm:$0xff]
      %v1553 = vld [vmem:[#allocation3 + $0x1d0] sm:$0xff]
      %v1554 = vld [vmem:[#allocation3 + $0x1d8] sm:$0xff]
      %v1555 = vld [vmem:[#allocation3 + $0x1e0] sm:$0xff]
      %v1556 = vld [vmem:[#allocation3 + $0x1e8] sm:$0xff]
      %v1557 = vld [vmem:[#allocation3 + $0x1f0] sm:$0xff]
      %v1558 = vld [vmem:[#allocation3 + $0x1f8] sm:$0xff]
      %v1559 = vld [vmem:[#allocation3 + $0x200] sm:$0xff]
      %v1560 = vld [vmem:[#allocation3 + $0x208] sm:$0xff]
      %v1561 = vld [vmem:[#allocation3 + $0x210] sm:$0xff]
      %v1562 = vld [vmem:[#allocation3 + $0x218] sm:$0xff]
      %v1563 = vld [vmem:[#allocation3 + $0x220] sm:$0xff]
      %v1564 = vld [vmem:[#allocation3 + $0x228] sm:$0xff]
      %v1565 = vld [vmem:[#allocation3 + $0x230] sm:$0xff]
      %v1566 = vld [vmem:[#allocation3 + $0x238] sm:$0xff]
      %v1567 = vld [vmem:[%s4] sm:$0xff]
      %v1568 = vld [vmem:[%s4 + $0x8] sm:$0xff]
      %v1569 = vld [vmem:[%s4 + $0x10] sm:$0xff]
      %v1570 = vld [vmem:[%s4 + $0x18] sm:$0xff]
      %v1571 = vld [vmem:[%s4 + $0x20] sm:$0xff]
      %v1572 = vld [vmem:[%s4 + $0x28] sm:$0xff]
      %1574 = vset.pattern.permute.xlu0 0
      %1575 = vperm.xlu0 %1574, %v1567
      %v1576 = vpop.permute.xlu0 %1575
      %1579 = vset.pattern.permute.xlu0 0
      %1580 = vperm.xlu0 %1579, %v1568
      %v1581 = vpop.permute.xlu0 %1580
      %1584 = vset.pattern.permute.xlu0 0
      %1585 = vperm.xlu0 %1584, %v1569
      %v1586 = vpop.permute.xlu0 %1585
      %1589 = vset.pattern.permute.xlu0 0
      %1590 = vperm.xlu0 %1589, %v1570
      %v1591 = vpop.permute.xlu0 %1590
      %1594 = vset.pattern.permute.xlu0 0
      %1595 = vperm.xlu0 %1594, %v1571
      %v1596 = vpop.permute.xlu0 %1595
      %1599 = vset.pattern.permute.xlu0 0
      %1600 = vperm.xlu0 %1599, %v1572
      %v1601 = vpop.permute.xlu0 %1600
      %v1621 = vunpack.c.l.b16 %v1477
      %v1622 = vunpack.c.h.b16 %v1477
      %v1623 = vunpack.c.l.b16 %v1478
      %v1624 = vunpack.c.h.b16 %v1478
      %v1625 = vunpack.c.l.b16 %v1479
      %v1626 = vunpack.c.l.b16 %v1480
      %v1627 = vunpack.c.h.b16 %v1480
      %v1628 = vunpack.c.l.b16 %v1481
      %v1629 = vunpack.c.h.b16 %v1481
      %v1630 = vunpack.c.l.b16 %v1482
      %v1631 = vunpack.c.l.b16 %v1483
      %v1632 = vunpack.c.h.b16 %v1483
      %v1633 = vunpack.c.l.b16 %v1484
      %v1634 = vunpack.c.h.b16 %v1484
      %v1635 = vunpack.c.l.b16 %v1485
      %v1636 = vunpack.c.l.b16 %v1486
      %v1637 = vunpack.c.h.b16 %v1486
      %v1638 = vunpack.c.l.b16 %v1487
      %v1639 = vunpack.c.h.b16 %v1487
      %v1640 = vunpack.c.l.b16 %v1488
      %v1641 = vunpack.c.l.b16 %v1489
      %v1642 = vunpack.c.h.b16 %v1489
      %v1643 = vunpack.c.l.b16 %v1490
      %v1644 = vunpack.c.h.b16 %v1490
      %v1645 = vunpack.c.l.b16 %v1491
      %v1646 = vunpack.c.l.b16 %v1492
      %v1647 = vunpack.c.h.b16 %v1492
      %v1648 = vunpack.c.l.b16 %v1493
      %v1649 = vunpack.c.h.b16 %v1493
      %v1650 = vunpack.c.l.b16 %v1494
      %v1651 = vpack.c.b16 %v1626, %v1621
      %v1652 = vpack.c.b16 %v1627, %v1622
      %v1653 = vpack.c.b16 %v1628, %v1623
      %v1654 = vpack.c.b16 %v1629, %v1624
      %v1655 = vpack.c.b16 %v1630, %v1625
      %v1656 = vpack.c.b16 %v1636, %v1631
      %v1657 = vpack.c.b16 %v1637, %v1632
      %v1658 = vpack.c.b16 %v1638, %v1633
      %v1659 = vpack.c.b16 %v1639, %v1634
      %v1660 = vpack.c.b16 %v1640, %v1635
      %v1661 = vpack.c.b16 %v1646, %v1641
      %v1662 = vpack.c.b16 %v1647, %v1642
      %v1663 = vpack.c.b16 %v1648, %v1643
      %v1664 = vpack.c.b16 %v1649, %v1644
      %v1665 = vpack.c.b16 %v1650, %v1645
      %vm1678 = vcmask 523264
      %v1680 = vsel %vm1678, %v1655, 0
      %v1683 = vsel %vm1678, %v1660, 0
      %v1686 = vsel %vm1678, %v1665, 0
      %1688 = vmatprep.subr.bf16.mxu0 %v1496
      %1689 = vmatpush1.bf16.msra.mxu0 %v1495
      %1690 = vmatprep.subr.bf16.mxu0 %v1498
      %1691 = vmatpush1.bf16.msra.mxu0 %v1497
      %1692 = vmatprep.subr.bf16.mxu0 %v1500
      %1693 = vmatpush1.bf16.msra.mxu0 %v1499
      %1694 = vmatprep.subr.bf16.mxu0 %v1502
      %1695 = vmatpush1.bf16.msra.mxu0 %v1501
      %1696 = vmatprep.subr.bf16.mxu0 %v1504
      %1697 = vmatpush1.bf16.msra.mxu0 %v1503
      %1698 = vmatprep.subr.bf16.mxu0 %v1506
      %1699 = vmatpush1.bf16.msra.mxu0 %v1505
      %1700 = vmatprep.subr.bf16.mxu0 %v1508
      %1701 = vmatpush1.bf16.msra.mxu0 %v1507
      %1702 = vmatprep.subr.bf16.mxu0 %v1510
      %1703 = vmatpush1.bf16.msra.mxu0 %v1509
      %1704 = vmatprep.subr.bf16.mxu0 %v1512
      %1705 = vmatpush1.bf16.msra.mxu0 %v1511
      %1706 = vmatprep.subr.bf16.mxu0 %v1514
      %1707 = vmatpush1.bf16.msra.mxu0 %v1513
      %1708 = vmatprep.subr.bf16.mxu0 %v1516
      %1709 = vmatpush1.bf16.msra.mxu0 %v1515
      %1710 = vmatprep.subr.bf16.mxu0 %v1518
      %1711 = vmatpush1.bf16.msra.mxu0 %v1517
      %1712 = vmatprep.subr.bf16.mxu0 %v1520
      %1713 = vmatpush1.bf16.msra.mxu0 %v1519
      %1714 = vmatprep.subr.bf16.mxu0 %v1522
      %1715 = vmatpush1.bf16.msra.mxu0 %v1521
      %1716 = vmatprep.subr.bf16.mxu0 %v1524
      %1717 = vmatpush1.bf16.msra.mxu0 %v1523
      %1718 = vmatprep.subr.bf16.mxu0 %v1526
      %1719 = vmatpush1.bf16.msra.mxu0 %v1525
      %1720 = vmatprep.mubr.bf16.mxu0 %v1652
      %1721 = vmatmul.mubr.bf16.gmra.mrb[0].mxu0 %v1651
      %v1722 = vpop.f32.mrb[0].mxu0
      %v1723 = vadd.f32 %v1576, %v1722
      %v1724 = vpop.f32.mrb[0].mxu0
      %v1725 = vadd.f32 %v1576, %v1724
      %v1726 = vpop.f32.mrb[0].mxu0
      %v1727 = vadd.f32 %v1581, %v1726
      %v1728 = vpop.f32.mrb[0].mxu0
      %v1729 = vadd.f32 %v1581, %v1728
      %1730 = vmatprep.mubr.bf16.mxu0 %v1657
      %1731 = vmatmul.mubr.bf16.gmra.mrb[0].mxu0 %v1656
      %v1732 = vpop.f32.mrb[0].mxu0
      %v1733 = vadd.f32 %v1586, %v1732
      %v1734 = vpop.f32.mrb[0].mxu0
      %v1735 = vadd.f32 %v1586, %v1734
      %v1736 = vpop.f32.mrb[0].mxu0
      %v1737 = vadd.f32 %v1591, %v1736
      %v1738 = vpop.f32.mrb[0].mxu0
      %v1739 = vadd.f32 %v1591, %v1738
      %1740 = vmatprep.mubr.bf16.mxu0 %v1662
      %1741 = vmatmul.mubr.bf16.gmra.mrb[0].mxu0 %v1661
      %v1742 = vpop.f32.mrb[0].mxu0
      %v1743 = vadd.f32 %v1596, %v1742
      %v1744 = vpop.f32.mrb[0].mxu0
      %v1745 = vadd.f32 %v1596, %v1744
      %v1746 = vpop.f32.mrb[0].mxu0
      %v1747 = vadd.f32 %v1601, %v1746
      %v1748 = vpop.f32.mrb[0].mxu0
      %v1749 = vadd.f32 %v1601, %v1748
      %1750 = vdwg.mxu0
      %1751 = vmatprep.subr.bf16.mxu0 %v1528
      %1752 = vmatpush1.bf16.msra.mxu0 %v1527
      %1753 = vmatprep.subr.bf16.mxu0 %v1530
      %1754 = vmatpush1.bf16.msra.mxu0 %v1529
      %1755 = vmatprep.subr.bf16.mxu0 %v1532
      %1756 = vmatpush1.bf16.msra.mxu0 %v1531
      %1757 = vmatprep.subr.bf16.mxu0 %v1534
      %1758 = vmatpush1.bf16.msra.mxu0 %v1533
      %1759 = vmatprep.subr.bf16.mxu0 %v1536
      %1760 = vmatpush1.bf16.msra.mxu0 %v1535
      %1761 = vmatprep.subr.bf16.mxu0 %v1538
      %1762 = vmatpush1.bf16.msra.mxu0 %v1537
      %1763 = vmatprep.subr.bf16.mxu0 %v1540
      %1764 = vmatpush1.bf16.msra.mxu0 %v1539
      %1765 = vmatprep.subr.bf16.mxu0 %v1542
      %1766 = vmatpush1.bf16.msra.mxu0 %v1541
      %1767 = vmatprep.subr.bf16.mxu0 %v1544
      %1768 = vmatpush1.bf16.msra.mxu0 %v1543
      %1769 = vmatprep.subr.bf16.mxu0 %v1546
      %1770 = vmatpush1.bf16.msra.mxu0 %v1545
      %1771 = vmatprep.subr.bf16.mxu0 %v1548
      %1772 = vmatpush1.bf16.msra.mxu0 %v1547
      %1773 = vmatprep.subr.bf16.mxu0 %v1550
      %1774 = vmatpush1.bf16.msra.mxu0 %v1549
      %1775 = vmatprep.subr.bf16.mxu0 %v1552
      %1776 = vmatpush1.bf16.msra.mxu0 %v1551
      %1777 = vmatprep.subr.bf16.mxu0 %v1554
      %1778 = vmatpush1.bf16.msra.mxu0 %v1553
      %1779 = vmatprep.subr.bf16.mxu0 %v1556
      %1780 = vmatpush1.bf16.msra.mxu0 %v1555
      %1781 = vmatprep.subr.bf16.mxu0 %v1558
      %1782 = vmatpush1.bf16.msra.mxu0 %v1557
      %1783 = vmatprep.mubr.bf16.mxu0 %v1654
      %1784 = vmatmul.mubr.bf16.gmra.mrb[0].mxu0 %v1653
      %v1785 = vpop.f32.mrb[0].mxu0
      %v1786 = vadd.f32 %v1723, %v1785
      %v1787 = vpop.f32.mrb[0].mxu0
      %v1788 = vadd.f32 %v1725, %v1787
      %v1789 = vpop.f32.mrb[0].mxu0
      %v1790 = vadd.f32 %v1727, %v1789
      %v1791 = vpop.f32.mrb[0].mxu0
      %v1792 = vadd.f32 %v1729, %v1791
      %1793 = vmatprep.mubr.bf16.mxu0 %v1659
      %1794 = vmatmul.mubr.bf16.gmra.mrb[0].mxu0 %v1658
      %v1795 = vpop.f32.mrb[0].mxu0
      %v1796 = vadd.f32 %v1733, %v1795
      %v1797 = vpop.f32.mrb[0].mxu0
      %v1798 = vadd.f32 %v1735, %v1797
      %v1799 = vpop.f32.mrb[0].mxu0
      %v1800 = vadd.f32 %v1737, %v1799
      %v1801 = vpop.f32.mrb[0].mxu0
      %v1802 = vadd.f32 %v1739, %v1801
      %1803 = vmatprep.mubr.bf16.mxu0 %v1664
      %1804 = vmatmul.mubr.bf16.gmra.mrb[0].mxu0 %v1663
      %v1805 = vpop.f32.mrb[0].mxu0
      %v1806 = vadd.f32 %v1743, %v1805
      %v1807 = vpop.f32.mrb[0].mxu0
      %v1808 = vadd.f32 %v1745, %v1807
      %v1809 = vpop.f32.mrb[0].mxu0
      %v1810 = vadd.f32 %v1747, %v1809
      %v1811 = vpop.f32.mrb[0].mxu0
      %v1812 = vadd.f32 %v1749, %v1811
      %1813 = vdwg.mxu0
      %1814 = vmatprep.subr.bf16.mxu0 %v1560
      %1815 = vmatpush1.bf16.msra.mxu0 %v1559
      %1816 = vmatprep.subr.bf16.mxu0 %v1562
      %1817 = vmatpush1.bf16.msra.mxu0 %v1561
      %1818 = vmatprep.subr.bf16.mxu0 %v1564
      %1819 = vmatpush1.bf16.msra.mxu0 %v1563
      %1820 = vmatprep.subr.bf16.mxu0 %v1566
      %1821 = vmatpush1.bf16.msra.mxu0 %v1565
      %1822 = vmatprep.subr.bf16.mxu0 0
      %1823 = vmatpush1.bf16.msra.mxu0 0
      %1824 = vmatprep.subr.bf16.mxu0 0
      %1825 = vmatpush1.bf16.msra.mxu0 0
      %1826 = vmatprep.subr.bf16.mxu0 0
      %1827 = vmatpush1.bf16.msra.mxu0 0
      %1828 = vmatprep.subr.bf16.mxu0 0
      %1829 = vmatpush1.bf16.msra.mxu0 0
      %1830 = vmatprep.subr.bf16.mxu0 0
      %1831 = vmatpush1.bf16.msra.mxu0 0
      %1832 = vmatprep.subr.bf16.mxu0 0
      %1833 = vmatpush1.bf16.msra.mxu0 0
      %1834 = vmatprep.subr.bf16.mxu0 0
      %1835 = vmatpush1.bf16.msra.mxu0 0
      %1836 = vmatprep.subr.bf16.mxu0 0
      %1837 = vmatpush1.bf16.msra.mxu0 0
      %1838 = vmatprep.subr.bf16.mxu0 0
      %1839 = vmatpush1.bf16.msra.mxu0 0
      %1840 = vmatprep.subr.bf16.mxu0 0
      %1841 = vmatpush1.bf16.msra.mxu0 0
      %1842 = vmatprep.subr.bf16.mxu0 0
      %1843 = vmatpush1.bf16.msra.mxu0 0
      %1844 = vmatprep.subr.bf16.mxu0 0
      %1845 = vmatpush1.bf16.msra.mxu0 0
      %1846 = vmatprep.mubr.bf16.mxu0 0
      %1847 = vmatmul.mubr.bf16.gmra.mrb[0].mxu0 %v1680
      %v1848 = vpop.f32.mrb[0].mxu0
      %v1849 = vadd.f32 %v1786, %v1848
      %v1850 = vpop.f32.mrb[0].mxu0
      %v1851 = vadd.f32 %v1788, %v1850
      %v1852 = vpop.f32.mrb[0].mxu0
      %v1853 = vadd.f32 %v1790, %v1852
      %v1854 = vpop.f32.mrb[0].mxu0
      %v1855 = vadd.f32 %v1792, %v1854
      %1856 = vmatprep.mubr.bf16.mxu0 0
      %1857 = vmatmul.mubr.bf16.gmra.mrb[0].mxu0 %v1683
      %v1858 = vpop.f32.mrb[0].mxu0
      %v1859 = vadd.f32 %v1796, %v1858
      %v1860 = vpop.f32.mrb[0].mxu0
      %v1861 = vadd.f32 %v1798, %v1860
      %v1862 = vpop.f32.mrb[0].mxu0
      %v1863 = vadd.f32 %v1800, %v1862
      %v1864 = vpop.f32.mrb[0].mxu0
      %v1865 = vadd.f32 %v1802, %v1864
      %1866 = vmatprep.mubr.bf16.mxu0 0
      %1867 = vmatmul.mubr.bf16.gmra.mrb[0].mxu0 %v1686
      %v1868 = vpop.f32.mrb[0].mxu0
      %v1869 = vadd.f32 %v1806, %v1868
      %v1870 = vpop.f32.mrb[0].mxu0
      %v1871 = vadd.f32 %v1808, %v1870
      %v1872 = vpop.f32.mrb[0].mxu0
      %v1873 = vadd.f32 %v1810, %v1872
      %v1874 = vpop.f32.mrb[0].mxu0
      %v1875 = vadd.f32 %v1812, %v1874
      %1876 = vdwg.mxu0
      %1877 = vst [vmem:[%s370] sm:$0xff] %v1849
      %1878 = vst [vmem:[%s370 + $0x8] sm:$0xff] %v1851
      %1879 = vst [vmem:[%s370 + $0x10] sm:$0xff] %v1853
      %1880 = vst [vmem:[%s370 + $0x18] sm:$0xff] %v1855
      %1881 = vst [vmem:[%s370 + $0x20] sm:$0xff] %v1859
      %1882 = vst [vmem:[%s370 + $0x28] sm:$0xff] %v1861
      %1883 = vst [vmem:[%s370 + $0x30] sm:$0xff] %v1863
      %1884 = vst [vmem:[%s370 + $0x38] sm:$0xff] %v1865
      %1885 = vst [vmem:[%s370 + $0x40] sm:$0xff] %v1869
      %1886 = vst [vmem:[%s370 + $0x48] sm:$0xff] %v1871
      %1887 = vst [vmem:[%s370 + $0x50] sm:$0xff] %v1873
      %1888 = vst [vmem:[%s370 + $0x58] sm:$0xff] %v1875
      %p1889 = scmp.lt.s32.totalorder %s20, 1
      %s1890 = scalar_select %p1889, %s20, 1
      %p1891 = scmp.lt.s32.totalorder %s21, 1
      %s1892 = scalar_select %p1891, %s21, 1
      %s1893 = smul.addr %s1892, 12
      %s1894 = smul.addr %s1890, 24
      %s1895 = sadd.s32 %s1893, %s1894
      %s1896 = smul.addr %s1895, 8
      %s1897 = scalar_lea.vmem %s5, %s1896
      // Predicated region
      $region49: #{fsrcnn_forward_pallas.5} parent=39 // pred_check
        %p1898 = pneg %p186
      $region50: #{fsrcnn_forward_pallas.5} parent=39 // pred_check_branch
        %1900 = sbr.rel (%p1898) target = $region52
      $region51: #{fsrcnn_forward_pallas.5} parent=39 // pred_region
        _
      $region52: #{fsrcnn_forward_pallas.5} parent=39 // pred_fallthru
        _
    $region40: #{fsrcnn_forward_pallas.5} parent=5 // pred_fallthru
      _
    %p1901 = scmp.le.s32.totalorder 2, %s11
    // Predicated region
    $region53: #{fsrcnn_forward_pallas.5} parent=5 // pred_check
      %p1902 = pneg %p1901
    $region54: #{fsrcnn_forward_pallas.5} parent=5 // pred_check_branch
      %1904 = sbr.rel (%p1902) target = $region56
    $region55: #{fsrcnn_forward_pallas.5} parent=5 // pred_region
      %s1905 = ssub.s32 %s11, 2
      // Predicated region
      $region57: #{fsrcnn_forward_pallas.5} parent=55 // pred_check
        %p1906 = pneg %p192
      $region58: #{fsrcnn_forward_pallas.5} parent=55 // pred_check_branch
        %1908 = sbr.rel (%p1906) target = $region60
      $region59: #{fsrcnn_forward_pallas.5} parent=55 // pred_region
        %p1909 = scmp.lt.s32.totalorder %s22, 1
        %s1910 = scalar_select %p1909, %s22, 1
        %p1911 = scmp.lt.s32.totalorder %s23, 1
        %s1912 = scalar_select %p1911, %s23, 1
        %s1913 = smul.addr %s1912, 12
        %s1914 = smul.addr %s1910, 24
        %s1915 = sadd.s32 %s1913, %s1914
        %s1916 = smul.addr %s1915, 8
        %s1917 = scalar_lea.vmem %s5, %s1916
      $region60: #{fsrcnn_forward_pallas.5} parent=55 // pred_fallthru
        _
    $region56: #{fsrcnn_forward_pallas.5} parent=5 // pred_fallthru
      _
  $region6: #{fsrcnn_forward_pallas.5} parent=0 // loop_footer
    %s15 = sadd.s32 1, %s11
  $region7: #{fsrcnn_forward_pallas.5} parent=0 // loop_footer_branch
    %10 = sbr.rel target = $region3
  $region8: #{fsrcnn_forward_pallas.5} parent=0 // loop_exit
    _

</llo_original>
